<compile_context>
chip_gen: v7x
topology: tpu7x:2x2x1
jax: 0.10.0
libtpu: 0.0.40
codegen_flags: <defaults>
</compile_context>

<pallas_src>
import math
from functools import partial

import jax
import jax.numpy as jnp
from jax.experimental import pallas as pl
from jax.experimental.pallas import tpu as pltpu

# ----------------------------- configuration -------------------------------
D_MODEL = 32
NUM_HEADS = 4
NUM_LAYERS = 2
D_FF = 2048          # nn.TransformerEncoderLayer default dim_feedforward
SEQ = 8
BATCH = 2
EPS = 1e-5           # nn.LayerNorm default eps


def _layer_norm(y, w, b):
    mu = jnp.mean(y, axis=-1, keepdims=True)
    var = jnp.mean((y - mu) ** 2, axis=-1, keepdims=True)
    return (y - mu) * jax.lax.rsqrt(var + EPS) * w + b


# ------------------------------ fused kernel --------------------------------
def fused_transformer_kernel(x_ref,                     # (B*S, D)
                             in_w_ref, in_b_ref,        # (L, D, 3D), (L, 1, 3D)
                             out_w_ref, out_b_ref,      # (L, D, D),  (L, 1, D)
                             ln1_w_ref, ln1_b_ref,      # (L, 1, D),  (L, 1, D)
                             ff1_w_ref, ff1_b_ref,      # (L, D, Dff),(L, 1, Dff)
                             ff2_w_ref, ff2_b_ref,      # (L, Dff, D),(L, 1, D)
                             ln2_w_ref, ln2_b_ref,      # (L, 1, D),  (L, 1, D)
                             vconv_w_ref, vconv_b_ref,  # (D, D), (1, D)  (pre-transposed)
                             o_ref,                     # (B, D)
                             *, batch, seq, num_heads, num_layers):
    d = x_ref.shape[-1]
    hd = d // num_heads
    scale = 1.0 / math.sqrt(hd)         # PyTorch MHA scales by 1/sqrt(head_dim)

    h = x_ref[...]                      # (B*S, D) float32, stays on-chip throughout

    for l in range(num_layers):         # static unroll over layers (NUM_LAYERS == 2)
        # ---- multi-head self-attention (weights pre-transposed: no .T in kernel) ----
        qkv = jnp.dot(h, in_w_ref[l], preferred_element_type=jnp.float32) + in_b_ref[l]
        q = qkv[:, 0 * d:1 * d]
        k = qkv[:, 1 * d:2 * d]
        v = qkv[:, 2 * d:3 * d]

        batch_outs = []
        for b in range(batch):          # static: attention never mixes samples
            r0 = b * seq
            qb = q[r0:r0 + seq, :]
            kb = k[r0:r0 + seq, :]
            vb = v[r0:r0 + seq, :]
            head_outs = []
            for hh in range(num_heads):  # static: tiny (S, hd) 2-D tiles
                c0 = hh * hd
                qh = qb[:, c0:c0 + hd]
                kh = kb[:, c0:c0 + hd]
                vh = vb[:, c0:c0 + hd]
                # q @ k^T without materializing a transpose
                s = jax.lax.dot_general(qh, kh, (((1,), (1,)), ((), ())),
                                        preferred_element_type=jnp.float32) * scale
                s = s - jnp.max(s, axis=-1, keepdims=True)
                p = jnp.exp(s)
                p = p / jnp.sum(p, axis=-1, keepdims=True)
                head_outs.append(jnp.dot(p, vh, preferred_element_type=jnp.float32))
            batch_outs.append(jnp.concatenate(head_outs, axis=-1))
        attn_out = jnp.concatenate(batch_outs, axis=0)              # (B*S, D)

        sa = jnp.dot(attn_out, out_w_ref[l],
                     preferred_element_type=jnp.float32) + out_b_ref[l]

        # ---- residual + LayerNorm1 (dropout == identity in eval mode) ----
        h1 = _layer_norm(h + sa, ln1_w_ref[l], ln1_b_ref[l])

        # ---- feed-forward (ReLU) ----
        ff = jnp.dot(h1, ff1_w_ref[l], preferred_element_type=jnp.float32) + ff1_b_ref[l]
        ff = jnp.maximum(ff, 0.0)
        ff = jnp.dot(ff, ff2_w_ref[l], preferred_element_type=jnp.float32) + ff2_b_ref[l]

        # ---- residual + LayerNorm2 ----
        h = _layer_norm(h1 + ff, ln2_w_ref[l], ln2_b_ref[l])

    # last time-step of every sample: rows S-1, 2S-1, ...
    last = jnp.concatenate(
        [h[b * seq + seq - 1: b * seq + seq, :] for b in range(batch)], axis=0)  # (B, D)

    # Final ScaledDotProductAttention has a single key/value token, so softmax over the
    # length-1 axis is exactly 1.0 and output == v_conv(last token).  q_conv is unused
    # in the torch forward and k_conv cannot influence the result.
    vout = jnp.dot(last, vconv_w_ref[...],
                   preferred_element_type=jnp.float32) + vconv_b_ref[...]
    o_ref[...] = vout.astype(o_ref.dtype)


# ------------------------------ wrapper --------------------------------------
def transformer_with_attention(x, params):
    """x: (B, S, D). params: 14 pre-packed arrays (see pack_params).
    Returns (output (B, 1, D), attn (B, 1, 1)) matching the PyTorch module."""
    B, S, D = x.shape
    x2 = x.reshape(B * S, D)            # fold batch into rows; attention is kept
                                        # per-sample inside the kernel.

    def full_spec(shape):
        nd = len(shape)
        return pl.BlockSpec(shape, lambda i, _nd=nd: (0,) * _nd)

    arrays = (x2,) + tuple(params)
    out = pl.pallas_call(
        partial(fused_transformer_kernel, batch=B, seq=S,
                num_heads=NUM_HEADS, num_layers=NUM_LAYERS),
        out_shape=jax.ShapeDtypeStruct((B, D), x.dtype),
        grid=(1,),
        in_specs=[full_spec(a.shape) for a in arrays],
        out_specs=full_spec((B, D)),
        compiler_params=pltpu.CompilerParams(dimension_semantics=("arbitrary",)),
        # TODO(synk): on v7x (2 TensorCores) a 2-wide "parallel" batch axis could split
        # the per-sample work across cores; kept a single program here since v5e/v6e
        # have one TC and the workload is launch/overhead bound.
    )(*arrays)

    output = out[:, None, :]                      # (B, 1, D)
    attn = jnp.ones((B, 1, 1), jnp.float32)       # softmax over a length-1 axis == 1.0
    return output, attn


# -------------------------- deterministic params -----------------------------
def make_layer_params(key, d_model, d_ff):
    """Random per-layer parameters in native PyTorch layout."""
    ks = jax.random.split(key, 6)
    s = 0.05
    return dict(
        in_w=s * jax.random.normal(ks[0], (3 * d_model, d_model), jnp.float32),
        in_b=s * jax.random.normal(ks[1], (3 * d_model,), jnp.float32),
        out_w=s * jax.random.normal(ks[2], (d_model, d_model), jnp.float32),
        out_b=jnp.zeros((d_model,), jnp.float32),
        ln1_w=jnp.ones((d_model,), jnp.float32),
        ln1_b=jnp.zeros((d_model,), jnp.float32),
        ff1_w=s * jax.random.normal(ks[3], (d_ff, d_model), jnp.float32),
        ff1_b=s * jax.random.normal(ks[4], (d_ff,), jnp.float32),
        ff2_w=s * jax.random.normal(ks[5], (d_model, d_ff), jnp.float32),
        ff2_b=jnp.zeros((d_model,), jnp.float32),
        ln2_w=jnp.ones((d_model,), jnp.float32),
        ln2_b=jnp.zeros((d_model,), jnp.float32),
    )


def pack_params(layers, v_conv_w, v_conv_b):
    """Stack per-layer params over a leading layer axis and pre-transpose every weight
    so the kernel computes jnp.dot(x, w) with no in-kernel transposes."""
    def stk(name, fn):
        return jnp.stack([fn(lp[name]) for lp in layers], axis=0)
    t = lambda a: a.T           # (out, in) -> (in, out)
    r = lambda a: a[None, :]    # 1-D bias -> (1, N) row for broadcasting
    return (
        stk('in_w', t),  stk('in_b', r),
        stk('out_w', t), stk('out_b', r),
        stk('ln1_w', r), stk('ln1_b', r),
        stk('ff1_w', t), stk('ff1_b', r),
        stk('ff2_w', t), stk('ff2_b', r),
        stk('ln2_w', r), stk('ln2_b', r),
        v_conv_w.T,      v_conv_b[None, :],
    )


if __name__ == "__main__":
    key = jax.random.PRNGKey(0)
    k_x, k_layers, k_kc, k_vc = jax.random.split(key, 4)

    x = jax.random.normal(k_x, (BATCH, SEQ, D_MODEL), jnp.float32)

    layer_keys = jax.random.split(k_layers, NUM_LAYERS)
    layers = [make_layer_params(k, D_MODEL, D_FF) for k in layer_keys]

    # Conv1d(d_model, d_model, kernel_size=1) weights as (D, D) + bias (D,).
    # q_conv / k_conv exist in the torch module but cannot affect the forward output
    # (q_conv is never applied; with a single key token softmax == 1 so k_conv is moot),
    # so they are created here for fidelity but not fed to the kernel.
    kk = jax.random.split(k_kc, 2)
    vv = jax.random.split(k_vc, 2)
    k_conv_w = 0.05 * jax.random.normal(kk[0], (D_MODEL, D_MODEL), jnp.float32)  # unused
    k_conv_b = 0.05 * jax.random.normal(kk[1], (D_MODEL,), jnp.float32)          # unused
    v_conv_w = 0.05 * jax.random.normal(vv[0], (D_MODEL, D_MODEL), jnp.float32)
    v_conv_b = 0.05 * jax.random.normal(vv[1], (D_MODEL,), jnp.float32)

    params = pack_params(layers, v_conv_w, v_conv_b)

    fwd = jax.jit(transformer_with_attention)
    output, attn = fwd(x, params)
    jax.block_until_ready((output, attn))

    assert output.shape == (BATCH, 1, D_MODEL)
    assert attn.shape == (BATCH, 1, 1)
    print("KERNEL_OK")
</pallas_src>

<mosaic_0001>
module attributes {stable_mosaic.version = 11 : i64} {
  func.func @fused_transformer_kernel(%arg0: i32, %arg1: memref<16x32xf32, #tpu.memory_space<vmem>>, %arg2: memref<2x32x96xf32, #tpu.memory_space<vmem>>, %arg3: memref<2x1x96xf32, #tpu.memory_space<vmem>>, %arg4: memref<2x32x32xf32, #tpu.memory_space<vmem>>, %arg5: memref<2x1x32xf32, #tpu.memory_space<vmem>>, %arg6: memref<2x1x32xf32, #tpu.memory_space<vmem>>, %arg7: memref<2x1x32xf32, #tpu.memory_space<vmem>>, %arg8: memref<2x32x2048xf32, #tpu.memory_space<vmem>>, %arg9: memref<2x1x2048xf32, #tpu.memory_space<vmem>>, %arg10: memref<2x2048x32xf32, #tpu.memory_space<vmem>>, %arg11: memref<2x1x32xf32, #tpu.memory_space<vmem>>, %arg12: memref<2x1x32xf32, #tpu.memory_space<vmem>>, %arg13: memref<2x1x32xf32, #tpu.memory_space<vmem>>, %arg14: memref<32x32xf32, #tpu.memory_space<vmem>>, %arg15: memref<1x32xf32, #tpu.memory_space<vmem>>, %arg16: memref<2x32xf32, #tpu.memory_space<vmem>>) attributes {dimension_semantics = [#tpu.dimension_semantics<arbitrary>], iteration_bounds = array<i64: 1>, scalar_prefetch = 0 : i64, scratch_operands = 0 : i64, tpu.core_type = #tpu.core_type<tc>, window_params = [{pipeline_mode = #tpu.pipeline_mode<synchronous>, transform_indices = @transform_0, window_bounds = array<i64: 16, 32>}, {pipeline_mode = #tpu.pipeline_mode<synchronous>, transform_indices = @transform_1, window_bounds = array<i64: 2, 32, 96>}, {pipeline_mode = #tpu.pipeline_mode<synchronous>, transform_indices = @transform_2, window_bounds = array<i64: 2, 1, 96>}, {pipeline_mode = #tpu.pipeline_mode<synchronous>, transform_indices = @transform_3, window_bounds = array<i64: 2, 32, 32>}, {pipeline_mode = #tpu.pipeline_mode<synchronous>, transform_indices = @transform_4, window_bounds = array<i64: 2, 1, 32>}, {pipeline_mode = #tpu.pipeline_mode<synchronous>, transform_indices = @transform_5, window_bounds = array<i64: 2, 1, 32>}, {pipeline_mode = #tpu.pipeline_mode<synchronous>, transform_indices = @transform_6, window_bounds = array<i64: 2, 1, 32>}, {pipeline_mode = #tpu.pipeline_mode<synchronous>, transform_indices = @transform_7, window_bounds = array<i64: 2, 32, 2048>}, {pipeline_mode = #tpu.pipeline_mode<synchronous>, transform_indices = @transform_8, window_bounds = array<i64: 2, 1, 2048>}, {pipeline_mode = #tpu.pipeline_mode<synchronous>, transform_indices = @transform_9, window_bounds = array<i64: 2, 2048, 32>}, {pipeline_mode = #tpu.pipeline_mode<synchronous>, transform_indices = @transform_10, window_bounds = array<i64: 2, 1, 32>}, {pipeline_mode = #tpu.pipeline_mode<synchronous>, transform_indices = @transform_11, window_bounds = array<i64: 2, 1, 32>}, {pipeline_mode = #tpu.pipeline_mode<synchronous>, transform_indices = @transform_12, window_bounds = array<i64: 2, 1, 32>}, {pipeline_mode = #tpu.pipeline_mode<synchronous>, transform_indices = @transform_13, window_bounds = array<i64: 32, 32>}, {pipeline_mode = #tpu.pipeline_mode<synchronous>, transform_indices = @transform_14, window_bounds = array<i64: 1, 32>}, {pipeline_mode = #tpu.pipeline_mode<synchronous>, transform_indices = @transform_15, window_bounds = array<i64: 2, 32>}]} {
    %c0 = arith.constant 0 : index
    %c0_0 = arith.constant 0 : index
    %0 = vector.load %arg1[%c0, %c0_0] : memref<16x32xf32, #tpu.memory_space<vmem>>, vector<16x32xf32>
    %c0_1 = arith.constant 0 : index
    %c0_2 = arith.constant 0 : index
    %c0_3 = arith.constant 0 : index
    %1 = vector.load %arg2[%c0_1, %c0_2, %c0_3] : memref<2x32x96xf32, #tpu.memory_space<vmem>>, vector<1x32x96xf32>
    %2 = vector.shape_cast %1 : vector<1x32x96xf32> to vector<32x96xf32>
    %cst = arith.constant dense<0.000000e+00> : vector<16x96xf32>
    %3 = tpu.matmul %0, %2, %cst {dimension_numbers = #tpu.dot_dimension_numbers<[1], [0], [0], [1], [0, 0, 1, 1], [], []>} : vector<16x32xf32>, vector<32x96xf32>, vector<16x96xf32> -> vector<16x96xf32>
    %c0_4 = arith.constant 0 : index
    %c0_5 = arith.constant 0 : index
    %c0_6 = arith.constant 0 : index
    %4 = vector.load %arg3[%c0_4, %c0_5, %c0_6] : memref<2x1x96xf32, #tpu.memory_space<vmem>>, vector<1x1x96xf32>
    %5 = vector.shape_cast %4 : vector<1x1x96xf32> to vector<1x96xf32>
    %6 = vector.broadcast %5 : vector<1x96xf32> to vector<16x96xf32>
    %7 = arith.addf %3, %6 : vector<16x96xf32>
    %8 = vector.extract_strided_slice %7 {offsets = [0, 0], sizes = [16, 32], strides = [1, 1]} : vector<16x96xf32> to vector<16x32xf32>
    %9 = vector.extract_strided_slice %7 {offsets = [0, 32], sizes = [16, 32], strides = [1, 1]} : vector<16x96xf32> to vector<16x32xf32>
    %10 = vector.extract_strided_slice %7 {offsets = [0, 64], sizes = [16, 32], strides = [1, 1]} : vector<16x96xf32> to vector<16x32xf32>
    %11 = vector.extract_strided_slice %8 {offsets = [0, 0], sizes = [8, 32], strides = [1, 1]} : vector<16x32xf32> to vector<8x32xf32>
    %12 = vector.extract_strided_slice %9 {offsets = [0, 0], sizes = [8, 32], strides = [1, 1]} : vector<16x32xf32> to vector<8x32xf32>
    %13 = vector.extract_strided_slice %10 {offsets = [0, 0], sizes = [8, 32], strides = [1, 1]} : vector<16x32xf32> to vector<8x32xf32>
    %14 = vector.extract_strided_slice %11 {offsets = [0, 0], sizes = [8, 8], strides = [1, 1]} : vector<8x32xf32> to vector<8x8xf32>
    %15 = vector.extract_strided_slice %12 {offsets = [0, 0], sizes = [8, 8], strides = [1, 1]} : vector<8x32xf32> to vector<8x8xf32>
    %16 = vector.extract_strided_slice %13 {offsets = [0, 0], sizes = [8, 8], strides = [1, 1]} : vector<8x32xf32> to vector<8x8xf32>
    %cst_7 = arith.constant dense<0.000000e+00> : vector<8x8xf32>
    %17 = tpu.matmul %14, %15, %cst_7 {dimension_numbers = #tpu.dot_dimension_numbers<[1], [1], [0], [0], [0, 0, 1, 0], [], []>} : vector<8x8xf32>, vector<8x8xf32>, vector<8x8xf32> -> vector<8x8xf32>
    %cst_8 = arith.constant 0.353553385 : f32
    %18 = vector.broadcast %cst_8 : f32 to vector<8x8xf32>
    %19 = arith.mulf %17, %18 : vector<8x8xf32>
    %cst_9 = arith.constant dense<0xFF800000> : vector<8xf32>
    %20 = vector.multi_reduction <maximumf>, %19, %cst_9 [1] : vector<8x8xf32> to vector<8xf32>
    %21 = vector.shape_cast %20 : vector<8xf32> to vector<8x1xf32>
    %22 = vector.broadcast %21 : vector<8x1xf32> to vector<8x8xf32>
    %23 = arith.subf %19, %22 : vector<8x8xf32>
    %24 = math.exp %23 : vector<8x8xf32>
    %cst_10 = arith.constant dense<0.000000e+00> : vector<8xf32>
    %25 = vector.multi_reduction <add>, %24, %cst_10 [1] : vector<8x8xf32> to vector<8xf32>
    %26 = vector.shape_cast %25 : vector<8xf32> to vector<8x1xf32>
    %27 = vector.broadcast %26 : vector<8x1xf32> to vector<8x8xf32>
    %28 = arith.divf %24, %27 : vector<8x8xf32>
    %cst_11 = arith.constant dense<0.000000e+00> : vector<8x8xf32>
    %29 = tpu.matmul %28, %16, %cst_11 {dimension_numbers = #tpu.dot_dimension_numbers<[1], [0], [0], [1], [0, 0, 1, 1], [], []>} : vector<8x8xf32>, vector<8x8xf32>, vector<8x8xf32> -> vector<8x8xf32>
    %30 = vector.extract_strided_slice %11 {offsets = [0, 8], sizes = [8, 8], strides = [1, 1]} : vector<8x32xf32> to vector<8x8xf32>
    %31 = vector.extract_strided_slice %12 {offsets = [0, 8], sizes = [8, 8], strides = [1, 1]} : vector<8x32xf32> to vector<8x8xf32>
    %32 = vector.extract_strided_slice %13 {offsets = [0, 8], sizes = [8, 8], strides = [1, 1]} : vector<8x32xf32> to vector<8x8xf32>
    %cst_12 = arith.constant dense<0.000000e+00> : vector<8x8xf32>
    %33 = tpu.matmul %30, %31, %cst_12 {dimension_numbers = #tpu.dot_dimension_numbers<[1], [1], [0], [0], [0, 0, 1, 0], [], []>} : vector<8x8xf32>, vector<8x8xf32>, vector<8x8xf32> -> vector<8x8xf32>
    %cst_13 = arith.constant 0.353553385 : f32
    %34 = vector.broadcast %cst_13 : f32 to vector<8x8xf32>
    %35 = arith.mulf %33, %34 : vector<8x8xf32>
    %cst_14 = arith.constant dense<0xFF800000> : vector<8xf32>
    %36 = vector.multi_reduction <maximumf>, %35, %cst_14 [1] : vector<8x8xf32> to vector<8xf32>
    %37 = vector.shape_cast %36 : vector<8xf32> to vector<8x1xf32>
    %38 = vector.broadcast %37 : vector<8x1xf32> to vector<8x8xf32>
    %39 = arith.subf %35, %38 : vector<8x8xf32>
    %40 = math.exp %39 : vector<8x8xf32>
    %cst_15 = arith.constant dense<0.000000e+00> : vector<8xf32>
    %41 = vector.multi_reduction <add>, %40, %cst_15 [1] : vector<8x8xf32> to vector<8xf32>
    %42 = vector.shape_cast %41 : vector<8xf32> to vector<8x1xf32>
    %43 = vector.broadcast %42 : vector<8x1xf32> to vector<8x8xf32>
    %44 = arith.divf %40, %43 : vector<8x8xf32>
    %cst_16 = arith.constant dense<0.000000e+00> : vector<8x8xf32>
    %45 = tpu.matmul %44, %32, %cst_16 {dimension_numbers = #tpu.dot_dimension_numbers<[1], [0], [0], [1], [0, 0, 1, 1], [], []>} : vector<8x8xf32>, vector<8x8xf32>, vector<8x8xf32> -> vector<8x8xf32>
    %46 = vector.extract_strided_slice %11 {offsets = [0, 16], sizes = [8, 8], strides = [1, 1]} : vector<8x32xf32> to vector<8x8xf32>
    %47 = vector.extract_strided_slice %12 {offsets = [0, 16], sizes = [8, 8], strides = [1, 1]} : vector<8x32xf32> to vector<8x8xf32>
    %48 = vector.extract_strided_slice %13 {offsets = [0, 16], sizes = [8, 8], strides = [1, 1]} : vector<8x32xf32> to vector<8x8xf32>
    %cst_17 = arith.constant dense<0.000000e+00> : vector<8x8xf32>
    %49 = tpu.matmul %46, %47, %cst_17 {dimension_numbers = #tpu.dot_dimension_numbers<[1], [1], [0], [0], [0, 0, 1, 0], [], []>} : vector<8x8xf32>, vector<8x8xf32>, vector<8x8xf32> -> vector<8x8xf32>
    %cst_18 = arith.constant 0.353553385 : f32
    %50 = vector.broadcast %cst_18 : f32 to vector<8x8xf32>
    %51 = arith.mulf %49, %50 : vector<8x8xf32>
    %cst_19 = arith.constant dense<0xFF800000> : vector<8xf32>
    %52 = vector.multi_reduction <maximumf>, %51, %cst_19 [1] : vector<8x8xf32> to vector<8xf32>
    %53 = vector.shape_cast %52 : vector<8xf32> to vector<8x1xf32>
    %54 = vector.broadcast %53 : vector<8x1xf32> to vector<8x8xf32>
    %55 = arith.subf %51, %54 : vector<8x8xf32>
    %56 = math.exp %55 : vector<8x8xf32>
    %cst_20 = arith.constant dense<0.000000e+00> : vector<8xf32>
    %57 = vector.multi_reduction <add>, %56, %cst_20 [1] : vector<8x8xf32> to vector<8xf32>
    %58 = vector.shape_cast %57 : vector<8xf32> to vector<8x1xf32>
    %59 = vector.broadcast %58 : vector<8x1xf32> to vector<8x8xf32>
    %60 = arith.divf %56, %59 : vector<8x8xf32>
    %cst_21 = arith.constant dense<0.000000e+00> : vector<8x8xf32>
    %61 = tpu.matmul %60, %48, %cst_21 {dimension_numbers = #tpu.dot_dimension_numbers<[1], [0], [0], [1], [0, 0, 1, 1], [], []>} : vector<8x8xf32>, vector<8x8xf32>, vector<8x8xf32> -> vector<8x8xf32>
    %62 = vector.extract_strided_slice %11 {offsets = [0, 24], sizes = [8, 8], strides = [1, 1]} : vector<8x32xf32> to vector<8x8xf32>
    %63 = vector.extract_strided_slice %12 {offsets = [0, 24], sizes = [8, 8], strides = [1, 1]} : vector<8x32xf32> to vector<8x8xf32>
    %64 = vector.extract_strided_slice %13 {offsets = [0, 24], sizes = [8, 8], strides = [1, 1]} : vector<8x32xf32> to vector<8x8xf32>
    %cst_22 = arith.constant dense<0.000000e+00> : vector<8x8xf32>
    %65 = tpu.matmul %62, %63, %cst_22 {dimension_numbers = #tpu.dot_dimension_numbers<[1], [1], [0], [0], [0, 0, 1, 0], [], []>} : vector<8x8xf32>, vector<8x8xf32>, vector<8x8xf32> -> vector<8x8xf32>
    %cst_23 = arith.constant 0.353553385 : f32
    %66 = vector.broadcast %cst_23 : f32 to vector<8x8xf32>
    %67 = arith.mulf %65, %66 : vector<8x8xf32>
    %cst_24 = arith.constant dense<0xFF800000> : vector<8xf32>
    %68 = vector.multi_reduction <maximumf>, %67, %cst_24 [1] : vector<8x8xf32> to vector<8xf32>
    %69 = vector.shape_cast %68 : vector<8xf32> to vector<8x1xf32>
    %70 = vector.broadcast %69 : vector<8x1xf32> to vector<8x8xf32>
    %71 = arith.subf %67, %70 : vector<8x8xf32>
    %72 = math.exp %71 : vector<8x8xf32>
    %cst_25 = arith.constant dense<0.000000e+00> : vector<8xf32>
    %73 = vector.multi_reduction <add>, %72, %cst_25 [1] : vector<8x8xf32> to vector<8xf32>
    %74 = vector.shape_cast %73 : vector<8xf32> to vector<8x1xf32>
    %75 = vector.broadcast %74 : vector<8x1xf32> to vector<8x8xf32>
    %76 = arith.divf %72, %75 : vector<8x8xf32>
    %cst_26 = arith.constant dense<0.000000e+00> : vector<8x8xf32>
    %77 = tpu.matmul %76, %64, %cst_26 {dimension_numbers = #tpu.dot_dimension_numbers<[1], [0], [0], [1], [0, 0, 1, 1], [], []>} : vector<8x8xf32>, vector<8x8xf32>, vector<8x8xf32> -> vector<8x8xf32>
    %78 = tpu.concatenate %29, %45, %61, %77 in 1 : vector<8x8xf32>, vector<8x8xf32>, vector<8x8xf32>, vector<8x8xf32> -> vector<8x32xf32>
    %79 = vector.extract_strided_slice %8 {offsets = [8, 0], sizes = [8, 32], strides = [1, 1]} : vector<16x32xf32> to vector<8x32xf32>
    %80 = vector.extract_strided_slice %9 {offsets = [8, 0], sizes = [8, 32], strides = [1, 1]} : vector<16x32xf32> to vector<8x32xf32>
    %81 = vector.extract_strided_slice %10 {offsets = [8, 0], sizes = [8, 32], strides = [1, 1]} : vector<16x32xf32> to vector<8x32xf32>
    %82 = vector.extract_strided_slice %79 {offsets = [0, 0], sizes = [8, 8], strides = [1, 1]} : vector<8x32xf32> to vector<8x8xf32>
    %83 = vector.extract_strided_slice %80 {offsets = [0, 0], sizes = [8, 8], strides = [1, 1]} : vector<8x32xf32> to vector<8x8xf32>
    %84 = vector.extract_strided_slice %81 {offsets = [0, 0], sizes = [8, 8], strides = [1, 1]} : vector<8x32xf32> to vector<8x8xf32>
    %cst_27 = arith.constant dense<0.000000e+00> : vector<8x8xf32>
    %85 = tpu.matmul %82, %83, %cst_27 {dimension_numbers = #tpu.dot_dimension_numbers<[1], [1], [0], [0], [0, 0, 1, 0], [], []>} : vector<8x8xf32>, vector<8x8xf32>, vector<8x8xf32> -> vector<8x8xf32>
    %cst_28 = arith.constant 0.353553385 : f32
    %86 = vector.broadcast %cst_28 : f32 to vector<8x8xf32>
    %87 = arith.mulf %85, %86 : vector<8x8xf32>
    %cst_29 = arith.constant dense<0xFF800000> : vector<8xf32>
    %88 = vector.multi_reduction <maximumf>, %87, %cst_29 [1] : vector<8x8xf32> to vector<8xf32>
    %89 = vector.shape_cast %88 : vector<8xf32> to vector<8x1xf32>
    %90 = vector.broadcast %89 : vector<8x1xf32> to vector<8x8xf32>
    %91 = arith.subf %87, %90 : vector<8x8xf32>
    %92 = math.exp %91 : vector<8x8xf32>
    %cst_30 = arith.constant dense<0.000000e+00> : vector<8xf32>
    %93 = vector.multi_reduction <add>, %92, %cst_30 [1] : vector<8x8xf32> to vector<8xf32>
    %94 = vector.shape_cast %93 : vector<8xf32> to vector<8x1xf32>
    %95 = vector.broadcast %94 : vector<8x1xf32> to vector<8x8xf32>
    %96 = arith.divf %92, %95 : vector<8x8xf32>
    %cst_31 = arith.constant dense<0.000000e+00> : vector<8x8xf32>
    %97 = tpu.matmul %96, %84, %cst_31 {dimension_numbers = #tpu.dot_dimension_numbers<[1], [0], [0], [1], [0, 0, 1, 1], [], []>} : vector<8x8xf32>, vector<8x8xf32>, vector<8x8xf32> -> vector<8x8xf32>
    %98 = vector.extract_strided_slice %79 {offsets = [0, 8], sizes = [8, 8], strides = [1, 1]} : vector<8x32xf32> to vector<8x8xf32>
    %99 = vector.extract_strided_slice %80 {offsets = [0, 8], sizes = [8, 8], strides = [1, 1]} : vector<8x32xf32> to vector<8x8xf32>
    %100 = vector.extract_strided_slice %81 {offsets = [0, 8], sizes = [8, 8], strides = [1, 1]} : vector<8x32xf32> to vector<8x8xf32>
    %cst_32 = arith.constant dense<0.000000e+00> : vector<8x8xf32>
    %101 = tpu.matmul %98, %99, %cst_32 {dimension_numbers = #tpu.dot_dimension_numbers<[1], [1], [0], [0], [0, 0, 1, 0], [], []>} : vector<8x8xf32>, vector<8x8xf32>, vector<8x8xf32> -> vector<8x8xf32>
    %cst_33 = arith.constant 0.353553385 : f32
    %102 = vector.broadcast %cst_33 : f32 to vector<8x8xf32>
    %103 = arith.mulf %101, %102 : vector<8x8xf32>
    %cst_34 = arith.constant dense<0xFF800000> : vector<8xf32>
    %104 = vector.multi_reduction <maximumf>, %103, %cst_34 [1] : vector<8x8xf32> to vector<8xf32>
    %105 = vector.shape_cast %104 : vector<8xf32> to vector<8x1xf32>
    %106 = vector.broadcast %105 : vector<8x1xf32> to vector<8x8xf32>
    %107 = arith.subf %103, %106 : vector<8x8xf32>
    %108 = math.exp %107 : vector<8x8xf32>
    %cst_35 = arith.constant dense<0.000000e+00> : vector<8xf32>
    %109 = vector.multi_reduction <add>, %108, %cst_35 [1] : vector<8x8xf32> to vector<8xf32>
    %110 = vector.shape_cast %109 : vector<8xf32> to vector<8x1xf32>
    %111 = vector.broadcast %110 : vector<8x1xf32> to vector<8x8xf32>
    %112 = arith.divf %108, %111 : vector<8x8xf32>
    %cst_36 = arith.constant dense<0.000000e+00> : vector<8x8xf32>
    %113 = tpu.matmul %112, %100, %cst_36 {dimension_numbers = #tpu.dot_dimension_numbers<[1], [0], [0], [1], [0, 0, 1, 1], [], []>} : vector<8x8xf32>, vector<8x8xf32>, vector<8x8xf32> -> vector<8x8xf32>
    %114 = vector.extract_strided_slice %79 {offsets = [0, 16], sizes = [8, 8], strides = [1, 1]} : vector<8x32xf32> to vector<8x8xf32>
    %115 = vector.extract_strided_slice %80 {offsets = [0, 16], sizes = [8, 8], strides = [1, 1]} : vector<8x32xf32> to vector<8x8xf32>
    %116 = vector.extract_strided_slice %81 {offsets = [0, 16], sizes = [8, 8], strides = [1, 1]} : vector<8x32xf32> to vector<8x8xf32>
    %cst_37 = arith.constant dense<0.000000e+00> : vector<8x8xf32>
    %117 = tpu.matmul %114, %115, %cst_37 {dimension_numbers = #tpu.dot_dimension_numbers<[1], [1], [0], [0], [0, 0, 1, 0], [], []>} : vector<8x8xf32>, vector<8x8xf32>, vector<8x8xf32> -> vector<8x8xf32>
    %cst_38 = arith.constant 0.353553385 : f32
    %118 = vector.broadcast %cst_38 : f32 to vector<8x8xf32>
    %119 = arith.mulf %117, %118 : vector<8x8xf32>
    %cst_39 = arith.constant dense<0xFF800000> : vector<8xf32>
    %120 = vector.multi_reduction <maximumf>, %119, %cst_39 [1] : vector<8x8xf32> to vector<8xf32>
    %121 = vector.shape_cast %120 : vector<8xf32> to vector<8x1xf32>
    %122 = vector.broadcast %121 : vector<8x1xf32> to vector<8x8xf32>
    %123 = arith.subf %119, %122 : vector<8x8xf32>
    %124 = math.exp %123 : vector<8x8xf32>
    %cst_40 = arith.constant dense<0.000000e+00> : vector<8xf32>
    %125 = vector.multi_reduction <add>, %124, %cst_40 [1] : vector<8x8xf32> to vector<8xf32>
    %126 = vector.shape_cast %125 : vector<8xf32> to vector<8x1xf32>
    %127 = vector.broadcast %126 : vector<8x1xf32> to vector<8x8xf32>
    %128 = arith.divf %124, %127 : vector<8x8xf32>
    %cst_41 = arith.constant dense<0.000000e+00> : vector<8x8xf32>
    %129 = tpu.matmul %128, %116, %cst_41 {dimension_numbers = #tpu.dot_dimension_numbers<[1], [0], [0], [1], [0, 0, 1, 1], [], []>} : vector<8x8xf32>, vector<8x8xf32>, vector<8x8xf32> -> vector<8x8xf32>
    %130 = vector.extract_strided_slice %79 {offsets = [0, 24], sizes = [8, 8], strides = [1, 1]} : vector<8x32xf32> to vector<8x8xf32>
    %131 = vector.extract_strided_slice %80 {offsets = [0, 24], sizes = [8, 8], strides = [1, 1]} : vector<8x32xf32> to vector<8x8xf32>
    %132 = vector.extract_strided_slice %81 {offsets = [0, 24], sizes = [8, 8], strides = [1, 1]} : vector<8x32xf32> to vector<8x8xf32>
    %cst_42 = arith.constant dense<0.000000e+00> : vector<8x8xf32>
    %133 = tpu.matmul %130, %131, %cst_42 {dimension_numbers = #tpu.dot_dimension_numbers<[1], [1], [0], [0], [0, 0, 1, 0], [], []>} : vector<8x8xf32>, vector<8x8xf32>, vector<8x8xf32> -> vector<8x8xf32>
    %cst_43 = arith.constant 0.353553385 : f32
    %134 = vector.broadcast %cst_43 : f32 to vector<8x8xf32>
    %135 = arith.mulf %133, %134 : vector<8x8xf32>
    %cst_44 = arith.constant dense<0xFF800000> : vector<8xf32>
    %136 = vector.multi_reduction <maximumf>, %135, %cst_44 [1] : vector<8x8xf32> to vector<8xf32>
    %137 = vector.shape_cast %136 : vector<8xf32> to vector<8x1xf32>
    %138 = vector.broadcast %137 : vector<8x1xf32> to vector<8x8xf32>
    %139 = arith.subf %135, %138 : vector<8x8xf32>
    %140 = math.exp %139 : vector<8x8xf32>
    %cst_45 = arith.constant dense<0.000000e+00> : vector<8xf32>
    %141 = vector.multi_reduction <add>, %140, %cst_45 [1] : vector<8x8xf32> to vector<8xf32>
    %142 = vector.shape_cast %141 : vector<8xf32> to vector<8x1xf32>
    %143 = vector.broadcast %142 : vector<8x1xf32> to vector<8x8xf32>
    %144 = arith.divf %140, %143 : vector<8x8xf32>
    %cst_46 = arith.constant dense<0.000000e+00> : vector<8x8xf32>
    %145 = tpu.matmul %144, %132, %cst_46 {dimension_numbers = #tpu.dot_dimension_numbers<[1], [0], [0], [1], [0, 0, 1, 1], [], []>} : vector<8x8xf32>, vector<8x8xf32>, vector<8x8xf32> -> vector<8x8xf32>
    %146 = tpu.concatenate %97, %113, %129, %145 in 1 : vector<8x8xf32>, vector<8x8xf32>, vector<8x8xf32>, vector<8x8xf32> -> vector<8x32xf32>
    %147 = tpu.concatenate %78, %146 in 0 : vector<8x32xf32>, vector<8x32xf32> -> vector<16x32xf32>
    %c0_47 = arith.constant 0 : index
    %c0_48 = arith.constant 0 : index
    %c0_49 = arith.constant 0 : index
    %148 = vector.load %arg4[%c0_47, %c0_48, %c0_49] : memref<2x32x32xf32, #tpu.memory_space<vmem>>, vector<1x32x32xf32>
    %149 = vector.shape_cast %148 : vector<1x32x32xf32> to vector<32x32xf32>
    %cst_50 = arith.constant dense<0.000000e+00> : vector<16x32xf32>
    %150 = tpu.matmul %147, %149, %cst_50 {dimension_numbers = #tpu.dot_dimension_numbers<[1], [0], [0], [1], [0, 0, 1, 1], [], []>} : vector<16x32xf32>, vector<32x32xf32>, vector<16x32xf32> -> vector<16x32xf32>
    %c0_51 = arith.constant 0 : index
    %c0_52 = arith.constant 0 : index
    %c0_53 = arith.constant 0 : index
    %151 = vector.load %arg5[%c0_51, %c0_52, %c0_53] : memref<2x1x32xf32, #tpu.memory_space<vmem>>, vector<1x1x32xf32>
    %152 = vector.shape_cast %151 : vector<1x1x32xf32> to vector<1x32xf32>
    %153 = vector.broadcast %152 : vector<1x32xf32> to vector<16x32xf32>
    %154 = arith.addf %150, %153 : vector<16x32xf32>
    %155 = arith.addf %0, %154 : vector<16x32xf32>
    %c0_54 = arith.constant 0 : index
    %c0_55 = arith.constant 0 : index
    %c0_56 = arith.constant 0 : index
    %156 = vector.load %arg6[%c0_54, %c0_55, %c0_56] : memref<2x1x32xf32, #tpu.memory_space<vmem>>, vector<1x1x32xf32>
    %157 = vector.shape_cast %156 : vector<1x1x32xf32> to vector<1x32xf32>
    %c0_57 = arith.constant 0 : index
    %c0_58 = arith.constant 0 : index
    %c0_59 = arith.constant 0 : index
    %158 = vector.load %arg7[%c0_57, %c0_58, %c0_59] : memref<2x1x32xf32, #tpu.memory_space<vmem>>, vector<1x1x32xf32>
    %159 = vector.shape_cast %158 : vector<1x1x32xf32> to vector<1x32xf32>
    %cst_60 = arith.constant dense<0.000000e+00> : vector<16xf32>
    %160 = vector.multi_reduction <add>, %155, %cst_60 [1] : vector<16x32xf32> to vector<16xf32>
    %161 = vector.shape_cast %160 : vector<16xf32> to vector<16x1xf32>
    %cst_61 = arith.constant 3.200000e+01 : f32
    %162 = vector.broadcast %cst_61 : f32 to vector<16x1xf32>
    %163 = arith.divf %161, %162 : vector<16x1xf32>
    %164 = vector.broadcast %163 : vector<16x1xf32> to vector<16x32xf32>
    %165 = arith.subf %155, %164 : vector<16x32xf32>
    %166 = arith.mulf %165, %165 : vector<16x32xf32>
    %cst_62 = arith.constant dense<0.000000e+00> : vector<16xf32>
    %167 = vector.multi_reduction <add>, %166, %cst_62 [1] : vector<16x32xf32> to vector<16xf32>
    %168 = vector.shape_cast %167 : vector<16xf32> to vector<16x1xf32>
    %cst_63 = arith.constant 3.200000e+01 : f32
    %169 = vector.broadcast %cst_63 : f32 to vector<16x1xf32>
    %170 = arith.divf %168, %169 : vector<16x1xf32>
    %171 = vector.broadcast %163 : vector<16x1xf32> to vector<16x32xf32>
    %172 = arith.subf %155, %171 : vector<16x32xf32>
    %cst_64 = arith.constant 9.99999974E-6 : f32
    %173 = vector.broadcast %cst_64 : f32 to vector<16x1xf32>
    %174 = arith.addf %170, %173 : vector<16x1xf32>
    %175 = math.rsqrt %174 : vector<16x1xf32>
    %176 = vector.broadcast %175 : vector<16x1xf32> to vector<16x32xf32>
    %177 = arith.mulf %172, %176 : vector<16x32xf32>
    %178 = vector.broadcast %157 : vector<1x32xf32> to vector<16x32xf32>
    %179 = arith.mulf %177, %178 : vector<16x32xf32>
    %180 = vector.broadcast %159 : vector<1x32xf32> to vector<16x32xf32>
    %181 = arith.addf %179, %180 : vector<16x32xf32>
    %c0_65 = arith.constant 0 : index
    %c0_66 = arith.constant 0 : index
    %c0_67 = arith.constant 0 : index
    %182 = vector.load %arg8[%c0_65, %c0_66, %c0_67] : memref<2x32x2048xf32, #tpu.memory_space<vmem>>, vector<1x32x2048xf32>
    %183 = vector.shape_cast %182 : vector<1x32x2048xf32> to vector<32x2048xf32>
    %cst_68 = arith.constant dense<0.000000e+00> : vector<16x2048xf32>
    %184 = tpu.matmul %181, %183, %cst_68 {dimension_numbers = #tpu.dot_dimension_numbers<[1], [0], [0], [1], [0, 0, 1, 1], [], []>} : vector<16x32xf32>, vector<32x2048xf32>, vector<16x2048xf32> -> vector<16x2048xf32>
    %c0_69 = arith.constant 0 : index
    %c0_70 = arith.constant 0 : index
    %c0_71 = arith.constant 0 : index
    %185 = vector.load %arg9[%c0_69, %c0_70, %c0_71] : memref<2x1x2048xf32, #tpu.memory_space<vmem>>, vector<1x1x2048xf32>
    %186 = vector.shape_cast %185 : vector<1x1x2048xf32> to vector<1x2048xf32>
    %187 = vector.broadcast %186 : vector<1x2048xf32> to vector<16x2048xf32>
    %188 = arith.addf %184, %187 : vector<16x2048xf32>
    %cst_72 = arith.constant 0.000000e+00 : f32
    %189 = vector.broadcast %cst_72 : f32 to vector<16x2048xf32>
    %190 = arith.maximumf %188, %189 : vector<16x2048xf32>
    %c0_73 = arith.constant 0 : index
    %c0_74 = arith.constant 0 : index
    %c0_75 = arith.constant 0 : index
    %191 = vector.load %arg10[%c0_73, %c0_74, %c0_75] : memref<2x2048x32xf32, #tpu.memory_space<vmem>>, vector<1x2048x32xf32>
    %192 = vector.shape_cast %191 : vector<1x2048x32xf32> to vector<2048x32xf32>
    %cst_76 = arith.constant dense<0.000000e+00> : vector<16x32xf32>
    %193 = tpu.matmul %190, %192, %cst_76 {dimension_numbers = #tpu.dot_dimension_numbers<[1], [0], [0], [1], [0, 0, 1, 1], [], []>} : vector<16x2048xf32>, vector<2048x32xf32>, vector<16x32xf32> -> vector<16x32xf32>
    %c0_77 = arith.constant 0 : index
    %c0_78 = arith.constant 0 : index
    %c0_79 = arith.constant 0 : index
    %194 = vector.load %arg11[%c0_77, %c0_78, %c0_79] : memref<2x1x32xf32, #tpu.memory_space<vmem>>, vector<1x1x32xf32>
    %195 = vector.shape_cast %194 : vector<1x1x32xf32> to vector<1x32xf32>
    %196 = vector.broadcast %195 : vector<1x32xf32> to vector<16x32xf32>
    %197 = arith.addf %193, %196 : vector<16x32xf32>
    %198 = arith.addf %181, %197 : vector<16x32xf32>
    %c0_80 = arith.constant 0 : index
    %c0_81 = arith.constant 0 : index
    %c0_82 = arith.constant 0 : index
    %199 = vector.load %arg12[%c0_80, %c0_81, %c0_82] : memref<2x1x32xf32, #tpu.memory_space<vmem>>, vector<1x1x32xf32>
    %200 = vector.shape_cast %199 : vector<1x1x32xf32> to vector<1x32xf32>
    %c0_83 = arith.constant 0 : index
    %c0_84 = arith.constant 0 : index
    %c0_85 = arith.constant 0 : index
    %201 = vector.load %arg13[%c0_83, %c0_84, %c0_85] : memref<2x1x32xf32, #tpu.memory_space<vmem>>, vector<1x1x32xf32>
    %202 = vector.shape_cast %201 : vector<1x1x32xf32> to vector<1x32xf32>
    %cst_86 = arith.constant dense<0.000000e+00> : vector<16xf32>
    %203 = vector.multi_reduction <add>, %198, %cst_86 [1] : vector<16x32xf32> to vector<16xf32>
    %204 = vector.shape_cast %203 : vector<16xf32> to vector<16x1xf32>
    %cst_87 = arith.constant 3.200000e+01 : f32
    %205 = vector.broadcast %cst_87 : f32 to vector<16x1xf32>
    %206 = arith.divf %204, %205 : vector<16x1xf32>
    %207 = vector.broadcast %206 : vector<16x1xf32> to vector<16x32xf32>
    %208 = arith.subf %198, %207 : vector<16x32xf32>
    %209 = arith.mulf %208, %208 : vector<16x32xf32>
    %cst_88 = arith.constant dense<0.000000e+00> : vector<16xf32>
    %210 = vector.multi_reduction <add>, %209, %cst_88 [1] : vector<16x32xf32> to vector<16xf32>
    %211 = vector.shape_cast %210 : vector<16xf32> to vector<16x1xf32>
    %cst_89 = arith.constant 3.200000e+01 : f32
    %212 = vector.broadcast %cst_89 : f32 to vector<16x1xf32>
    %213 = arith.divf %211, %212 : vector<16x1xf32>
    %214 = vector.broadcast %206 : vector<16x1xf32> to vector<16x32xf32>
    %215 = arith.subf %198, %214 : vector<16x32xf32>
    %cst_90 = arith.constant 9.99999974E-6 : f32
    %216 = vector.broadcast %cst_90 : f32 to vector<16x1xf32>
    %217 = arith.addf %213, %216 : vector<16x1xf32>
    %218 = math.rsqrt %217 : vector<16x1xf32>
    %219 = vector.broadcast %218 : vector<16x1xf32> to vector<16x32xf32>
    %220 = arith.mulf %215, %219 : vector<16x32xf32>
    %221 = vector.broadcast %200 : vector<1x32xf32> to vector<16x32xf32>
    %222 = arith.mulf %220, %221 : vector<16x32xf32>
    %223 = vector.broadcast %202 : vector<1x32xf32> to vector<16x32xf32>
    %224 = arith.addf %222, %223 : vector<16x32xf32>
    %c1 = arith.constant 1 : index
    %c0_91 = arith.constant 0 : index
    %c0_92 = arith.constant 0 : index
    %225 = vector.load %arg2[%c1, %c0_91, %c0_92] : memref<2x32x96xf32, #tpu.memory_space<vmem>>, vector<1x32x96xf32>
    %226 = vector.shape_cast %225 : vector<1x32x96xf32> to vector<32x96xf32>
    %cst_93 = arith.constant dense<0.000000e+00> : vector<16x96xf32>
    %227 = tpu.matmul %224, %226, %cst_93 {dimension_numbers = #tpu.dot_dimension_numbers<[1], [0], [0], [1], [0, 0, 1, 1], [], []>} : vector<16x32xf32>, vector<32x96xf32>, vector<16x96xf32> -> vector<16x96xf32>
    %c1_94 = arith.constant 1 : index
    %c0_95 = arith.constant 0 : index
    %c0_96 = arith.constant 0 : index
    %228 = vector.load %arg3[%c1_94, %c0_95, %c0_96] : memref<2x1x96xf32, #tpu.memory_space<vmem>>, vector<1x1x96xf32>
    %229 = vector.shape_cast %228 : vector<1x1x96xf32> to vector<1x96xf32>
    %230 = vector.broadcast %229 : vector<1x96xf32> to vector<16x96xf32>
    %231 = arith.addf %227, %230 : vector<16x96xf32>
    %232 = vector.extract_strided_slice %231 {offsets = [0, 0], sizes = [16, 32], strides = [1, 1]} : vector<16x96xf32> to vector<16x32xf32>
    %233 = vector.extract_strided_slice %231 {offsets = [0, 32], sizes = [16, 32], strides = [1, 1]} : vector<16x96xf32> to vector<16x32xf32>
    %234 = vector.extract_strided_slice %231 {offsets = [0, 64], sizes = [16, 32], strides = [1, 1]} : vector<16x96xf32> to vector<16x32xf32>
    %235 = vector.extract_strided_slice %232 {offsets = [0, 0], sizes = [8, 32], strides = [1, 1]} : vector<16x32xf32> to vector<8x32xf32>
    %236 = vector.extract_strided_slice %233 {offsets = [0, 0], sizes = [8, 32], strides = [1, 1]} : vector<16x32xf32> to vector<8x32xf32>
    %237 = vector.extract_strided_slice %234 {offsets = [0, 0], sizes = [8, 32], strides = [1, 1]} : vector<16x32xf32> to vector<8x32xf32>
    %238 = vector.extract_strided_slice %235 {offsets = [0, 0], sizes = [8, 8], strides = [1, 1]} : vector<8x32xf32> to vector<8x8xf32>
    %239 = vector.extract_strided_slice %236 {offsets = [0, 0], sizes = [8, 8], strides = [1, 1]} : vector<8x32xf32> to vector<8x8xf32>
    %240 = vector.extract_strided_slice %237 {offsets = [0, 0], sizes = [8, 8], strides = [1, 1]} : vector<8x32xf32> to vector<8x8xf32>
    %cst_97 = arith.constant dense<0.000000e+00> : vector<8x8xf32>
    %241 = tpu.matmul %238, %239, %cst_97 {dimension_numbers = #tpu.dot_dimension_numbers<[1], [1], [0], [0], [0, 0, 1, 0], [], []>} : vector<8x8xf32>, vector<8x8xf32>, vector<8x8xf32> -> vector<8x8xf32>
    %cst_98 = arith.constant 0.353553385 : f32
    %242 = vector.broadcast %cst_98 : f32 to vector<8x8xf32>
    %243 = arith.mulf %241, %242 : vector<8x8xf32>
    %cst_99 = arith.constant dense<0xFF800000> : vector<8xf32>
    %244 = vector.multi_reduction <maximumf>, %243, %cst_99 [1] : vector<8x8xf32> to vector<8xf32>
    %245 = vector.shape_cast %244 : vector<8xf32> to vector<8x1xf32>
    %246 = vector.broadcast %245 : vector<8x1xf32> to vector<8x8xf32>
    %247 = arith.subf %243, %246 : vector<8x8xf32>
    %248 = math.exp %247 : vector<8x8xf32>
    %cst_100 = arith.constant dense<0.000000e+00> : vector<8xf32>
    %249 = vector.multi_reduction <add>, %248, %cst_100 [1] : vector<8x8xf32> to vector<8xf32>
    %250 = vector.shape_cast %249 : vector<8xf32> to vector<8x1xf32>
    %251 = vector.broadcast %250 : vector<8x1xf32> to vector<8x8xf32>
    %252 = arith.divf %248, %251 : vector<8x8xf32>
    %cst_101 = arith.constant dense<0.000000e+00> : vector<8x8xf32>
    %253 = tpu.matmul %252, %240, %cst_101 {dimension_numbers = #tpu.dot_dimension_numbers<[1], [0], [0], [1], [0, 0, 1, 1], [], []>} : vector<8x8xf32>, vector<8x8xf32>, vector<8x8xf32> -> vector<8x8xf32>
    %254 = vector.extract_strided_slice %235 {offsets = [0, 8], sizes = [8, 8], strides = [1, 1]} : vector<8x32xf32> to vector<8x8xf32>
    %255 = vector.extract_strided_slice %236 {offsets = [0, 8], sizes = [8, 8], strides = [1, 1]} : vector<8x32xf32> to vector<8x8xf32>
    %256 = vector.extract_strided_slice %237 {offsets = [0, 8], sizes = [8, 8], strides = [1, 1]} : vector<8x32xf32> to vector<8x8xf32>
    %cst_102 = arith.constant dense<0.000000e+00> : vector<8x8xf32>
    %257 = tpu.matmul %254, %255, %cst_102 {dimension_numbers = #tpu.dot_dimension_numbers<[1], [1], [0], [0], [0, 0, 1, 0], [], []>} : vector<8x8xf32>, vector<8x8xf32>, vector<8x8xf32> -> vector<8x8xf32>
    %cst_103 = arith.constant 0.353553385 : f32
    %258 = vector.broadcast %cst_103 : f32 to vector<8x8xf32>
    %259 = arith.mulf %257, %258 : vector<8x8xf32>
    %cst_104 = arith.constant dense<0xFF800000> : vector<8xf32>
    %260 = vector.multi_reduction <maximumf>, %259, %cst_104 [1] : vector<8x8xf32> to vector<8xf32>
    %261 = vector.shape_cast %260 : vector<8xf32> to vector<8x1xf32>
    %262 = vector.broadcast %261 : vector<8x1xf32> to vector<8x8xf32>
    %263 = arith.subf %259, %262 : vector<8x8xf32>
    %264 = math.exp %263 : vector<8x8xf32>
    %cst_105 = arith.constant dense<0.000000e+00> : vector<8xf32>
    %265 = vector.multi_reduction <add>, %264, %cst_105 [1] : vector<8x8xf32> to vector<8xf32>
    %266 = vector.shape_cast %265 : vector<8xf32> to vector<8x1xf32>
    %267 = vector.broadcast %266 : vector<8x1xf32> to vector<8x8xf32>
    %268 = arith.divf %264, %267 : vector<8x8xf32>
    %cst_106 = arith.constant dense<0.000000e+00> : vector<8x8xf32>
    %269 = tpu.matmul %268, %256, %cst_106 {dimension_numbers = #tpu.dot_dimension_numbers<[1], [0], [0], [1], [0, 0, 1, 1], [], []>} : vector<8x8xf32>, vector<8x8xf32>, vector<8x8xf32> -> vector<8x8xf32>
    %270 = vector.extract_strided_slice %235 {offsets = [0, 16], sizes = [8, 8], strides = [1, 1]} : vector<8x32xf32> to vector<8x8xf32>
    %271 = vector.extract_strided_slice %236 {offsets = [0, 16], sizes = [8, 8], strides = [1, 1]} : vector<8x32xf32> to vector<8x8xf32>
    %272 = vector.extract_strided_slice %237 {offsets = [0, 16], sizes = [8, 8], strides = [1, 1]} : vector<8x32xf32> to vector<8x8xf32>
    %cst_107 = arith.constant dense<0.000000e+00> : vector<8x8xf32>
    %273 = tpu.matmul %270, %271, %cst_107 {dimension_numbers = #tpu.dot_dimension_numbers<[1], [1], [0], [0], [0, 0, 1, 0], [], []>} : vector<8x8xf32>, vector<8x8xf32>, vector<8x8xf32> -> vector<8x8xf32>
    %cst_108 = arith.constant 0.353553385 : f32
    %274 = vector.broadcast %cst_108 : f32 to vector<8x8xf32>
    %275 = arith.mulf %273, %274 : vector<8x8xf32>
    %cst_109 = arith.constant dense<0xFF800000> : vector<8xf32>
    %276 = vector.multi_reduction <maximumf>, %275, %cst_109 [1] : vector<8x8xf32> to vector<8xf32>
    %277 = vector.shape_cast %276 : vector<8xf32> to vector<8x1xf32>
    %278 = vector.broadcast %277 : vector<8x1xf32> to vector<8x8xf32>
    %279 = arith.subf %275, %278 : vector<8x8xf32>
    %280 = math.exp %279 : vector<8x8xf32>
    %cst_110 = arith.constant dense<0.000000e+00> : vector<8xf32>
    %281 = vector.multi_reduction <add>, %280, %cst_110 [1] : vector<8x8xf32> to vector<8xf32>
    %282 = vector.shape_cast %281 : vector<8xf32> to vector<8x1xf32>
    %283 = vector.broadcast %282 : vector<8x1xf32> to vector<8x8xf32>
    %284 = arith.divf %280, %283 : vector<8x8xf32>
    %cst_111 = arith.constant dense<0.000000e+00> : vector<8x8xf32>
    %285 = tpu.matmul %284, %272, %cst_111 {dimension_numbers = #tpu.dot_dimension_numbers<[1], [0], [0], [1], [0, 0, 1, 1], [], []>} : vector<8x8xf32>, vector<8x8xf32>, vector<8x8xf32> -> vector<8x8xf32>
    %286 = vector.extract_strided_slice %235 {offsets = [0, 24], sizes = [8, 8], strides = [1, 1]} : vector<8x32xf32> to vector<8x8xf32>
    %287 = vector.extract_strided_slice %236 {offsets = [0, 24], sizes = [8, 8], strides = [1, 1]} : vector<8x32xf32> to vector<8x8xf32>
    %288 = vector.extract_strided_slice %237 {offsets = [0, 24], sizes = [8, 8], strides = [1, 1]} : vector<8x32xf32> to vector<8x8xf32>
    %cst_112 = arith.constant dense<0.000000e+00> : vector<8x8xf32>
    %289 = tpu.matmul %286, %287, %cst_112 {dimension_numbers = #tpu.dot_dimension_numbers<[1], [1], [0], [0], [0, 0, 1, 0], [], []>} : vector<8x8xf32>, vector<8x8xf32>, vector<8x8xf32> -> vector<8x8xf32>
    %cst_113 = arith.constant 0.353553385 : f32
    %290 = vector.broadcast %cst_113 : f32 to vector<8x8xf32>
    %291 = arith.mulf %289, %290 : vector<8x8xf32>
    %cst_114 = arith.constant dense<0xFF800000> : vector<8xf32>
    %292 = vector.multi_reduction <maximumf>, %291, %cst_114 [1] : vector<8x8xf32> to vector<8xf32>
    %293 = vector.shape_cast %292 : vector<8xf32> to vector<8x1xf32>
    %294 = vector.broadcast %293 : vector<8x1xf32> to vector<8x8xf32>
    %295 = arith.subf %291, %294 : vector<8x8xf32>
    %296 = math.exp %295 : vector<8x8xf32>
    %cst_115 = arith.constant dense<0.000000e+00> : vector<8xf32>
    %297 = vector.multi_reduction <add>, %296, %cst_115 [1] : vector<8x8xf32> to vector<8xf32>
    %298 = vector.shape_cast %297 : vector<8xf32> to vector<8x1xf32>
    %299 = vector.broadcast %298 : vector<8x1xf32> to vector<8x8xf32>
    %300 = arith.divf %296, %299 : vector<8x8xf32>
    %cst_116 = arith.constant dense<0.000000e+00> : vector<8x8xf32>
    %301 = tpu.matmul %300, %288, %cst_116 {dimension_numbers = #tpu.dot_dimension_numbers<[1], [0], [0], [1], [0, 0, 1, 1], [], []>} : vector<8x8xf32>, vector<8x8xf32>, vector<8x8xf32> -> vector<8x8xf32>
    %302 = tpu.concatenate %253, %269, %285, %301 in 1 : vector<8x8xf32>, vector<8x8xf32>, vector<8x8xf32>, vector<8x8xf32> -> vector<8x32xf32>
    %303 = vector.extract_strided_slice %232 {offsets = [8, 0], sizes = [8, 32], strides = [1, 1]} : vector<16x32xf32> to vector<8x32xf32>
    %304 = vector.extract_strided_slice %233 {offsets = [8, 0], sizes = [8, 32], strides = [1, 1]} : vector<16x32xf32> to vector<8x32xf32>
    %305 = vector.extract_strided_slice %234 {offsets = [8, 0], sizes = [8, 32], strides = [1, 1]} : vector<16x32xf32> to vector<8x32xf32>
    %306 = vector.extract_strided_slice %303 {offsets = [0, 0], sizes = [8, 8], strides = [1, 1]} : vector<8x32xf32> to vector<8x8xf32>
    %307 = vector.extract_strided_slice %304 {offsets = [0, 0], sizes = [8, 8], strides = [1, 1]} : vector<8x32xf32> to vector<8x8xf32>
    %308 = vector.extract_strided_slice %305 {offsets = [0, 0], sizes = [8, 8], strides = [1, 1]} : vector<8x32xf32> to vector<8x8xf32>
    %cst_117 = arith.constant dense<0.000000e+00> : vector<8x8xf32>
    %309 = tpu.matmul %306, %307, %cst_117 {dimension_numbers = #tpu.dot_dimension_numbers<[1], [1], [0], [0], [0, 0, 1, 0], [], []>} : vector<8x8xf32>, vector<8x8xf32>, vector<8x8xf32> -> vector<8x8xf32>
    %cst_118 = arith.constant 0.353553385 : f32
    %310 = vector.broadcast %cst_118 : f32 to vector<8x8xf32>
    %311 = arith.mulf %309, %310 : vector<8x8xf32>
    %cst_119 = arith.constant dense<0xFF800000> : vector<8xf32>
    %312 = vector.multi_reduction <maximumf>, %311, %cst_119 [1] : vector<8x8xf32> to vector<8xf32>
    %313 = vector.shape_cast %312 : vector<8xf32> to vector<8x1xf32>
    %314 = vector.broadcast %313 : vector<8x1xf32> to vector<8x8xf32>
    %315 = arith.subf %311, %314 : vector<8x8xf32>
    %316 = math.exp %315 : vector<8x8xf32>
    %cst_120 = arith.constant dense<0.000000e+00> : vector<8xf32>
    %317 = vector.multi_reduction <add>, %316, %cst_120 [1] : vector<8x8xf32> to vector<8xf32>
    %318 = vector.shape_cast %317 : vector<8xf32> to vector<8x1xf32>
    %319 = vector.broadcast %318 : vector<8x1xf32> to vector<8x8xf32>
    %320 = arith.divf %316, %319 : vector<8x8xf32>
    %cst_121 = arith.constant dense<0.000000e+00> : vector<8x8xf32>
    %321 = tpu.matmul %320, %308, %cst_121 {dimension_numbers = #tpu.dot_dimension_numbers<[1], [0], [0], [1], [0, 0, 1, 1], [], []>} : vector<8x8xf32>, vector<8x8xf32>, vector<8x8xf32> -> vector<8x8xf32>
    %322 = vector.extract_strided_slice %303 {offsets = [0, 8], sizes = [8, 8], strides = [1, 1]} : vector<8x32xf32> to vector<8x8xf32>
    %323 = vector.extract_strided_slice %304 {offsets = [0, 8], sizes = [8, 8], strides = [1, 1]} : vector<8x32xf32> to vector<8x8xf32>
    %324 = vector.extract_strided_slice %305 {offsets = [0, 8], sizes = [8, 8], strides = [1, 1]} : vector<8x32xf32> to vector<8x8xf32>
    %cst_122 = arith.constant dense<0.000000e+00> : vector<8x8xf32>
    %325 = tpu.matmul %322, %323, %cst_122 {dimension_numbers = #tpu.dot_dimension_numbers<[1], [1], [0], [0], [0, 0, 1, 0], [], []>} : vector<8x8xf32>, vector<8x8xf32>, vector<8x8xf32> -> vector<8x8xf32>
    %cst_123 = arith.constant 0.353553385 : f32
    %326 = vector.broadcast %cst_123 : f32 to vector<8x8xf32>
    %327 = arith.mulf %325, %326 : vector<8x8xf32>
    %cst_124 = arith.constant dense<0xFF800000> : vector<8xf32>
    %328 = vector.multi_reduction <maximumf>, %327, %cst_124 [1] : vector<8x8xf32> to vector<8xf32>
    %329 = vector.shape_cast %328 : vector<8xf32> to vector<8x1xf32>
    %330 = vector.broadcast %329 : vector<8x1xf32> to vector<8x8xf32>
    %331 = arith.subf %327, %330 : vector<8x8xf32>
    %332 = math.exp %331 : vector<8x8xf32>
    %cst_125 = arith.constant dense<0.000000e+00> : vector<8xf32>
    %333 = vector.multi_reduction <add>, %332, %cst_125 [1] : vector<8x8xf32> to vector<8xf32>
    %334 = vector.shape_cast %333 : vector<8xf32> to vector<8x1xf32>
    %335 = vector.broadcast %334 : vector<8x1xf32> to vector<8x8xf32>
    %336 = arith.divf %332, %335 : vector<8x8xf32>
    %cst_126 = arith.constant dense<0.000000e+00> : vector<8x8xf32>
    %337 = tpu.matmul %336, %324, %cst_126 {dimension_numbers = #tpu.dot_dimension_numbers<[1], [0], [0], [1], [0, 0, 1, 1], [], []>} : vector<8x8xf32>, vector<8x8xf32>, vector<8x8xf32> -> vector<8x8xf32>
    %338 = vector.extract_strided_slice %303 {offsets = [0, 16], sizes = [8, 8], strides = [1, 1]} : vector<8x32xf32> to vector<8x8xf32>
    %339 = vector.extract_strided_slice %304 {offsets = [0, 16], sizes = [8, 8], strides = [1, 1]} : vector<8x32xf32> to vector<8x8xf32>
    %340 = vector.extract_strided_slice %305 {offsets = [0, 16], sizes = [8, 8], strides = [1, 1]} : vector<8x32xf32> to vector<8x8xf32>
    %cst_127 = arith.constant dense<0.000000e+00> : vector<8x8xf32>
    %341 = tpu.matmul %338, %339, %cst_127 {dimension_numbers = #tpu.dot_dimension_numbers<[1], [1], [0], [0], [0, 0, 1, 0], [], []>} : vector<8x8xf32>, vector<8x8xf32>, vector<8x8xf32> -> vector<8x8xf32>
    %cst_128 = arith.constant 0.353553385 : f32
    %342 = vector.broadcast %cst_128 : f32 to vector<8x8xf32>
    %343 = arith.mulf %341, %342 : vector<8x8xf32>
    %cst_129 = arith.constant dense<0xFF800000> : vector<8xf32>
    %344 = vector.multi_reduction <maximumf>, %343, %cst_129 [1] : vector<8x8xf32> to vector<8xf32>
    %345 = vector.shape_cast %344 : vector<8xf32> to vector<8x1xf32>
    %346 = vector.broadcast %345 : vector<8x1xf32> to vector<8x8xf32>
    %347 = arith.subf %343, %346 : vector<8x8xf32>
    %348 = math.exp %347 : vector<8x8xf32>
    %cst_130 = arith.constant dense<0.000000e+00> : vector<8xf32>
    %349 = vector.multi_reduction <add>, %348, %cst_130 [1] : vector<8x8xf32> to vector<8xf32>
    %350 = vector.shape_cast %349 : vector<8xf32> to vector<8x1xf32>
    %351 = vector.broadcast %350 : vector<8x1xf32> to vector<8x8xf32>
    %352 = arith.divf %348, %351 : vector<8x8xf32>
    %cst_131 = arith.constant dense<0.000000e+00> : vector<8x8xf32>
    %353 = tpu.matmul %352, %340, %cst_131 {dimension_numbers = #tpu.dot_dimension_numbers<[1], [0], [0], [1], [0, 0, 1, 1], [], []>} : vector<8x8xf32>, vector<8x8xf32>, vector<8x8xf32> -> vector<8x8xf32>
    %354 = vector.extract_strided_slice %303 {offsets = [0, 24], sizes = [8, 8], strides = [1, 1]} : vector<8x32xf32> to vector<8x8xf32>
    %355 = vector.extract_strided_slice %304 {offsets = [0, 24], sizes = [8, 8], strides = [1, 1]} : vector<8x32xf32> to vector<8x8xf32>
    %356 = vector.extract_strided_slice %305 {offsets = [0, 24], sizes = [8, 8], strides = [1, 1]} : vector<8x32xf32> to vector<8x8xf32>
    %cst_132 = arith.constant dense<0.000000e+00> : vector<8x8xf32>
    %357 = tpu.matmul %354, %355, %cst_132 {dimension_numbers = #tpu.dot_dimension_numbers<[1], [1], [0], [0], [0, 0, 1, 0], [], []>} : vector<8x8xf32>, vector<8x8xf32>, vector<8x8xf32> -> vector<8x8xf32>
    %cst_133 = arith.constant 0.353553385 : f32
    %358 = vector.broadcast %cst_133 : f32 to vector<8x8xf32>
    %359 = arith.mulf %357, %358 : vector<8x8xf32>
    %cst_134 = arith.constant dense<0xFF800000> : vector<8xf32>
    %360 = vector.multi_reduction <maximumf>, %359, %cst_134 [1] : vector<8x8xf32> to vector<8xf32>
    %361 = vector.shape_cast %360 : vector<8xf32> to vector<8x1xf32>
    %362 = vector.broadcast %361 : vector<8x1xf32> to vector<8x8xf32>
    %363 = arith.subf %359, %362 : vector<8x8xf32>
    %364 = math.exp %363 : vector<8x8xf32>
    %cst_135 = arith.constant dense<0.000000e+00> : vector<8xf32>
    %365 = vector.multi_reduction <add>, %364, %cst_135 [1] : vector<8x8xf32> to vector<8xf32>
    %366 = vector.shape_cast %365 : vector<8xf32> to vector<8x1xf32>
    %367 = vector.broadcast %366 : vector<8x1xf32> to vector<8x8xf32>
    %368 = arith.divf %364, %367 : vector<8x8xf32>
    %cst_136 = arith.constant dense<0.000000e+00> : vector<8x8xf32>
    %369 = tpu.matmul %368, %356, %cst_136 {dimension_numbers = #tpu.dot_dimension_numbers<[1], [0], [0], [1], [0, 0, 1, 1], [], []>} : vector<8x8xf32>, vector<8x8xf32>, vector<8x8xf32> -> vector<8x8xf32>
    %370 = tpu.concatenate %321, %337, %353, %369 in 1 : vector<8x8xf32>, vector<8x8xf32>, vector<8x8xf32>, vector<8x8xf32> -> vector<8x32xf32>
    %371 = tpu.concatenate %302, %370 in 0 : vector<8x32xf32>, vector<8x32xf32> -> vector<16x32xf32>
    %c1_137 = arith.constant 1 : index
    %c0_138 = arith.constant 0 : index
    %c0_139 = arith.constant 0 : index
    %372 = vector.load %arg4[%c1_137, %c0_138, %c0_139] : memref<2x32x32xf32, #tpu.memory_space<vmem>>, vector<1x32x32xf32>
    %373 = vector.shape_cast %372 : vector<1x32x32xf32> to vector<32x32xf32>
    %cst_140 = arith.constant dense<0.000000e+00> : vector<16x32xf32>
    %374 = tpu.matmul %371, %373, %cst_140 {dimension_numbers = #tpu.dot_dimension_numbers<[1], [0], [0], [1], [0, 0, 1, 1], [], []>} : vector<16x32xf32>, vector<32x32xf32>, vector<16x32xf32> -> vector<16x32xf32>
    %c1_141 = arith.constant 1 : index
    %c0_142 = arith.constant 0 : index
    %c0_143 = arith.constant 0 : index
    %375 = vector.load %arg5[%c1_141, %c0_142, %c0_143] : memref<2x1x32xf32, #tpu.memory_space<vmem>>, vector<1x1x32xf32>
    %376 = vector.shape_cast %375 : vector<1x1x32xf32> to vector<1x32xf32>
    %377 = vector.broadcast %376 : vector<1x32xf32> to vector<16x32xf32>
    %378 = arith.addf %374, %377 : vector<16x32xf32>
    %379 = arith.addf %224, %378 : vector<16x32xf32>
    %c1_144 = arith.constant 1 : index
    %c0_145 = arith.constant 0 : index
    %c0_146 = arith.constant 0 : index
    %380 = vector.load %arg6[%c1_144, %c0_145, %c0_146] : memref<2x1x32xf32, #tpu.memory_space<vmem>>, vector<1x1x32xf32>
    %381 = vector.shape_cast %380 : vector<1x1x32xf32> to vector<1x32xf32>
    %c1_147 = arith.constant 1 : index
    %c0_148 = arith.constant 0 : index
    %c0_149 = arith.constant 0 : index
    %382 = vector.load %arg7[%c1_147, %c0_148, %c0_149] : memref<2x1x32xf32, #tpu.memory_space<vmem>>, vector<1x1x32xf32>
    %383 = vector.shape_cast %382 : vector<1x1x32xf32> to vector<1x32xf32>
    %cst_150 = arith.constant dense<0.000000e+00> : vector<16xf32>
    %384 = vector.multi_reduction <add>, %379, %cst_150 [1] : vector<16x32xf32> to vector<16xf32>
    %385 = vector.shape_cast %384 : vector<16xf32> to vector<16x1xf32>
    %cst_151 = arith.constant 3.200000e+01 : f32
    %386 = vector.broadcast %cst_151 : f32 to vector<16x1xf32>
    %387 = arith.divf %385, %386 : vector<16x1xf32>
    %388 = vector.broadcast %387 : vector<16x1xf32> to vector<16x32xf32>
    %389 = arith.subf %379, %388 : vector<16x32xf32>
    %390 = arith.mulf %389, %389 : vector<16x32xf32>
    %cst_152 = arith.constant dense<0.000000e+00> : vector<16xf32>
    %391 = vector.multi_reduction <add>, %390, %cst_152 [1] : vector<16x32xf32> to vector<16xf32>
    %392 = vector.shape_cast %391 : vector<16xf32> to vector<16x1xf32>
    %cst_153 = arith.constant 3.200000e+01 : f32
    %393 = vector.broadcast %cst_153 : f32 to vector<16x1xf32>
    %394 = arith.divf %392, %393 : vector<16x1xf32>
    %395 = vector.broadcast %387 : vector<16x1xf32> to vector<16x32xf32>
    %396 = arith.subf %379, %395 : vector<16x32xf32>
    %cst_154 = arith.constant 9.99999974E-6 : f32
    %397 = vector.broadcast %cst_154 : f32 to vector<16x1xf32>
    %398 = arith.addf %394, %397 : vector<16x1xf32>
    %399 = math.rsqrt %398 : vector<16x1xf32>
    %400 = vector.broadcast %399 : vector<16x1xf32> to vector<16x32xf32>
    %401 = arith.mulf %396, %400 : vector<16x32xf32>
    %402 = vector.broadcast %381 : vector<1x32xf32> to vector<16x32xf32>
    %403 = arith.mulf %401, %402 : vector<16x32xf32>
    %404 = vector.broadcast %383 : vector<1x32xf32> to vector<16x32xf32>
    %405 = arith.addf %403, %404 : vector<16x32xf32>
    %c1_155 = arith.constant 1 : index
    %c0_156 = arith.constant 0 : index
    %c0_157 = arith.constant 0 : index
    %406 = vector.load %arg8[%c1_155, %c0_156, %c0_157] : memref<2x32x2048xf32, #tpu.memory_space<vmem>>, vector<1x32x2048xf32>
    %407 = vector.shape_cast %406 : vector<1x32x2048xf32> to vector<32x2048xf32>
    %cst_158 = arith.constant dense<0.000000e+00> : vector<16x2048xf32>
    %408 = tpu.matmul %405, %407, %cst_158 {dimension_numbers = #tpu.dot_dimension_numbers<[1], [0], [0], [1], [0, 0, 1, 1], [], []>} : vector<16x32xf32>, vector<32x2048xf32>, vector<16x2048xf32> -> vector<16x2048xf32>
    %c1_159 = arith.constant 1 : index
    %c0_160 = arith.constant 0 : index
    %c0_161 = arith.constant 0 : index
    %409 = vector.load %arg9[%c1_159, %c0_160, %c0_161] : memref<2x1x2048xf32, #tpu.memory_space<vmem>>, vector<1x1x2048xf32>
    %410 = vector.shape_cast %409 : vector<1x1x2048xf32> to vector<1x2048xf32>
    %411 = vector.broadcast %410 : vector<1x2048xf32> to vector<16x2048xf32>
    %412 = arith.addf %408, %411 : vector<16x2048xf32>
    %cst_162 = arith.constant 0.000000e+00 : f32
    %413 = vector.broadcast %cst_162 : f32 to vector<16x2048xf32>
    %414 = arith.maximumf %412, %413 : vector<16x2048xf32>
    %c1_163 = arith.constant 1 : index
    %c0_164 = arith.constant 0 : index
    %c0_165 = arith.constant 0 : index
    %415 = vector.load %arg10[%c1_163, %c0_164, %c0_165] : memref<2x2048x32xf32, #tpu.memory_space<vmem>>, vector<1x2048x32xf32>
    %416 = vector.shape_cast %415 : vector<1x2048x32xf32> to vector<2048x32xf32>
    %cst_166 = arith.constant dense<0.000000e+00> : vector<16x32xf32>
    %417 = tpu.matmul %414, %416, %cst_166 {dimension_numbers = #tpu.dot_dimension_numbers<[1], [0], [0], [1], [0, 0, 1, 1], [], []>} : vector<16x2048xf32>, vector<2048x32xf32>, vector<16x32xf32> -> vector<16x32xf32>
    %c1_167 = arith.constant 1 : index
    %c0_168 = arith.constant 0 : index
    %c0_169 = arith.constant 0 : index
    %418 = vector.load %arg11[%c1_167, %c0_168, %c0_169] : memref<2x1x32xf32, #tpu.memory_space<vmem>>, vector<1x1x32xf32>
    %419 = vector.shape_cast %418 : vector<1x1x32xf32> to vector<1x32xf32>
    %420 = vector.broadcast %419 : vector<1x32xf32> to vector<16x32xf32>
    %421 = arith.addf %417, %420 : vector<16x32xf32>
    %422 = arith.addf %405, %421 : vector<16x32xf32>
    %c1_170 = arith.constant 1 : index
    %c0_171 = arith.constant 0 : index
    %c0_172 = arith.constant 0 : index
    %423 = vector.load %arg12[%c1_170, %c0_171, %c0_172] : memref<2x1x32xf32, #tpu.memory_space<vmem>>, vector<1x1x32xf32>
    %424 = vector.shape_cast %423 : vector<1x1x32xf32> to vector<1x32xf32>
    %c1_173 = arith.constant 1 : index
    %c0_174 = arith.constant 0 : index
    %c0_175 = arith.constant 0 : index
    %425 = vector.load %arg13[%c1_173, %c0_174, %c0_175] : memref<2x1x32xf32, #tpu.memory_space<vmem>>, vector<1x1x32xf32>
    %426 = vector.shape_cast %425 : vector<1x1x32xf32> to vector<1x32xf32>
    %cst_176 = arith.constant dense<0.000000e+00> : vector<16xf32>
    %427 = vector.multi_reduction <add>, %422, %cst_176 [1] : vector<16x32xf32> to vector<16xf32>
    %428 = vector.shape_cast %427 : vector<16xf32> to vector<16x1xf32>
    %cst_177 = arith.constant 3.200000e+01 : f32
    %429 = vector.broadcast %cst_177 : f32 to vector<16x1xf32>
    %430 = arith.divf %428, %429 : vector<16x1xf32>
    %431 = vector.broadcast %430 : vector<16x1xf32> to vector<16x32xf32>
    %432 = arith.subf %422, %431 : vector<16x32xf32>
    %433 = arith.mulf %432, %432 : vector<16x32xf32>
    %cst_178 = arith.constant dense<0.000000e+00> : vector<16xf32>
    %434 = vector.multi_reduction <add>, %433, %cst_178 [1] : vector<16x32xf32> to vector<16xf32>
    %435 = vector.shape_cast %434 : vector<16xf32> to vector<16x1xf32>
    %cst_179 = arith.constant 3.200000e+01 : f32
    %436 = vector.broadcast %cst_179 : f32 to vector<16x1xf32>
    %437 = arith.divf %435, %436 : vector<16x1xf32>
    %438 = vector.broadcast %430 : vector<16x1xf32> to vector<16x32xf32>
    %439 = arith.subf %422, %438 : vector<16x32xf32>
    %cst_180 = arith.constant 9.99999974E-6 : f32
    %440 = vector.broadcast %cst_180 : f32 to vector<16x1xf32>
    %441 = arith.addf %437, %440 : vector<16x1xf32>
    %442 = math.rsqrt %441 : vector<16x1xf32>
    %443 = vector.broadcast %442 : vector<16x1xf32> to vector<16x32xf32>
    %444 = arith.mulf %439, %443 : vector<16x32xf32>
    %445 = vector.broadcast %424 : vector<1x32xf32> to vector<16x32xf32>
    %446 = arith.mulf %444, %445 : vector<16x32xf32>
    %447 = vector.broadcast %426 : vector<1x32xf32> to vector<16x32xf32>
    %448 = arith.addf %446, %447 : vector<16x32xf32>
    %449 = vector.extract_strided_slice %448 {offsets = [7, 0], sizes = [1, 32], strides = [1, 1]} : vector<16x32xf32> to vector<1x32xf32>
    %450 = vector.extract_strided_slice %448 {offsets = [15, 0], sizes = [1, 32], strides = [1, 1]} : vector<16x32xf32> to vector<1x32xf32>
    %451 = tpu.concatenate %449, %450 in 0 : vector<1x32xf32>, vector<1x32xf32> -> vector<2x32xf32>
    %c0_181 = arith.constant 0 : index
    %c0_182 = arith.constant 0 : index
    %452 = vector.load %arg14[%c0_181, %c0_182] : memref<32x32xf32, #tpu.memory_space<vmem>>, vector<32x32xf32>
    %cst_183 = arith.constant dense<0.000000e+00> : vector<2x32xf32>
    %453 = tpu.matmul %451, %452, %cst_183 {dimension_numbers = #tpu.dot_dimension_numbers<[1], [0], [0], [1], [0, 0, 1, 1], [], []>} : vector<2x32xf32>, vector<32x32xf32>, vector<2x32xf32> -> vector<2x32xf32>
    %c0_184 = arith.constant 0 : index
    %c0_185 = arith.constant 0 : index
    %454 = vector.load %arg15[%c0_184, %c0_185] : memref<1x32xf32, #tpu.memory_space<vmem>>, vector<1x32xf32>
    %455 = vector.broadcast %454 : vector<1x32xf32> to vector<2x32xf32>
    %456 = arith.addf %453, %455 : vector<2x32xf32>
    %c0_186 = arith.constant 0 : index
    %c0_187 = arith.constant 0 : index
    %457 = vector.load %arg16[%c0_186, %c0_187] : memref<2x32xf32, #tpu.memory_space<vmem>>, vector<2x32xf32>
    tpu.vector_store %arg16[%c0_186, %c0_187], %456 {strides = array<i32>} : memref<2x32xf32, #tpu.memory_space<vmem>>, vector<2x32xf32>,
    return
  }
  func.func @transform_0(%arg0: i32) -> (i32, i32) {
    %c0_i32 = arith.constant 0 : i32
    %c0_i32_0 = arith.constant 0 : i32
    %c0_i32_1 = arith.constant 0 : i32
    return %c0_i32, %c0_i32_0 : i32, i32
  }
  func.func @transform_1(%arg0: i32) -> (i32, i32, i32) {
    %c0_i32 = arith.constant 0 : i32
    %c0_i32_0 = arith.constant 0 : i32
    %c0_i32_1 = arith.constant 0 : i32
    %c0_i32_2 = arith.constant 0 : i32
    return %c0_i32, %c0_i32_0, %c0_i32_1 : i32, i32, i32
  }
  func.func @transform_2(%arg0: i32) -> (i32, i32, i32) {
    %c0_i32 = arith.constant 0 : i32
    %c0_i32_0 = arith.constant 0 : i32
    %c0_i32_1 = arith.constant 0 : i32
    %c0_i32_2 = arith.constant 0 : i32
    return %c0_i32, %c0_i32_0, %c0_i32_1 : i32, i32, i32
  }
  func.func @transform_3(%arg0: i32) -> (i32, i32, i32) {
    %c0_i32 = arith.constant 0 : i32
    %c0_i32_0 = arith.constant 0 : i32
    %c0_i32_1 = arith.constant 0 : i32
    %c0_i32_2 = arith.constant 0 : i32
    return %c0_i32, %c0_i32_0, %c0_i32_1 : i32, i32, i32
  }
  func.func @transform_4(%arg0: i32) -> (i32, i32, i32) {
    %c0_i32 = arith.constant 0 : i32
    %c0_i32_0 = arith.constant 0 : i32
    %c0_i32_1 = arith.constant 0 : i32
    %c0_i32_2 = arith.constant 0 : i32
    return %c0_i32, %c0_i32_0, %c0_i32_1 : i32, i32, i32
  }
  func.func @transform_5(%arg0: i32) -> (i32, i32, i32) {
    %c0_i32 = arith.constant 0 : i32
    %c0_i32_0 = arith.constant 0 : i32
    %c0_i32_1 = arith.constant 0 : i32
    %c0_i32_2 = arith.constant 0 : i32
    return %c0_i32, %c0_i32_0, %c0_i32_1 : i32, i32, i32
  }
  func.func @transform_6(%arg0: i32) -> (i32, i32, i32) {
    %c0_i32 = arith.constant 0 : i32
    %c0_i32_0 = arith.constant 0 : i32
    %c0_i32_1 = arith.constant 0 : i32
    %c0_i32_2 = arith.constant 0 : i32
    return %c0_i32, %c0_i32_0, %c0_i32_1 : i32, i32, i32
  }
  func.func @transform_7(%arg0: i32) -> (i32, i32, i32) {
    %c0_i32 = arith.constant 0 : i32
    %c0_i32_0 = arith.constant 0 : i32
    %c0_i32_1 = arith.constant 0 : i32
    %c0_i32_2 = arith.constant 0 : i32
    return %c0_i32, %c0_i32_0, %c0_i32_1 : i32, i32, i32
  }
  func.func @transform_8(%arg0: i32) -> (i32, i32, i32) {
    %c0_i32 = arith.constant 0 : i32
    %c0_i32_0 = arith.constant 0 : i32
    %c0_i32_1 = arith.constant 0 : i32
    %c0_i32_2 = arith.constant 0 : i32
    return %c0_i32, %c0_i32_0, %c0_i32_1 : i32, i32, i32
  }
  func.func @transform_9(%arg0: i32) -> (i32, i32, i32) {
    %c0_i32 = arith.constant 0 : i32
    %c0_i32_0 = arith.constant 0 : i32
    %c0_i32_1 = arith.constant 0 : i32
    %c0_i32_2 = arith.constant 0 : i32
    return %c0_i32, %c0_i32_0, %c0_i32_1 : i32, i32, i32
  }
  func.func @transform_10(%arg0: i32) -> (i32, i32, i32) {
    %c0_i32 = arith.constant 0 : i32
    %c0_i32_0 = arith.constant 0 : i32
    %c0_i32_1 = arith.constant 0 : i32
    %c0_i32_2 = arith.constant 0 : i32
    return %c0_i32, %c0_i32_0, %c0_i32_1 : i32, i32, i32
  }
  func.func @transform_11(%arg0: i32) -> (i32, i32, i32) {
    %c0_i32 = arith.constant 0 : i32
    %c0_i32_0 = arith.constant 0 : i32
    %c0_i32_1 = arith.constant 0 : i32
    %c0_i32_2 = arith.constant 0 : i32
    return %c0_i32, %c0_i32_0, %c0_i32_1 : i32, i32, i32
  }
  func.func @transform_12(%arg0: i32) -> (i32, i32, i32) {
    %c0_i32 = arith.constant 0 : i32
    %c0_i32_0 = arith.constant 0 : i32
    %c0_i32_1 = arith.constant 0 : i32
    %c0_i32_2 = arith.constant 0 : i32
    return %c0_i32, %c0_i32_0, %c0_i32_1 : i32, i32, i32
  }
  func.func @transform_13(%arg0: i32) -> (i32, i32) {
    %c0_i32 = arith.constant 0 : i32
    %c0_i32_0 = arith.constant 0 : i32
    %c0_i32_1 = arith.constant 0 : i32
    return %c0_i32, %c0_i32_0 : i32, i32
  }
  func.func @transform_14(%arg0: i32) -> (i32, i32) {
    %c0_i32 = arith.constant 0 : i32
    %c0_i32_0 = arith.constant 0 : i32
    %c0_i32_1 = arith.constant 0 : i32
    return %c0_i32, %c0_i32_0 : i32, i32
  }
  func.func @transform_15(%arg0: i32) -> (i32, i32) {
    %c0_i32 = arith.constant 0 : i32
    %c0_i32_0 = arith.constant 0 : i32
    %c0_i32_1 = arith.constant 0 : i32
    return %c0_i32, %c0_i32_0 : i32, i32
  }
}

</mosaic_0001>

<llo_original>
// kernel: transformer_with_attention.1
$region0: #{transformer_with_attention.1}
  #allocation0 [shape = 'u32[]', space=smem, size = 0x4, offset = 0x4, fixed_abs, tag = 'smem constant byte address 0x4 - core index']
  #allocation1 [shape = 'u32[144,128]{1,0:T(1,128)}', space=vmem, size = 0x12000, scoped, tag = 'internal scratch']
  %s0 = inlined_call_operand.vmem [shape: f32[16,32], index: 0, kind: input, shape index: {}]
  %s1 = inlined_call_operand.vmem [shape: f32[2,32,96], index: 1, kind: input, shape index: {}]
  %s2 = inlined_call_operand.vmem [shape: f32[2,1,96], index: 2, kind: input, shape index: {}]
  %s3 = inlined_call_operand.vmem [shape: f32[2,32,32], index: 3, kind: input, shape index: {}]
  %s4 = inlined_call_operand.vmem [shape: f32[2,1,32], index: 4, kind: input, shape index: {}]
  %s5 = inlined_call_operand.vmem [shape: f32[2,1,32], index: 5, kind: input, shape index: {}]
  %s6 = inlined_call_operand.vmem [shape: f32[2,1,32], index: 6, kind: input, shape index: {}]
  %s7 = inlined_call_operand.vmem [shape: f32[2,32,2048], index: 7, kind: input, shape index: {}]
  %s8 = inlined_call_operand.vmem [shape: f32[2,1,2048], index: 8, kind: input, shape index: {}]
  %s9 = inlined_call_operand.vmem [shape: f32[2,2048,32], index: 9, kind: input, shape index: {}]
  %s10 = inlined_call_operand.vmem [shape: f32[2,1,32], index: 10, kind: input, shape index: {}]
  %s11 = inlined_call_operand.vmem [shape: f32[2,1,32], index: 11, kind: input, shape index: {}]
  %s12 = inlined_call_operand.vmem [shape: f32[2,1,32], index: 12, kind: input, shape index: {}]
  %s13 = inlined_call_operand.vmem [shape: f32[32,32], index: 13, kind: input, shape index: {}]
  %s14 = inlined_call_operand.vmem [shape: f32[1,32], index: 14, kind: input, shape index: {}]
  %s15 = inlined_call_operand.hbm [shape: f32[2,32], index: 15, kind: output, shape index: {}]
  %s16 = sld [smem:[#allocation0]]
  $region70: #{transformer_with_attention.1} parent=0
    _
  %s18 = ssub.s32 1, %s16
  %s19 = scalar_select 0, %s18, %s16
  $region1: #{transformer_with_attention.1} parent=0
    #allocation2 [shape = 'u8[1024]{0}', space=vmem, size = 0x400, scoped, tag = 'output window, operand 0, single buffered']
    #allocation3 [shape = 's32[1]{0}', space=sflag, size = 0x4, scoped, tag = 'scoped memory for transformer_with_attention.1']
    %20 = vsyncpa [#allocation3], 0
    // Predicated region
    $region2: #{transformer_with_attention.1} parent=1 // pred_check
      _
    $region3: #{transformer_with_attention.1} parent=1 // pred_check_branch
      %22 = sbr.rel (0) target = $region5
    $region4: #{transformer_with_attention.1} parent=1 // pred_region
      _
    $region5: #{transformer_with_attention.1} parent=1 // pred_fallthru
      _
    // Predicated region
    $region6: #{transformer_with_attention.1} parent=1 // pred_check
      _
    $region7: #{transformer_with_attention.1} parent=1 // pred_check_branch
      %24 = sbr.rel (0) target = $region9
    $region8: #{transformer_with_attention.1} parent=1 // pred_region
      _
    $region9: #{transformer_with_attention.1} parent=1 // pred_fallthru
      _
    // Predicated region
    $region10: #{transformer_with_attention.1} parent=1 // pred_check
      _
    $region11: #{transformer_with_attention.1} parent=1 // pred_check_branch
      %26 = sbr.rel (0) target = $region13
    $region12: #{transformer_with_attention.1} parent=1 // pred_region
      _
    $region13: #{transformer_with_attention.1} parent=1 // pred_fallthru
      _
    // Predicated region
    $region14: #{transformer_with_attention.1} parent=1 // pred_check
      _
    $region15: #{transformer_with_attention.1} parent=1 // pred_check_branch
      %28 = sbr.rel (0) target = $region17
    $region16: #{transformer_with_attention.1} parent=1 // pred_region
      _
    $region17: #{transformer_with_attention.1} parent=1 // pred_fallthru
      _
    // Predicated region
    $region18: #{transformer_with_attention.1} parent=1 // pred_check
      _
    $region19: #{transformer_with_attention.1} parent=1 // pred_check_branch
      %30 = sbr.rel (0) target = $region21
    $region20: #{transformer_with_attention.1} parent=1 // pred_region
      _
    $region21: #{transformer_with_attention.1} parent=1 // pred_fallthru
      _
    // Predicated region
    $region22: #{transformer_with_attention.1} parent=1 // pred_check
      _
    $region23: #{transformer_with_attention.1} parent=1 // pred_check_branch
      %32 = sbr.rel (0) target = $region25
    $region24: #{transformer_with_attention.1} parent=1 // pred_region
      _
    $region25: #{transformer_with_attention.1} parent=1 // pred_fallthru
      _
    // Predicated region
    $region26: #{transformer_with_attention.1} parent=1 // pred_check
      _
    $region27: #{transformer_with_attention.1} parent=1 // pred_check_branch
      %34 = sbr.rel (0) target = $region29
    $region28: #{transformer_with_attention.1} parent=1 // pred_region
      _
    $region29: #{transformer_with_attention.1} parent=1 // pred_fallthru
      _
    // Predicated region
    $region30: #{transformer_with_attention.1} parent=1 // pred_check
      _
    $region31: #{transformer_with_attention.1} parent=1 // pred_check_branch
      %36 = sbr.rel (0) target = $region33
    $region32: #{transformer_with_attention.1} parent=1 // pred_region
      _
    $region33: #{transformer_with_attention.1} parent=1 // pred_fallthru
      _
    // Predicated region
    $region34: #{transformer_with_attention.1} parent=1 // pred_check
      _
    $region35: #{transformer_with_attention.1} parent=1 // pred_check_branch
      %38 = sbr.rel (0) target = $region37
    $region36: #{transformer_with_attention.1} parent=1 // pred_region
      _
    $region37: #{transformer_with_attention.1} parent=1 // pred_fallthru
      _
    // Predicated region
    $region38: #{transformer_with_attention.1} parent=1 // pred_check
      _
    $region39: #{transformer_with_attention.1} parent=1 // pred_check_branch
      %40 = sbr.rel (0) target = $region41
    $region40: #{transformer_with_attention.1} parent=1 // pred_region
      _
    $region41: #{transformer_with_attention.1} parent=1 // pred_fallthru
      _
    // Predicated region
    $region42: #{transformer_with_attention.1} parent=1 // pred_check
      _
    $region43: #{transformer_with_attention.1} parent=1 // pred_check_branch
      %42 = sbr.rel (0) target = $region45
    $region44: #{transformer_with_attention.1} parent=1 // pred_region
      _
    $region45: #{transformer_with_attention.1} parent=1 // pred_fallthru
      _
    // Predicated region
    $region46: #{transformer_with_attention.1} parent=1 // pred_check
      _
    $region47: #{transformer_with_attention.1} parent=1 // pred_check_branch
      %44 = sbr.rel (0) target = $region49
    $region48: #{transformer_with_attention.1} parent=1 // pred_region
      _
    $region49: #{transformer_with_attention.1} parent=1 // pred_fallthru
      _
    // Predicated region
    $region50: #{transformer_with_attention.1} parent=1 // pred_check
      _
    $region51: #{transformer_with_attention.1} parent=1 // pred_check_branch
      %46 = sbr.rel (0) target = $region53
    $region52: #{transformer_with_attention.1} parent=1 // pred_region
      _
    $region53: #{transformer_with_attention.1} parent=1 // pred_fallthru
      _
    // Predicated region
    $region54: #{transformer_with_attention.1} parent=1 // pred_check
      _
    $region55: #{transformer_with_attention.1} parent=1 // pred_check_branch
      %48 = sbr.rel (0) target = $region57
    $region56: #{transformer_with_attention.1} parent=1 // pred_region
      _
    $region57: #{transformer_with_attention.1} parent=1 // pred_fallthru
      _
    // Predicated region
    $region58: #{transformer_with_attention.1} parent=1 // pred_check
      _
    $region59: #{transformer_with_attention.1} parent=1 // pred_check_branch
      %50 = sbr.rel (0) target = $region61
    $region60: #{transformer_with_attention.1} parent=1 // pred_region
      _
    $region61: #{transformer_with_attention.1} parent=1 // pred_fallthru
      _
    %v51 = vld [vmem:[%s0] sm:$0xff]
    %v52 = vld [vmem:[%s0 + $0x8] sm:$0xff]
    %v53 = vld [vmem:[%s1] sm:$0xff]
    %v54 = vld [vmem:[%s1 + $0x8] sm:$0xff]
    %v55 = vld [vmem:[%s1 + $0x10] sm:$0xff]
    %v56 = vld [vmem:[%s1 + $0x18] sm:$0xff]
    %v57 = vld [vmem:[%s2] sm:$0x1]
    %v59 = vlaneseq
    %v60 = vshrl.u32 %v59, 7
    %v61 = vsub.s32 0, %v60
    %v62 = vrot.slane %v57, %v61
    %vm64 = vcmask 261120
    %v66 = vsel %vm64, %v51, 0
    %v69 = vsel %vm64, %v52, 0
    %71 = vmatprep.subr.mxu0 0.0
    %72 = vmatpush1.msra.mxu0 %v53
    %73 = vmatprep.subr.mxu0 0.0
    %74 = vmatpush1.msra.mxu0 %v54
    %75 = vmatprep.subr.mxu0 0.0
    %76 = vmatpush1.msra.mxu0 %v55
    %77 = vmatprep.subr.mxu0 0.0
    %78 = vmatpush1.msra.mxu0 %v56
    %79 = vmatprep.subr.mxu0 0.0
    %80 = vmatpush1.msra.mxu0 0.0
    %81 = vmatprep.subr.mxu0 0.0
    %82 = vmatpush1.msra.mxu0 0.0
    %83 = vmatprep.subr.mxu0 0.0
    %84 = vmatpush1.msra.mxu0 0.0
    %85 = vmatprep.subr.mxu0 0.0
    %86 = vmatpush1.msra.mxu0 0.0
    %87 = vmatprep.subr.mxu0 0.0
    %88 = vmatpush1.msra.mxu0 0.0
    %89 = vmatprep.subr.mxu0 0.0
    %90 = vmatpush1.msra.mxu0 0.0
    %91 = vmatprep.subr.mxu0 0.0
    %92 = vmatpush1.msra.mxu0 0.0
    %93 = vmatprep.subr.mxu0 0.0
    %94 = vmatpush1.msra.mxu0 0.0
    %95 = vmatprep.subr.mxu0 0.0
    %96 = vmatpush1.msra.mxu0 0.0
    %97 = vmatprep.subr.mxu0 0.0
    %98 = vmatpush1.msra.mxu0 0.0
    %99 = vmatprep.subr.mxu0 0.0
    %100 = vmatpush1.msra.mxu0 0.0
    %101 = vmatprep.subr.mxu0 0.0
    %102 = vmatpush1.msra.mxu0 0.0
    %103 = vmatprep.subr.mxu0 0.0
    %104 = vmatpush1.msra.mxu0 0.0
    %105 = vmatprep.subr.mxu0 0.0
    %106 = vmatpush1.msra.mxu0 0.0
    %107 = vmatprep.subr.mxu0 0.0
    %108 = vmatpush1.msra.mxu0 0.0
    %109 = vmatprep.subr.mxu0 0.0
    %110 = vmatpush1.msra.mxu0 0.0
    %111 = vmatprep.subr.mxu0 0.0
    %112 = vmatpush1.msra.mxu0 0.0
    %113 = vmatprep.subr.mxu0 0.0
    %114 = vmatpush1.msra.mxu0 0.0
    %115 = vmatprep.subr.mxu0 0.0
    %116 = vmatpush1.msra.mxu0 0.0
    %117 = vmatprep.subr.mxu0 0.0
    %118 = vmatpush1.msra.mxu0 0.0
    %119 = vmatprep.subr.mxu0 0.0
    %120 = vmatpush1.msra.mxu0 0.0
    %121 = vmatprep.subr.mxu0 0.0
    %122 = vmatpush1.msra.mxu0 0.0
    %123 = vmatprep.subr.mxu0 0.0
    %124 = vmatpush1.msra.mxu0 0.0
    %125 = vmatprep.subr.mxu0 0.0
    %126 = vmatpush1.msra.mxu0 0.0
    %127 = vmatprep.subr.mxu0 0.0
    %128 = vmatpush1.msra.mxu0 0.0
    %129 = vmatprep.subr.mxu0 0.0
    %130 = vmatpush1.msra.mxu0 0.0
    %131 = vmatprep.subr.mxu0 0.0
    %132 = vmatpush1.msra.mxu0 0.0
    %133 = vmatprep.subr.mxu0 0.0
    %134 = vmatpush1.msra.mxu0 0.0
    %135 = vmatprep.mubr.f32.mxu0 0.0
    %136 = vmatmul.mubr.f32.gmra.mrb[0].mxu0 %v66
    %v137 = vpop.f32.mrb[0].mxu0
    %v138 = vadd.f32 %v62, %v137
    %v139 = vpop.f32.mrb[0].mxu0
    %140 = vmatprep.mubr.f32.mxu0 0.0
    %141 = vmatmul.mubr.f32.gmra.mrb[0].mxu0 %v69
    %v142 = vpop.f32.mrb[0].mxu0
    %v143 = vadd.f32 %v62, %v142
    %v144 = vpop.f32.mrb[0].mxu0
    %145 = vdwg.mxu0
    %147 = vrot.lane.b32.xlu0 %v138, 96
    %v148 = vpop.permute.xlu0 %147
    %vm149 = vcmask 64512
    %v150 = vsel %vm149, %v138, 0
    %v152 = vsel %vm149, %v148, 0
    %154 = vmatprep.subr.mxu0 0.0
    %155 = vmatpush1.xpose.msra.mxu0 %v152
    %156 = vmatprep.subr.mxu0 0.0
    %157 = vmatpush1.xpose.msra.mxu0 0.0
    %158 = vmatprep.subr.mxu0 0.0
    %159 = vmatpush1.xpose.msra.mxu0 0.0
    %160 = vmatprep.subr.mxu0 0.0
    %161 = vmatpush1.xpose.msra.mxu0 0.0
    %162 = vmatprep.subr.mxu0 0.0
    %163 = vmatpush1.xpose.msra.mxu0 0.0
    %164 = vmatprep.subr.mxu0 0.0
    %165 = vmatpush1.xpose.msra.mxu0 0.0
    %166 = vmatprep.subr.mxu0 0.0
    %167 = vmatpush1.xpose.msra.mxu0 0.0
    %168 = vmatprep.subr.mxu0 0.0
    %169 = vmatpush1.xpose.msra.mxu0 0.0
    %170 = vmatprep.subr.mxu0 0.0
    %171 = vmatpush1.xpose.msra.mxu0 0.0
    %172 = vmatprep.subr.mxu0 0.0
    %173 = vmatpush1.xpose.msra.mxu0 0.0
    %174 = vmatprep.subr.mxu0 0.0
    %175 = vmatpush1.xpose.msra.mxu0 0.0
    %176 = vmatprep.subr.mxu0 0.0
    %177 = vmatpush1.xpose.msra.mxu0 0.0
    %178 = vmatprep.subr.mxu0 0.0
    %179 = vmatpush1.xpose.msra.mxu0 0.0
    %180 = vmatprep.subr.mxu0 0.0
    %181 = vmatpush1.xpose.msra.mxu0 0.0
    %182 = vmatprep.subr.mxu0 0.0
    %183 = vmatpush1.xpose.msra.mxu0 0.0
    %184 = vmatprep.subr.mxu0 0.0
    %185 = vmatpush1.xpose.msra.mxu0 0.0
    %186 = vmatprep.subr.mxu0 0.0
    %187 = vmatpush1.xpose.msra.mxu0 0.0
    %188 = vmatprep.subr.mxu0 0.0
    %189 = vmatpush1.xpose.msra.mxu0 0.0
    %190 = vmatprep.subr.mxu0 0.0
    %191 = vmatpush1.xpose.msra.mxu0 0.0
    %192 = vmatprep.subr.mxu0 0.0
    %193 = vmatpush1.xpose.msra.mxu0 0.0
    %194 = vmatprep.subr.mxu0 0.0
    %195 = vmatpush1.xpose.msra.mxu0 0.0
    %196 = vmatprep.subr.mxu0 0.0
    %197 = vmatpush1.xpose.msra.mxu0 0.0
    %198 = vmatprep.subr.mxu0 0.0
    %199 = vmatpush1.xpose.msra.mxu0 0.0
    %200 = vmatprep.subr.mxu0 0.0
    %201 = vmatpush1.xpose.msra.mxu0 0.0
    %202 = vmatprep.subr.mxu0 0.0
    %203 = vmatpush1.xpose.msra.mxu0 0.0
    %204 = vmatprep.subr.mxu0 0.0
    %205 = vmatpush1.xpose.msra.mxu0 0.0
    %206 = vmatprep.subr.mxu0 0.0
    %207 = vmatpush1.xpose.msra.mxu0 0.0
    %208 = vmatprep.subr.mxu0 0.0
    %209 = vmatpush1.xpose.msra.mxu0 0.0
    %210 = vmatprep.subr.mxu0 0.0
    %211 = vmatpush1.xpose.msra.mxu0 0.0
    %212 = vmatprep.subr.mxu0 0.0
    %213 = vmatpush1.xpose.msra.mxu0 0.0
    %214 = vmatprep.subr.mxu0 0.0
    %215 = vmatpush1.xpose.msra.mxu0 0.0
    %216 = vmatprep.subr.mxu0 0.0
    %217 = vmatpush1.xpose.msra.mxu0 0.0
    %218 = vmatprep.mubr.f32.mxu0 0.0
    %219 = vmatmul.mubr.f32.gmra.mrb[0].mxu0 %v150
    %v220 = vpop.f32.mrb[0].mxu0
    %v221 = vadd.f32 0.0, %v220
    %v222 = vpop.f32.mrb[0].mxu0
    %223 = vdwg.mxu0
    %v224 = vmul.f32 %v221, 0.35355338
    %v225 = vsel %vm149, %v224, -inf
    %226 = vmax.xlane.f32.xlu0 %v225
    %v227 = vpop.xlane.xlu0 %226
    %v228 = vsub.f32 %v224, %v227
    %v229 = vmul.f32 %v228, 1.442695
    %v230 = vpow.pop %v229
    %v231 = vsel %vm149, %v230, 0.0
    %232 = vadd.xlane.f32.xlu0 %v231
    %v233 = vpop.xlane.xlu0 %232
    %v234 = vrcp.pop %v233
    %v235 = vmul.f32 %v230, %v234
    %236 = vrot.lane.b32.xlu0 %v138, 64
    %v237 = vpop.permute.xlu0 %236
    %v240 = vsel %vm149, %v235, 0
    %242 = vmatprep.subr.mxu0 0.0
    %243 = vmatpush1.msra.mxu0 %v237
    %244 = vmatprep.subr.mxu0 0.0
    %245 = vmatpush1.msra.mxu0 0.0
    %246 = vmatprep.subr.mxu0 0.0
    %247 = vmatpush1.msra.mxu0 0.0
    %248 = vmatprep.subr.mxu0 0.0
    %249 = vmatpush1.msra.mxu0 0.0
    %250 = vmatprep.subr.mxu0 0.0
    %251 = vmatpush1.msra.mxu0 0.0
    %252 = vmatprep.subr.mxu0 0.0
    %253 = vmatpush1.msra.mxu0 0.0
    %254 = vmatprep.subr.mxu0 0.0
    %255 = vmatpush1.msra.mxu0 0.0
    %256 = vmatprep.subr.mxu0 0.0
    %257 = vmatpush1.msra.mxu0 0.0
    %258 = vmatprep.subr.mxu0 0.0
    %259 = vmatpush1.msra.mxu0 0.0
    %260 = vmatprep.subr.mxu0 0.0
    %261 = vmatpush1.msra.mxu0 0.0
    %262 = vmatprep.subr.mxu0 0.0
    %263 = vmatpush1.msra.mxu0 0.0
    %264 = vmatprep.subr.mxu0 0.0
    %265 = vmatpush1.msra.mxu0 0.0
    %266 = vmatprep.subr.mxu0 0.0
    %267 = vmatpush1.msra.mxu0 0.0
    %268 = vmatprep.subr.mxu0 0.0
    %269 = vmatpush1.msra.mxu0 0.0
    %270 = vmatprep.subr.mxu0 0.0
    %271 = vmatpush1.msra.mxu0 0.0
    %272 = vmatprep.subr.mxu0 0.0
    %273 = vmatpush1.msra.mxu0 0.0
    %274 = vmatprep.subr.mxu0 0.0
    %275 = vmatpush1.msra.mxu0 0.0
    %276 = vmatprep.subr.mxu0 0.0
    %277 = vmatpush1.msra.mxu0 0.0
    %278 = vmatprep.subr.mxu0 0.0
    %279 = vmatpush1.msra.mxu0 0.0
    %280 = vmatprep.subr.mxu0 0.0
    %281 = vmatpush1.msra.mxu0 0.0
    %282 = vmatprep.subr.mxu0 0.0
    %283 = vmatpush1.msra.mxu0 0.0
    %284 = vmatprep.subr.mxu0 0.0
    %285 = vmatpush1.msra.mxu0 0.0
    %286 = vmatprep.subr.mxu0 0.0
    %287 = vmatpush1.msra.mxu0 0.0
    %288 = vmatprep.subr.mxu0 0.0
    %289 = vmatpush1.msra.mxu0 0.0
    %290 = vmatprep.subr.mxu0 0.0
    %291 = vmatpush1.msra.mxu0 0.0
    %292 = vmatprep.subr.mxu0 0.0
    %293 = vmatpush1.msra.mxu0 0.0
    %294 = vmatprep.subr.mxu0 0.0
    %295 = vmatpush1.msra.mxu0 0.0
    %296 = vmatprep.subr.mxu0 0.0
    %297 = vmatpush1.msra.mxu0 0.0
    %298 = vmatprep.subr.mxu0 0.0
    %299 = vmatpush1.msra.mxu0 0.0
    %300 = vmatprep.subr.mxu0 0.0
    %301 = vmatpush1.msra.mxu0 0.0
    %302 = vmatprep.subr.mxu0 0.0
    %303 = vmatpush1.msra.mxu0 0.0
    %304 = vmatprep.subr.mxu0 0.0
    %305 = vmatpush1.msra.mxu0 0.0
    %306 = vmatprep.mubr.f32.mxu0 0.0
    %307 = vmatmul.mubr.f32.gmra.mrb[0].mxu0 %v240
    %v308 = vpop.f32.mrb[0].mxu0
    %v309 = vadd.f32 0.0, %v308
    %v310 = vpop.f32.mrb[0].mxu0
    %311 = vdwg.mxu0
    %312 = vrot.lane.b32.xlu0 %v138, 120
    %v313 = vpop.permute.xlu0 %312
    %314 = vrot.lane.b32.xlu0 %v138, 88
    %v315 = vpop.permute.xlu0 %314
    %v316 = vsel %vm149, %v313, 0
    %v318 = vsel %vm149, %v315, 0
    %320 = vmatprep.subr.mxu0 0.0
    %321 = vmatpush1.xpose.msra.mxu0 %v318
    %322 = vmatprep.subr.mxu0 0.0
    %323 = vmatpush1.xpose.msra.mxu0 0.0
    %324 = vmatprep.subr.mxu0 0.0
    %325 = vmatpush1.xpose.msra.mxu0 0.0
    %326 = vmatprep.subr.mxu0 0.0
    %327 = vmatpush1.xpose.msra.mxu0 0.0
    %328 = vmatprep.subr.mxu0 0.0
    %329 = vmatpush1.xpose.msra.mxu0 0.0
    %330 = vmatprep.subr.mxu0 0.0
    %331 = vmatpush1.xpose.msra.mxu0 0.0
    %332 = vmatprep.subr.mxu0 0.0
    %333 = vmatpush1.xpose.msra.mxu0 0.0
    %334 = vmatprep.subr.mxu0 0.0
    %335 = vmatpush1.xpose.msra.mxu0 0.0
    %336 = vmatprep.subr.mxu0 0.0
    %337 = vmatpush1.xpose.msra.mxu0 0.0
    %338 = vmatprep.subr.mxu0 0.0
    %339 = vmatpush1.xpose.msra.mxu0 0.0
    %340 = vmatprep.subr.mxu0 0.0
    %341 = vmatpush1.xpose.msra.mxu0 0.0
    %342 = vmatprep.subr.mxu0 0.0
    %343 = vmatpush1.xpose.msra.mxu0 0.0
    %344 = vmatprep.subr.mxu0 0.0
    %345 = vmatpush1.xpose.msra.mxu0 0.0
    %346 = vmatprep.subr.mxu0 0.0
    %347 = vmatpush1.xpose.msra.mxu0 0.0
    %348 = vmatprep.subr.mxu0 0.0
    %349 = vmatpush1.xpose.msra.mxu0 0.0
    %350 = vmatprep.subr.mxu0 0.0
    %351 = vmatpush1.xpose.msra.mxu0 0.0
    %352 = vmatprep.subr.mxu0 0.0
    %353 = vmatpush1.xpose.msra.mxu0 0.0
    %354 = vmatprep.subr.mxu0 0.0
    %355 = vmatpush1.xpose.msra.mxu0 0.0
    %356 = vmatprep.subr.mxu0 0.0
    %357 = vmatpush1.xpose.msra.mxu0 0.0
    %358 = vmatprep.subr.mxu0 0.0
    %359 = vmatpush1.xpose.msra.mxu0 0.0
    %360 = vmatprep.subr.mxu0 0.0
    %361 = vmatpush1.xpose.msra.mxu0 0.0
    %362 = vmatprep.subr.mxu0 0.0
    %363 = vmatpush1.xpose.msra.mxu0 0.0
    %364 = vmatprep.subr.mxu0 0.0
    %365 = vmatpush1.xpose.msra.mxu0 0.0
    %366 = vmatprep.subr.mxu0 0.0
    %367 = vmatpush1.xpose.msra.mxu0 0.0
    %368 = vmatprep.subr.mxu0 0.0
    %369 = vmatpush1.xpose.msra.mxu0 0.0
    %370 = vmatprep.subr.mxu0 0.0
    %371 = vmatpush1.xpose.msra.mxu0 0.0
    %372 = vmatprep.subr.mxu0 0.0
    %373 = vmatpush1.xpose.msra.mxu0 0.0
    %374 = vmatprep.subr.mxu0 0.0
    %375 = vmatpush1.xpose.msra.mxu0 0.0
    %376 = vmatprep.subr.mxu0 0.0
    %377 = vmatpush1.xpose.msra.mxu0 0.0
    %378 = vmatprep.subr.mxu0 0.0
    %379 = vmatpush1.xpose.msra.mxu0 0.0
    %380 = vmatprep.subr.mxu0 0.0
    %381 = vmatpush1.xpose.msra.mxu0 0.0
    %382 = vmatprep.subr.mxu0 0.0
    %383 = vmatpush1.xpose.msra.mxu0 0.0
    %384 = vmatprep.mubr.f32.mxu0 0.0
    %385 = vmatmul.mubr.f32.gmra.mrb[0].mxu0 %v316
    %v386 = vpop.f32.mrb[0].mxu0
    %v387 = vadd.f32 0.0, %v386
    %v388 = vpop.f32.mrb[0].mxu0
    %389 = vdwg.mxu0
    %v390 = vmul.f32 %v387, 0.35355338
    %v391 = vsel %vm149, %v390, -inf
    %392 = vmax.xlane.f32.xlu0 %v391
    %v393 = vpop.xlane.xlu0 %392
    %v394 = vsub.f32 %v390, %v393
    %v395 = vmul.f32 %v394, 1.442695
    %v396 = vpow.pop %v395
    %v397 = vsel %vm149, %v396, 0.0
    %398 = vadd.xlane.f32.xlu0 %v397
    %v399 = vpop.xlane.xlu0 %398
    %v400 = vrcp.pop %v399
    %v401 = vmul.f32 %v396, %v400
    %402 = vrot.lane.b32.xlu0 %v138, 56
    %v403 = vpop.permute.xlu0 %402
    %v406 = vsel %vm149, %v401, 0
    %408 = vmatprep.subr.mxu0 0.0
    %409 = vmatpush1.msra.mxu0 %v403
    %410 = vmatprep.subr.mxu0 0.0
    %411 = vmatpush1.msra.mxu0 0.0
    %412 = vmatprep.subr.mxu0 0.0
    %413 = vmatpush1.msra.mxu0 0.0
    %414 = vmatprep.subr.mxu0 0.0
    %415 = vmatpush1.msra.mxu0 0.0
    %416 = vmatprep.subr.mxu0 0.0
    %417 = vmatpush1.msra.mxu0 0.0
    %418 = vmatprep.subr.mxu0 0.0
    %419 = vmatpush1.msra.mxu0 0.0
    %420 = vmatprep.subr.mxu0 0.0
    %421 = vmatpush1.msra.mxu0 0.0
    %422 = vmatprep.subr.mxu0 0.0
    %423 = vmatpush1.msra.mxu0 0.0
    %424 = vmatprep.subr.mxu0 0.0
    %425 = vmatpush1.msra.mxu0 0.0
    %426 = vmatprep.subr.mxu0 0.0
    %427 = vmatpush1.msra.mxu0 0.0
    %428 = vmatprep.subr.mxu0 0.0
    %429 = vmatpush1.msra.mxu0 0.0
    %430 = vmatprep.subr.mxu0 0.0
    %431 = vmatpush1.msra.mxu0 0.0
    %432 = vmatprep.subr.mxu0 0.0
    %433 = vmatpush1.msra.mxu0 0.0
    %434 = vmatprep.subr.mxu0 0.0
    %435 = vmatpush1.msra.mxu0 0.0
    %436 = vmatprep.subr.mxu0 0.0
    %437 = vmatpush1.msra.mxu0 0.0
    %438 = vmatprep.subr.mxu0 0.0
    %439 = vmatpush1.msra.mxu0 0.0
    %440 = vmatprep.subr.mxu0 0.0
    %441 = vmatpush1.msra.mxu0 0.0
    %442 = vmatprep.subr.mxu0 0.0
    %443 = vmatpush1.msra.mxu0 0.0
    %444 = vmatprep.subr.mxu0 0.0
    %445 = vmatpush1.msra.mxu0 0.0
    %446 = vmatprep.subr.mxu0 0.0
    %447 = vmatpush1.msra.mxu0 0.0
    %448 = vmatprep.subr.mxu0 0.0
    %449 = vmatpush1.msra.mxu0 0.0
    %450 = vmatprep.subr.mxu0 0.0
    %451 = vmatpush1.msra.mxu0 0.0
    %452 = vmatprep.subr.mxu0 0.0
    %453 = vmatpush1.msra.mxu0 0.0
    %454 = vmatprep.subr.mxu0 0.0
    %455 = vmatpush1.msra.mxu0 0.0
    %456 = vmatprep.subr.mxu0 0.0
    %457 = vmatpush1.msra.mxu0 0.0
    %458 = vmatprep.subr.mxu0 0.0
    %459 = vmatpush1.msra.mxu0 0.0
    %460 = vmatprep.subr.mxu0 0.0
    %461 = vmatpush1.msra.mxu0 0.0
    %462 = vmatprep.subr.mxu0 0.0
    %463 = vmatpush1.msra.mxu0 0.0
    %464 = vmatprep.subr.mxu0 0.0
    %465 = vmatpush1.msra.mxu0 0.0
    %466 = vmatprep.subr.mxu0 0.0
    %467 = vmatpush1.msra.mxu0 0.0
    %468 = vmatprep.subr.mxu0 0.0
    %469 = vmatpush1.msra.mxu0 0.0
    %470 = vmatprep.subr.mxu0 0.0
    %471 = vmatpush1.msra.mxu0 0.0
    %472 = vmatprep.mubr.f32.mxu0 0.0
    %473 = vmatmul.mubr.f32.gmra.mrb[0].mxu0 %v406
    %v474 = vpop.f32.mrb[0].mxu0
    %v475 = vadd.f32 0.0, %v474
    %v476 = vpop.f32.mrb[0].mxu0
    %477 = vdwg.mxu0
    %478 = vrot.lane.b32.xlu0 %v138, 112
    %v479 = vpop.permute.xlu0 %478
    %480 = vrot.lane.b32.xlu0 %v138, 80
    %v481 = vpop.permute.xlu0 %480
    %v482 = vsel %vm149, %v479, 0
    %v484 = vsel %vm149, %v481, 0
    %486 = vmatprep.subr.mxu0 0.0
    %487 = vmatpush1.xpose.msra.mxu0 %v484
    %488 = vmatprep.subr.mxu0 0.0
    %489 = vmatpush1.xpose.msra.mxu0 0.0
    %490 = vmatprep.subr.mxu0 0.0
    %491 = vmatpush1.xpose.msra.mxu0 0.0
    %492 = vmatprep.subr.mxu0 0.0
    %493 = vmatpush1.xpose.msra.mxu0 0.0
    %494 = vmatprep.subr.mxu0 0.0
    %495 = vmatpush1.xpose.msra.mxu0 0.0
    %496 = vmatprep.subr.mxu0 0.0
    %497 = vmatpush1.xpose.msra.mxu0 0.0
    %498 = vmatprep.subr.mxu0 0.0
    %499 = vmatpush1.xpose.msra.mxu0 0.0
    %500 = vmatprep.subr.mxu0 0.0
    %501 = vmatpush1.xpose.msra.mxu0 0.0
    %502 = vmatprep.subr.mxu0 0.0
    %503 = vmatpush1.xpose.msra.mxu0 0.0
    %504 = vmatprep.subr.mxu0 0.0
    %505 = vmatpush1.xpose.msra.mxu0 0.0
    %506 = vmatprep.subr.mxu0 0.0
    %507 = vmatpush1.xpose.msra.mxu0 0.0
    %508 = vmatprep.subr.mxu0 0.0
    %509 = vmatpush1.xpose.msra.mxu0 0.0
    %510 = vmatprep.subr.mxu0 0.0
    %511 = vmatpush1.xpose.msra.mxu0 0.0
    %512 = vmatprep.subr.mxu0 0.0
    %513 = vmatpush1.xpose.msra.mxu0 0.0
    %514 = vmatprep.subr.mxu0 0.0
    %515 = vmatpush1.xpose.msra.mxu0 0.0
    %516 = vmatprep.subr.mxu0 0.0
    %517 = vmatpush1.xpose.msra.mxu0 0.0
    %518 = vmatprep.subr.mxu0 0.0
    %519 = vmatpush1.xpose.msra.mxu0 0.0
    %520 = vmatprep.subr.mxu0 0.0
    %521 = vmatpush1.xpose.msra.mxu0 0.0
    %522 = vmatprep.subr.mxu0 0.0
    %523 = vmatpush1.xpose.msra.mxu0 0.0
    %524 = vmatprep.subr.mxu0 0.0
    %525 = vmatpush1.xpose.msra.mxu0 0.0
    %526 = vmatprep.subr.mxu0 0.0
    %527 = vmatpush1.xpose.msra.mxu0 0.0
    %528 = vmatprep.subr.mxu0 0.0
    %529 = vmatpush1.xpose.msra.mxu0 0.0
    %530 = vmatprep.subr.mxu0 0.0
    %531 = vmatpush1.xpose.msra.mxu0 0.0
    %532 = vmatprep.subr.mxu0 0.0
    %533 = vmatpush1.xpose.msra.mxu0 0.0
    %534 = vmatprep.subr.mxu0 0.0
    %535 = vmatpush1.xpose.msra.mxu0 0.0
    %536 = vmatprep.subr.mxu0 0.0
    %537 = vmatpush1.xpose.msra.mxu0 0.0
    %538 = vmatprep.subr.mxu0 0.0
    %539 = vmatpush1.xpose.msra.mxu0 0.0
    %540 = vmatprep.subr.mxu0 0.0
    %541 = vmatpush1.xpose.msra.mxu0 0.0
    %542 = vmatprep.subr.mxu0 0.0
    %543 = vmatpush1.xpose.msra.mxu0 0.0
    %544 = vmatprep.subr.mxu0 0.0
    %545 = vmatpush1.xpose.msra.mxu0 0.0
    %546 = vmatprep.subr.mxu0 0.0
    %547 = vmatpush1.xpose.msra.mxu0 0.0
    %548 = vmatprep.subr.mxu0 0.0
    %549 = vmatpush1.xpose.msra.mxu0 0.0
    %550 = vmatprep.mubr.f32.mxu0 0.0
    %551 = vmatmul.mubr.f32.gmra.mrb[0].mxu0 %v482
    %v552 = vpop.f32.mrb[0].mxu0
    %v553 = vadd.f32 0.0, %v552
    %v554 = vpop.f32.mrb[0].mxu0
    %555 = vdwg.mxu0
    %v556 = vmul.f32 %v553, 0.35355338
    %v557 = vsel %vm149, %v556, -inf
    %558 = vmax.xlane.f32.xlu0 %v557
    %v559 = vpop.xlane.xlu0 %558
    %v560 = vsub.f32 %v556, %v559
    %v561 = vmul.f32 %v560, 1.442695
    %v562 = vpow.pop %v561
    %v563 = vsel %vm149, %v562, 0.0
    %564 = vadd.xlane.f32.xlu0 %v563
    %v565 = vpop.xlane.xlu0 %564
    %v566 = vrcp.pop %v565
    %v567 = vmul.f32 %v562, %v566
    %568 = vrot.lane.b32.xlu0 %v138, 48
    %v569 = vpop.permute.xlu0 %568
    %v572 = vsel %vm149, %v567, 0
    %574 = vmatprep.subr.mxu0 0.0
    %575 = vmatpush1.msra.mxu0 %v569
    %576 = vmatprep.subr.mxu0 0.0
    %577 = vmatpush1.msra.mxu0 0.0
    %578 = vmatprep.subr.mxu0 0.0
    %579 = vmatpush1.msra.mxu0 0.0
    %580 = vmatprep.subr.mxu0 0.0
    %581 = vmatpush1.msra.mxu0 0.0
    %582 = vmatprep.subr.mxu0 0.0
    %583 = vmatpush1.msra.mxu0 0.0
    %584 = vmatprep.subr.mxu0 0.0
    %585 = vmatpush1.msra.mxu0 0.0
    %586 = vmatprep.subr.mxu0 0.0
    %587 = vmatpush1.msra.mxu0 0.0
    %588 = vmatprep.subr.mxu0 0.0
    %589 = vmatpush1.msra.mxu0 0.0
    %590 = vmatprep.subr.mxu0 0.0
    %591 = vmatpush1.msra.mxu0 0.0
    %592 = vmatprep.subr.mxu0 0.0
    %593 = vmatpush1.msra.mxu0 0.0
    %594 = vmatprep.subr.mxu0 0.0
    %595 = vmatpush1.msra.mxu0 0.0
    %596 = vmatprep.subr.mxu0 0.0
    %597 = vmatpush1.msra.mxu0 0.0
    %598 = vmatprep.subr.mxu0 0.0
    %599 = vmatpush1.msra.mxu0 0.0
    %600 = vmatprep.subr.mxu0 0.0
    %601 = vmatpush1.msra.mxu0 0.0
    %602 = vmatprep.subr.mxu0 0.0
    %603 = vmatpush1.msra.mxu0 0.0
    %604 = vmatprep.subr.mxu0 0.0
    %605 = vmatpush1.msra.mxu0 0.0
    %606 = vmatprep.subr.mxu0 0.0
    %607 = vmatpush1.msra.mxu0 0.0
    %608 = vmatprep.subr.mxu0 0.0
    %609 = vmatpush1.msra.mxu0 0.0
    %610 = vmatprep.subr.mxu0 0.0
    %611 = vmatpush1.msra.mxu0 0.0
    %612 = vmatprep.subr.mxu0 0.0
    %613 = vmatpush1.msra.mxu0 0.0
    %614 = vmatprep.subr.mxu0 0.0
    %615 = vmatpush1.msra.mxu0 0.0
    %616 = vmatprep.subr.mxu0 0.0
    %617 = vmatpush1.msra.mxu0 0.0
    %618 = vmatprep.subr.mxu0 0.0
    %619 = vmatpush1.msra.mxu0 0.0
    %620 = vmatprep.subr.mxu0 0.0
    %621 = vmatpush1.msra.mxu0 0.0
    %622 = vmatprep.subr.mxu0 0.0
    %623 = vmatpush1.msra.mxu0 0.0
    %624 = vmatprep.subr.mxu0 0.0
    %625 = vmatpush1.msra.mxu0 0.0
    %626 = vmatprep.subr.mxu0 0.0
    %627 = vmatpush1.msra.mxu0 0.0
    %628 = vmatprep.subr.mxu0 0.0
    %629 = vmatpush1.msra.mxu0 0.0
    %630 = vmatprep.subr.mxu0 0.0
    %631 = vmatpush1.msra.mxu0 0.0
    %632 = vmatprep.subr.mxu0 0.0
    %633 = vmatpush1.msra.mxu0 0.0
    %634 = vmatprep.subr.mxu0 0.0
    %635 = vmatpush1.msra.mxu0 0.0
    %636 = vmatprep.subr.mxu0 0.0
    %637 = vmatpush1.msra.mxu0 0.0
    %638 = vmatprep.mubr.f32.mxu0 0.0
    %639 = vmatmul.mubr.f32.gmra.mrb[0].mxu0 %v572
    %v640 = vpop.f32.mrb[0].mxu0
    %v641 = vadd.f32 0.0, %v640
    %v642 = vpop.f32.mrb[0].mxu0
    %643 = vdwg.mxu0
    %644 = vrot.lane.b32.xlu0 %v138, 104
    %v645 = vpop.permute.xlu0 %644
    %646 = vrot.lane.b32.xlu0 %v138, 72
    %v647 = vpop.permute.xlu0 %646
    %v648 = vsel %vm149, %v645, 0
    %v650 = vsel %vm149, %v647, 0
    %652 = vmatprep.subr.mxu0 0.0
    %653 = vmatpush1.xpose.msra.mxu0 %v650
    %654 = vmatprep.subr.mxu0 0.0
    %655 = vmatpush1.xpose.msra.mxu0 0.0
    %656 = vmatprep.subr.mxu0 0.0
    %657 = vmatpush1.xpose.msra.mxu0 0.0
    %658 = vmatprep.subr.mxu0 0.0
    %659 = vmatpush1.xpose.msra.mxu0 0.0
    %660 = vmatprep.subr.mxu0 0.0
    %661 = vmatpush1.xpose.msra.mxu0 0.0
    %662 = vmatprep.subr.mxu0 0.0
    %663 = vmatpush1.xpose.msra.mxu0 0.0
    %664 = vmatprep.subr.mxu0 0.0
    %665 = vmatpush1.xpose.msra.mxu0 0.0
    %666 = vmatprep.subr.mxu0 0.0
    %667 = vmatpush1.xpose.msra.mxu0 0.0
    %668 = vmatprep.subr.mxu0 0.0
    %669 = vmatpush1.xpose.msra.mxu0 0.0
    %670 = vmatprep.subr.mxu0 0.0
    %671 = vmatpush1.xpose.msra.mxu0 0.0
    %672 = vmatprep.subr.mxu0 0.0
    %673 = vmatpush1.xpose.msra.mxu0 0.0
    %674 = vmatprep.subr.mxu0 0.0
    %675 = vmatpush1.xpose.msra.mxu0 0.0
    %676 = vmatprep.subr.mxu0 0.0
    %677 = vmatpush1.xpose.msra.mxu0 0.0
    %678 = vmatprep.subr.mxu0 0.0
    %679 = vmatpush1.xpose.msra.mxu0 0.0
    %680 = vmatprep.subr.mxu0 0.0
    %681 = vmatpush1.xpose.msra.mxu0 0.0
    %682 = vmatprep.subr.mxu0 0.0
    %683 = vmatpush1.xpose.msra.mxu0 0.0
    %684 = vmatprep.subr.mxu0 0.0
    %685 = vmatpush1.xpose.msra.mxu0 0.0
    %686 = vmatprep.subr.mxu0 0.0
    %687 = vmatpush1.xpose.msra.mxu0 0.0
    %688 = vmatprep.subr.mxu0 0.0
    %689 = vmatpush1.xpose.msra.mxu0 0.0
    %690 = vmatprep.subr.mxu0 0.0
    %691 = vmatpush1.xpose.msra.mxu0 0.0
    %692 = vmatprep.subr.mxu0 0.0
    %693 = vmatpush1.xpose.msra.mxu0 0.0
    %694 = vmatprep.subr.mxu0 0.0
    %695 = vmatpush1.xpose.msra.mxu0 0.0
    %696 = vmatprep.subr.mxu0 0.0
    %697 = vmatpush1.xpose.msra.mxu0 0.0
    %698 = vmatprep.subr.mxu0 0.0
    %699 = vmatpush1.xpose.msra.mxu0 0.0
    %700 = vmatprep.subr.mxu0 0.0
    %701 = vmatpush1.xpose.msra.mxu0 0.0
    %702 = vmatprep.subr.mxu0 0.0
    %703 = vmatpush1.xpose.msra.mxu0 0.0
    %704 = vmatprep.subr.mxu0 0.0
    %705 = vmatpush1.xpose.msra.mxu0 0.0
    %706 = vmatprep.subr.mxu0 0.0
    %707 = vmatpush1.xpose.msra.mxu0 0.0
    %708 = vmatprep.subr.mxu0 0.0
    %709 = vmatpush1.xpose.msra.mxu0 0.0
    %710 = vmatprep.subr.mxu0 0.0
    %711 = vmatpush1.xpose.msra.mxu0 0.0
    %712 = vmatprep.subr.mxu0 0.0
    %713 = vmatpush1.xpose.msra.mxu0 0.0
    %714 = vmatprep.subr.mxu0 0.0
    %715 = vmatpush1.xpose.msra.mxu0 0.0
    %716 = vmatprep.mubr.f32.mxu0 0.0
    %717 = vmatmul.mubr.f32.gmra.mrb[0].mxu0 %v648
    %v718 = vpop.f32.mrb[0].mxu0
    %v719 = vadd.f32 0.0, %v718
    %v720 = vpop.f32.mrb[0].mxu0
    %721 = vdwg.mxu0
    %v722 = vmul.f32 %v719, 0.35355338
    %v723 = vsel %vm149, %v722, -inf
    %724 = vmax.xlane.f32.xlu0 %v723
    %v725 = vpop.xlane.xlu0 %724
    %v726 = vsub.f32 %v722, %v725
    %v727 = vmul.f32 %v726, 1.442695
    %v728 = vpow.pop %v727
    %v729 = vsel %vm149, %v728, 0.0
    %730 = vadd.xlane.f32.xlu0 %v729
    %v731 = vpop.xlane.xlu0 %730
    %v732 = vrcp.pop %v731
    %v733 = vmul.f32 %v728, %v732
    %734 = vrot.lane.b32.xlu0 %v138, 40
    %v735 = vpop.permute.xlu0 %734
    %v738 = vsel %vm149, %v733, 0
    %740 = vmatprep.subr.mxu0 0.0
    %741 = vmatpush1.msra.mxu0 %v735
    %742 = vmatprep.subr.mxu0 0.0
    %743 = vmatpush1.msra.mxu0 0.0
    %744 = vmatprep.subr.mxu0 0.0
    %745 = vmatpush1.msra.mxu0 0.0
    %746 = vmatprep.subr.mxu0 0.0
    %747 = vmatpush1.msra.mxu0 0.0
    %748 = vmatprep.subr.mxu0 0.0
    %749 = vmatpush1.msra.mxu0 0.0
    %750 = vmatprep.subr.mxu0 0.0
    %751 = vmatpush1.msra.mxu0 0.0
    %752 = vmatprep.subr.mxu0 0.0
    %753 = vmatpush1.msra.mxu0 0.0
    %754 = vmatprep.subr.mxu0 0.0
    %755 = vmatpush1.msra.mxu0 0.0
    %756 = vmatprep.subr.mxu0 0.0
    %757 = vmatpush1.msra.mxu0 0.0
    %758 = vmatprep.subr.mxu0 0.0
    %759 = vmatpush1.msra.mxu0 0.0
    %760 = vmatprep.subr.mxu0 0.0
    %761 = vmatpush1.msra.mxu0 0.0
    %762 = vmatprep.subr.mxu0 0.0
    %763 = vmatpush1.msra.mxu0 0.0
    %764 = vmatprep.subr.mxu0 0.0
    %765 = vmatpush1.msra.mxu0 0.0
    %766 = vmatprep.subr.mxu0 0.0
    %767 = vmatpush1.msra.mxu0 0.0
    %768 = vmatprep.subr.mxu0 0.0
    %769 = vmatpush1.msra.mxu0 0.0
    %770 = vmatprep.subr.mxu0 0.0
    %771 = vmatpush1.msra.mxu0 0.0
    %772 = vmatprep.subr.mxu0 0.0
    %773 = vmatpush1.msra.mxu0 0.0
    %774 = vmatprep.subr.mxu0 0.0
    %775 = vmatpush1.msra.mxu0 0.0
    %776 = vmatprep.subr.mxu0 0.0
    %777 = vmatpush1.msra.mxu0 0.0
    %778 = vmatprep.subr.mxu0 0.0
    %779 = vmatpush1.msra.mxu0 0.0
    %780 = vmatprep.subr.mxu0 0.0
    %781 = vmatpush1.msra.mxu0 0.0
    %782 = vmatprep.subr.mxu0 0.0
    %783 = vmatpush1.msra.mxu0 0.0
    %784 = vmatprep.subr.mxu0 0.0
    %785 = vmatpush1.msra.mxu0 0.0
    %786 = vmatprep.subr.mxu0 0.0
    %787 = vmatpush1.msra.mxu0 0.0
    %788 = vmatprep.subr.mxu0 0.0
    %789 = vmatpush1.msra.mxu0 0.0
    %790 = vmatprep.subr.mxu0 0.0
    %791 = vmatpush1.msra.mxu0 0.0
    %792 = vmatprep.subr.mxu0 0.0
    %793 = vmatpush1.msra.mxu0 0.0
    %794 = vmatprep.subr.mxu0 0.0
    %795 = vmatpush1.msra.mxu0 0.0
    %796 = vmatprep.subr.mxu0 0.0
    %797 = vmatpush1.msra.mxu0 0.0
    %798 = vmatprep.subr.mxu0 0.0
    %799 = vmatpush1.msra.mxu0 0.0
    %800 = vmatprep.subr.mxu0 0.0
    %801 = vmatpush1.msra.mxu0 0.0
    %802 = vmatprep.subr.mxu0 0.0
    %803 = vmatpush1.msra.mxu0 0.0
    %804 = vmatprep.mubr.f32.mxu0 0.0
    %805 = vmatmul.mubr.f32.gmra.mrb[0].mxu0 %v738
    %v806 = vpop.f32.mrb[0].mxu0
    %v807 = vadd.f32 0.0, %v806
    %v808 = vpop.f32.mrb[0].mxu0
    %809 = vdwg.mxu0
    %811 = vrot.lane.b32.xlu0 %v475, 8
    %v812 = vpop.permute.xlu0 %811
    %815 = vrot.lane.b32.xlu0 %v641, 16
    %v816 = vpop.permute.xlu0 %815
    %819 = vrot.lane.b32.xlu0 %v807, 24
    %v820 = vpop.permute.xlu0 %819
    %v822 = vsel %vm149, %v309, %v812
    %vm823 = vcmask 130048
    %v824 = vsel %vm823, %v822, %v816
    %vm825 = vcmask 195584
    %v826 = vsel %vm825, %v824, %v820
    %828 = vrot.lane.b32.xlu0 %v143, 96
    %v829 = vpop.permute.xlu0 %828
    %v830 = vsel %vm149, %v143, 0
    %v832 = vsel %vm149, %v829, 0
    %834 = vmatprep.subr.mxu0 0.0
    %835 = vmatpush1.xpose.msra.mxu0 %v832
    %836 = vmatprep.subr.mxu0 0.0
    %837 = vmatpush1.xpose.msra.mxu0 0.0
    %838 = vmatprep.subr.mxu0 0.0
    %839 = vmatpush1.xpose.msra.mxu0 0.0
    %840 = vmatprep.subr.mxu0 0.0
    %841 = vmatpush1.xpose.msra.mxu0 0.0
    %842 = vmatprep.subr.mxu0 0.0
    %843 = vmatpush1.xpose.msra.mxu0 0.0
    %844 = vmatprep.subr.mxu0 0.0
    %845 = vmatpush1.xpose.msra.mxu0 0.0
    %846 = vmatprep.subr.mxu0 0.0
    %847 = vmatpush1.xpose.msra.mxu0 0.0
    %848 = vmatprep.subr.mxu0 0.0
    %849 = vmatpush1.xpose.msra.mxu0 0.0
    %850 = vmatprep.subr.mxu0 0.0
    %851 = vmatpush1.xpose.msra.mxu0 0.0
    %852 = vmatprep.subr.mxu0 0.0
    %853 = vmatpush1.xpose.msra.mxu0 0.0
    %854 = vmatprep.subr.mxu0 0.0
    %855 = vmatpush1.xpose.msra.mxu0 0.0
    %856 = vmatprep.subr.mxu0 0.0
    %857 = vmatpush1.xpose.msra.mxu0 0.0
    %858 = vmatprep.subr.mxu0 0.0
    %859 = vmatpush1.xpose.msra.mxu0 0.0
    %860 = vmatprep.subr.mxu0 0.0
    %861 = vmatpush1.xpose.msra.mxu0 0.0
    %862 = vmatprep.subr.mxu0 0.0
    %863 = vmatpush1.xpose.msra.mxu0 0.0
    %864 = vmatprep.subr.mxu0 0.0
    %865 = vmatpush1.xpose.msra.mxu0 0.0
    %866 = vmatprep.subr.mxu0 0.0
    %867 = vmatpush1.xpose.msra.mxu0 0.0
    %868 = vmatprep.subr.mxu0 0.0
    %869 = vmatpush1.xpose.msra.mxu0 0.0
    %870 = vmatprep.subr.mxu0 0.0
    %871 = vmatpush1.xpose.msra.mxu0 0.0
    %872 = vmatprep.subr.mxu0 0.0
    %873 = vmatpush1.xpose.msra.mxu0 0.0
    %874 = vmatprep.subr.mxu0 0.0
    %875 = vmatpush1.xpose.msra.mxu0 0.0
    %876 = vmatprep.subr.mxu0 0.0
    %877 = vmatpush1.xpose.msra.mxu0 0.0
    %878 = vmatprep.subr.mxu0 0.0
    %879 = vmatpush1.xpose.msra.mxu0 0.0
    %880 = vmatprep.subr.mxu0 0.0
    %881 = vmatpush1.xpose.msra.mxu0 0.0
    %882 = vmatprep.subr.mxu0 0.0
    %883 = vmatpush1.xpose.msra.mxu0 0.0
    %884 = vmatprep.subr.mxu0 0.0
    %885 = vmatpush1.xpose.msra.mxu0 0.0
    %886 = vmatprep.subr.mxu0 0.0
    %887 = vmatpush1.xpose.msra.mxu0 0.0
    %888 = vmatprep.subr.mxu0 0.0
    %889 = vmatpush1.xpose.msra.mxu0 0.0
    %890 = vmatprep.subr.mxu0 0.0
    %891 = vmatpush1.xpose.msra.mxu0 0.0
    %892 = vmatprep.subr.mxu0 0.0
    %893 = vmatpush1.xpose.msra.mxu0 0.0
    %894 = vmatprep.subr.mxu0 0.0
    %895 = vmatpush1.xpose.msra.mxu0 0.0
    %896 = vmatprep.subr.mxu0 0.0
    %897 = vmatpush1.xpose.msra.mxu0 0.0
    %898 = vmatprep.mubr.f32.mxu0 0.0
    %899 = vmatmul.mubr.f32.gmra.mrb[0].mxu0 %v830
    %v900 = vpop.f32.mrb[0].mxu0
    %v901 = vadd.f32 0.0, %v900
    %v902 = vpop.f32.mrb[0].mxu0
    %903 = vdwg.mxu0
    %v904 = vmul.f32 %v901, 0.35355338
    %v905 = vsel %vm149, %v904, -inf
    %906 = vmax.xlane.f32.xlu0 %v905
    %v907 = vpop.xlane.xlu0 %906
    %v908 = vsub.f32 %v904, %v907
    %v909 = vmul.f32 %v908, 1.442695
    %v910 = vpow.pop %v909
    %v911 = vsel %vm149, %v910, 0.0
    %912 = vadd.xlane.f32.xlu0 %v911
    %v913 = vpop.xlane.xlu0 %912
    %v914 = vrcp.pop %v913
    %v915 = vmul.f32 %v910, %v914
    %916 = vrot.lane.b32.xlu0 %v143, 64
    %v917 = vpop.permute.xlu0 %916
    %v920 = vsel %vm149, %v915, 0
    %922 = vmatprep.subr.mxu0 0.0
    %923 = vmatpush1.msra.mxu0 %v917
    %924 = vmatprep.subr.mxu0 0.0
    %925 = vmatpush1.msra.mxu0 0.0
    %926 = vmatprep.subr.mxu0 0.0
    %927 = vmatpush1.msra.mxu0 0.0
    %928 = vmatprep.subr.mxu0 0.0
    %929 = vmatpush1.msra.mxu0 0.0
    %930 = vmatprep.subr.mxu0 0.0
    %931 = vmatpush1.msra.mxu0 0.0
    %932 = vmatprep.subr.mxu0 0.0
    %933 = vmatpush1.msra.mxu0 0.0
    %934 = vmatprep.subr.mxu0 0.0
    %935 = vmatpush1.msra.mxu0 0.0
    %936 = vmatprep.subr.mxu0 0.0
    %937 = vmatpush1.msra.mxu0 0.0
    %938 = vmatprep.subr.mxu0 0.0
    %939 = vmatpush1.msra.mxu0 0.0
    %940 = vmatprep.subr.mxu0 0.0
    %941 = vmatpush1.msra.mxu0 0.0
    %942 = vmatprep.subr.mxu0 0.0
    %943 = vmatpush1.msra.mxu0 0.0
    %944 = vmatprep.subr.mxu0 0.0
    %945 = vmatpush1.msra.mxu0 0.0
    %946 = vmatprep.subr.mxu0 0.0
    %947 = vmatpush1.msra.mxu0 0.0
    %948 = vmatprep.subr.mxu0 0.0
    %949 = vmatpush1.msra.mxu0 0.0
    %950 = vmatprep.subr.mxu0 0.0
    %951 = vmatpush1.msra.mxu0 0.0
    %952 = vmatprep.subr.mxu0 0.0
    %953 = vmatpush1.msra.mxu0 0.0
    %954 = vmatprep.subr.mxu0 0.0
    %955 = vmatpush1.msra.mxu0 0.0
    %956 = vmatprep.subr.mxu0 0.0
    %957 = vmatpush1.msra.mxu0 0.0
    %958 = vmatprep.subr.mxu0 0.0
    %959 = vmatpush1.msra.mxu0 0.0
    %960 = vmatprep.subr.mxu0 0.0
    %961 = vmatpush1.msra.mxu0 0.0
    %962 = vmatprep.subr.mxu0 0.0
    %963 = vmatpush1.msra.mxu0 0.0
    %964 = vmatprep.subr.mxu0 0.0
    %965 = vmatpush1.msra.mxu0 0.0
    %966 = vmatprep.subr.mxu0 0.0
    %967 = vmatpush1.msra.mxu0 0.0
    %968 = vmatprep.subr.mxu0 0.0
    %969 = vmatpush1.msra.mxu0 0.0
    %970 = vmatprep.subr.mxu0 0.0
    %971 = vmatpush1.msra.mxu0 0.0
    %972 = vmatprep.subr.mxu0 0.0
    %973 = vmatpush1.msra.mxu0 0.0
    %974 = vmatprep.subr.mxu0 0.0
    %975 = vmatpush1.msra.mxu0 0.0
    %976 = vmatprep.subr.mxu0 0.0
    %977 = vmatpush1.msra.mxu0 0.0
    %978 = vmatprep.subr.mxu0 0.0
    %979 = vmatpush1.msra.mxu0 0.0
    %980 = vmatprep.subr.mxu0 0.0
    %981 = vmatpush1.msra.mxu0 0.0
    %982 = vmatprep.subr.mxu0 0.0
    %983 = vmatpush1.msra.mxu0 0.0
    %984 = vmatprep.subr.mxu0 0.0
    %985 = vmatpush1.msra.mxu0 0.0
    %986 = vmatprep.mubr.f32.mxu0 0.0
    %987 = vmatmul.mubr.f32.gmra.mrb[0].mxu0 %v920
    %v988 = vpop.f32.mrb[0].mxu0
    %v989 = vadd.f32 0.0, %v988
    %v990 = vpop.f32.mrb[0].mxu0
    %991 = vdwg.mxu0
    %992 = vrot.lane.b32.xlu0 %v143, 120
    %v993 = vpop.permute.xlu0 %992
    %994 = vrot.lane.b32.xlu0 %v143, 88
    %v995 = vpop.permute.xlu0 %994
    %v996 = vsel %vm149, %v993, 0
    %v998 = vsel %vm149, %v995, 0
    %1000 = vmatprep.subr.mxu0 0.0
    %1001 = vmatpush1.xpose.msra.mxu0 %v998
    %1002 = vmatprep.subr.mxu0 0.0
    %1003 = vmatpush1.xpose.msra.mxu0 0.0
    %1004 = vmatprep.subr.mxu0 0.0
    %1005 = vmatpush1.xpose.msra.mxu0 0.0
    %1006 = vmatprep.subr.mxu0 0.0
    %1007 = vmatpush1.xpose.msra.mxu0 0.0
    %1008 = vmatprep.subr.mxu0 0.0
    %1009 = vmatpush1.xpose.msra.mxu0 0.0
    %1010 = vmatprep.subr.mxu0 0.0
    %1011 = vmatpush1.xpose.msra.mxu0 0.0
    %1012 = vmatprep.subr.mxu0 0.0
    %1013 = vmatpush1.xpose.msra.mxu0 0.0
    %1014 = vmatprep.subr.mxu0 0.0
    %1015 = vmatpush1.xpose.msra.mxu0 0.0
    %1016 = vmatprep.subr.mxu0 0.0
    %1017 = vmatpush1.xpose.msra.mxu0 0.0
    %1018 = vmatprep.subr.mxu0 0.0
    %1019 = vmatpush1.xpose.msra.mxu0 0.0
    %1020 = vmatprep.subr.mxu0 0.0
    %1021 = vmatpush1.xpose.msra.mxu0 0.0
    %1022 = vmatprep.subr.mxu0 0.0
    %1023 = vmatpush1.xpose.msra.mxu0 0.0
    %1024 = vmatprep.subr.mxu0 0.0
    %1025 = vmatpush1.xpose.msra.mxu0 0.0
    %1026 = vmatprep.subr.mxu0 0.0
    %1027 = vmatpush1.xpose.msra.mxu0 0.0
    %1028 = vmatprep.subr.mxu0 0.0
    %1029 = vmatpush1.xpose.msra.mxu0 0.0
    %1030 = vmatprep.subr.mxu0 0.0
    %1031 = vmatpush1.xpose.msra.mxu0 0.0
    %1032 = vmatprep.subr.mxu0 0.0
    %1033 = vmatpush1.xpose.msra.mxu0 0.0
    %1034 = vmatprep.subr.mxu0 0.0
    %1035 = vmatpush1.xpose.msra.mxu0 0.0
    %1036 = vmatprep.subr.mxu0 0.0
    %1037 = vmatpush1.xpose.msra.mxu0 0.0
    %1038 = vmatprep.subr.mxu0 0.0
    %1039 = vmatpush1.xpose.msra.mxu0 0.0
    %1040 = vmatprep.subr.mxu0 0.0
    %1041 = vmatpush1.xpose.msra.mxu0 0.0
    %1042 = vmatprep.subr.mxu0 0.0
    %1043 = vmatpush1.xpose.msra.mxu0 0.0
    %1044 = vmatprep.subr.mxu0 0.0
    %1045 = vmatpush1.xpose.msra.mxu0 0.0
    %1046 = vmatprep.subr.mxu0 0.0
    %1047 = vmatpush1.xpose.msra.mxu0 0.0
    %1048 = vmatprep.subr.mxu0 0.0
    %1049 = vmatpush1.xpose.msra.mxu0 0.0
    %1050 = vmatprep.subr.mxu0 0.0
    %1051 = vmatpush1.xpose.msra.mxu0 0.0
    %1052 = vmatprep.subr.mxu0 0.0
    %1053 = vmatpush1.xpose.msra.mxu0 0.0
    %1054 = vmatprep.subr.mxu0 0.0
    %1055 = vmatpush1.xpose.msra.mxu0 0.0
    %1056 = vmatprep.subr.mxu0 0.0
    %1057 = vmatpush1.xpose.msra.mxu0 0.0
    %1058 = vmatprep.subr.mxu0 0.0
    %1059 = vmatpush1.xpose.msra.mxu0 0.0
    %1060 = vmatprep.subr.mxu0 0.0
    %1061 = vmatpush1.xpose.msra.mxu0 0.0
    %1062 = vmatprep.subr.mxu0 0.0
    %1063 = vmatpush1.xpose.msra.mxu0 0.0
    %1064 = vmatprep.mubr.f32.mxu0 0.0
    %1065 = vmatmul.mubr.f32.gmra.mrb[0].mxu0 %v996
    %v1066 = vpop.f32.mrb[0].mxu0
    %v1067 = vadd.f32 0.0, %v1066
    %v1068 = vpop.f32.mrb[0].mxu0
    %1069 = vdwg.mxu0
    %v1070 = vmul.f32 %v1067, 0.35355338
    %v1071 = vsel %vm149, %v1070, -inf
    %1072 = vmax.xlane.f32.xlu0 %v1071
    %v1073 = vpop.xlane.xlu0 %1072
    %v1074 = vsub.f32 %v1070, %v1073
    %v1075 = vmul.f32 %v1074, 1.442695
    %v1076 = vpow.pop %v1075
    %v1077 = vsel %vm149, %v1076, 0.0
    %1078 = vadd.xlane.f32.xlu0 %v1077
    %v1079 = vpop.xlane.xlu0 %1078
    %v1080 = vrcp.pop %v1079
    %v1081 = vmul.f32 %v1076, %v1080
    %1082 = vrot.lane.b32.xlu0 %v143, 56
    %v1083 = vpop.permute.xlu0 %1082
    %v1086 = vsel %vm149, %v1081, 0
    %1088 = vmatprep.subr.mxu0 0.0
    %1089 = vmatpush1.msra.mxu0 %v1083
    %1090 = vmatprep.subr.mxu0 0.0
    %1091 = vmatpush1.msra.mxu0 0.0
    %1092 = vmatprep.subr.mxu0 0.0
    %1093 = vmatpush1.msra.mxu0 0.0
    %1094 = vmatprep.subr.mxu0 0.0
    %1095 = vmatpush1.msra.mxu0 0.0
    %1096 = vmatprep.subr.mxu0 0.0
    %1097 = vmatpush1.msra.mxu0 0.0
    %1098 = vmatprep.subr.mxu0 0.0
    %1099 = vmatpush1.msra.mxu0 0.0
    %1100 = vmatprep.subr.mxu0 0.0
    %1101 = vmatpush1.msra.mxu0 0.0
    %1102 = vmatprep.subr.mxu0 0.0
    %1103 = vmatpush1.msra.mxu0 0.0
    %1104 = vmatprep.subr.mxu0 0.0
    %1105 = vmatpush1.msra.mxu0 0.0
    %1106 = vmatprep.subr.mxu0 0.0
    %1107 = vmatpush1.msra.mxu0 0.0
    %1108 = vmatprep.subr.mxu0 0.0
    %1109 = vmatpush1.msra.mxu0 0.0
    %1110 = vmatprep.subr.mxu0 0.0
    %1111 = vmatpush1.msra.mxu0 0.0
    %1112 = vmatprep.subr.mxu0 0.0
    %1113 = vmatpush1.msra.mxu0 0.0
    %1114 = vmatprep.subr.mxu0 0.0
    %1115 = vmatpush1.msra.mxu0 0.0
    %1116 = vmatprep.subr.mxu0 0.0
    %1117 = vmatpush1.msra.mxu0 0.0
    %1118 = vmatprep.subr.mxu0 0.0
    %1119 = vmatpush1.msra.mxu0 0.0
    %1120 = vmatprep.subr.mxu0 0.0
    %1121 = vmatpush1.msra.mxu0 0.0
    %1122 = vmatprep.subr.mxu0 0.0
    %1123 = vmatpush1.msra.mxu0 0.0
    %1124 = vmatprep.subr.mxu0 0.0
    %1125 = vmatpush1.msra.mxu0 0.0
    %1126 = vmatprep.subr.mxu0 0.0
    %1127 = vmatpush1.msra.mxu0 0.0
    %1128 = vmatprep.subr.mxu0 0.0
    %1129 = vmatpush1.msra.mxu0 0.0
    %1130 = vmatprep.subr.mxu0 0.0
    %1131 = vmatpush1.msra.mxu0 0.0
    %1132 = vmatprep.subr.mxu0 0.0
    %1133 = vmatpush1.msra.mxu0 0.0
    %1134 = vmatprep.subr.mxu0 0.0
    %1135 = vmatpush1.msra.mxu0 0.0
    %1136 = vmatprep.subr.mxu0 0.0
    %1137 = vmatpush1.msra.mxu0 0.0
    %1138 = vmatprep.subr.mxu0 0.0
    %1139 = vmatpush1.msra.mxu0 0.0
    %1140 = vmatprep.subr.mxu0 0.0
    %1141 = vmatpush1.msra.mxu0 0.0
    %1142 = vmatprep.subr.mxu0 0.0
    %1143 = vmatpush1.msra.mxu0 0.0
    %1144 = vmatprep.subr.mxu0 0.0
    %1145 = vmatpush1.msra.mxu0 0.0
    %1146 = vmatprep.subr.mxu0 0.0
    %1147 = vmatpush1.msra.mxu0 0.0
    %1148 = vmatprep.subr.mxu0 0.0
    %1149 = vmatpush1.msra.mxu0 0.0
    %1150 = vmatprep.subr.mxu0 0.0
    %1151 = vmatpush1.msra.mxu0 0.0
    %1152 = vmatprep.mubr.f32.mxu0 0.0
    %1153 = vmatmul.mubr.f32.gmra.mrb[0].mxu0 %v1086
    %v1154 = vpop.f32.mrb[0].mxu0
    %v1155 = vadd.f32 0.0, %v1154
    %v1156 = vpop.f32.mrb[0].mxu0
    %1157 = vdwg.mxu0
    %1158 = vrot.lane.b32.xlu0 %v143, 112
    %v1159 = vpop.permute.xlu0 %1158
    %1160 = vrot.lane.b32.xlu0 %v143, 80
    %v1161 = vpop.permute.xlu0 %1160
    %v1162 = vsel %vm149, %v1159, 0
    %v1164 = vsel %vm149, %v1161, 0
    %1166 = vmatprep.subr.mxu0 0.0
    %1167 = vmatpush1.xpose.msra.mxu0 %v1164
    %1168 = vmatprep.subr.mxu0 0.0
    %1169 = vmatpush1.xpose.msra.mxu0 0.0
    %1170 = vmatprep.subr.mxu0 0.0
    %1171 = vmatpush1.xpose.msra.mxu0 0.0
    %1172 = vmatprep.subr.mxu0 0.0
    %1173 = vmatpush1.xpose.msra.mxu0 0.0
    %1174 = vmatprep.subr.mxu0 0.0
    %1175 = vmatpush1.xpose.msra.mxu0 0.0
    %1176 = vmatprep.subr.mxu0 0.0
    %1177 = vmatpush1.xpose.msra.mxu0 0.0
    %1178 = vmatprep.subr.mxu0 0.0
    %1179 = vmatpush1.xpose.msra.mxu0 0.0
    %1180 = vmatprep.subr.mxu0 0.0
    %1181 = vmatpush1.xpose.msra.mxu0 0.0
    %1182 = vmatprep.subr.mxu0 0.0
    %1183 = vmatpush1.xpose.msra.mxu0 0.0
    %1184 = vmatprep.subr.mxu0 0.0
    %1185 = vmatpush1.xpose.msra.mxu0 0.0
    %1186 = vmatprep.subr.mxu0 0.0
    %1187 = vmatpush1.xpose.msra.mxu0 0.0
    %1188 = vmatprep.subr.mxu0 0.0
    %1189 = vmatpush1.xpose.msra.mxu0 0.0
    %1190 = vmatprep.subr.mxu0 0.0
    %1191 = vmatpush1.xpose.msra.mxu0 0.0
    %1192 = vmatprep.subr.mxu0 0.0
    %1193 = vmatpush1.xpose.msra.mxu0 0.0
    %1194 = vmatprep.subr.mxu0 0.0
    %1195 = vmatpush1.xpose.msra.mxu0 0.0
    %1196 = vmatprep.subr.mxu0 0.0
    %1197 = vmatpush1.xpose.msra.mxu0 0.0
    %1198 = vmatprep.subr.mxu0 0.0
    %1199 = vmatpush1.xpose.msra.mxu0 0.0
    %1200 = vmatprep.subr.mxu0 0.0
    %1201 = vmatpush1.xpose.msra.mxu0 0.0
    %1202 = vmatprep.subr.mxu0 0.0
    %1203 = vmatpush1.xpose.msra.mxu0 0.0
    %1204 = vmatprep.subr.mxu0 0.0
    %1205 = vmatpush1.xpose.msra.mxu0 0.0
    %1206 = vmatprep.subr.mxu0 0.0
    %1207 = vmatpush1.xpose.msra.mxu0 0.0
    %1208 = vmatprep.subr.mxu0 0.0
    %1209 = vmatpush1.xpose.msra.mxu0 0.0
    %1210 = vmatprep.subr.mxu0 0.0
    %1211 = vmatpush1.xpose.msra.mxu0 0.0
    %1212 = vmatprep.subr.mxu0 0.0
    %1213 = vmatpush1.xpose.msra.mxu0 0.0
    %1214 = vmatprep.subr.mxu0 0.0
    %1215 = vmatpush1.xpose.msra.mxu0 0.0
    %1216 = vmatprep.subr.mxu0 0.0
    %1217 = vmatpush1.xpose.msra.mxu0 0.0
    %1218 = vmatprep.subr.mxu0 0.0
    %1219 = vmatpush1.xpose.msra.mxu0 0.0
    %1220 = vmatprep.subr.mxu0 0.0
    %1221 = vmatpush1.xpose.msra.mxu0 0.0
    %1222 = vmatprep.subr.mxu0 0.0
    %1223 = vmatpush1.xpose.msra.mxu0 0.0
    %1224 = vmatprep.subr.mxu0 0.0
    %1225 = vmatpush1.xpose.msra.mxu0 0.0
    %1226 = vmatprep.subr.mxu0 0.0
    %1227 = vmatpush1.xpose.msra.mxu0 0.0
    %1228 = vmatprep.subr.mxu0 0.0
    %1229 = vmatpush1.xpose.msra.mxu0 0.0
    %1230 = vmatprep.mubr.f32.mxu0 0.0
    %1231 = vmatmul.mubr.f32.gmra.mrb[0].mxu0 %v1162
    %v1232 = vpop.f32.mrb[0].mxu0
    %v1233 = vadd.f32 0.0, %v1232
    %v1234 = vpop.f32.mrb[0].mxu0
    %1235 = vdwg.mxu0
    %v1236 = vmul.f32 %v1233, 0.35355338
    %v1237 = vsel %vm149, %v1236, -inf
    %1238 = vmax.xlane.f32.xlu0 %v1237
    %v1239 = vpop.xlane.xlu0 %1238
    %v1240 = vsub.f32 %v1236, %v1239
    %v1241 = vmul.f32 %v1240, 1.442695
    %v1242 = vpow.pop %v1241
    %v1243 = vsel %vm149, %v1242, 0.0
    %1244 = vadd.xlane.f32.xlu0 %v1243
    %v1245 = vpop.xlane.xlu0 %1244
    %v1246 = vrcp.pop %v1245
    %v1247 = vmul.f32 %v1242, %v1246
    %1248 = vrot.lane.b32.xlu0 %v143, 48
    %v1249 = vpop.permute.xlu0 %1248
    %v1252 = vsel %vm149, %v1247, 0
    %1254 = vmatprep.subr.mxu0 0.0
    %1255 = vmatpush1.msra.mxu0 %v1249
    %1256 = vmatprep.subr.mxu0 0.0
    %1257 = vmatpush1.msra.mxu0 0.0
    %1258 = vmatprep.subr.mxu0 0.0
    %1259 = vmatpush1.msra.mxu0 0.0
    %1260 = vmatprep.subr.mxu0 0.0
    %1261 = vmatpush1.msra.mxu0 0.0
    %1262 = vmatprep.subr.mxu0 0.0
    %1263 = vmatpush1.msra.mxu0 0.0
    %1264 = vmatprep.subr.mxu0 0.0
    %1265 = vmatpush1.msra.mxu0 0.0
    %1266 = vmatprep.subr.mxu0 0.0
    %1267 = vmatpush1.msra.mxu0 0.0
    %1268 = vmatprep.subr.mxu0 0.0
    %1269 = vmatpush1.msra.mxu0 0.0
    %1270 = vmatprep.subr.mxu0 0.0
    %1271 = vmatpush1.msra.mxu0 0.0
    %1272 = vmatprep.subr.mxu0 0.0
    %1273 = vmatpush1.msra.mxu0 0.0
    %1274 = vmatprep.subr.mxu0 0.0
    %1275 = vmatpush1.msra.mxu0 0.0
    %1276 = vmatprep.subr.mxu0 0.0
    %1277 = vmatpush1.msra.mxu0 0.0
    %1278 = vmatprep.subr.mxu0 0.0
    %1279 = vmatpush1.msra.mxu0 0.0
    %1280 = vmatprep.subr.mxu0 0.0
    %1281 = vmatpush1.msra.mxu0 0.0
    %1282 = vmatprep.subr.mxu0 0.0
    %1283 = vmatpush1.msra.mxu0 0.0
    %1284 = vmatprep.subr.mxu0 0.0
    %1285 = vmatpush1.msra.mxu0 0.0
    %1286 = vmatprep.subr.mxu0 0.0
    %1287 = vmatpush1.msra.mxu0 0.0
    %1288 = vmatprep.subr.mxu0 0.0
    %1289 = vmatpush1.msra.mxu0 0.0
    %1290 = vmatprep.subr.mxu0 0.0
    %1291 = vmatpush1.msra.mxu0 0.0
    %1292 = vmatprep.subr.mxu0 0.0
    %1293 = vmatpush1.msra.mxu0 0.0
    %1294 = vmatprep.subr.mxu0 0.0
    %1295 = vmatpush1.msra.mxu0 0.0
    %1296 = vmatprep.subr.mxu0 0.0
    %1297 = vmatpush1.msra.mxu0 0.0
    %1298 = vmatprep.subr.mxu0 0.0
    %1299 = vmatpush1.msra.mxu0 0.0
    %1300 = vmatprep.subr.mxu0 0.0
    %1301 = vmatpush1.msra.mxu0 0.0
    %1302 = vmatprep.subr.mxu0 0.0
    %1303 = vmatpush1.msra.mxu0 0.0
    %1304 = vmatprep.subr.mxu0 0.0
    %1305 = vmatpush1.msra.mxu0 0.0
    %1306 = vmatprep.subr.mxu0 0.0
    %1307 = vmatpush1.msra.mxu0 0.0
    %1308 = vmatprep.subr.mxu0 0.0
    %1309 = vmatpush1.msra.mxu0 0.0
    %1310 = vmatprep.subr.mxu0 0.0
    %1311 = vmatpush1.msra.mxu0 0.0
    %1312 = vmatprep.subr.mxu0 0.0
    %1313 = vmatpush1.msra.mxu0 0.0
    %1314 = vmatprep.subr.mxu0 0.0
    %1315 = vmatpush1.msra.mxu0 0.0
    %1316 = vmatprep.subr.mxu0 0.0
    %1317 = vmatpush1.msra.mxu0 0.0
    %1318 = vmatprep.mubr.f32.mxu0 0.0
    %1319 = vmatmul.mubr.f32.gmra.mrb[0].mxu0 %v1252
    %v1320 = vpop.f32.mrb[0].mxu0
    %v1321 = vadd.f32 0.0, %v1320
    %v1322 = vpop.f32.mrb[0].mxu0
    %1323 = vdwg.mxu0
    %1324 = vrot.lane.b32.xlu0 %v143, 104
    %v1325 = vpop.permute.xlu0 %1324
    %1326 = vrot.lane.b32.xlu0 %v143, 72
    %v1327 = vpop.permute.xlu0 %1326
    %v1328 = vsel %vm149, %v1325, 0
    %v1330 = vsel %vm149, %v1327, 0
    %1332 = vmatprep.subr.mxu0 0.0
    %1333 = vmatpush1.xpose.msra.mxu0 %v1330
    %1334 = vmatprep.subr.mxu0 0.0
    %1335 = vmatpush1.xpose.msra.mxu0 0.0
    %1336 = vmatprep.subr.mxu0 0.0
    %1337 = vmatpush1.xpose.msra.mxu0 0.0
    %1338 = vmatprep.subr.mxu0 0.0
    %1339 = vmatpush1.xpose.msra.mxu0 0.0
    %1340 = vmatprep.subr.mxu0 0.0
    %1341 = vmatpush1.xpose.msra.mxu0 0.0
    %1342 = vmatprep.subr.mxu0 0.0
    %1343 = vmatpush1.xpose.msra.mxu0 0.0
    %1344 = vmatprep.subr.mxu0 0.0
    %1345 = vmatpush1.xpose.msra.mxu0 0.0
    %1346 = vmatprep.subr.mxu0 0.0
    %1347 = vmatpush1.xpose.msra.mxu0 0.0
    %1348 = vmatprep.subr.mxu0 0.0
    %1349 = vmatpush1.xpose.msra.mxu0 0.0
    %1350 = vmatprep.subr.mxu0 0.0
    %1351 = vmatpush1.xpose.msra.mxu0 0.0
    %1352 = vmatprep.subr.mxu0 0.0
    %1353 = vmatpush1.xpose.msra.mxu0 0.0
    %1354 = vmatprep.subr.mxu0 0.0
    %1355 = vmatpush1.xpose.msra.mxu0 0.0
    %1356 = vmatprep.subr.mxu0 0.0
    %1357 = vmatpush1.xpose.msra.mxu0 0.0
    %1358 = vmatprep.subr.mxu0 0.0
    %1359 = vmatpush1.xpose.msra.mxu0 0.0
    %1360 = vmatprep.subr.mxu0 0.0
    %1361 = vmatpush1.xpose.msra.mxu0 0.0
    %1362 = vmatprep.subr.mxu0 0.0
    %1363 = vmatpush1.xpose.msra.mxu0 0.0
    %1364 = vmatprep.subr.mxu0 0.0
    %1365 = vmatpush1.xpose.msra.mxu0 0.0
    %1366 = vmatprep.subr.mxu0 0.0
    %1367 = vmatpush1.xpose.msra.mxu0 0.0
    %1368 = vmatprep.subr.mxu0 0.0
    %1369 = vmatpush1.xpose.msra.mxu0 0.0
    %1370 = vmatprep.subr.mxu0 0.0
    %1371 = vmatpush1.xpose.msra.mxu0 0.0
    %1372 = vmatprep.subr.mxu0 0.0
    %1373 = vmatpush1.xpose.msra.mxu0 0.0
    %1374 = vmatprep.subr.mxu0 0.0
    %1375 = vmatpush1.xpose.msra.mxu0 0.0
    %1376 = vmatprep.subr.mxu0 0.0
    %1377 = vmatpush1.xpose.msra.mxu0 0.0
    %1378 = vmatprep.subr.mxu0 0.0
    %1379 = vmatpush1.xpose.msra.mxu0 0.0
    %1380 = vmatprep.subr.mxu0 0.0
    %1381 = vmatpush1.xpose.msra.mxu0 0.0
    %1382 = vmatprep.subr.mxu0 0.0
    %1383 = vmatpush1.xpose.msra.mxu0 0.0
    %1384 = vmatprep.subr.mxu0 0.0
    %1385 = vmatpush1.xpose.msra.mxu0 0.0
    %1386 = vmatprep.subr.mxu0 0.0
    %1387 = vmatpush1.xpose.msra.mxu0 0.0
    %1388 = vmatprep.subr.mxu0 0.0
    %1389 = vmatpush1.xpose.msra.mxu0 0.0
    %1390 = vmatprep.subr.mxu0 0.0
    %1391 = vmatpush1.xpose.msra.mxu0 0.0
    %1392 = vmatprep.subr.mxu0 0.0
    %1393 = vmatpush1.xpose.msra.mxu0 0.0
    %1394 = vmatprep.subr.mxu0 0.0
    %1395 = vmatpush1.xpose.msra.mxu0 0.0
    %1396 = vmatprep.mubr.f32.mxu0 0.0
    %1397 = vmatmul.mubr.f32.gmra.mrb[0].mxu0 %v1328
    %v1398 = vpop.f32.mrb[0].mxu0
    %v1399 = vadd.f32 0.0, %v1398
    %v1400 = vpop.f32.mrb[0].mxu0
    %1401 = vdwg.mxu0
    %v1402 = vmul.f32 %v1399, 0.35355338
    %v1403 = vsel %vm149, %v1402, -inf
    %1404 = vmax.xlane.f32.xlu0 %v1403
    %v1405 = vpop.xlane.xlu0 %1404
    %v1406 = vsub.f32 %v1402, %v1405
    %v1407 = vmul.f32 %v1406, 1.442695
    %v1408 = vpow.pop %v1407
    %v1409 = vsel %vm149, %v1408, 0.0
    %1410 = vadd.xlane.f32.xlu0 %v1409
    %v1411 = vpop.xlane.xlu0 %1410
    %v1412 = vrcp.pop %v1411
    %v1413 = vmul.f32 %v1408, %v1412
    %1414 = vrot.lane.b32.xlu0 %v143, 40
    %v1415 = vpop.permute.xlu0 %1414
    %v1418 = vsel %vm149, %v1413, 0
    %1420 = vmatprep.subr.mxu0 0.0
    %1421 = vmatpush1.msra.mxu0 %v1415
    %1422 = vmatprep.subr.mxu0 0.0
    %1423 = vmatpush1.msra.mxu0 0.0
    %1424 = vmatprep.subr.mxu0 0.0
    %1425 = vmatpush1.msra.mxu0 0.0
    %1426 = vmatprep.subr.mxu0 0.0
    %1427 = vmatpush1.msra.mxu0 0.0
    %1428 = vmatprep.subr.mxu0 0.0
    %1429 = vmatpush1.msra.mxu0 0.0
    %1430 = vmatprep.subr.mxu0 0.0
    %1431 = vmatpush1.msra.mxu0 0.0
    %1432 = vmatprep.subr.mxu0 0.0
    %1433 = vmatpush1.msra.mxu0 0.0
    %1434 = vmatprep.subr.mxu0 0.0
    %1435 = vmatpush1.msra.mxu0 0.0
    %1436 = vmatprep.subr.mxu0 0.0
    %1437 = vmatpush1.msra.mxu0 0.0
    %1438 = vmatprep.subr.mxu0 0.0
    %1439 = vmatpush1.msra.mxu0 0.0
    %1440 = vmatprep.subr.mxu0 0.0
    %1441 = vmatpush1.msra.mxu0 0.0
    %1442 = vmatprep.subr.mxu0 0.0
    %1443 = vmatpush1.msra.mxu0 0.0
    %1444 = vmatprep.subr.mxu0 0.0
    %1445 = vmatpush1.msra.mxu0 0.0
    %1446 = vmatprep.subr.mxu0 0.0
    %1447 = vmatpush1.msra.mxu0 0.0
    %1448 = vmatprep.subr.mxu0 0.0
    %1449 = vmatpush1.msra.mxu0 0.0
    %1450 = vmatprep.subr.mxu0 0.0
    %1451 = vmatpush1.msra.mxu0 0.0
    %1452 = vmatprep.subr.mxu0 0.0
    %1453 = vmatpush1.msra.mxu0 0.0
    %1454 = vmatprep.subr.mxu0 0.0
    %1455 = vmatpush1.msra.mxu0 0.0
    %1456 = vmatprep.subr.mxu0 0.0
    %1457 = vmatpush1.msra.mxu0 0.0
    %1458 = vmatprep.subr.mxu0 0.0
    %1459 = vmatpush1.msra.mxu0 0.0
    %1460 = vmatprep.subr.mxu0 0.0
    %1461 = vmatpush1.msra.mxu0 0.0
    %1462 = vmatprep.subr.mxu0 0.0
    %1463 = vmatpush1.msra.mxu0 0.0
    %1464 = vmatprep.subr.mxu0 0.0
    %1465 = vmatpush1.msra.mxu0 0.0
    %1466 = vmatprep.subr.mxu0 0.0
    %1467 = vmatpush1.msra.mxu0 0.0
    %1468 = vmatprep.subr.mxu0 0.0
    %1469 = vmatpush1.msra.mxu0 0.0
    %1470 = vmatprep.subr.mxu0 0.0
    %1471 = vmatpush1.msra.mxu0 0.0
    %1472 = vmatprep.subr.mxu0 0.0
    %1473 = vmatpush1.msra.mxu0 0.0
    %1474 = vmatprep.subr.mxu0 0.0
    %1475 = vmatpush1.msra.mxu0 0.0
    %1476 = vmatprep.subr.mxu0 0.0
    %1477 = vmatpush1.msra.mxu0 0.0
    %1478 = vmatprep.subr.mxu0 0.0
    %1479 = vmatpush1.msra.mxu0 0.0
    %1480 = vmatprep.subr.mxu0 0.0
    %1481 = vmatpush1.msra.mxu0 0.0
    %1482 = vmatprep.subr.mxu0 0.0
    %1483 = vmatpush1.msra.mxu0 0.0
    %1484 = vmatprep.mubr.f32.mxu0 0.0
    %1485 = vmatmul.mubr.f32.gmra.mrb[0].mxu0 %v1418
    %v1486 = vpop.f32.mrb[0].mxu0
    %v1487 = vadd.f32 0.0, %v1486
    %v1488 = vpop.f32.mrb[0].mxu0
    %1489 = vdwg.mxu0
    %1491 = vrot.lane.b32.xlu0 %v1155, 8
    %v1492 = vpop.permute.xlu0 %1491
    %1495 = vrot.lane.b32.xlu0 %v1321, 16
    %v1496 = vpop.permute.xlu0 %1495
    %1499 = vrot.lane.b32.xlu0 %v1487, 24
    %v1500 = vpop.permute.xlu0 %1499
    %v1502 = vsel %vm149, %v989, %v1492
    %v1503 = vsel %vm823, %v1502, %v1496
    %v1504 = vsel %vm825, %v1503, %v1500
    %v1505 = vld [vmem:[%s3] sm:$0xff]
    %v1506 = vld [vmem:[%s3 + $0x8] sm:$0xff]
    %v1507 = vld [vmem:[%s3 + $0x10] sm:$0xff]
    %v1508 = vld [vmem:[%s3 + $0x18] sm:$0xff]
    %v1509 = vld [vmem:[%s4] sm:$0x1]
    %v1511 = vlaneseq
    %v1512 = vshrl.u32 %v1511, 7
    %v1513 = vsub.s32 0, %v1512
    %v1514 = vrot.slane %v1509, %v1513
    %v1517 = vsel %vm64, %v826, 0
    %v1520 = vsel %vm64, %v1504, 0
    %1522 = vmatprep.subr.mxu0 0.0
    %1523 = vmatpush1.msra.mxu0 %v1505
    %1524 = vmatprep.subr.mxu0 0.0
    %1525 = vmatpush1.msra.mxu0 %v1506
    %1526 = vmatprep.subr.mxu0 0.0
    %1527 = vmatpush1.msra.mxu0 %v1507
    %1528 = vmatprep.subr.mxu0 0.0
    %1529 = vmatpush1.msra.mxu0 %v1508
    %1530 = vmatprep.subr.mxu0 0.0
    %1531 = vmatpush1.msra.mxu0 0.0
    %1532 = vmatprep.subr.mxu0 0.0
    %1533 = vmatpush1.msra.mxu0 0.0
    %1534 = vmatprep.subr.mxu0 0.0
    %1535 = vmatpush1.msra.mxu0 0.0
    %1536 = vmatprep.subr.mxu0 0.0
    %1537 = vmatpush1.msra.mxu0 0.0
    %1538 = vmatprep.subr.mxu0 0.0
    %1539 = vmatpush1.msra.mxu0 0.0
    %1540 = vmatprep.subr.mxu0 0.0
    %1541 = vmatpush1.msra.mxu0 0.0
    %1542 = vmatprep.subr.mxu0 0.0
    %1543 = vmatpush1.msra.mxu0 0.0
    %1544 = vmatprep.subr.mxu0 0.0
    %1545 = vmatpush1.msra.mxu0 0.0
    %1546 = vmatprep.subr.mxu0 0.0
    %1547 = vmatpush1.msra.mxu0 0.0
    %1548 = vmatprep.subr.mxu0 0.0
    %1549 = vmatpush1.msra.mxu0 0.0
    %1550 = vmatprep.subr.mxu0 0.0
    %1551 = vmatpush1.msra.mxu0 0.0
    %1552 = vmatprep.subr.mxu0 0.0
    %1553 = vmatpush1.msra.mxu0 0.0
    %1554 = vmatprep.subr.mxu0 0.0
    %1555 = vmatpush1.msra.mxu0 0.0
    %1556 = vmatprep.subr.mxu0 0.0
    %1557 = vmatpush1.msra.mxu0 0.0
    %1558 = vmatprep.subr.mxu0 0.0
    %1559 = vmatpush1.msra.mxu0 0.0
    %1560 = vmatprep.subr.mxu0 0.0
    %1561 = vmatpush1.msra.mxu0 0.0
    %1562 = vmatprep.subr.mxu0 0.0
    %1563 = vmatpush1.msra.mxu0 0.0
    %1564 = vmatprep.subr.mxu0 0.0
    %1565 = vmatpush1.msra.mxu0 0.0
    %1566 = vmatprep.subr.mxu0 0.0
    %1567 = vmatpush1.msra.mxu0 0.0
    %1568 = vmatprep.subr.mxu0 0.0
    %1569 = vmatpush1.msra.mxu0 0.0
    %1570 = vmatprep.subr.mxu0 0.0
    %1571 = vmatpush1.msra.mxu0 0.0
    %1572 = vmatprep.subr.mxu0 0.0
    %1573 = vmatpush1.msra.mxu0 0.0
    %1574 = vmatprep.subr.mxu0 0.0
    %1575 = vmatpush1.msra.mxu0 0.0
    %1576 = vmatprep.subr.mxu0 0.0
    %1577 = vmatpush1.msra.mxu0 0.0
    %1578 = vmatprep.subr.mxu0 0.0
    %1579 = vmatpush1.msra.mxu0 0.0
    %1580 = vmatprep.subr.mxu0 0.0
    %1581 = vmatpush1.msra.mxu0 0.0
    %1582 = vmatprep.subr.mxu0 0.0
    %1583 = vmatpush1.msra.mxu0 0.0
    %1584 = vmatprep.subr.mxu0 0.0
    %1585 = vmatpush1.msra.mxu0 0.0
    %1586 = vmatprep.mubr.f32.mxu0 0.0
    %1587 = vmatmul.mubr.f32.gmra.mrb[0].mxu0 %v1517
    %v1588 = vpop.f32.mrb[0].mxu0
    %v1589 = vadd.f32 %v1514, %v1588
    %v1590 = vpop.f32.mrb[0].mxu0
    %1591 = vmatprep.mubr.f32.mxu0 0.0
    %1592 = vmatmul.mubr.f32.gmra.mrb[0].mxu0 %v1520
    %v1593 = vpop.f32.mrb[0].mxu0
    %v1594 = vadd.f32 %v1514, %v1593
    %v1595 = vpop.f32.mrb[0].mxu0
    %1596 = vdwg.mxu0
    %v1597 = vadd.f32 %v51, %v1589
    %v1598 = vadd.f32 %v52, %v1594
    %v1599 = vld [vmem:[%s5] sm:$0x1]
    %v1600 = vld [vmem:[%s6] sm:$0x1]
    %v1601 = vsel %vm64, %v1597, 0.0
    %1602 = vadd.xlane.f32.xlu0 %v1601
    %v1603 = vpop.xlane.xlu0 %1602
    %v1604 = vsel %vm64, %v1598, 0.0
    %1605 = vadd.xlane.f32.xlu0 %v1604
    %v1606 = vpop.xlane.xlu0 %1605
    %v1607 = vrcp.pop 32.0
    %v1608 = vmul.f32 %v1603, %v1607
    %v1609 = vmul.f32 %v1606, %v1607
    %v1610 = vsub.f32 %v1597, %v1608
    %v1611 = vsub.f32 %v1598, %v1609
    %v1612 = vmul.f32 %v1610, %v1610
    %v1613 = vmul.f32 %v1611, %v1611
    %v1614 = vsel %vm64, %v1612, 0.0
    %1615 = vadd.xlane.f32.xlu0 %v1614
    %v1616 = vpop.xlane.xlu0 %1615
    %v1617 = vsel %vm64, %v1613, 0.0
    %1618 = vadd.xlane.f32.xlu0 %v1617
    %v1619 = vpop.xlane.xlu0 %1618
    %v1620 = vmul.f32 %v1616, %v1607
    %v1621 = vmul.f32 %v1619, %v1607
    %v1622 = vadd.f32 %v1620, 1e-05
    %v1623 = vadd.f32 %v1621, 1e-05
    %v1624 = vrsqrt.pop %v1622
    %v1625 = vrsqrt.pop %v1623
    %v1626 = vmul.f32 %v1610, %v1624
    %v1627 = vmul.f32 %v1611, %v1625
    %v1629 = vlaneseq
    %v1630 = vshrl.u32 %v1629, 7
    %v1631 = vsub.s32 0, %v1630
    %v1632 = vrot.slane %v1599, %v1631
    %v1634 = vmul.f32 %v1626, %v1632
    %v1635 = vmul.f32 %v1627, %v1632
    %v1637 = vlaneseq
    %v1638 = vshrl.u32 %v1637, 7
    %v1639 = vsub.s32 0, %v1638
    %v1640 = vrot.slane %v1600, %v1639
    %v1642 = vadd.f32 %v1634, %v1640
    %v1643 = vadd.f32 %v1635, %v1640
    %v1644 = vld [vmem:[%s7] sm:$0xff]
    %v1645 = vld [vmem:[%s7 + $0x8] sm:$0xff]
    %v1646 = vld [vmem:[%s7 + $0x10] sm:$0xff]
    %v1647 = vld [vmem:[%s7 + $0x18] sm:$0xff]
    %v1648 = vld [vmem:[%s7 + $0x20] sm:$0xff]
    %v1649 = vld [vmem:[%s7 + $0x28] sm:$0xff]
    %v1650 = vld [vmem:[%s7 + $0x30] sm:$0xff]
    %v1651 = vld [vmem:[%s7 + $0x38] sm:$0xff]
    %v1652 = vld [vmem:[%s7 + $0x40] sm:$0xff]
    %v1653 = vld [vmem:[%s7 + $0x48] sm:$0xff]
    %v1654 = vld [vmem:[%s7 + $0x50] sm:$0xff]
    %v1655 = vld [vmem:[%s7 + $0x58] sm:$0xff]
    %v1656 = vld [vmem:[%s7 + $0x60] sm:$0xff]
    %v1657 = vld [vmem:[%s7 + $0x68] sm:$0xff]
    %v1658 = vld [vmem:[%s7 + $0x70] sm:$0xff]
    %v1659 = vld [vmem:[%s7 + $0x78] sm:$0xff]
    %v1660 = vld [vmem:[%s7 + $0x80] sm:$0xff]
    %v1661 = vld [vmem:[%s7 + $0x88] sm:$0xff]
    %v1662 = vld [vmem:[%s7 + $0x90] sm:$0xff]
    %v1663 = vld [vmem:[%s7 + $0x98] sm:$0xff]
    %v1664 = vld [vmem:[%s7 + $0xa0] sm:$0xff]
    %v1665 = vld [vmem:[%s7 + $0xa8] sm:$0xff]
    %v1666 = vld [vmem:[%s7 + $0xb0] sm:$0xff]
    %v1667 = vld [vmem:[%s7 + $0xb8] sm:$0xff]
    %v1668 = vld [vmem:[%s7 + $0xc0] sm:$0xff]
    %v1669 = vld [vmem:[%s7 + $0xc8] sm:$0xff]
    %v1670 = vld [vmem:[%s7 + $0xd0] sm:$0xff]
    %v1671 = vld [vmem:[%s7 + $0xd8] sm:$0xff]
    %v1672 = vld [vmem:[%s7 + $0xe0] sm:$0xff]
    %v1673 = vld [vmem:[%s7 + $0xe8] sm:$0xff]
    %v1674 = vld [vmem:[%s7 + $0xf0] sm:$0xff]
    %v1675 = vld [vmem:[%s7 + $0xf8] sm:$0xff]
    %v1676 = vld [vmem:[%s7 + $0x100] sm:$0xff]
    %v1677 = vld [vmem:[%s7 + $0x108] sm:$0xff]
    %v1678 = vld [vmem:[%s7 + $0x110] sm:$0xff]
    %v1679 = vld [vmem:[%s7 + $0x118] sm:$0xff]
    %v1680 = vld [vmem:[%s7 + $0x120] sm:$0xff]
    %v1681 = vld [vmem:[%s7 + $0x128] sm:$0xff]
    %v1682 = vld [vmem:[%s7 + $0x130] sm:$0xff]
    %v1683 = vld [vmem:[%s7 + $0x138] sm:$0xff]
    %v1684 = vld [vmem:[%s7 + $0x140] sm:$0xff]
    %v1685 = vld [vmem:[%s7 + $0x148] sm:$0xff]
    %v1686 = vld [vmem:[%s7 + $0x150] sm:$0xff]
    %v1687 = vld [vmem:[%s7 + $0x158] sm:$0xff]
    %v1688 = vld [vmem:[%s7 + $0x160] sm:$0xff]
    %v1689 = vld [vmem:[%s7 + $0x168] sm:$0xff]
    %v1690 = vld [vmem:[%s7 + $0x170] sm:$0xff]
    %v1691 = vld [vmem:[%s7 + $0x178] sm:$0xff]
    %v1692 = vld [vmem:[%s7 + $0x180] sm:$0xff]
    %v1693 = vld [vmem:[%s7 + $0x188] sm:$0xff]
    %v1694 = vld [vmem:[%s7 + $0x190] sm:$0xff]
    %v1695 = vld [vmem:[%s7 + $0x198] sm:$0xff]
    %v1696 = vld [vmem:[%s7 + $0x1a0] sm:$0xff]
    %v1697 = vld [vmem:[%s7 + $0x1a8] sm:$0xff]
    %v1698 = vld [vmem:[%s7 + $0x1b0] sm:$0xff]
    %v1699 = vld [vmem:[%s7 + $0x1b8] sm:$0xff]
    %v1700 = vld [vmem:[%s7 + $0x1c0] sm:$0xff]
    %v1701 = vld [vmem:[%s7 + $0x1c8] sm:$0xff]
    %v1702 = vld [vmem:[%s7 + $0x1d0] sm:$0xff]
    %v1703 = vld [vmem:[%s7 + $0x1d8] sm:$0xff]
    %v1704 = vld [vmem:[%s7 + $0x1e0] sm:$0xff]
    %v1705 = vld [vmem:[%s7 + $0x1e8] sm:$0xff]
    %v1706 = vld [vmem:[%s7 + $0x1f0] sm:$0xff]
    %v1707 = vld [vmem:[%s7 + $0x1f8] sm:$0xff]
    %v1708 = vld [vmem:[%s8] sm:$0xff]
    %v1709 = vld [vmem:[%s8 + $0x8] sm:$0xff]
    %v1712 = vlaneseq
    %v1713 = vshrl.u32 %v1712, 7
    %v1714 = vsub.s32 0, %v1713
    %v1715 = vrot.slane %v1708, %v1714
    %v1716 = vlaneseq
    %v1717 = vshrl.u32 %v1716, 7
    %v1718 = vsub.s32 1, %v1717
    %v1719 = vrot.slane %v1708, %v1718
    %v1720 = vlaneseq
    %v1721 = vshrl.u32 %v1720, 7
    %v1722 = vsub.s32 2, %v1721
    %v1723 = vrot.slane %v1708, %v1722
    %v1724 = vlaneseq
    %v1725 = vshrl.u32 %v1724, 7
    %v1726 = vsub.s32 3, %v1725
    %v1727 = vrot.slane %v1708, %v1726
    %v1728 = vlaneseq
    %v1729 = vshrl.u32 %v1728, 7
    %v1730 = vsub.s32 4, %v1729
    %v1731 = vrot.slane %v1708, %v1730
    %v1732 = vlaneseq
    %v1733 = vshrl.u32 %v1732, 7
    %v1734 = vsub.s32 5, %v1733
    %v1735 = vrot.slane %v1708, %v1734
    %v1736 = vlaneseq
    %v1737 = vshrl.u32 %v1736, 7
    %v1738 = vsub.s32 6, %v1737
    %v1739 = vrot.slane %v1708, %v1738
    %v1740 = vlaneseq
    %v1741 = vshrl.u32 %v1740, 7
    %v1742 = vsub.s32 7, %v1741
    %v1743 = vrot.slane %v1708, %v1742
    %v1744 = vlaneseq
    %v1745 = vshrl.u32 %v1744, 7
    %v1746 = vsub.s32 0, %v1745
    %v1747 = vrot.slane %v1709, %v1746
    %v1748 = vlaneseq
    %v1749 = vshrl.u32 %v1748, 7
    %v1750 = vsub.s32 1, %v1749
    %v1751 = vrot.slane %v1709, %v1750
    %v1752 = vlaneseq
    %v1753 = vshrl.u32 %v1752, 7
    %v1754 = vsub.s32 2, %v1753
    %v1755 = vrot.slane %v1709, %v1754
    %v1756 = vlaneseq
    %v1757 = vshrl.u32 %v1756, 7
    %v1758 = vsub.s32 3, %v1757
    %v1759 = vrot.slane %v1709, %v1758
    %v1760 = vlaneseq
    %v1761 = vshrl.u32 %v1760, 7
    %v1762 = vsub.s32 4, %v1761
    %v1763 = vrot.slane %v1709, %v1762
    %v1764 = vlaneseq
    %v1765 = vshrl.u32 %v1764, 7
    %v1766 = vsub.s32 5, %v1765
    %v1767 = vrot.slane %v1709, %v1766
    %v1768 = vlaneseq
    %v1769 = vshrl.u32 %v1768, 7
    %v1770 = vsub.s32 6, %v1769
    %v1771 = vrot.slane %v1709, %v1770
    %v1772 = vlaneseq
    %v1773 = vshrl.u32 %v1772, 7
    %v1774 = vsub.s32 7, %v1773
    %v1775 = vrot.slane %v1709, %v1774
    %v1793 = vsel %vm64, %v1642, 0
    %v1796 = vsel %vm64, %v1643, 0
    %1798 = vmatprep.subr.mxu0 %v1645
    %1799 = vmatpush1.msra.mxu0 %v1644
    %1800 = vmatprep.subr.mxu0 %v1661
    %1801 = vmatpush1.msra.mxu0 %v1660
    %1802 = vmatprep.subr.mxu0 %v1677
    %1803 = vmatpush1.msra.mxu0 %v1676
    %1804 = vmatprep.subr.mxu0 %v1693
    %1805 = vmatpush1.msra.mxu0 %v1692
    %1806 = vmatprep.subr.mxu0 0.0
    %1807 = vmatpush1.msra.mxu0 0.0
    %1808 = vmatprep.subr.mxu0 0.0
    %1809 = vmatpush1.msra.mxu0 0.0
    %1810 = vmatprep.subr.mxu0 0.0
    %1811 = vmatpush1.msra.mxu0 0.0
    %1812 = vmatprep.subr.mxu0 0.0
    %1813 = vmatpush1.msra.mxu0 0.0
    %1814 = vmatprep.subr.mxu0 0.0
    %1815 = vmatpush1.msra.mxu0 0.0
    %1816 = vmatprep.subr.mxu0 0.0
    %1817 = vmatpush1.msra.mxu0 0.0
    %1818 = vmatprep.subr.mxu0 0.0
    %1819 = vmatpush1.msra.mxu0 0.0
    %1820 = vmatprep.subr.mxu0 0.0
    %1821 = vmatpush1.msra.mxu0 0.0
    %1822 = vmatprep.subr.mxu0 0.0
    %1823 = vmatpush1.msra.mxu0 0.0
    %1824 = vmatprep.subr.mxu0 0.0
    %1825 = vmatpush1.msra.mxu0 0.0
    %1826 = vmatprep.subr.mxu0 0.0
    %1827 = vmatpush1.msra.mxu0 0.0
    %1828 = vmatprep.subr.mxu0 0.0
    %1829 = vmatpush1.msra.mxu0 0.0
    %1830 = vmatprep.subr.mxu0 0.0
    %1831 = vmatpush1.msra.mxu0 0.0
    %1832 = vmatprep.subr.mxu0 0.0
    %1833 = vmatpush1.msra.mxu0 0.0
    %1834 = vmatprep.subr.mxu0 0.0
    %1835 = vmatpush1.msra.mxu0 0.0
    %1836 = vmatprep.subr.mxu0 0.0
    %1837 = vmatpush1.msra.mxu0 0.0
    %1838 = vmatprep.subr.mxu0 0.0
    %1839 = vmatpush1.msra.mxu0 0.0
    %1840 = vmatprep.subr.mxu0 0.0
    %1841 = vmatpush1.msra.mxu0 0.0
    %1842 = vmatprep.subr.mxu0 0.0
    %1843 = vmatpush1.msra.mxu0 0.0
    %1844 = vmatprep.subr.mxu0 0.0
    %1845 = vmatpush1.msra.mxu0 0.0
    %1846 = vmatprep.subr.mxu0 0.0
    %1847 = vmatpush1.msra.mxu0 0.0
    %1848 = vmatprep.subr.mxu0 0.0
    %1849 = vmatpush1.msra.mxu0 0.0
    %1850 = vmatprep.subr.mxu0 0.0
    %1851 = vmatpush1.msra.mxu0 0.0
    %1852 = vmatprep.subr.mxu0 0.0
    %1853 = vmatpush1.msra.mxu0 0.0
    %1854 = vmatprep.subr.mxu0 0.0
    %1855 = vmatpush1.msra.mxu0 0.0
    %1856 = vmatprep.subr.mxu0 0.0
    %1857 = vmatpush1.msra.mxu0 0.0
    %1858 = vmatprep.subr.mxu0 0.0
    %1859 = vmatpush1.msra.mxu0 0.0
    %1860 = vmatprep.subr.mxu0 0.0
    %1861 = vmatpush1.msra.mxu0 0.0
    %1862 = vmatprep.mubr.f32.mxu0 0.0
    %1863 = vmatmul.mubr.f32.gmra.mrb[0].mxu0 %v1793
    %v1864 = vpop.f32.mrb[0].mxu0
    %v1865 = vadd.f32 %v1715, %v1864
    %v1866 = vpop.f32.mrb[0].mxu0
    %v1867 = vadd.f32 %v1719, %v1866
    %1868 = vmatprep.mubr.f32.mxu0 0.0
    %1869 = vmatmul.mubr.f32.gmra.mrb[0].mxu0 %v1796
    %v1870 = vpop.f32.mrb[0].mxu0
    %v1871 = vadd.f32 %v1715, %v1870
    %v1872 = vpop.f32.mrb[0].mxu0
    %v1873 = vadd.f32 %v1719, %v1872
    %1874 = vdwg.mxu0
    %1875 = vmatprep.subr.mxu0 %v1647
    %1876 = vmatpush1.msra.mxu0 %v1646
    %1877 = vmatprep.subr.mxu0 %v1663
    %1878 = vmatpush1.msra.mxu0 %v1662
    %1879 = vmatprep.subr.mxu0 %v1679
    %1880 = vmatpush1.msra.mxu0 %v1678
    %1881 = vmatprep.subr.mxu0 %v1695
    %1882 = vmatpush1.msra.mxu0 %v1694
    %1883 = vmatprep.subr.mxu0 0.0
    %1884 = vmatpush1.msra.mxu0 0.0
    %1885 = vmatprep.subr.mxu0 0.0
    %1886 = vmatpush1.msra.mxu0 0.0
    %1887 = vmatprep.subr.mxu0 0.0
    %1888 = vmatpush1.msra.mxu0 0.0
    %1889 = vmatprep.subr.mxu0 0.0
    %1890 = vmatpush1.msra.mxu0 0.0
    %1891 = vmatprep.subr.mxu0 0.0
    %1892 = vmatpush1.msra.mxu0 0.0
    %1893 = vmatprep.subr.mxu0 0.0
    %1894 = vmatpush1.msra.mxu0 0.0
    %1895 = vmatprep.subr.mxu0 0.0
    %1896 = vmatpush1.msra.mxu0 0.0
    %1897 = vmatprep.subr.mxu0 0.0
    %1898 = vmatpush1.msra.mxu0 0.0
    %1899 = vmatprep.subr.mxu0 0.0
    %1900 = vmatpush1.msra.mxu0 0.0
    %1901 = vmatprep.subr.mxu0 0.0
    %1902 = vmatpush1.msra.mxu0 0.0
    %1903 = vmatprep.subr.mxu0 0.0
    %1904 = vmatpush1.msra.mxu0 0.0
    %1905 = vmatprep.subr.mxu0 0.0
    %1906 = vmatpush1.msra.mxu0 0.0
    %1907 = vmatprep.subr.mxu0 0.0
    %1908 = vmatpush1.msra.mxu0 0.0
    %1909 = vmatprep.subr.mxu0 0.0
    %1910 = vmatpush1.msra.mxu0 0.0
    %1911 = vmatprep.subr.mxu0 0.0
    %1912 = vmatpush1.msra.mxu0 0.0
    %1913 = vmatprep.subr.mxu0 0.0
    %1914 = vmatpush1.msra.mxu0 0.0
    %1915 = vmatprep.subr.mxu0 0.0
    %1916 = vmatpush1.msra.mxu0 0.0
    %1917 = vmatprep.subr.mxu0 0.0
    %1918 = vmatpush1.msra.mxu0 0.0
    %1919 = vmatprep.subr.mxu0 0.0
    %1920 = vmatpush1.msra.mxu0 0.0
    %1921 = vmatprep.subr.mxu0 0.0
    %1922 = vmatpush1.msra.mxu0 0.0
    %1923 = vmatprep.subr.mxu0 0.0
    %1924 = vmatpush1.msra.mxu0 0.0
    %1925 = vmatprep.subr.mxu0 0.0
    %1926 = vmatpush1.msra.mxu0 0.0
    %1927 = vmatprep.subr.mxu0 0.0
    %1928 = vmatpush1.msra.mxu0 0.0
    %1929 = vmatprep.subr.mxu0 0.0
    %1930 = vmatpush1.msra.mxu0 0.0
    %1931 = vmatprep.subr.mxu0 0.0
    %1932 = vmatpush1.msra.mxu0 0.0
    %1933 = vmatprep.subr.mxu0 0.0
    %1934 = vmatpush1.msra.mxu0 0.0
    %1935 = vmatprep.subr.mxu0 0.0
    %1936 = vmatpush1.msra.mxu0 0.0
    %1937 = vmatprep.subr.mxu0 0.0
    %1938 = vmatpush1.msra.mxu0 0.0
    %1939 = vmatprep.mubr.f32.mxu0 0.0
    %1940 = vmatmul.mubr.f32.gmra.mrb[0].mxu0 %v1793
    %v1941 = vpop.f32.mrb[0].mxu0
    %v1942 = vadd.f32 %v1723, %v1941
    %v1943 = vpop.f32.mrb[0].mxu0
    %v1944 = vadd.f32 %v1727, %v1943
    %1945 = vmatprep.mubr.f32.mxu0 0.0
    %1946 = vmatmul.mubr.f32.gmra.mrb[0].mxu0 %v1796
    %v1947 = vpop.f32.mrb[0].mxu0
    %v1948 = vadd.f32 %v1723, %v1947
    %v1949 = vpop.f32.mrb[0].mxu0
    %v1950 = vadd.f32 %v1727, %v1949
    %1951 = vdwg.mxu0
    %1952 = vmatprep.subr.mxu0 %v1649
    %1953 = vmatpush1.msra.mxu0 %v1648
    %1954 = vmatprep.subr.mxu0 %v1665
    %1955 = vmatpush1.msra.mxu0 %v1664
    %1956 = vmatprep.subr.mxu0 %v1681
    %1957 = vmatpush1.msra.mxu0 %v1680
    %1958 = vmatprep.subr.mxu0 %v1697
    %1959 = vmatpush1.msra.mxu0 %v1696
    %1960 = vmatprep.subr.mxu0 0.0
    %1961 = vmatpush1.msra.mxu0 0.0
    %1962 = vmatprep.subr.mxu0 0.0
    %1963 = vmatpush1.msra.mxu0 0.0
    %1964 = vmatprep.subr.mxu0 0.0
    %1965 = vmatpush1.msra.mxu0 0.0
    %1966 = vmatprep.subr.mxu0 0.0
    %1967 = vmatpush1.msra.mxu0 0.0
    %1968 = vmatprep.subr.mxu0 0.0
    %1969 = vmatpush1.msra.mxu0 0.0
    %1970 = vmatprep.subr.mxu0 0.0
    %1971 = vmatpush1.msra.mxu0 0.0
    %1972 = vmatprep.subr.mxu0 0.0
    %1973 = vmatpush1.msra.mxu0 0.0
    %1974 = vmatprep.subr.mxu0 0.0
    %1975 = vmatpush1.msra.mxu0 0.0
    %1976 = vmatprep.subr.mxu0 0.0
    %1977 = vmatpush1.msra.mxu0 0.0
    %1978 = vmatprep.subr.mxu0 0.0
    %1979 = vmatpush1.msra.mxu0 0.0
    %1980 = vmatprep.subr.mxu0 0.0
    %1981 = vmatpush1.msra.mxu0 0.0
    %1982 = vmatprep.subr.mxu0 0.0
    %1983 = vmatpush1.msra.mxu0 0.0
    %1984 = vmatprep.subr.mxu0 0.0
    %1985 = vmatpush1.msra.mxu0 0.0
    %1986 = vmatprep.subr.mxu0 0.0
    %1987 = vmatpush1.msra.mxu0 0.0
    %1988 = vmatprep.subr.mxu0 0.0
    %1989 = vmatpush1.msra.mxu0 0.0
    %1990 = vmatprep.subr.mxu0 0.0
    %1991 = vmatpush1.msra.mxu0 0.0
    %1992 = vmatprep.subr.mxu0 0.0
    %1993 = vmatpush1.msra.mxu0 0.0
    %1994 = vmatprep.subr.mxu0 0.0
    %1995 = vmatpush1.msra.mxu0 0.0
    %1996 = vmatprep.subr.mxu0 0.0
    %1997 = vmatpush1.msra.mxu0 0.0
    %1998 = vmatprep.subr.mxu0 0.0
    %1999 = vmatpush1.msra.mxu0 0.0
    %2000 = vmatprep.subr.mxu0 0.0
    %2001 = vmatpush1.msra.mxu0 0.0
    %2002 = vmatprep.subr.mxu0 0.0
    %2003 = vmatpush1.msra.mxu0 0.0
    %2004 = vmatprep.subr.mxu0 0.0
    %2005 = vmatpush1.msra.mxu0 0.0
    %2006 = vmatprep.subr.mxu0 0.0
    %2007 = vmatpush1.msra.mxu0 0.0
    %2008 = vmatprep.subr.mxu0 0.0
    %2009 = vmatpush1.msra.mxu0 0.0
    %2010 = vmatprep.subr.mxu0 0.0
    %2011 = vmatpush1.msra.mxu0 0.0
    %2012 = vmatprep.subr.mxu0 0.0
    %2013 = vmatpush1.msra.mxu0 0.0
    %2014 = vmatprep.subr.mxu0 0.0
    %2015 = vmatpush1.msra.mxu0 0.0
    %2016 = vmatprep.mubr.f32.mxu0 0.0
    %2017 = vmatmul.mubr.f32.gmra.mrb[0].mxu0 %v1793
    %v2018 = vpop.f32.mrb[0].mxu0
    %v2019 = vadd.f32 %v1731, %v2018
    %v2020 = vpop.f32.mrb[0].mxu0
    %v2021 = vadd.f32 %v1735, %v2020
    %2022 = vmatprep.mubr.f32.mxu0 0.0
    %2023 = vmatmul.mubr.f32.gmra.mrb[0].mxu0 %v1796
    %v2024 = vpop.f32.mrb[0].mxu0
    %v2025 = vadd.f32 %v1731, %v2024
    %v2026 = vpop.f32.mrb[0].mxu0
    %v2027 = vadd.f32 %v1735, %v2026
    %2028 = vdwg.mxu0
    %2029 = vmatprep.subr.mxu0 %v1651
    %2030 = vmatpush1.msra.mxu0 %v1650
    %2031 = vmatprep.subr.mxu0 %v1667
    %2032 = vmatpush1.msra.mxu0 %v1666
    %2033 = vmatprep.subr.mxu0 %v1683
    %2034 = vmatpush1.msra.mxu0 %v1682
    %2035 = vmatprep.subr.mxu0 %v1699
    %2036 = vmatpush1.msra.mxu0 %v1698
    %2037 = vmatprep.subr.mxu0 0.0
    %2038 = vmatpush1.msra.mxu0 0.0
    %2039 = vmatprep.subr.mxu0 0.0
    %2040 = vmatpush1.msra.mxu0 0.0
    %2041 = vmatprep.subr.mxu0 0.0
    %2042 = vmatpush1.msra.mxu0 0.0
    %2043 = vmatprep.subr.mxu0 0.0
    %2044 = vmatpush1.msra.mxu0 0.0
    %2045 = vmatprep.subr.mxu0 0.0
    %2046 = vmatpush1.msra.mxu0 0.0
    %2047 = vmatprep.subr.mxu0 0.0
    %2048 = vmatpush1.msra.mxu0 0.0
    %2049 = vmatprep.subr.mxu0 0.0
    %2050 = vmatpush1.msra.mxu0 0.0
    %2051 = vmatprep.subr.mxu0 0.0
    %2052 = vmatpush1.msra.mxu0 0.0
    %2053 = vmatprep.subr.mxu0 0.0
    %2054 = vmatpush1.msra.mxu0 0.0
    %2055 = vmatprep.subr.mxu0 0.0
    %2056 = vmatpush1.msra.mxu0 0.0
    %2057 = vmatprep.subr.mxu0 0.0
    %2058 = vmatpush1.msra.mxu0 0.0
    %2059 = vmatprep.subr.mxu0 0.0
    %2060 = vmatpush1.msra.mxu0 0.0
    %2061 = vmatprep.subr.mxu0 0.0
    %2062 = vmatpush1.msra.mxu0 0.0
    %2063 = vmatprep.subr.mxu0 0.0
    %2064 = vmatpush1.msra.mxu0 0.0
    %2065 = vmatprep.subr.mxu0 0.0
    %2066 = vmatpush1.msra.mxu0 0.0
    %2067 = vmatprep.subr.mxu0 0.0
    %2068 = vmatpush1.msra.mxu0 0.0
    %2069 = vmatprep.subr.mxu0 0.0
    %2070 = vmatpush1.msra.mxu0 0.0
    %2071 = vmatprep.subr.mxu0 0.0
    %2072 = vmatpush1.msra.mxu0 0.0
    %2073 = vmatprep.subr.mxu0 0.0
    %2074 = vmatpush1.msra.mxu0 0.0
    %2075 = vmatprep.subr.mxu0 0.0
    %2076 = vmatpush1.msra.mxu0 0.0
    %2077 = vmatprep.subr.mxu0 0.0
    %2078 = vmatpush1.msra.mxu0 0.0
    %2079 = vmatprep.subr.mxu0 0.0
    %2080 = vmatpush1.msra.mxu0 0.0
    %2081 = vmatprep.subr.mxu0 0.0
    %2082 = vmatpush1.msra.mxu0 0.0
    %2083 = vmatprep.subr.mxu0 0.0
    %2084 = vmatpush1.msra.mxu0 0.0
    %2085 = vmatprep.subr.mxu0 0.0
    %2086 = vmatpush1.msra.mxu0 0.0
    %2087 = vmatprep.subr.mxu0 0.0
    %2088 = vmatpush1.msra.mxu0 0.0
    %2089 = vmatprep.subr.mxu0 0.0
    %2090 = vmatpush1.msra.mxu0 0.0
    %2091 = vmatprep.subr.mxu0 0.0
    %2092 = vmatpush1.msra.mxu0 0.0
    %2093 = vmatprep.mubr.f32.mxu0 0.0
    %2094 = vmatmul.mubr.f32.gmra.mrb[0].mxu0 %v1793
    %v2095 = vpop.f32.mrb[0].mxu0
    %v2096 = vadd.f32 %v1739, %v2095
    %v2097 = vpop.f32.mrb[0].mxu0
    %v2098 = vadd.f32 %v1743, %v2097
    %2099 = vmatprep.mubr.f32.mxu0 0.0
    %2100 = vmatmul.mubr.f32.gmra.mrb[0].mxu0 %v1796
    %v2101 = vpop.f32.mrb[0].mxu0
    %v2102 = vadd.f32 %v1739, %v2101
    %v2103 = vpop.f32.mrb[0].mxu0
    %v2104 = vadd.f32 %v1743, %v2103
    %2105 = vdwg.mxu0
    %2106 = vmatprep.subr.mxu0 %v1653
    %2107 = vmatpush1.msra.mxu0 %v1652
    %2108 = vmatprep.subr.mxu0 %v1669
    %2109 = vmatpush1.msra.mxu0 %v1668
    %2110 = vmatprep.subr.mxu0 %v1685
    %2111 = vmatpush1.msra.mxu0 %v1684
    %2112 = vmatprep.subr.mxu0 %v1701
    %2113 = vmatpush1.msra.mxu0 %v1700
    %2114 = vmatprep.subr.mxu0 0.0
    %2115 = vmatpush1.msra.mxu0 0.0
    %2116 = vmatprep.subr.mxu0 0.0
    %2117 = vmatpush1.msra.mxu0 0.0
    %2118 = vmatprep.subr.mxu0 0.0
    %2119 = vmatpush1.msra.mxu0 0.0
    %2120 = vmatprep.subr.mxu0 0.0
    %2121 = vmatpush1.msra.mxu0 0.0
    %2122 = vmatprep.subr.mxu0 0.0
    %2123 = vmatpush1.msra.mxu0 0.0
    %2124 = vmatprep.subr.mxu0 0.0
    %2125 = vmatpush1.msra.mxu0 0.0
    %2126 = vmatprep.subr.mxu0 0.0
    %2127 = vmatpush1.msra.mxu0 0.0
    %2128 = vmatprep.subr.mxu0 0.0
    %2129 = vmatpush1.msra.mxu0 0.0
    %2130 = vmatprep.subr.mxu0 0.0
    %2131 = vmatpush1.msra.mxu0 0.0
    %2132 = vmatprep.subr.mxu0 0.0
    %2133 = vmatpush1.msra.mxu0 0.0
    %2134 = vmatprep.subr.mxu0 0.0
    %2135 = vmatpush1.msra.mxu0 0.0
    %2136 = vmatprep.subr.mxu0 0.0
    %2137 = vmatpush1.msra.mxu0 0.0
    %2138 = vmatprep.subr.mxu0 0.0
    %2139 = vmatpush1.msra.mxu0 0.0
    %2140 = vmatprep.subr.mxu0 0.0
    %2141 = vmatpush1.msra.mxu0 0.0
    %2142 = vmatprep.subr.mxu0 0.0
    %2143 = vmatpush1.msra.mxu0 0.0
    %2144 = vmatprep.subr.mxu0 0.0
    %2145 = vmatpush1.msra.mxu0 0.0
    %2146 = vmatprep.subr.mxu0 0.0
    %2147 = vmatpush1.msra.mxu0 0.0
    %2148 = vmatprep.subr.mxu0 0.0
    %2149 = vmatpush1.msra.mxu0 0.0
    %2150 = vmatprep.subr.mxu0 0.0
    %2151 = vmatpush1.msra.mxu0 0.0
    %2152 = vmatprep.subr.mxu0 0.0
    %2153 = vmatpush1.msra.mxu0 0.0
    %2154 = vmatprep.subr.mxu0 0.0
    %2155 = vmatpush1.msra.mxu0 0.0
    %2156 = vmatprep.subr.mxu0 0.0
    %2157 = vmatpush1.msra.mxu0 0.0
    %2158 = vmatprep.subr.mxu0 0.0
    %2159 = vmatpush1.msra.mxu0 0.0
    %2160 = vmatprep.subr.mxu0 0.0
    %2161 = vmatpush1.msra.mxu0 0.0
    %2162 = vmatprep.subr.mxu0 0.0
    %2163 = vmatpush1.msra.mxu0 0.0
    %2164 = vmatprep.subr.mxu0 0.0
    %2165 = vmatpush1.msra.mxu0 0.0
    %2166 = vmatprep.subr.mxu0 0.0
    %2167 = vmatpush1.msra.mxu0 0.0
    %2168 = vmatprep.subr.mxu0 0.0
    %2169 = vmatpush1.msra.mxu0 0.0
    %2170 = vmatprep.mubr.f32.mxu0 0.0
    %2171 = vmatmul.mubr.f32.gmra.mrb[0].mxu0 %v1793
    %v2172 = vpop.f32.mrb[0].mxu0
    %v2173 = vadd.f32 %v1747, %v2172
    %v2174 = vpop.f32.mrb[0].mxu0
    %v2175 = vadd.f32 %v1751, %v2174
    %2176 = vmatprep.mubr.f32.mxu0 0.0
    %2177 = vmatmul.mubr.f32.gmra.mrb[0].mxu0 %v1796
    %v2178 = vpop.f32.mrb[0].mxu0
    %v2179 = vadd.f32 %v1747, %v2178
    %v2180 = vpop.f32.mrb[0].mxu0
    %v2181 = vadd.f32 %v1751, %v2180
    %2182 = vdwg.mxu0
    %2183 = vmatprep.subr.mxu0 %v1655
    %2184 = vmatpush1.msra.mxu0 %v1654
    %2185 = vmatprep.subr.mxu0 %v1671
    %2186 = vmatpush1.msra.mxu0 %v1670
    %2187 = vmatprep.subr.mxu0 %v1687
    %2188 = vmatpush1.msra.mxu0 %v1686
    %2189 = vmatprep.subr.mxu0 %v1703
    %2190 = vmatpush1.msra.mxu0 %v1702
    %2191 = vmatprep.subr.mxu0 0.0
    %2192 = vmatpush1.msra.mxu0 0.0
    %2193 = vmatprep.subr.mxu0 0.0
    %2194 = vmatpush1.msra.mxu0 0.0
    %2195 = vmatprep.subr.mxu0 0.0
    %2196 = vmatpush1.msra.mxu0 0.0
    %2197 = vmatprep.subr.mxu0 0.0
    %2198 = vmatpush1.msra.mxu0 0.0
    %2199 = vmatprep.subr.mxu0 0.0
    %2200 = vmatpush1.msra.mxu0 0.0
    %2201 = vmatprep.subr.mxu0 0.0
    %2202 = vmatpush1.msra.mxu0 0.0
    %2203 = vmatprep.subr.mxu0 0.0
    %2204 = vmatpush1.msra.mxu0 0.0
    %2205 = vmatprep.subr.mxu0 0.0
    %2206 = vmatpush1.msra.mxu0 0.0
    %2207 = vmatprep.subr.mxu0 0.0
    %2208 = vmatpush1.msra.mxu0 0.0
    %2209 = vmatprep.subr.mxu0 0.0
    %2210 = vmatpush1.msra.mxu0 0.0
    %2211 = vmatprep.subr.mxu0 0.0
    %2212 = vmatpush1.msra.mxu0 0.0
    %2213 = vmatprep.subr.mxu0 0.0
    %2214 = vmatpush1.msra.mxu0 0.0
    %2215 = vmatprep.subr.mxu0 0.0
    %2216 = vmatpush1.msra.mxu0 0.0
    %2217 = vmatprep.subr.mxu0 0.0
    %2218 = vmatpush1.msra.mxu0 0.0
    %2219 = vmatprep.subr.mxu0 0.0
    %2220 = vmatpush1.msra.mxu0 0.0
    %2221 = vmatprep.subr.mxu0 0.0
    %2222 = vmatpush1.msra.mxu0 0.0
    %2223 = vmatprep.subr.mxu0 0.0
    %2224 = vmatpush1.msra.mxu0 0.0
    %2225 = vmatprep.subr.mxu0 0.0
    %2226 = vmatpush1.msra.mxu0 0.0
    %2227 = vmatprep.subr.mxu0 0.0
    %2228 = vmatpush1.msra.mxu0 0.0
    %2229 = vmatprep.subr.mxu0 0.0
    %2230 = vmatpush1.msra.mxu0 0.0
    %2231 = vmatprep.subr.mxu0 0.0
    %2232 = vmatpush1.msra.mxu0 0.0
    %2233 = vmatprep.subr.mxu0 0.0
    %2234 = vmatpush1.msra.mxu0 0.0
    %2235 = vmatprep.subr.mxu0 0.0
    %2236 = vmatpush1.msra.mxu0 0.0
    %2237 = vmatprep.subr.mxu0 0.0
    %2238 = vmatpush1.msra.mxu0 0.0
    %2239 = vmatprep.subr.mxu0 0.0
    %2240 = vmatpush1.msra.mxu0 0.0
    %2241 = vmatprep.subr.mxu0 0.0
    %2242 = vmatpush1.msra.mxu0 0.0
    %2243 = vmatprep.subr.mxu0 0.0
    %2244 = vmatpush1.msra.mxu0 0.0
    %2245 = vmatprep.subr.mxu0 0.0
    %2246 = vmatpush1.msra.mxu0 0.0
    %2247 = vmatprep.mubr.f32.mxu0 0.0
    %2248 = vmatmul.mubr.f32.gmra.mrb[0].mxu0 %v1793
    %v2249 = vpop.f32.mrb[0].mxu0
    %v2250 = vadd.f32 %v1755, %v2249
    %v2251 = vpop.f32.mrb[0].mxu0
    %v2252 = vadd.f32 %v1759, %v2251
    %2253 = vmatprep.mubr.f32.mxu0 0.0
    %2254 = vmatmul.mubr.f32.gmra.mrb[0].mxu0 %v1796
    %v2255 = vpop.f32.mrb[0].mxu0
    %v2256 = vadd.f32 %v1755, %v2255
    %v2257 = vpop.f32.mrb[0].mxu0
    %v2258 = vadd.f32 %v1759, %v2257
    %2259 = vdwg.mxu0
    %2260 = vmatprep.subr.mxu0 %v1657
    %2261 = vmatpush1.msra.mxu0 %v1656
    %2262 = vmatprep.subr.mxu0 %v1673
    %2263 = vmatpush1.msra.mxu0 %v1672
    %2264 = vmatprep.subr.mxu0 %v1689
    %2265 = vmatpush1.msra.mxu0 %v1688
    %2266 = vmatprep.subr.mxu0 %v1705
    %2267 = vmatpush1.msra.mxu0 %v1704
    %2268 = vmatprep.subr.mxu0 0.0
    %2269 = vmatpush1.msra.mxu0 0.0
    %2270 = vmatprep.subr.mxu0 0.0
    %2271 = vmatpush1.msra.mxu0 0.0
    %2272 = vmatprep.subr.mxu0 0.0
    %2273 = vmatpush1.msra.mxu0 0.0
    %2274 = vmatprep.subr.mxu0 0.0
    %2275 = vmatpush1.msra.mxu0 0.0
    %2276 = vmatprep.subr.mxu0 0.0
    %2277 = vmatpush1.msra.mxu0 0.0
    %2278 = vmatprep.subr.mxu0 0.0
    %2279 = vmatpush1.msra.mxu0 0.0
    %2280 = vmatprep.subr.mxu0 0.0
    %2281 = vmatpush1.msra.mxu0 0.0
    %2282 = vmatprep.subr.mxu0 0.0
    %2283 = vmatpush1.msra.mxu0 0.0
    %2284 = vmatprep.subr.mxu0 0.0
    %2285 = vmatpush1.msra.mxu0 0.0
    %2286 = vmatprep.subr.mxu0 0.0
    %2287 = vmatpush1.msra.mxu0 0.0
    %2288 = vmatprep.subr.mxu0 0.0
    %2289 = vmatpush1.msra.mxu0 0.0
    %2290 = vmatprep.subr.mxu0 0.0
    %2291 = vmatpush1.msra.mxu0 0.0
    %2292 = vmatprep.subr.mxu0 0.0
    %2293 = vmatpush1.msra.mxu0 0.0
    %2294 = vmatprep.subr.mxu0 0.0
    %2295 = vmatpush1.msra.mxu0 0.0
    %2296 = vmatprep.subr.mxu0 0.0
    %2297 = vmatpush1.msra.mxu0 0.0
    %2298 = vmatprep.subr.mxu0 0.0
    %2299 = vmatpush1.msra.mxu0 0.0
    %2300 = vmatprep.subr.mxu0 0.0
    %2301 = vmatpush1.msra.mxu0 0.0
    %2302 = vmatprep.subr.mxu0 0.0
    %2303 = vmatpush1.msra.mxu0 0.0
    %2304 = vmatprep.subr.mxu0 0.0
    %2305 = vmatpush1.msra.mxu0 0.0
    %2306 = vmatprep.subr.mxu0 0.0
    %2307 = vmatpush1.msra.mxu0 0.0
    %2308 = vmatprep.subr.mxu0 0.0
    %2309 = vmatpush1.msra.mxu0 0.0
    %2310 = vmatprep.subr.mxu0 0.0
    %2311 = vmatpush1.msra.mxu0 0.0
    %2312 = vmatprep.subr.mxu0 0.0
    %2313 = vmatpush1.msra.mxu0 0.0
    %2314 = vmatprep.subr.mxu0 0.0
    %2315 = vmatpush1.msra.mxu0 0.0
    %2316 = vmatprep.subr.mxu0 0.0
    %2317 = vmatpush1.msra.mxu0 0.0
    %2318 = vmatprep.subr.mxu0 0.0
    %2319 = vmatpush1.msra.mxu0 0.0
    %2320 = vmatprep.subr.mxu0 0.0
    %2321 = vmatpush1.msra.mxu0 0.0
    %2322 = vmatprep.subr.mxu0 0.0
    %2323 = vmatpush1.msra.mxu0 0.0
    %2324 = vmatprep.mubr.f32.mxu0 0.0
    %2325 = vmatmul.mubr.f32.gmra.mrb[0].mxu0 %v1793
    %v2326 = vpop.f32.mrb[0].mxu0
    %v2327 = vadd.f32 %v1763, %v2326
    %v2328 = vpop.f32.mrb[0].mxu0
    %v2329 = vadd.f32 %v1767, %v2328
    %2330 = vmatprep.mubr.f32.mxu0 0.0
    %2331 = vmatmul.mubr.f32.gmra.mrb[0].mxu0 %v1796
    %v2332 = vpop.f32.mrb[0].mxu0
    %v2333 = vadd.f32 %v1763, %v2332
    %v2334 = vpop.f32.mrb[0].mxu0
    %v2335 = vadd.f32 %v1767, %v2334
    %2336 = vdwg.mxu0
    %2337 = vmatprep.subr.mxu0 %v1659
    %2338 = vmatpush1.msra.mxu0 %v1658
    %2339 = vmatprep.subr.mxu0 %v1675
    %2340 = vmatpush1.msra.mxu0 %v1674
    %2341 = vmatprep.subr.mxu0 %v1691
    %2342 = vmatpush1.msra.mxu0 %v1690
    %2343 = vmatprep.subr.mxu0 %v1707
    %2344 = vmatpush1.msra.mxu0 %v1706
    %2345 = vmatprep.subr.mxu0 0.0
    %2346 = vmatpush1.msra.mxu0 0.0
    %2347 = vmatprep.subr.mxu0 0.0
    %2348 = vmatpush1.msra.mxu0 0.0
    %2349 = vmatprep.subr.mxu0 0.0
    %2350 = vmatpush1.msra.mxu0 0.0
    %2351 = vmatprep.subr.mxu0 0.0
    %2352 = vmatpush1.msra.mxu0 0.0
    %2353 = vmatprep.subr.mxu0 0.0
    %2354 = vmatpush1.msra.mxu0 0.0
    %2355 = vmatprep.subr.mxu0 0.0
    %2356 = vmatpush1.msra.mxu0 0.0
    %2357 = vmatprep.subr.mxu0 0.0
    %2358 = vmatpush1.msra.mxu0 0.0
    %2359 = vmatprep.subr.mxu0 0.0
    %2360 = vmatpush1.msra.mxu0 0.0
    %2361 = vmatprep.subr.mxu0 0.0
    %2362 = vmatpush1.msra.mxu0 0.0
    %2363 = vmatprep.subr.mxu0 0.0
    %2364 = vmatpush1.msra.mxu0 0.0
    %2365 = vmatprep.subr.mxu0 0.0
    %2366 = vmatpush1.msra.mxu0 0.0
    %2367 = vmatprep.subr.mxu0 0.0
    %2368 = vmatpush1.msra.mxu0 0.0
    %2369 = vmatprep.subr.mxu0 0.0
    %2370 = vmatpush1.msra.mxu0 0.0
    %2371 = vmatprep.subr.mxu0 0.0
    %2372 = vmatpush1.msra.mxu0 0.0
    %2373 = vmatprep.subr.mxu0 0.0
    %2374 = vmatpush1.msra.mxu0 0.0
    %2375 = vmatprep.subr.mxu0 0.0
    %2376 = vmatpush1.msra.mxu0 0.0
    %2377 = vmatprep.subr.mxu0 0.0
    %2378 = vmatpush1.msra.mxu0 0.0
    %2379 = vmatprep.subr.mxu0 0.0
    %2380 = vmatpush1.msra.mxu0 0.0
    %2381 = vmatprep.subr.mxu0 0.0
    %2382 = vmatpush1.msra.mxu0 0.0
    %2383 = vmatprep.subr.mxu0 0.0
    %2384 = vmatpush1.msra.mxu0 0.0
    %2385 = vmatprep.subr.mxu0 0.0
    %2386 = vmatpush1.msra.mxu0 0.0
    %2387 = vmatprep.subr.mxu0 0.0
    %2388 = vmatpush1.msra.mxu0 0.0
    %2389 = vmatprep.subr.mxu0 0.0
    %2390 = vmatpush1.msra.mxu0 0.0
    %2391 = vmatprep.subr.mxu0 0.0
    %2392 = vmatpush1.msra.mxu0 0.0
    %2393 = vmatprep.subr.mxu0 0.0
    %2394 = vmatpush1.msra.mxu0 0.0
    %2395 = vmatprep.subr.mxu0 0.0
    %2396 = vmatpush1.msra.mxu0 0.0
    %2397 = vmatprep.subr.mxu0 0.0
    %2398 = vmatpush1.msra.mxu0 0.0
    %2399 = vmatprep.subr.mxu0 0.0
    %2400 = vmatpush1.msra.mxu0 0.0
    %2401 = vmatprep.mubr.f32.mxu0 0.0
    %2402 = vmatmul.mubr.f32.gmra.mrb[0].mxu0 %v1793
    %v2403 = vpop.f32.mrb[0].mxu0
    %v2404 = vadd.f32 %v1771, %v2403
    %v2405 = vpop.f32.mrb[0].mxu0
    %v2406 = vadd.f32 %v1775, %v2405
    %2407 = vmatprep.mubr.f32.mxu0 0.0
    %2408 = vmatmul.mubr.f32.gmra.mrb[0].mxu0 %v1796
    %v2409 = vpop.f32.mrb[0].mxu0
    %v2410 = vadd.f32 %v1771, %v2409
    %v2411 = vpop.f32.mrb[0].mxu0
    %v2412 = vadd.f32 %v1775, %v2411
    %2413 = vdwg.mxu0
    %v2414 = vmax.f32 %v1865, 0.0
    %v2415 = vmax.f32 %v1867, 0.0
    %v2416 = vmax.f32 %v1942, 0.0
    %v2417 = vmax.f32 %v1944, 0.0
    %v2418 = vmax.f32 %v2019, 0.0
    %v2419 = vmax.f32 %v2021, 0.0
    %v2420 = vmax.f32 %v2096, 0.0
    %v2421 = vmax.f32 %v2098, 0.0
    %v2422 = vmax.f32 %v2173, 0.0
    %v2423 = vmax.f32 %v2175, 0.0
    %v2424 = vmax.f32 %v2250, 0.0
    %v2425 = vmax.f32 %v2252, 0.0
    %v2426 = vmax.f32 %v2327, 0.0
    %v2427 = vmax.f32 %v2329, 0.0
    %v2428 = vmax.f32 %v2404, 0.0
    %v2429 = vmax.f32 %v2406, 0.0
    %v2430 = vmax.f32 %v1871, 0.0
    %v2431 = vmax.f32 %v1873, 0.0
    %v2432 = vmax.f32 %v1948, 0.0
    %v2433 = vmax.f32 %v1950, 0.0
    %v2434 = vmax.f32 %v2025, 0.0
    %v2435 = vmax.f32 %v2027, 0.0
    %v2436 = vmax.f32 %v2102, 0.0
    %v2437 = vmax.f32 %v2104, 0.0
    %v2438 = vmax.f32 %v2179, 0.0
    %v2439 = vmax.f32 %v2181, 0.0
    %v2440 = vmax.f32 %v2256, 0.0
    %v2441 = vmax.f32 %v2258, 0.0
    %v2442 = vmax.f32 %v2333, 0.0
    %v2443 = vmax.f32 %v2335, 0.0
    %v2444 = vmax.f32 %v2410, 0.0
    %v2445 = vmax.f32 %v2412, 0.0
    %v2446 = vld [vmem:[%s9] sm:$0xff]
    %v2447 = vld [vmem:[%s9 + $0x8] sm:$0xff]
    %v2448 = vld [vmem:[%s9 + $0x10] sm:$0xff]
    %v2449 = vld [vmem:[%s9 + $0x18] sm:$0xff]
    %v2450 = vld [vmem:[%s9 + $0x20] sm:$0xff]
    %v2451 = vld [vmem:[%s9 + $0x28] sm:$0xff]
    %v2452 = vld [vmem:[%s9 + $0x30] sm:$0xff]
    %v2453 = vld [vmem:[%s9 + $0x38] sm:$0xff]
    %v2454 = vld [vmem:[%s9 + $0x40] sm:$0xff]
    %v2455 = vld [vmem:[%s9 + $0x48] sm:$0xff]
    %v2456 = vld [vmem:[%s9 + $0x50] sm:$0xff]
    %v2457 = vld [vmem:[%s9 + $0x58] sm:$0xff]
    %v2458 = vld [vmem:[%s9 + $0x60] sm:$0xff]
    %v2459 = vld [vmem:[%s9 + $0x68] sm:$0xff]
    %v2460 = vld [vmem:[%s9 + $0x70] sm:$0xff]
    %v2461 = vld [vmem:[%s9 + $0x78] sm:$0xff]
    %v2462 = vld [vmem:[%s9 + $0x80] sm:$0xff]
    %v2463 = vld [vmem:[%s9 + $0x88] sm:$0xff]
    %v2464 = vld [vmem:[%s9 + $0x90] sm:$0xff]
    %v2465 = vld [vmem:[%s9 + $0x98] sm:$0xff]
    %v2466 = vld [vmem:[%s9 + $0xa0] sm:$0xff]
    %v2467 = vld [vmem:[%s9 + $0xa8] sm:$0xff]
    %v2468 = vld [vmem:[%s9 + $0xb0] sm:$0xff]
    %v2469 = vld [vmem:[%s9 + $0xb8] sm:$0xff]
    %v2470 = vld [vmem:[%s9 + $0xc0] sm:$0xff]
    %v2471 = vld [vmem:[%s9 + $0xc8] sm:$0xff]
    %v2472 = vld [vmem:[%s9 + $0xd0] sm:$0xff]
    %v2473 = vld [vmem:[%s9 + $0xd8] sm:$0xff]
    %v2474 = vld [vmem:[%s9 + $0xe0] sm:$0xff]
    %v2475 = vld [vmem:[%s9 + $0xe8] sm:$0xff]
    %v2476 = vld [vmem:[%s9 + $0xf0] sm:$0xff]
    %v2477 = vld [vmem:[%s9 + $0xf8] sm:$0xff]
    %v2478 = vld [vmem:[%s9 + $0x100] sm:$0xff]
    %v2479 = vld [vmem:[%s9 + $0x108] sm:$0xff]
    %v2480 = vld [vmem:[%s9 + $0x110] sm:$0xff]
    %v2481 = vld [vmem:[%s9 + $0x118] sm:$0xff]
    %v2482 = vld [vmem:[%s9 + $0x120] sm:$0xff]
    %v2483 = vld [vmem:[%s9 + $0x128] sm:$0xff]
    %v2484 = vld [vmem:[%s9 + $0x130] sm:$0xff]
    %v2485 = vld [vmem:[%s9 + $0x138] sm:$0xff]
    %v2486 = vld [vmem:[%s9 + $0x140] sm:$0xff]
    %v2487 = vld [vmem:[%s9 + $0x148] sm:$0xff]
    %v2488 = vld [vmem:[%s9 + $0x150] sm:$0xff]
    %v2489 = vld [vmem:[%s9 + $0x158] sm:$0xff]
    %v2490 = vld [vmem:[%s9 + $0x160] sm:$0xff]
    %v2491 = vld [vmem:[%s9 + $0x168] sm:$0xff]
    %v2492 = vld [vmem:[%s9 + $0x170] sm:$0xff]
    %v2493 = vld [vmem:[%s9 + $0x178] sm:$0xff]
    %v2494 = vld [vmem:[%s9 + $0x180] sm:$0xff]
    %v2495 = vld [vmem:[%s9 + $0x188] sm:$0xff]
    %v2496 = vld [vmem:[%s9 + $0x190] sm:$0xff]
    %v2497 = vld [vmem:[%s9 + $0x198] sm:$0xff]
    %v2498 = vld [vmem:[%s9 + $0x1a0] sm:$0xff]
    %v2499 = vld [vmem:[%s9 + $0x1a8] sm:$0xff]
    %v2500 = vld [vmem:[%s9 + $0x1b0] sm:$0xff]
    %v2501 = vld [vmem:[%s9 + $0x1b8] sm:$0xff]
    %v2502 = vld [vmem:[%s9 + $0x1c0] sm:$0xff]
    %v2503 = vld [vmem:[%s9 + $0x1c8] sm:$0xff]
    %v2504 = vld [vmem:[%s9 + $0x1d0] sm:$0xff]
    %v2505 = vld [vmem:[%s9 + $0x1d8] sm:$0xff]
    %v2506 = vld [vmem:[%s9 + $0x1e0] sm:$0xff]
    %v2507 = vld [vmem:[%s9 + $0x1e8] sm:$0xff]
    %v2508 = vld [vmem:[%s9 + $0x1f0] sm:$0xff]
    %v2509 = vld [vmem:[%s9 + $0x1f8] sm:$0xff]
    %v2510 = vld [vmem:[%s9 + $0x200] sm:$0xff]
    %v2511 = vld [vmem:[%s9 + $0x208] sm:$0xff]
    %v2512 = vld [vmem:[%s9 + $0x210] sm:$0xff]
    %v2513 = vld [vmem:[%s9 + $0x218] sm:$0xff]
    %v2514 = vld [vmem:[%s9 + $0x220] sm:$0xff]
    %v2515 = vld [vmem:[%s9 + $0x228] sm:$0xff]
    %v2516 = vld [vmem:[%s9 + $0x230] sm:$0xff]
    %v2517 = vld [vmem:[%s9 + $0x238] sm:$0xff]
    %v2518 = vld [vmem:[%s9 + $0x240] sm:$0xff]
    %v2519 = vld [vmem:[%s9 + $0x248] sm:$0xff]
    %v2520 = vld [vmem:[%s9 + $0x250] sm:$0xff]
    %v2521 = vld [vmem:[%s9 + $0x258] sm:$0xff]
    %v2522 = vld [vmem:[%s9 + $0x260] sm:$0xff]
    %v2523 = vld [vmem:[%s9 + $0x268] sm:$0xff]
    %v2524 = vld [vmem:[%s9 + $0x270] sm:$0xff]
    %v2525 = vld [vmem:[%s9 + $0x278] sm:$0xff]
    %v2526 = vld [vmem:[%s9 + $0x280] sm:$0xff]
    %v2527 = vld [vmem:[%s9 + $0x288] sm:$0xff]
    %v2528 = vld [vmem:[%s9 + $0x290] sm:$0xff]
    %v2529 = vld [vmem:[%s9 + $0x298] sm:$0xff]
    %v2530 = vld [vmem:[%s9 + $0x2a0] sm:$0xff]
    %v2531 = vld [vmem:[%s9 + $0x2a8] sm:$0xff]
    %v2532 = vld [vmem:[%s9 + $0x2b0] sm:$0xff]
    %v2533 = vld [vmem:[%s9 + $0x2b8] sm:$0xff]
    %v2534 = vld [vmem:[%s9 + $0x2c0] sm:$0xff]
    %v2535 = vld [vmem:[%s9 + $0x2c8] sm:$0xff]
    %v2536 = vld [vmem:[%s9 + $0x2d0] sm:$0xff]
    %v2537 = vld [vmem:[%s9 + $0x2d8] sm:$0xff]
    %v2538 = vld [vmem:[%s9 + $0x2e0] sm:$0xff]
    %v2539 = vld [vmem:[%s9 + $0x2e8] sm:$0xff]
    %v2540 = vld [vmem:[%s9 + $0x2f0] sm:$0xff]
    %v2541 = vld [vmem:[%s9 + $0x2f8] sm:$0xff]
    %v2542 = vld [vmem:[%s9 + $0x300] sm:$0xff]
    %v2543 = vld [vmem:[%s9 + $0x308] sm:$0xff]
    %v2544 = vld [vmem:[%s9 + $0x310] sm:$0xff]
    %v2545 = vld [vmem:[%s9 + $0x318] sm:$0xff]
    %v2546 = vld [vmem:[%s9 + $0x320] sm:$0xff]
    %v2547 = vld [vmem:[%s9 + $0x328] sm:$0xff]
    %v2548 = vld [vmem:[%s9 + $0x330] sm:$0xff]
    %v2549 = vld [vmem:[%s9 + $0x338] sm:$0xff]
    %v2550 = vld [vmem:[%s9 + $0x340] sm:$0xff]
    %v2551 = vld [vmem:[%s9 + $0x348] sm:$0xff]
    %v2552 = vld [vmem:[%s9 + $0x350] sm:$0xff]
    %v2553 = vld [vmem:[%s9 + $0x358] sm:$0xff]
    %v2554 = vld [vmem:[%s9 + $0x360] sm:$0xff]
    %v2555 = vld [vmem:[%s9 + $0x368] sm:$0xff]
    %v2556 = vld [vmem:[%s9 + $0x370] sm:$0xff]
    %v2557 = vld [vmem:[%s9 + $0x378] sm:$0xff]
    %v2558 = vld [vmem:[%s9 + $0x380] sm:$0xff]
    %v2559 = vld [vmem:[%s9 + $0x388] sm:$0xff]
    %v2560 = vld [vmem:[%s9 + $0x390] sm:$0xff]
    %v2561 = vld [vmem:[%s9 + $0x398] sm:$0xff]
    %v2562 = vld [vmem:[%s9 + $0x3a0] sm:$0xff]
    %v2563 = vld [vmem:[%s9 + $0x3a8] sm:$0xff]
    %v2564 = vld [vmem:[%s9 + $0x3b0] sm:$0xff]
    %v2565 = vld [vmem:[%s9 + $0x3b8] sm:$0xff]
    %v2566 = vld [vmem:[%s9 + $0x3c0] sm:$0xff]
    %v2567 = vld [vmem:[%s9 + $0x3c8] sm:$0xff]
    %v2568 = vld [vmem:[%s9 + $0x3d0] sm:$0xff]
    %v2569 = vld [vmem:[%s9 + $0x3d8] sm:$0xff]
    %v2570 = vld [vmem:[%s9 + $0x3e0] sm:$0xff]
    %v2571 = vld [vmem:[%s9 + $0x3e8] sm:$0xff]
    %v2572 = vld [vmem:[%s9 + $0x3f0] sm:$0xff]
    %v2573 = vld [vmem:[%s9 + $0x3f8] sm:$0xff]
    %v2574 = vld [vmem:[%s9 + $0x400] sm:$0xff]
    %v2575 = vld [vmem:[%s9 + $0x408] sm:$0xff]
    %v2576 = vld [vmem:[%s9 + $0x410] sm:$0xff]
    %v2577 = vld [vmem:[%s9 + $0x418] sm:$0xff]
    %v2578 = vld [vmem:[%s9 + $0x420] sm:$0xff]
    %v2579 = vld [vmem:[%s9 + $0x428] sm:$0xff]
    %v2580 = vld [vmem:[%s9 + $0x430] sm:$0xff]
    %v2581 = vld [vmem:[%s9 + $0x438] sm:$0xff]
    %v2582 = vld [vmem:[%s9 + $0x440] sm:$0xff]
    %v2583 = vld [vmem:[%s9 + $0x448] sm:$0xff]
    %v2584 = vld [vmem:[%s9 + $0x450] sm:$0xff]
    %v2585 = vld [vmem:[%s9 + $0x458] sm:$0xff]
    %v2586 = vld [vmem:[%s9 + $0x460] sm:$0xff]
    %v2587 = vld [vmem:[%s9 + $0x468] sm:$0xff]
    %v2588 = vld [vmem:[%s9 + $0x470] sm:$0xff]
    %v2589 = vld [vmem:[%s9 + $0x478] sm:$0xff]
    %v2590 = vld [vmem:[%s9 + $0x480] sm:$0xff]
    %v2591 = vld [vmem:[%s9 + $0x488] sm:$0xff]
    %v2592 = vld [vmem:[%s9 + $0x490] sm:$0xff]
    %v2593 = vld [vmem:[%s9 + $0x498] sm:$0xff]
    %v2594 = vld [vmem:[%s9 + $0x4a0] sm:$0xff]
    %v2595 = vld [vmem:[%s9 + $0x4a8] sm:$0xff]
    %v2596 = vld [vmem:[%s9 + $0x4b0] sm:$0xff]
    %v2597 = vld [vmem:[%s9 + $0x4b8] sm:$0xff]
    %v2598 = vld [vmem:[%s9 + $0x4c0] sm:$0xff]
    %v2599 = vld [vmem:[%s9 + $0x4c8] sm:$0xff]
    %v2600 = vld [vmem:[%s9 + $0x4d0] sm:$0xff]
    %v2601 = vld [vmem:[%s9 + $0x4d8] sm:$0xff]
    %v2602 = vld [vmem:[%s9 + $0x4e0] sm:$0xff]
    %v2603 = vld [vmem:[%s9 + $0x4e8] sm:$0xff]
    %v2604 = vld [vmem:[%s9 + $0x4f0] sm:$0xff]
    %v2605 = vld [vmem:[%s9 + $0x4f8] sm:$0xff]
    %v2606 = vld [vmem:[%s9 + $0x500] sm:$0xff]
    %v2607 = vld [vmem:[%s9 + $0x508] sm:$0xff]
    %v2608 = vld [vmem:[%s9 + $0x510] sm:$0xff]
    %v2609 = vld [vmem:[%s9 + $0x518] sm:$0xff]
    %v2610 = vld [vmem:[%s9 + $0x520] sm:$0xff]
    %v2611 = vld [vmem:[%s9 + $0x528] sm:$0xff]
    %v2612 = vld [vmem:[%s9 + $0x530] sm:$0xff]
    %v2613 = vld [vmem:[%s9 + $0x538] sm:$0xff]
    %v2614 = vld [vmem:[%s9 + $0x540] sm:$0xff]
    %v2615 = vld [vmem:[%s9 + $0x548] sm:$0xff]
    %v2616 = vld [vmem:[%s9 + $0x550] sm:$0xff]
    %v2617 = vld [vmem:[%s9 + $0x558] sm:$0xff]
    %v2618 = vld [vmem:[%s9 + $0x560] sm:$0xff]
    %v2619 = vld [vmem:[%s9 + $0x568] sm:$0xff]
    %v2620 = vld [vmem:[%s9 + $0x570] sm:$0xff]
    %v2621 = vld [vmem:[%s9 + $0x578] sm:$0xff]
    %v2622 = vld [vmem:[%s9 + $0x580] sm:$0xff]
    %v2623 = vld [vmem:[%s9 + $0x588] sm:$0xff]
    %v2624 = vld [vmem:[%s9 + $0x590] sm:$0xff]
    %v2625 = vld [vmem:[%s9 + $0x598] sm:$0xff]
    %v2626 = vld [vmem:[%s9 + $0x5a0] sm:$0xff]
    %v2627 = vld [vmem:[%s9 + $0x5a8] sm:$0xff]
    %v2628 = vld [vmem:[%s9 + $0x5b0] sm:$0xff]
    %v2629 = vld [vmem:[%s9 + $0x5b8] sm:$0xff]
    %v2630 = vld [vmem:[%s9 + $0x5c0] sm:$0xff]
    %v2631 = vld [vmem:[%s9 + $0x5c8] sm:$0xff]
    %v2632 = vld [vmem:[%s9 + $0x5d0] sm:$0xff]
    %v2633 = vld [vmem:[%s9 + $0x5d8] sm:$0xff]
    %v2634 = vld [vmem:[%s9 + $0x5e0] sm:$0xff]
    %v2635 = vld [vmem:[%s9 + $0x5e8] sm:$0xff]
    %v2636 = vld [vmem:[%s9 + $0x5f0] sm:$0xff]
    %v2637 = vld [vmem:[%s9 + $0x5f8] sm:$0xff]
    %v2638 = vld [vmem:[%s9 + $0x600] sm:$0xff]
    %v2639 = vld [vmem:[%s9 + $0x608] sm:$0xff]
    %v2640 = vld [vmem:[%s9 + $0x610] sm:$0xff]
    %v2641 = vld [vmem:[%s9 + $0x618] sm:$0xff]
    %v2642 = vld [vmem:[%s9 + $0x620] sm:$0xff]
    %v2643 = vld [vmem:[%s9 + $0x628] sm:$0xff]
    %v2644 = vld [vmem:[%s9 + $0x630] sm:$0xff]
    %v2645 = vld [vmem:[%s9 + $0x638] sm:$0xff]
    %v2646 = vld [vmem:[%s9 + $0x640] sm:$0xff]
    %v2647 = vld [vmem:[%s9 + $0x648] sm:$0xff]
    %v2648 = vld [vmem:[%s9 + $0x650] sm:$0xff]
    %v2649 = vld [vmem:[%s9 + $0x658] sm:$0xff]
    %v2650 = vld [vmem:[%s9 + $0x660] sm:$0xff]
    %v2651 = vld [vmem:[%s9 + $0x668] sm:$0xff]
    %v2652 = vld [vmem:[%s9 + $0x670] sm:$0xff]
    %v2653 = vld [vmem:[%s9 + $0x678] sm:$0xff]
    %v2654 = vld [vmem:[%s9 + $0x680] sm:$0xff]
    %v2655 = vld [vmem:[%s9 + $0x688] sm:$0xff]
    %v2656 = vld [vmem:[%s9 + $0x690] sm:$0xff]
    %v2657 = vld [vmem:[%s9 + $0x698] sm:$0xff]
    %v2658 = vld [vmem:[%s9 + $0x6a0] sm:$0xff]
    %v2659 = vld [vmem:[%s9 + $0x6a8] sm:$0xff]
    %v2660 = vld [vmem:[%s9 + $0x6b0] sm:$0xff]
    %v2661 = vld [vmem:[%s9 + $0x6b8] sm:$0xff]
    %v2662 = vld [vmem:[%s9 + $0x6c0] sm:$0xff]
    %v2663 = vld [vmem:[%s9 + $0x6c8] sm:$0xff]
    %v2664 = vld [vmem:[%s9 + $0x6d0] sm:$0xff]
    %v2665 = vld [vmem:[%s9 + $0x6d8] sm:$0xff]
    %v2666 = vld [vmem:[%s9 + $0x6e0] sm:$0xff]
    %v2667 = vld [vmem:[%s9 + $0x6e8] sm:$0xff]
    %v2668 = vld [vmem:[%s9 + $0x6f0] sm:$0xff]
    %v2669 = vld [vmem:[%s9 + $0x6f8] sm:$0xff]
    %v2670 = vld [vmem:[%s9 + $0x700] sm:$0xff]
    %v2671 = vld [vmem:[%s9 + $0x708] sm:$0xff]
    %v2672 = vld [vmem:[%s9 + $0x710] sm:$0xff]
    %v2673 = vld [vmem:[%s9 + $0x718] sm:$0xff]
    %v2674 = vld [vmem:[%s9 + $0x720] sm:$0xff]
    %v2675 = vld [vmem:[%s9 + $0x728] sm:$0xff]
    %v2676 = vld [vmem:[%s9 + $0x730] sm:$0xff]
    %v2677 = vld [vmem:[%s9 + $0x738] sm:$0xff]
    %v2678 = vld [vmem:[%s9 + $0x740] sm:$0xff]
    %v2679 = vld [vmem:[%s9 + $0x748] sm:$0xff]
    %v2680 = vld [vmem:[%s9 + $0x750] sm:$0xff]
    %v2681 = vld [vmem:[%s9 + $0x758] sm:$0xff]
    %v2682 = vld [vmem:[%s9 + $0x760] sm:$0xff]
    %v2683 = vld [vmem:[%s9 + $0x768] sm:$0xff]
    %v2684 = vld [vmem:[%s9 + $0x770] sm:$0xff]
    %v2685 = vld [vmem:[%s9 + $0x778] sm:$0xff]
    %v2686 = vld [vmem:[%s9 + $0x780] sm:$0xff]
    %v2687 = vld [vmem:[%s9 + $0x788] sm:$0xff]
    %v2688 = vld [vmem:[%s9 + $0x790] sm:$0xff]
    %v2689 = vld [vmem:[%s9 + $0x798] sm:$0xff]
    %v2690 = vld [vmem:[%s9 + $0x7a0] sm:$0xff]
    %v2691 = vld [vmem:[%s9 + $0x7a8] sm:$0xff]
    %v2692 = vld [vmem:[%s9 + $0x7b0] sm:$0xff]
    %v2693 = vld [vmem:[%s9 + $0x7b8] sm:$0xff]
    %v2694 = vld [vmem:[%s9 + $0x7c0] sm:$0xff]
    %v2695 = vld [vmem:[%s9 + $0x7c8] sm:$0xff]
    %v2696 = vld [vmem:[%s9 + $0x7d0] sm:$0xff]
    %v2697 = vld [vmem:[%s9 + $0x7d8] sm:$0xff]
    %v2698 = vld [vmem:[%s9 + $0x7e0] sm:$0xff]
    %v2699 = vld [vmem:[%s9 + $0x7e8] sm:$0xff]
    %v2700 = vld [vmem:[%s9 + $0x7f0] sm:$0xff]
    %v2701 = vld [vmem:[%s9 + $0x7f8] sm:$0xff]
    %v2702 = vld [vmem:[%s10] sm:$0x1]
    %v2704 = vlaneseq
    %v2705 = vshrl.u32 %v2704, 7
    %v2706 = vsub.s32 0, %v2705
    %v2707 = vrot.slane %v2702, %v2706
    %2709 = vmatprep.subr.mxu0 0.0
    %2710 = vmatpush1.msra.mxu0 %v2446
    %2711 = vmatprep.subr.mxu0 0.0
    %2712 = vmatpush1.msra.mxu0 %v2447
    %2713 = vmatprep.subr.mxu0 0.0
    %2714 = vmatpush1.msra.mxu0 %v2448
    %2715 = vmatprep.subr.mxu0 0.0
    %2716 = vmatpush1.msra.mxu0 %v2449
    %2717 = vmatprep.subr.mxu0 0.0
    %2718 = vmatpush1.msra.mxu0 %v2450
    %2719 = vmatprep.subr.mxu0 0.0
    %2720 = vmatpush1.msra.mxu0 %v2451
    %2721 = vmatprep.subr.mxu0 0.0
    %2722 = vmatpush1.msra.mxu0 %v2452
    %2723 = vmatprep.subr.mxu0 0.0
    %2724 = vmatpush1.msra.mxu0 %v2453
    %2725 = vmatprep.subr.mxu0 0.0
    %2726 = vmatpush1.msra.mxu0 %v2454
    %2727 = vmatprep.subr.mxu0 0.0
    %2728 = vmatpush1.msra.mxu0 %v2455
    %2729 = vmatprep.subr.mxu0 0.0
    %2730 = vmatpush1.msra.mxu0 %v2456
    %2731 = vmatprep.subr.mxu0 0.0
    %2732 = vmatpush1.msra.mxu0 %v2457
    %2733 = vmatprep.subr.mxu0 0.0
    %2734 = vmatpush1.msra.mxu0 %v2458
    %2735 = vmatprep.subr.mxu0 0.0
    %2736 = vmatpush1.msra.mxu0 %v2459
    %2737 = vmatprep.subr.mxu0 0.0
    %2738 = vmatpush1.msra.mxu0 %v2460
    %2739 = vmatprep.subr.mxu0 0.0
    %2740 = vmatpush1.msra.mxu0 %v2461
    %2741 = vmatprep.subr.mxu0 0.0
    %2742 = vmatpush1.msra.mxu0 %v2462
    %2743 = vmatprep.subr.mxu0 0.0
    %2744 = vmatpush1.msra.mxu0 %v2463
    %2745 = vmatprep.subr.mxu0 0.0
    %2746 = vmatpush1.msra.mxu0 %v2464
    %2747 = vmatprep.subr.mxu0 0.0
    %2748 = vmatpush1.msra.mxu0 %v2465
    %2749 = vmatprep.subr.mxu0 0.0
    %2750 = vmatpush1.msra.mxu0 %v2466
    %2751 = vmatprep.subr.mxu0 0.0
    %2752 = vmatpush1.msra.mxu0 %v2467
    %2753 = vmatprep.subr.mxu0 0.0
    %2754 = vmatpush1.msra.mxu0 %v2468
    %2755 = vmatprep.subr.mxu0 0.0
    %2756 = vmatpush1.msra.mxu0 %v2469
    %2757 = vmatprep.subr.mxu0 0.0
    %2758 = vmatpush1.msra.mxu0 %v2470
    %2759 = vmatprep.subr.mxu0 0.0
    %2760 = vmatpush1.msra.mxu0 %v2471
    %2761 = vmatprep.subr.mxu0 0.0
    %2762 = vmatpush1.msra.mxu0 %v2472
    %2763 = vmatprep.subr.mxu0 0.0
    %2764 = vmatpush1.msra.mxu0 %v2473
    %2765 = vmatprep.subr.mxu0 0.0
    %2766 = vmatpush1.msra.mxu0 %v2474
    %2767 = vmatprep.subr.mxu0 0.0
    %2768 = vmatpush1.msra.mxu0 %v2475
    %2769 = vmatprep.subr.mxu0 0.0
    %2770 = vmatpush1.msra.mxu0 %v2476
    %2771 = vmatprep.subr.mxu0 0.0
    %2772 = vmatpush1.msra.mxu0 %v2477
    %2773 = vmatprep.mubr.f32.mxu0 %v2415
    %2774 = vmatmul.mubr.f32.gmra.mrb[0].mxu0 %v2414
    %v2775 = vpop.f32.mrb[0].mxu0
    %v2776 = vadd.f32 %v2707, %v2775
    %v2777 = vpop.f32.mrb[0].mxu0
    %2778 = vmatprep.mubr.f32.mxu0 %v2431
    %2779 = vmatmul.mubr.f32.gmra.mrb[0].mxu0 %v2430
    %v2780 = vpop.f32.mrb[0].mxu0
    %v2781 = vadd.f32 %v2707, %v2780
    %v2782 = vpop.f32.mrb[0].mxu0
    %2783 = vdwg.mxu0
    %2784 = vmatprep.subr.mxu0 0.0
    %2785 = vmatpush1.msra.mxu0 %v2478
    %2786 = vmatprep.subr.mxu0 0.0
    %2787 = vmatpush1.msra.mxu0 %v2479
    %2788 = vmatprep.subr.mxu0 0.0
    %2789 = vmatpush1.msra.mxu0 %v2480
    %2790 = vmatprep.subr.mxu0 0.0
    %2791 = vmatpush1.msra.mxu0 %v2481
    %2792 = vmatprep.subr.mxu0 0.0
    %2793 = vmatpush1.msra.mxu0 %v2482
    %2794 = vmatprep.subr.mxu0 0.0
    %2795 = vmatpush1.msra.mxu0 %v2483
    %2796 = vmatprep.subr.mxu0 0.0
    %2797 = vmatpush1.msra.mxu0 %v2484
    %2798 = vmatprep.subr.mxu0 0.0
    %2799 = vmatpush1.msra.mxu0 %v2485
    %2800 = vmatprep.subr.mxu0 0.0
    %2801 = vmatpush1.msra.mxu0 %v2486
    %2802 = vmatprep.subr.mxu0 0.0
    %2803 = vmatpush1.msra.mxu0 %v2487
    %2804 = vmatprep.subr.mxu0 0.0
    %2805 = vmatpush1.msra.mxu0 %v2488
    %2806 = vmatprep.subr.mxu0 0.0
    %2807 = vmatpush1.msra.mxu0 %v2489
    %2808 = vmatprep.subr.mxu0 0.0
    %2809 = vmatpush1.msra.mxu0 %v2490
    %2810 = vmatprep.subr.mxu0 0.0
    %2811 = vmatpush1.msra.mxu0 %v2491
    %2812 = vmatprep.subr.mxu0 0.0
    %2813 = vmatpush1.msra.mxu0 %v2492
    %2814 = vmatprep.subr.mxu0 0.0
    %2815 = vmatpush1.msra.mxu0 %v2493
    %2816 = vmatprep.subr.mxu0 0.0
    %2817 = vmatpush1.msra.mxu0 %v2494
    %2818 = vmatprep.subr.mxu0 0.0
    %2819 = vmatpush1.msra.mxu0 %v2495
    %2820 = vmatprep.subr.mxu0 0.0
    %2821 = vmatpush1.msra.mxu0 %v2496
    %2822 = vmatprep.subr.mxu0 0.0
    %2823 = vmatpush1.msra.mxu0 %v2497
    %2824 = vmatprep.subr.mxu0 0.0
    %2825 = vmatpush1.msra.mxu0 %v2498
    %2826 = vmatprep.subr.mxu0 0.0
    %2827 = vmatpush1.msra.mxu0 %v2499
    %2828 = vmatprep.subr.mxu0 0.0
    %2829 = vmatpush1.msra.mxu0 %v2500
    %2830 = vmatprep.subr.mxu0 0.0
    %2831 = vmatpush1.msra.mxu0 %v2501
    %2832 = vmatprep.subr.mxu0 0.0
    %2833 = vmatpush1.msra.mxu0 %v2502
    %2834 = vmatprep.subr.mxu0 0.0
    %2835 = vmatpush1.msra.mxu0 %v2503
    %2836 = vmatprep.subr.mxu0 0.0
    %2837 = vmatpush1.msra.mxu0 %v2504
    %2838 = vmatprep.subr.mxu0 0.0
    %2839 = vmatpush1.msra.mxu0 %v2505
    %2840 = vmatprep.subr.mxu0 0.0
    %2841 = vmatpush1.msra.mxu0 %v2506
    %2842 = vmatprep.subr.mxu0 0.0
    %2843 = vmatpush1.msra.mxu0 %v2507
    %2844 = vmatprep.subr.mxu0 0.0
    %2845 = vmatpush1.msra.mxu0 %v2508
    %2846 = vmatprep.subr.mxu0 0.0
    %2847 = vmatpush1.msra.mxu0 %v2509
    %2848 = vmatprep.mubr.f32.mxu0 %v2417
    %2849 = vmatmul.mubr.f32.gmra.mrb[0].mxu0 %v2416
    %v2850 = vpop.f32.mrb[0].mxu0
    %v2851 = vadd.f32 %v2776, %v2850
    %v2852 = vpop.f32.mrb[0].mxu0
    %2853 = vmatprep.mubr.f32.mxu0 %v2433
    %2854 = vmatmul.mubr.f32.gmra.mrb[0].mxu0 %v2432
    %v2855 = vpop.f32.mrb[0].mxu0
    %v2856 = vadd.f32 %v2781, %v2855
    %v2857 = vpop.f32.mrb[0].mxu0
    %2858 = vdwg.mxu0
    %2859 = vmatprep.subr.mxu0 0.0
    %2860 = vmatpush1.msra.mxu0 %v2510
    %2861 = vmatprep.subr.mxu0 0.0
    %2862 = vmatpush1.msra.mxu0 %v2511
    %2863 = vmatprep.subr.mxu0 0.0
    %2864 = vmatpush1.msra.mxu0 %v2512
    %2865 = vmatprep.subr.mxu0 0.0
    %2866 = vmatpush1.msra.mxu0 %v2513
    %2867 = vmatprep.subr.mxu0 0.0
    %2868 = vmatpush1.msra.mxu0 %v2514
    %2869 = vmatprep.subr.mxu0 0.0
    %2870 = vmatpush1.msra.mxu0 %v2515
    %2871 = vmatprep.subr.mxu0 0.0
    %2872 = vmatpush1.msra.mxu0 %v2516
    %2873 = vmatprep.subr.mxu0 0.0
    %2874 = vmatpush1.msra.mxu0 %v2517
    %2875 = vmatprep.subr.mxu0 0.0
    %2876 = vmatpush1.msra.mxu0 %v2518
    %2877 = vmatprep.subr.mxu0 0.0
    %2878 = vmatpush1.msra.mxu0 %v2519
    %2879 = vmatprep.subr.mxu0 0.0
    %2880 = vmatpush1.msra.mxu0 %v2520
    %2881 = vmatprep.subr.mxu0 0.0
    %2882 = vmatpush1.msra.mxu0 %v2521
    %2883 = vmatprep.subr.mxu0 0.0
    %2884 = vmatpush1.msra.mxu0 %v2522
    %2885 = vmatprep.subr.mxu0 0.0
    %2886 = vmatpush1.msra.mxu0 %v2523
    %2887 = vmatprep.subr.mxu0 0.0
    %2888 = vmatpush1.msra.mxu0 %v2524
    %2889 = vmatprep.subr.mxu0 0.0
    %2890 = vmatpush1.msra.mxu0 %v2525
    %2891 = vmatprep.subr.mxu0 0.0
    %2892 = vmatpush1.msra.mxu0 %v2526
    %2893 = vmatprep.subr.mxu0 0.0
    %2894 = vmatpush1.msra.mxu0 %v2527
    %2895 = vmatprep.subr.mxu0 0.0
    %2896 = vmatpush1.msra.mxu0 %v2528
    %2897 = vmatprep.subr.mxu0 0.0
    %2898 = vmatpush1.msra.mxu0 %v2529
    %2899 = vmatprep.subr.mxu0 0.0
    %2900 = vmatpush1.msra.mxu0 %v2530
    %2901 = vmatprep.subr.mxu0 0.0
    %2902 = vmatpush1.msra.mxu0 %v2531
    %2903 = vmatprep.subr.mxu0 0.0
    %2904 = vmatpush1.msra.mxu0 %v2532
    %2905 = vmatprep.subr.mxu0 0.0
    %2906 = vmatpush1.msra.mxu0 %v2533
    %2907 = vmatprep.subr.mxu0 0.0
    %2908 = vmatpush1.msra.mxu0 %v2534
    %2909 = vmatprep.subr.mxu0 0.0
    %2910 = vmatpush1.msra.mxu0 %v2535
    %2911 = vmatprep.subr.mxu0 0.0
    %2912 = vmatpush1.msra.mxu0 %v2536
    %2913 = vmatprep.subr.mxu0 0.0
    %2914 = vmatpush1.msra.mxu0 %v2537
    %2915 = vmatprep.subr.mxu0 0.0
    %2916 = vmatpush1.msra.mxu0 %v2538
    %2917 = vmatprep.subr.mxu0 0.0
    %2918 = vmatpush1.msra.mxu0 %v2539
    %2919 = vmatprep.subr.mxu0 0.0
    %2920 = vmatpush1.msra.mxu0 %v2540
    %2921 = vmatprep.subr.mxu0 0.0
    %2922 = vmatpush1.msra.mxu0 %v2541
    %2923 = vmatprep.mubr.f32.mxu0 %v2419
    %2924 = vmatmul.mubr.f32.gmra.mrb[0].mxu0 %v2418
    %v2925 = vpop.f32.mrb[0].mxu0
    %v2926 = vadd.f32 %v2851, %v2925
    %v2927 = vpop.f32.mrb[0].mxu0
    %2928 = vmatprep.mubr.f32.mxu0 %v2435
    %2929 = vmatmul.mubr.f32.gmra.mrb[0].mxu0 %v2434
    %v2930 = vpop.f32.mrb[0].mxu0
    %v2931 = vadd.f32 %v2856, %v2930
    %v2932 = vpop.f32.mrb[0].mxu0
    %2933 = vdwg.mxu0
    %2934 = vmatprep.subr.mxu0 0.0
    %2935 = vmatpush1.msra.mxu0 %v2542
    %2936 = vmatprep.subr.mxu0 0.0
    %2937 = vmatpush1.msra.mxu0 %v2543
    %2938 = vmatprep.subr.mxu0 0.0
    %2939 = vmatpush1.msra.mxu0 %v2544
    %2940 = vmatprep.subr.mxu0 0.0
    %2941 = vmatpush1.msra.mxu0 %v2545
    %2942 = vmatprep.subr.mxu0 0.0
    %2943 = vmatpush1.msra.mxu0 %v2546
    %2944 = vmatprep.subr.mxu0 0.0
    %2945 = vmatpush1.msra.mxu0 %v2547
    %2946 = vmatprep.subr.mxu0 0.0
    %2947 = vmatpush1.msra.mxu0 %v2548
    %2948 = vmatprep.subr.mxu0 0.0
    %2949 = vmatpush1.msra.mxu0 %v2549
    %2950 = vmatprep.subr.mxu0 0.0
    %2951 = vmatpush1.msra.mxu0 %v2550
    %2952 = vmatprep.subr.mxu0 0.0
    %2953 = vmatpush1.msra.mxu0 %v2551
    %2954 = vmatprep.subr.mxu0 0.0
    %2955 = vmatpush1.msra.mxu0 %v2552
    %2956 = vmatprep.subr.mxu0 0.0
    %2957 = vmatpush1.msra.mxu0 %v2553
    %2958 = vmatprep.subr.mxu0 0.0
    %2959 = vmatpush1.msra.mxu0 %v2554
    %2960 = vmatprep.subr.mxu0 0.0
    %2961 = vmatpush1.msra.mxu0 %v2555
    %2962 = vmatprep.subr.mxu0 0.0
    %2963 = vmatpush1.msra.mxu0 %v2556
    %2964 = vmatprep.subr.mxu0 0.0
    %2965 = vmatpush1.msra.mxu0 %v2557
    %2966 = vmatprep.subr.mxu0 0.0
    %2967 = vmatpush1.msra.mxu0 %v2558
    %2968 = vmatprep.subr.mxu0 0.0
    %2969 = vmatpush1.msra.mxu0 %v2559
    %2970 = vmatprep.subr.mxu0 0.0
    %2971 = vmatpush1.msra.mxu0 %v2560
    %2972 = vmatprep.subr.mxu0 0.0
    %2973 = vmatpush1.msra.mxu0 %v2561
    %2974 = vmatprep.subr.mxu0 0.0
    %2975 = vmatpush1.msra.mxu0 %v2562
    %2976 = vmatprep.subr.mxu0 0.0
    %2977 = vmatpush1.msra.mxu0 %v2563
    %2978 = vmatprep.subr.mxu0 0.0
    %2979 = vmatpush1.msra.mxu0 %v2564
    %2980 = vmatprep.subr.mxu0 0.0
    %2981 = vmatpush1.msra.mxu0 %v2565
    %2982 = vmatprep.subr.mxu0 0.0
    %2983 = vmatpush1.msra.mxu0 %v2566
    %2984 = vmatprep.subr.mxu0 0.0
    %2985 = vmatpush1.msra.mxu0 %v2567
    %2986 = vmatprep.subr.mxu0 0.0
    %2987 = vmatpush1.msra.mxu0 %v2568
    %2988 = vmatprep.subr.mxu0 0.0
    %2989 = vmatpush1.msra.mxu0 %v2569
    %2990 = vmatprep.subr.mxu0 0.0
    %2991 = vmatpush1.msra.mxu0 %v2570
    %2992 = vmatprep.subr.mxu0 0.0
    %2993 = vmatpush1.msra.mxu0 %v2571
    %2994 = vmatprep.subr.mxu0 0.0
    %2995 = vmatpush1.msra.mxu0 %v2572
    %2996 = vmatprep.subr.mxu0 0.0
    %2997 = vmatpush1.msra.mxu0 %v2573
    %2998 = vmatprep.mubr.f32.mxu0 %v2421
    %2999 = vmatmul.mubr.f32.gmra.mrb[0].mxu0 %v2420
    %v3000 = vpop.f32.mrb[0].mxu0
    %v3001 = vadd.f32 %v2926, %v3000
    %v3002 = vpop.f32.mrb[0].mxu0
    %3003 = vmatprep.mubr.f32.mxu0 %v2437
    %3004 = vmatmul.mubr.f32.gmra.mrb[0].mxu0 %v2436
    %v3005 = vpop.f32.mrb[0].mxu0
    %v3006 = vadd.f32 %v2931, %v3005
    %v3007 = vpop.f32.mrb[0].mxu0
    %3008 = vdwg.mxu0
    %3009 = vmatprep.subr.mxu0 0.0
    %3010 = vmatpush1.msra.mxu0 %v2574
    %3011 = vmatprep.subr.mxu0 0.0
    %3012 = vmatpush1.msra.mxu0 %v2575
    %3013 = vmatprep.subr.mxu0 0.0
    %3014 = vmatpush1.msra.mxu0 %v2576
    %3015 = vmatprep.subr.mxu0 0.0
    %3016 = vmatpush1.msra.mxu0 %v2577
    %3017 = vmatprep.subr.mxu0 0.0
    %3018 = vmatpush1.msra.mxu0 %v2578
    %3019 = vmatprep.subr.mxu0 0.0
    %3020 = vmatpush1.msra.mxu0 %v2579
    %3021 = vmatprep.subr.mxu0 0.0
    %3022 = vmatpush1.msra.mxu0 %v2580
    %3023 = vmatprep.subr.mxu0 0.0
    %3024 = vmatpush1.msra.mxu0 %v2581
    %3025 = vmatprep.subr.mxu0 0.0
    %3026 = vmatpush1.msra.mxu0 %v2582
    %3027 = vmatprep.subr.mxu0 0.0
    %3028 = vmatpush1.msra.mxu0 %v2583
    %3029 = vmatprep.subr.mxu0 0.0
    %3030 = vmatpush1.msra.mxu0 %v2584
    %3031 = vmatprep.subr.mxu0 0.0
    %3032 = vmatpush1.msra.mxu0 %v2585
    %3033 = vmatprep.subr.mxu0 0.0
    %3034 = vmatpush1.msra.mxu0 %v2586
    %3035 = vmatprep.subr.mxu0 0.0
    %3036 = vmatpush1.msra.mxu0 %v2587
    %3037 = vmatprep.subr.mxu0 0.0
    %3038 = vmatpush1.msra.mxu0 %v2588
    %3039 = vmatprep.subr.mxu0 0.0
    %3040 = vmatpush1.msra.mxu0 %v2589
    %3041 = vmatprep.subr.mxu0 0.0
    %3042 = vmatpush1.msra.mxu0 %v2590
    %3043 = vmatprep.subr.mxu0 0.0
    %3044 = vmatpush1.msra.mxu0 %v2591
    %3045 = vmatprep.subr.mxu0 0.0
    %3046 = vmatpush1.msra.mxu0 %v2592
    %3047 = vmatprep.subr.mxu0 0.0
    %3048 = vmatpush1.msra.mxu0 %v2593
    %3049 = vmatprep.subr.mxu0 0.0
    %3050 = vmatpush1.msra.mxu0 %v2594
    %3051 = vmatprep.subr.mxu0 0.0
    %3052 = vmatpush1.msra.mxu0 %v2595
    %3053 = vmatprep.subr.mxu0 0.0
    %3054 = vmatpush1.msra.mxu0 %v2596
    %3055 = vmatprep.subr.mxu0 0.0
    %3056 = vmatpush1.msra.mxu0 %v2597
    %3057 = vmatprep.subr.mxu0 0.0
    %3058 = vmatpush1.msra.mxu0 %v2598
    %3059 = vmatprep.subr.mxu0 0.0
    %3060 = vmatpush1.msra.mxu0 %v2599
    %3061 = vmatprep.subr.mxu0 0.0
    %3062 = vmatpush1.msra.mxu0 %v2600
    %3063 = vmatprep.subr.mxu0 0.0
    %3064 = vmatpush1.msra.mxu0 %v2601
    %3065 = vmatprep.subr.mxu0 0.0
    %3066 = vmatpush1.msra.mxu0 %v2602
    %3067 = vmatprep.subr.mxu0 0.0
    %3068 = vmatpush1.msra.mxu0 %v2603
    %3069 = vmatprep.subr.mxu0 0.0
    %3070 = vmatpush1.msra.mxu0 %v2604
    %3071 = vmatprep.subr.mxu0 0.0
    %3072 = vmatpush1.msra.mxu0 %v2605
    %3073 = vmatprep.mubr.f32.mxu0 %v2423
    %3074 = vmatmul.mubr.f32.gmra.mrb[0].mxu0 %v2422
    %v3075 = vpop.f32.mrb[0].mxu0
    %v3076 = vadd.f32 %v3001, %v3075
    %v3077 = vpop.f32.mrb[0].mxu0
    %3078 = vmatprep.mubr.f32.mxu0 %v2439
    %3079 = vmatmul.mubr.f32.gmra.mrb[0].mxu0 %v2438
    %v3080 = vpop.f32.mrb[0].mxu0
    %v3081 = vadd.f32 %v3006, %v3080
    %v3082 = vpop.f32.mrb[0].mxu0
    %3083 = vdwg.mxu0
    %3084 = vmatprep.subr.mxu0 0.0
    %3085 = vmatpush1.msra.mxu0 %v2606
    %3086 = vmatprep.subr.mxu0 0.0
    %3087 = vmatpush1.msra.mxu0 %v2607
    %3088 = vmatprep.subr.mxu0 0.0
    %3089 = vmatpush1.msra.mxu0 %v2608
    %3090 = vmatprep.subr.mxu0 0.0
    %3091 = vmatpush1.msra.mxu0 %v2609
    %3092 = vmatprep.subr.mxu0 0.0
    %3093 = vmatpush1.msra.mxu0 %v2610
    %3094 = vmatprep.subr.mxu0 0.0
    %3095 = vmatpush1.msra.mxu0 %v2611
    %3096 = vmatprep.subr.mxu0 0.0
    %3097 = vmatpush1.msra.mxu0 %v2612
    %3098 = vmatprep.subr.mxu0 0.0
    %3099 = vmatpush1.msra.mxu0 %v2613
    %3100 = vmatprep.subr.mxu0 0.0
    %3101 = vmatpush1.msra.mxu0 %v2614
    %3102 = vmatprep.subr.mxu0 0.0
    %3103 = vmatpush1.msra.mxu0 %v2615
    %3104 = vmatprep.subr.mxu0 0.0
    %3105 = vmatpush1.msra.mxu0 %v2616
    %3106 = vmatprep.subr.mxu0 0.0
    %3107 = vmatpush1.msra.mxu0 %v2617
    %3108 = vmatprep.subr.mxu0 0.0
    %3109 = vmatpush1.msra.mxu0 %v2618
    %3110 = vmatprep.subr.mxu0 0.0
    %3111 = vmatpush1.msra.mxu0 %v2619
    %3112 = vmatprep.subr.mxu0 0.0
    %3113 = vmatpush1.msra.mxu0 %v2620
    %3114 = vmatprep.subr.mxu0 0.0
    %3115 = vmatpush1.msra.mxu0 %v2621
    %3116 = vmatprep.subr.mxu0 0.0
    %3117 = vmatpush1.msra.mxu0 %v2622
    %3118 = vmatprep.subr.mxu0 0.0
    %3119 = vmatpush1.msra.mxu0 %v2623
    %3120 = vmatprep.subr.mxu0 0.0
    %3121 = vmatpush1.msra.mxu0 %v2624
    %3122 = vmatprep.subr.mxu0 0.0
    %3123 = vmatpush1.msra.mxu0 %v2625
    %3124 = vmatprep.subr.mxu0 0.0
    %3125 = vmatpush1.msra.mxu0 %v2626
    %3126 = vmatprep.subr.mxu0 0.0
    %3127 = vmatpush1.msra.mxu0 %v2627
    %3128 = vmatprep.subr.mxu0 0.0
    %3129 = vmatpush1.msra.mxu0 %v2628
    %3130 = vmatprep.subr.mxu0 0.0
    %3131 = vmatpush1.msra.mxu0 %v2629
    %3132 = vmatprep.subr.mxu0 0.0
    %3133 = vmatpush1.msra.mxu0 %v2630
    %3134 = vmatprep.subr.mxu0 0.0
    %3135 = vmatpush1.msra.mxu0 %v2631
    %3136 = vmatprep.subr.mxu0 0.0
    %3137 = vmatpush1.msra.mxu0 %v2632
    %3138 = vmatprep.subr.mxu0 0.0
    %3139 = vmatpush1.msra.mxu0 %v2633
    %3140 = vmatprep.subr.mxu0 0.0
    %3141 = vmatpush1.msra.mxu0 %v2634
    %3142 = vmatprep.subr.mxu0 0.0
    %3143 = vmatpush1.msra.mxu0 %v2635
    %3144 = vmatprep.subr.mxu0 0.0
    %3145 = vmatpush1.msra.mxu0 %v2636
    %3146 = vmatprep.subr.mxu0 0.0
    %3147 = vmatpush1.msra.mxu0 %v2637
    %3148 = vmatprep.mubr.f32.mxu0 %v2425
    %3149 = vmatmul.mubr.f32.gmra.mrb[0].mxu0 %v2424
    %v3150 = vpop.f32.mrb[0].mxu0
    %v3151 = vadd.f32 %v3076, %v3150
    %v3152 = vpop.f32.mrb[0].mxu0
    %3153 = vmatprep.mubr.f32.mxu0 %v2441
    %3154 = vmatmul.mubr.f32.gmra.mrb[0].mxu0 %v2440
    %v3155 = vpop.f32.mrb[0].mxu0
    %v3156 = vadd.f32 %v3081, %v3155
    %v3157 = vpop.f32.mrb[0].mxu0
    %3158 = vdwg.mxu0
    %3159 = vmatprep.subr.mxu0 0.0
    %3160 = vmatpush1.msra.mxu0 %v2638
    %3161 = vmatprep.subr.mxu0 0.0
    %3162 = vmatpush1.msra.mxu0 %v2639
    %3163 = vmatprep.subr.mxu0 0.0
    %3164 = vmatpush1.msra.mxu0 %v2640
    %3165 = vmatprep.subr.mxu0 0.0
    %3166 = vmatpush1.msra.mxu0 %v2641
    %3167 = vmatprep.subr.mxu0 0.0
    %3168 = vmatpush1.msra.mxu0 %v2642
    %3169 = vmatprep.subr.mxu0 0.0
    %3170 = vmatpush1.msra.mxu0 %v2643
    %3171 = vmatprep.subr.mxu0 0.0
    %3172 = vmatpush1.msra.mxu0 %v2644
    %3173 = vmatprep.subr.mxu0 0.0
    %3174 = vmatpush1.msra.mxu0 %v2645
    %3175 = vmatprep.subr.mxu0 0.0
    %3176 = vmatpush1.msra.mxu0 %v2646
    %3177 = vmatprep.subr.mxu0 0.0
    %3178 = vmatpush1.msra.mxu0 %v2647
    %3179 = vmatprep.subr.mxu0 0.0
    %3180 = vmatpush1.msra.mxu0 %v2648
    %3181 = vmatprep.subr.mxu0 0.0
    %3182 = vmatpush1.msra.mxu0 %v2649
    %3183 = vmatprep.subr.mxu0 0.0
    %3184 = vmatpush1.msra.mxu0 %v2650
    %3185 = vmatprep.subr.mxu0 0.0
    %3186 = vmatpush1.msra.mxu0 %v2651
    %3187 = vmatprep.subr.mxu0 0.0
    %3188 = vmatpush1.msra.mxu0 %v2652
    %3189 = vmatprep.subr.mxu0 0.0
    %3190 = vmatpush1.msra.mxu0 %v2653
    %3191 = vmatprep.subr.mxu0 0.0
    %3192 = vmatpush1.msra.mxu0 %v2654
    %3193 = vmatprep.subr.mxu0 0.0
    %3194 = vmatpush1.msra.mxu0 %v2655
    %3195 = vmatprep.subr.mxu0 0.0
    %3196 = vmatpush1.msra.mxu0 %v2656
    %3197 = vmatprep.subr.mxu0 0.0
    %3198 = vmatpush1.msra.mxu0 %v2657
    %3199 = vmatprep.subr.mxu0 0.0
    %3200 = vmatpush1.msra.mxu0 %v2658
    %3201 = vmatprep.subr.mxu0 0.0
    %3202 = vmatpush1.msra.mxu0 %v2659
    %3203 = vmatprep.subr.mxu0 0.0
    %3204 = vmatpush1.msra.mxu0 %v2660
    %3205 = vmatprep.subr.mxu0 0.0
    %3206 = vmatpush1.msra.mxu0 %v2661
    %3207 = vmatprep.subr.mxu0 0.0
    %3208 = vmatpush1.msra.mxu0 %v2662
    %3209 = vmatprep.subr.mxu0 0.0
    %3210 = vmatpush1.msra.mxu0 %v2663
    %3211 = vmatprep.subr.mxu0 0.0
    %3212 = vmatpush1.msra.mxu0 %v2664
    %3213 = vmatprep.subr.mxu0 0.0
    %3214 = vmatpush1.msra.mxu0 %v2665
    %3215 = vmatprep.subr.mxu0 0.0
    %3216 = vmatpush1.msra.mxu0 %v2666
    %3217 = vmatprep.subr.mxu0 0.0
    %3218 = vmatpush1.msra.mxu0 %v2667
    %3219 = vmatprep.subr.mxu0 0.0
    %3220 = vmatpush1.msra.mxu0 %v2668
    %3221 = vmatprep.subr.mxu0 0.0
    %3222 = vmatpush1.msra.mxu0 %v2669
    %3223 = vmatprep.mubr.f32.mxu0 %v2427
    %3224 = vmatmul.mubr.f32.gmra.mrb[0].mxu0 %v2426
    %v3225 = vpop.f32.mrb[0].mxu0
    %v3226 = vadd.f32 %v3151, %v3225
    %v3227 = vpop.f32.mrb[0].mxu0
    %3228 = vmatprep.mubr.f32.mxu0 %v2443
    %3229 = vmatmul.mubr.f32.gmra.mrb[0].mxu0 %v2442
    %v3230 = vpop.f32.mrb[0].mxu0
    %v3231 = vadd.f32 %v3156, %v3230
    %v3232 = vpop.f32.mrb[0].mxu0
    %3233 = vdwg.mxu0
    %3234 = vmatprep.subr.mxu0 0.0
    %3235 = vmatpush1.msra.mxu0 %v2670
    %3236 = vmatprep.subr.mxu0 0.0
    %3237 = vmatpush1.msra.mxu0 %v2671
    %3238 = vmatprep.subr.mxu0 0.0
    %3239 = vmatpush1.msra.mxu0 %v2672
    %3240 = vmatprep.subr.mxu0 0.0
    %3241 = vmatpush1.msra.mxu0 %v2673
    %3242 = vmatprep.subr.mxu0 0.0
    %3243 = vmatpush1.msra.mxu0 %v2674
    %3244 = vmatprep.subr.mxu0 0.0
    %3245 = vmatpush1.msra.mxu0 %v2675
    %3246 = vmatprep.subr.mxu0 0.0
    %3247 = vmatpush1.msra.mxu0 %v2676
    %3248 = vmatprep.subr.mxu0 0.0
    %3249 = vmatpush1.msra.mxu0 %v2677
    %3250 = vmatprep.subr.mxu0 0.0
    %3251 = vmatpush1.msra.mxu0 %v2678
    %3252 = vmatprep.subr.mxu0 0.0
    %3253 = vmatpush1.msra.mxu0 %v2679
    %3254 = vmatprep.subr.mxu0 0.0
    %3255 = vmatpush1.msra.mxu0 %v2680
    %3256 = vmatprep.subr.mxu0 0.0
    %3257 = vmatpush1.msra.mxu0 %v2681
    %3258 = vmatprep.subr.mxu0 0.0
    %3259 = vmatpush1.msra.mxu0 %v2682
    %3260 = vmatprep.subr.mxu0 0.0
    %3261 = vmatpush1.msra.mxu0 %v2683
    %3262 = vmatprep.subr.mxu0 0.0
    %3263 = vmatpush1.msra.mxu0 %v2684
    %3264 = vmatprep.subr.mxu0 0.0
    %3265 = vmatpush1.msra.mxu0 %v2685
    %3266 = vmatprep.subr.mxu0 0.0
    %3267 = vmatpush1.msra.mxu0 %v2686
    %3268 = vmatprep.subr.mxu0 0.0
    %3269 = vmatpush1.msra.mxu0 %v2687
    %3270 = vmatprep.subr.mxu0 0.0
    %3271 = vmatpush1.msra.mxu0 %v2688
    %3272 = vmatprep.subr.mxu0 0.0
    %3273 = vmatpush1.msra.mxu0 %v2689
    %3274 = vmatprep.subr.mxu0 0.0
    %3275 = vmatpush1.msra.mxu0 %v2690
    %3276 = vmatprep.subr.mxu0 0.0
    %3277 = vmatpush1.msra.mxu0 %v2691
    %3278 = vmatprep.subr.mxu0 0.0
    %3279 = vmatpush1.msra.mxu0 %v2692
    %3280 = vmatprep.subr.mxu0 0.0
    %3281 = vmatpush1.msra.mxu0 %v2693
    %3282 = vmatprep.subr.mxu0 0.0
    %3283 = vmatpush1.msra.mxu0 %v2694
    %3284 = vmatprep.subr.mxu0 0.0
    %3285 = vmatpush1.msra.mxu0 %v2695
    %3286 = vmatprep.subr.mxu0 0.0
    %3287 = vmatpush1.msra.mxu0 %v2696
    %3288 = vmatprep.subr.mxu0 0.0
    %3289 = vmatpush1.msra.mxu0 %v2697
    %3290 = vmatprep.subr.mxu0 0.0
    %3291 = vmatpush1.msra.mxu0 %v2698
    %3292 = vmatprep.subr.mxu0 0.0
    %3293 = vmatpush1.msra.mxu0 %v2699
    %3294 = vmatprep.subr.mxu0 0.0
    %3295 = vmatpush1.msra.mxu0 %v2700
    %3296 = vmatprep.subr.mxu0 0.0
    %3297 = vmatpush1.msra.mxu0 %v2701
    %3298 = vmatprep.mubr.f32.mxu0 %v2429
    %3299 = vmatmul.mubr.f32.gmra.mrb[0].mxu0 %v2428
    %v3300 = vpop.f32.mrb[0].mxu0
    %v3301 = vadd.f32 %v3226, %v3300
    %v3302 = vpop.f32.mrb[0].mxu0
    %3303 = vmatprep.mubr.f32.mxu0 %v2445
    %3304 = vmatmul.mubr.f32.gmra.mrb[0].mxu0 %v2444
    %v3305 = vpop.f32.mrb[0].mxu0
    %v3306 = vadd.f32 %v3231, %v3305
    %v3307 = vpop.f32.mrb[0].mxu0
    %3308 = vdwg.mxu0
    %v3309 = vadd.f32 %v1642, %v3301
    %v3310 = vadd.f32 %v1643, %v3306
    %v3311 = vld [vmem:[%s11] sm:$0x1]
    %v3312 = vld [vmem:[%s12] sm:$0x1]
    %v3313 = vsel %vm64, %v3309, 0.0
    %3314 = vadd.xlane.f32.xlu0 %v3313
    %v3315 = vpop.xlane.xlu0 %3314
    %v3316 = vsel %vm64, %v3310, 0.0
    %3317 = vadd.xlane.f32.xlu0 %v3316
    %v3318 = vpop.xlane.xlu0 %3317
    %v3319 = vmul.f32 %v3315, %v1607
    %v3320 = vmul.f32 %v3318, %v1607
    %v3321 = vsub.f32 %v3309, %v3319
    %v3322 = vsub.f32 %v3310, %v3320
    %v3323 = vmul.f32 %v3321, %v3321
    %v3324 = vmul.f32 %v3322, %v3322
    %v3325 = vsel %vm64, %v3323, 0.0
    %3326 = vadd.xlane.f32.xlu0 %v3325
    %v3327 = vpop.xlane.xlu0 %3326
    %v3328 = vsel %vm64, %v3324, 0.0
    %3329 = vadd.xlane.f32.xlu0 %v3328
    %v3330 = vpop.xlane.xlu0 %3329
    %v3331 = vmul.f32 %v3327, %v1607
    %v3332 = vmul.f32 %v3330, %v1607
    %v3333 = vadd.f32 %v3331, 1e-05
    %v3334 = vadd.f32 %v3332, 1e-05
    %v3335 = vrsqrt.pop %v3333
    %v3336 = vrsqrt.pop %v3334
    %v3337 = vmul.f32 %v3321, %v3335
    %v3338 = vmul.f32 %v3322, %v3336
    %v3340 = vlaneseq
    %v3341 = vshrl.u32 %v3340, 7
    %v3342 = vsub.s32 0, %v3341
    %v3343 = vrot.slane %v3311, %v3342
    %v3345 = vmul.f32 %v3337, %v3343
    %v3346 = vmul.f32 %v3338, %v3343
    %v3348 = vlaneseq
    %v3349 = vshrl.u32 %v3348, 7
    %v3350 = vsub.s32 0, %v3349
    %v3351 = vrot.slane %v3312, %v3350
    %v3353 = vadd.f32 %v3345, %v3351
    %v3354 = vadd.f32 %v3346, %v3351
    %s3355 = scalar_lea.vmem %s1, 32
    %v3356 = vld [vmem:[%s3355] sm:$0xff]
    %v3357 = vld [vmem:[%s3355 + $0x8] sm:$0xff]
    %v3358 = vld [vmem:[%s3355 + $0x10] sm:$0xff]
    %v3359 = vld [vmem:[%s3355 + $0x18] sm:$0xff]
    %s3360 = scalar_lea.vmem %s2, 1
    %v3361 = vld [vmem:[%s3360] sm:$0x1]
    %v3363 = vlaneseq
    %v3364 = vshrl.u32 %v3363, 7
    %v3365 = vsub.s32 0, %v3364
    %v3366 = vrot.slane %v3361, %v3365
    %v3369 = vsel %vm64, %v3353, 0
    %v3372 = vsel %vm64, %v3354, 0
    %3374 = vmatprep.subr.mxu0 0.0
    %3375 = vmatpush1.msra.mxu0 %v3356
    %3376 = vmatprep.subr.mxu0 0.0
    %3377 = vmatpush1.msra.mxu0 %v3357
    %3378 = vmatprep.subr.mxu0 0.0
    %3379 = vmatpush1.msra.mxu0 %v3358
    %3380 = vmatprep.subr.mxu0 0.0
    %3381 = vmatpush1.msra.mxu0 %v3359
    %3382 = vmatprep.subr.mxu0 0.0
    %3383 = vmatpush1.msra.mxu0 0.0
    %3384 = vmatprep.subr.mxu0 0.0
    %3385 = vmatpush1.msra.mxu0 0.0
    %3386 = vmatprep.subr.mxu0 0.0
    %3387 = vmatpush1.msra.mxu0 0.0
    %3388 = vmatprep.subr.mxu0 0.0
    %3389 = vmatpush1.msra.mxu0 0.0
    %3390 = vmatprep.subr.mxu0 0.0
    %3391 = vmatpush1.msra.mxu0 0.0
    %3392 = vmatprep.subr.mxu0 0.0
    %3393 = vmatpush1.msra.mxu0 0.0
    %3394 = vmatprep.subr.mxu0 0.0
    %3395 = vmatpush1.msra.mxu0 0.0
    %3396 = vmatprep.subr.mxu0 0.0
    %3397 = vmatpush1.msra.mxu0 0.0
    %3398 = vmatprep.subr.mxu0 0.0
    %3399 = vmatpush1.msra.mxu0 0.0
    %3400 = vmatprep.subr.mxu0 0.0
    %3401 = vmatpush1.msra.mxu0 0.0
    %3402 = vmatprep.subr.mxu0 0.0
    %3403 = vmatpush1.msra.mxu0 0.0
    %3404 = vmatprep.subr.mxu0 0.0
    %3405 = vmatpush1.msra.mxu0 0.0
    %3406 = vmatprep.subr.mxu0 0.0
    %3407 = vmatpush1.msra.mxu0 0.0
    %3408 = vmatprep.subr.mxu0 0.0
    %3409 = vmatpush1.msra.mxu0 0.0
    %3410 = vmatprep.subr.mxu0 0.0
    %3411 = vmatpush1.msra.mxu0 0.0
    %3412 = vmatprep.subr.mxu0 0.0
    %3413 = vmatpush1.msra.mxu0 0.0
    %3414 = vmatprep.subr.mxu0 0.0
    %3415 = vmatpush1.msra.mxu0 0.0
    %3416 = vmatprep.subr.mxu0 0.0
    %3417 = vmatpush1.msra.mxu0 0.0
    %3418 = vmatprep.subr.mxu0 0.0
    %3419 = vmatpush1.msra.mxu0 0.0
    %3420 = vmatprep.subr.mxu0 0.0
    %3421 = vmatpush1.msra.mxu0 0.0
    %3422 = vmatprep.subr.mxu0 0.0
    %3423 = vmatpush1.msra.mxu0 0.0
    %3424 = vmatprep.subr.mxu0 0.0
    %3425 = vmatpush1.msra.mxu0 0.0
    %3426 = vmatprep.subr.mxu0 0.0
    %3427 = vmatpush1.msra.mxu0 0.0
    %3428 = vmatprep.subr.mxu0 0.0
    %3429 = vmatpush1.msra.mxu0 0.0
    %3430 = vmatprep.subr.mxu0 0.0
    %3431 = vmatpush1.msra.mxu0 0.0
    %3432 = vmatprep.subr.mxu0 0.0
    %3433 = vmatpush1.msra.mxu0 0.0
    %3434 = vmatprep.subr.mxu0 0.0
    %3435 = vmatpush1.msra.mxu0 0.0
    %3436 = vmatprep.subr.mxu0 0.0
    %3437 = vmatpush1.msra.mxu0 0.0
    %3438 = vmatprep.mubr.f32.mxu0 0.0
    %3439 = vmatmul.mubr.f32.gmra.mrb[0].mxu0 %v3369
    %v3440 = vpop.f32.mrb[0].mxu0
    %v3441 = vadd.f32 %v3366, %v3440
    %v3442 = vpop.f32.mrb[0].mxu0
    %3443 = vmatprep.mubr.f32.mxu0 0.0
    %3444 = vmatmul.mubr.f32.gmra.mrb[0].mxu0 %v3372
    %v3445 = vpop.f32.mrb[0].mxu0
    %v3446 = vadd.f32 %v3366, %v3445
    %v3447 = vpop.f32.mrb[0].mxu0
    %3448 = vdwg.mxu0
    %3450 = vrot.lane.b32.xlu0 %v3441, 96
    %v3451 = vpop.permute.xlu0 %3450
    %v3452 = vsel %vm149, %v3441, 0
    %v3454 = vsel %vm149, %v3451, 0
    %3456 = vmatprep.subr.mxu0 0.0
    %3457 = vmatpush1.xpose.msra.mxu0 %v3454
    %3458 = vmatprep.subr.mxu0 0.0
    %3459 = vmatpush1.xpose.msra.mxu0 0.0
    %3460 = vmatprep.subr.mxu0 0.0
    %3461 = vmatpush1.xpose.msra.mxu0 0.0
    %3462 = vmatprep.subr.mxu0 0.0
    %3463 = vmatpush1.xpose.msra.mxu0 0.0
    %3464 = vmatprep.subr.mxu0 0.0
    %3465 = vmatpush1.xpose.msra.mxu0 0.0
    %3466 = vmatprep.subr.mxu0 0.0
    %3467 = vmatpush1.xpose.msra.mxu0 0.0
    %3468 = vmatprep.subr.mxu0 0.0
    %3469 = vmatpush1.xpose.msra.mxu0 0.0
    %3470 = vmatprep.subr.mxu0 0.0
    %3471 = vmatpush1.xpose.msra.mxu0 0.0
    %3472 = vmatprep.subr.mxu0 0.0
    %3473 = vmatpush1.xpose.msra.mxu0 0.0
    %3474 = vmatprep.subr.mxu0 0.0
    %3475 = vmatpush1.xpose.msra.mxu0 0.0
    %3476 = vmatprep.subr.mxu0 0.0
    %3477 = vmatpush1.xpose.msra.mxu0 0.0
    %3478 = vmatprep.subr.mxu0 0.0
    %3479 = vmatpush1.xpose.msra.mxu0 0.0
    %3480 = vmatprep.subr.mxu0 0.0
    %3481 = vmatpush1.xpose.msra.mxu0 0.0
    %3482 = vmatprep.subr.mxu0 0.0
    %3483 = vmatpush1.xpose.msra.mxu0 0.0
    %3484 = vmatprep.subr.mxu0 0.0
    %3485 = vmatpush1.xpose.msra.mxu0 0.0
    %3486 = vmatprep.subr.mxu0 0.0
    %3487 = vmatpush1.xpose.msra.mxu0 0.0
    %3488 = vmatprep.subr.mxu0 0.0
    %3489 = vmatpush1.xpose.msra.mxu0 0.0
    %3490 = vmatprep.subr.mxu0 0.0
    %3491 = vmatpush1.xpose.msra.mxu0 0.0
    %3492 = vmatprep.subr.mxu0 0.0
    %3493 = vmatpush1.xpose.msra.mxu0 0.0
    %3494 = vmatprep.subr.mxu0 0.0
    %3495 = vmatpush1.xpose.msra.mxu0 0.0
    %3496 = vmatprep.subr.mxu0 0.0
    %3497 = vmatpush1.xpose.msra.mxu0 0.0
    %3498 = vmatprep.subr.mxu0 0.0
    %3499 = vmatpush1.xpose.msra.mxu0 0.0
    %3500 = vmatprep.subr.mxu0 0.0
    %3501 = vmatpush1.xpose.msra.mxu0 0.0
    %3502 = vmatprep.subr.mxu0 0.0
    %3503 = vmatpush1.xpose.msra.mxu0 0.0
    %3504 = vmatprep.subr.mxu0 0.0
    %3505 = vmatpush1.xpose.msra.mxu0 0.0
    %3506 = vmatprep.subr.mxu0 0.0
    %3507 = vmatpush1.xpose.msra.mxu0 0.0
    %3508 = vmatprep.subr.mxu0 0.0
    %3509 = vmatpush1.xpose.msra.mxu0 0.0
    %3510 = vmatprep.subr.mxu0 0.0
    %3511 = vmatpush1.xpose.msra.mxu0 0.0
    %3512 = vmatprep.subr.mxu0 0.0
    %3513 = vmatpush1.xpose.msra.mxu0 0.0
    %3514 = vmatprep.subr.mxu0 0.0
    %3515 = vmatpush1.xpose.msra.mxu0 0.0
    %3516 = vmatprep.subr.mxu0 0.0
    %3517 = vmatpush1.xpose.msra.mxu0 0.0
    %3518 = vmatprep.subr.mxu0 0.0
    %3519 = vmatpush1.xpose.msra.mxu0 0.0
    %3520 = vmatprep.mubr.f32.mxu0 0.0
    %3521 = vmatmul.mubr.f32.gmra.mrb[0].mxu0 %v3452
    %v3522 = vpop.f32.mrb[0].mxu0
    %v3523 = vadd.f32 0.0, %v3522
    %v3524 = vpop.f32.mrb[0].mxu0
    %3525 = vdwg.mxu0
    %v3526 = vmul.f32 %v3523, 0.35355338
    %v3527 = vsel %vm149, %v3526, -inf
    %3528 = vmax.xlane.f32.xlu0 %v3527
    %v3529 = vpop.xlane.xlu0 %3528
    %v3530 = vsub.f32 %v3526, %v3529
    %v3531 = vmul.f32 %v3530, 1.442695
    %v3532 = vpow.pop %v3531
    %v3533 = vsel %vm149, %v3532, 0.0
    %3534 = vadd.xlane.f32.xlu0 %v3533
    %v3535 = vpop.xlane.xlu0 %3534
    %v3536 = vrcp.pop %v3535
    %v3537 = vmul.f32 %v3532, %v3536
    %3538 = vrot.lane.b32.xlu0 %v3441, 64
    %v3539 = vpop.permute.xlu0 %3538
    %v3542 = vsel %vm149, %v3537, 0
    %3544 = vmatprep.subr.mxu0 0.0
    %3545 = vmatpush1.msra.mxu0 %v3539
    %3546 = vmatprep.subr.mxu0 0.0
    %3547 = vmatpush1.msra.mxu0 0.0
    %3548 = vmatprep.subr.mxu0 0.0
    %3549 = vmatpush1.msra.mxu0 0.0
    %3550 = vmatprep.subr.mxu0 0.0
    %3551 = vmatpush1.msra.mxu0 0.0
    %3552 = vmatprep.subr.mxu0 0.0
    %3553 = vmatpush1.msra.mxu0 0.0
    %3554 = vmatprep.subr.mxu0 0.0
    %3555 = vmatpush1.msra.mxu0 0.0
    %3556 = vmatprep.subr.mxu0 0.0
    %3557 = vmatpush1.msra.mxu0 0.0
    %3558 = vmatprep.subr.mxu0 0.0
    %3559 = vmatpush1.msra.mxu0 0.0
    %3560 = vmatprep.subr.mxu0 0.0
    %3561 = vmatpush1.msra.mxu0 0.0
    %3562 = vmatprep.subr.mxu0 0.0
    %3563 = vmatpush1.msra.mxu0 0.0
    %3564 = vmatprep.subr.mxu0 0.0
    %3565 = vmatpush1.msra.mxu0 0.0
    %3566 = vmatprep.subr.mxu0 0.0
    %3567 = vmatpush1.msra.mxu0 0.0
    %3568 = vmatprep.subr.mxu0 0.0
    %3569 = vmatpush1.msra.mxu0 0.0
    %3570 = vmatprep.subr.mxu0 0.0
    %3571 = vmatpush1.msra.mxu0 0.0
    %3572 = vmatprep.subr.mxu0 0.0
    %3573 = vmatpush1.msra.mxu0 0.0
    %3574 = vmatprep.subr.mxu0 0.0
    %3575 = vmatpush1.msra.mxu0 0.0
    %3576 = vmatprep.subr.mxu0 0.0
    %3577 = vmatpush1.msra.mxu0 0.0
    %3578 = vmatprep.subr.mxu0 0.0
    %3579 = vmatpush1.msra.mxu0 0.0
    %3580 = vmatprep.subr.mxu0 0.0
    %3581 = vmatpush1.msra.mxu0 0.0
    %3582 = vmatprep.subr.mxu0 0.0
    %3583 = vmatpush1.msra.mxu0 0.0
    %3584 = vmatprep.subr.mxu0 0.0
    %3585 = vmatpush1.msra.mxu0 0.0
    %3586 = vmatprep.subr.mxu0 0.0
    %3587 = vmatpush1.msra.mxu0 0.0
    %3588 = vmatprep.subr.mxu0 0.0
    %3589 = vmatpush1.msra.mxu0 0.0
    %3590 = vmatprep.subr.mxu0 0.0
    %3591 = vmatpush1.msra.mxu0 0.0
    %3592 = vmatprep.subr.mxu0 0.0
    %3593 = vmatpush1.msra.mxu0 0.0
    %3594 = vmatprep.subr.mxu0 0.0
    %3595 = vmatpush1.msra.mxu0 0.0
    %3596 = vmatprep.subr.mxu0 0.0
    %3597 = vmatpush1.msra.mxu0 0.0
    %3598 = vmatprep.subr.mxu0 0.0
    %3599 = vmatpush1.msra.mxu0 0.0
    %3600 = vmatprep.subr.mxu0 0.0
    %3601 = vmatpush1.msra.mxu0 0.0
    %3602 = vmatprep.subr.mxu0 0.0
    %3603 = vmatpush1.msra.mxu0 0.0
    %3604 = vmatprep.subr.mxu0 0.0
    %3605 = vmatpush1.msra.mxu0 0.0
    %3606 = vmatprep.subr.mxu0 0.0
    %3607 = vmatpush1.msra.mxu0 0.0
    %3608 = vmatprep.mubr.f32.mxu0 0.0
    %3609 = vmatmul.mubr.f32.gmra.mrb[0].mxu0 %v3542
    %v3610 = vpop.f32.mrb[0].mxu0
    %v3611 = vadd.f32 0.0, %v3610
    %v3612 = vpop.f32.mrb[0].mxu0
    %3613 = vdwg.mxu0
    %3614 = vrot.lane.b32.xlu0 %v3441, 120
    %v3615 = vpop.permute.xlu0 %3614
    %3616 = vrot.lane.b32.xlu0 %v3441, 88
    %v3617 = vpop.permute.xlu0 %3616
    %v3618 = vsel %vm149, %v3615, 0
    %v3620 = vsel %vm149, %v3617, 0
    %3622 = vmatprep.subr.mxu0 0.0
    %3623 = vmatpush1.xpose.msra.mxu0 %v3620
    %3624 = vmatprep.subr.mxu0 0.0
    %3625 = vmatpush1.xpose.msra.mxu0 0.0
    %3626 = vmatprep.subr.mxu0 0.0
    %3627 = vmatpush1.xpose.msra.mxu0 0.0
    %3628 = vmatprep.subr.mxu0 0.0
    %3629 = vmatpush1.xpose.msra.mxu0 0.0
    %3630 = vmatprep.subr.mxu0 0.0
    %3631 = vmatpush1.xpose.msra.mxu0 0.0
    %3632 = vmatprep.subr.mxu0 0.0
    %3633 = vmatpush1.xpose.msra.mxu0 0.0
    %3634 = vmatprep.subr.mxu0 0.0
    %3635 = vmatpush1.xpose.msra.mxu0 0.0
    %3636 = vmatprep.subr.mxu0 0.0
    %3637 = vmatpush1.xpose.msra.mxu0 0.0
    %3638 = vmatprep.subr.mxu0 0.0
    %3639 = vmatpush1.xpose.msra.mxu0 0.0
    %3640 = vmatprep.subr.mxu0 0.0
    %3641 = vmatpush1.xpose.msra.mxu0 0.0
    %3642 = vmatprep.subr.mxu0 0.0
    %3643 = vmatpush1.xpose.msra.mxu0 0.0
    %3644 = vmatprep.subr.mxu0 0.0
    %3645 = vmatpush1.xpose.msra.mxu0 0.0
    %3646 = vmatprep.subr.mxu0 0.0
    %3647 = vmatpush1.xpose.msra.mxu0 0.0
    %3648 = vmatprep.subr.mxu0 0.0
    %3649 = vmatpush1.xpose.msra.mxu0 0.0
    %3650 = vmatprep.subr.mxu0 0.0
    %3651 = vmatpush1.xpose.msra.mxu0 0.0
    %3652 = vmatprep.subr.mxu0 0.0
    %3653 = vmatpush1.xpose.msra.mxu0 0.0
    %3654 = vmatprep.subr.mxu0 0.0
    %3655 = vmatpush1.xpose.msra.mxu0 0.0
    %3656 = vmatprep.subr.mxu0 0.0
    %3657 = vmatpush1.xpose.msra.mxu0 0.0
    %3658 = vmatprep.subr.mxu0 0.0
    %3659 = vmatpush1.xpose.msra.mxu0 0.0
    %3660 = vmatprep.subr.mxu0 0.0
    %3661 = vmatpush1.xpose.msra.mxu0 0.0
    %3662 = vmatprep.subr.mxu0 0.0
    %3663 = vmatpush1.xpose.msra.mxu0 0.0
    %3664 = vmatprep.subr.mxu0 0.0
    %3665 = vmatpush1.xpose.msra.mxu0 0.0
    %3666 = vmatprep.subr.mxu0 0.0
    %3667 = vmatpush1.xpose.msra.mxu0 0.0
    %3668 = vmatprep.subr.mxu0 0.0
    %3669 = vmatpush1.xpose.msra.mxu0 0.0
    %3670 = vmatprep.subr.mxu0 0.0
    %3671 = vmatpush1.xpose.msra.mxu0 0.0
    %3672 = vmatprep.subr.mxu0 0.0
    %3673 = vmatpush1.xpose.msra.mxu0 0.0
    %3674 = vmatprep.subr.mxu0 0.0
    %3675 = vmatpush1.xpose.msra.mxu0 0.0
    %3676 = vmatprep.subr.mxu0 0.0
    %3677 = vmatpush1.xpose.msra.mxu0 0.0
    %3678 = vmatprep.subr.mxu0 0.0
    %3679 = vmatpush1.xpose.msra.mxu0 0.0
    %3680 = vmatprep.subr.mxu0 0.0
    %3681 = vmatpush1.xpose.msra.mxu0 0.0
    %3682 = vmatprep.subr.mxu0 0.0
    %3683 = vmatpush1.xpose.msra.mxu0 0.0
    %3684 = vmatprep.subr.mxu0 0.0
    %3685 = vmatpush1.xpose.msra.mxu0 0.0
    %3686 = vmatprep.mubr.f32.mxu0 0.0
    %3687 = vmatmul.mubr.f32.gmra.mrb[0].mxu0 %v3618
    %v3688 = vpop.f32.mrb[0].mxu0
    %v3689 = vadd.f32 0.0, %v3688
    %v3690 = vpop.f32.mrb[0].mxu0
    %3691 = vdwg.mxu0
    %v3692 = vmul.f32 %v3689, 0.35355338
    %v3693 = vsel %vm149, %v3692, -inf
    %3694 = vmax.xlane.f32.xlu0 %v3693
    %v3695 = vpop.xlane.xlu0 %3694
    %v3696 = vsub.f32 %v3692, %v3695
    %v3697 = vmul.f32 %v3696, 1.442695
    %v3698 = vpow.pop %v3697
    %v3699 = vsel %vm149, %v3698, 0.0
    %3700 = vadd.xlane.f32.xlu0 %v3699
    %v3701 = vpop.xlane.xlu0 %3700
    %v3702 = vrcp.pop %v3701
    %v3703 = vmul.f32 %v3698, %v3702
    %3704 = vrot.lane.b32.xlu0 %v3441, 56
    %v3705 = vpop.permute.xlu0 %3704
    %v3708 = vsel %vm149, %v3703, 0
    %3710 = vmatprep.subr.mxu0 0.0
    %3711 = vmatpush1.msra.mxu0 %v3705
    %3712 = vmatprep.subr.mxu0 0.0
    %3713 = vmatpush1.msra.mxu0 0.0
    %3714 = vmatprep.subr.mxu0 0.0
    %3715 = vmatpush1.msra.mxu0 0.0
    %3716 = vmatprep.subr.mxu0 0.0
    %3717 = vmatpush1.msra.mxu0 0.0
    %3718 = vmatprep.subr.mxu0 0.0
    %3719 = vmatpush1.msra.mxu0 0.0
    %3720 = vmatprep.subr.mxu0 0.0
    %3721 = vmatpush1.msra.mxu0 0.0
    %3722 = vmatprep.subr.mxu0 0.0
    %3723 = vmatpush1.msra.mxu0 0.0
    %3724 = vmatprep.subr.mxu0 0.0
    %3725 = vmatpush1.msra.mxu0 0.0
    %3726 = vmatprep.subr.mxu0 0.0
    %3727 = vmatpush1.msra.mxu0 0.0
    %3728 = vmatprep.subr.mxu0 0.0
    %3729 = vmatpush1.msra.mxu0 0.0
    %3730 = vmatprep.subr.mxu0 0.0
    %3731 = vmatpush1.msra.mxu0 0.0
    %3732 = vmatprep.subr.mxu0 0.0
    %3733 = vmatpush1.msra.mxu0 0.0
    %3734 = vmatprep.subr.mxu0 0.0
    %3735 = vmatpush1.msra.mxu0 0.0
    %3736 = vmatprep.subr.mxu0 0.0
    %3737 = vmatpush1.msra.mxu0 0.0
    %3738 = vmatprep.subr.mxu0 0.0
    %3739 = vmatpush1.msra.mxu0 0.0
    %3740 = vmatprep.subr.mxu0 0.0
    %3741 = vmatpush1.msra.mxu0 0.0
    %3742 = vmatprep.subr.mxu0 0.0
    %3743 = vmatpush1.msra.mxu0 0.0
    %3744 = vmatprep.subr.mxu0 0.0
    %3745 = vmatpush1.msra.mxu0 0.0
    %3746 = vmatprep.subr.mxu0 0.0
    %3747 = vmatpush1.msra.mxu0 0.0
    %3748 = vmatprep.subr.mxu0 0.0
    %3749 = vmatpush1.msra.mxu0 0.0
    %3750 = vmatprep.subr.mxu0 0.0
    %3751 = vmatpush1.msra.mxu0 0.0
    %3752 = vmatprep.subr.mxu0 0.0
    %3753 = vmatpush1.msra.mxu0 0.0
    %3754 = vmatprep.subr.mxu0 0.0
    %3755 = vmatpush1.msra.mxu0 0.0
    %3756 = vmatprep.subr.mxu0 0.0
    %3757 = vmatpush1.msra.mxu0 0.0
    %3758 = vmatprep.subr.mxu0 0.0
    %3759 = vmatpush1.msra.mxu0 0.0
    %3760 = vmatprep.subr.mxu0 0.0
    %3761 = vmatpush1.msra.mxu0 0.0
    %3762 = vmatprep.subr.mxu0 0.0
    %3763 = vmatpush1.msra.mxu0 0.0
    %3764 = vmatprep.subr.mxu0 0.0
    %3765 = vmatpush1.msra.mxu0 0.0
    %3766 = vmatprep.subr.mxu0 0.0
    %3767 = vmatpush1.msra.mxu0 0.0
    %3768 = vmatprep.subr.mxu0 0.0
    %3769 = vmatpush1.msra.mxu0 0.0
    %3770 = vmatprep.subr.mxu0 0.0
    %3771 = vmatpush1.msra.mxu0 0.0
    %3772 = vmatprep.subr.mxu0 0.0
    %3773 = vmatpush1.msra.mxu0 0.0
    %3774 = vmatprep.mubr.f32.mxu0 0.0
    %3775 = vmatmul.mubr.f32.gmra.mrb[0].mxu0 %v3708
    %v3776 = vpop.f32.mrb[0].mxu0
    %v3777 = vadd.f32 0.0, %v3776
    %v3778 = vpop.f32.mrb[0].mxu0
    %3779 = vdwg.mxu0
    %3780 = vrot.lane.b32.xlu0 %v3441, 112
    %v3781 = vpop.permute.xlu0 %3780
    %3782 = vrot.lane.b32.xlu0 %v3441, 80
    %v3783 = vpop.permute.xlu0 %3782
    %v3784 = vsel %vm149, %v3781, 0
    %v3786 = vsel %vm149, %v3783, 0
    %3788 = vmatprep.subr.mxu0 0.0
    %3789 = vmatpush1.xpose.msra.mxu0 %v3786
    %3790 = vmatprep.subr.mxu0 0.0
    %3791 = vmatpush1.xpose.msra.mxu0 0.0
    %3792 = vmatprep.subr.mxu0 0.0
    %3793 = vmatpush1.xpose.msra.mxu0 0.0
    %3794 = vmatprep.subr.mxu0 0.0
    %3795 = vmatpush1.xpose.msra.mxu0 0.0
    %3796 = vmatprep.subr.mxu0 0.0
    %3797 = vmatpush1.xpose.msra.mxu0 0.0
    %3798 = vmatprep.subr.mxu0 0.0
    %3799 = vmatpush1.xpose.msra.mxu0 0.0
    %3800 = vmatprep.subr.mxu0 0.0
    %3801 = vmatpush1.xpose.msra.mxu0 0.0
    %3802 = vmatprep.subr.mxu0 0.0
    %3803 = vmatpush1.xpose.msra.mxu0 0.0
    %3804 = vmatprep.subr.mxu0 0.0
    %3805 = vmatpush1.xpose.msra.mxu0 0.0
    %3806 = vmatprep.subr.mxu0 0.0
    %3807 = vmatpush1.xpose.msra.mxu0 0.0
    %3808 = vmatprep.subr.mxu0 0.0
    %3809 = vmatpush1.xpose.msra.mxu0 0.0
    %3810 = vmatprep.subr.mxu0 0.0
    %3811 = vmatpush1.xpose.msra.mxu0 0.0
    %3812 = vmatprep.subr.mxu0 0.0
    %3813 = vmatpush1.xpose.msra.mxu0 0.0
    %3814 = vmatprep.subr.mxu0 0.0
    %3815 = vmatpush1.xpose.msra.mxu0 0.0
    %3816 = vmatprep.subr.mxu0 0.0
    %3817 = vmatpush1.xpose.msra.mxu0 0.0
    %3818 = vmatprep.subr.mxu0 0.0
    %3819 = vmatpush1.xpose.msra.mxu0 0.0
    %3820 = vmatprep.subr.mxu0 0.0
    %3821 = vmatpush1.xpose.msra.mxu0 0.0
    %3822 = vmatprep.subr.mxu0 0.0
    %3823 = vmatpush1.xpose.msra.mxu0 0.0
    %3824 = vmatprep.subr.mxu0 0.0
    %3825 = vmatpush1.xpose.msra.mxu0 0.0
    %3826 = vmatprep.subr.mxu0 0.0
    %3827 = vmatpush1.xpose.msra.mxu0 0.0
    %3828 = vmatprep.subr.mxu0 0.0
    %3829 = vmatpush1.xpose.msra.mxu0 0.0
    %3830 = vmatprep.subr.mxu0 0.0
    %3831 = vmatpush1.xpose.msra.mxu0 0.0
    %3832 = vmatprep.subr.mxu0 0.0
    %3833 = vmatpush1.xpose.msra.mxu0 0.0
    %3834 = vmatprep.subr.mxu0 0.0
    %3835 = vmatpush1.xpose.msra.mxu0 0.0
    %3836 = vmatprep.subr.mxu0 0.0
    %3837 = vmatpush1.xpose.msra.mxu0 0.0
    %3838 = vmatprep.subr.mxu0 0.0
    %3839 = vmatpush1.xpose.msra.mxu0 0.0
    %3840 = vmatprep.subr.mxu0 0.0
    %3841 = vmatpush1.xpose.msra.mxu0 0.0
    %3842 = vmatprep.subr.mxu0 0.0
    %3843 = vmatpush1.xpose.msra.mxu0 0.0
    %3844 = vmatprep.subr.mxu0 0.0
    %3845 = vmatpush1.xpose.msra.mxu0 0.0
    %3846 = vmatprep.subr.mxu0 0.0
    %3847 = vmatpush1.xpose.msra.mxu0 0.0
    %3848 = vmatprep.subr.mxu0 0.0
    %3849 = vmatpush1.xpose.msra.mxu0 0.0
    %3850 = vmatprep.subr.mxu0 0.0
    %3851 = vmatpush1.xpose.msra.mxu0 0.0
    %3852 = vmatprep.mubr.f32.mxu0 0.0
    %3853 = vmatmul.mubr.f32.gmra.mrb[0].mxu0 %v3784
    %v3854 = vpop.f32.mrb[0].mxu0
    %v3855 = vadd.f32 0.0, %v3854
    %v3856 = vpop.f32.mrb[0].mxu0
    %3857 = vdwg.mxu0
    %v3858 = vmul.f32 %v3855, 0.35355338
    %v3859 = vsel %vm149, %v3858, -inf
    %3860 = vmax.xlane.f32.xlu0 %v3859
    %v3861 = vpop.xlane.xlu0 %3860
    %v3862 = vsub.f32 %v3858, %v3861
    %v3863 = vmul.f32 %v3862, 1.442695
    %v3864 = vpow.pop %v3863
    %v3865 = vsel %vm149, %v3864, 0.0
    %3866 = vadd.xlane.f32.xlu0 %v3865
    %v3867 = vpop.xlane.xlu0 %3866
    %v3868 = vrcp.pop %v3867
    %v3869 = vmul.f32 %v3864, %v3868
    %3870 = vrot.lane.b32.xlu0 %v3441, 48
    %v3871 = vpop.permute.xlu0 %3870
    %v3874 = vsel %vm149, %v3869, 0
    %3876 = vmatprep.subr.mxu0 0.0
    %3877 = vmatpush1.msra.mxu0 %v3871
    %3878 = vmatprep.subr.mxu0 0.0
    %3879 = vmatpush1.msra.mxu0 0.0
    %3880 = vmatprep.subr.mxu0 0.0
    %3881 = vmatpush1.msra.mxu0 0.0
    %3882 = vmatprep.subr.mxu0 0.0
    %3883 = vmatpush1.msra.mxu0 0.0
    %3884 = vmatprep.subr.mxu0 0.0
    %3885 = vmatpush1.msra.mxu0 0.0
    %3886 = vmatprep.subr.mxu0 0.0
    %3887 = vmatpush1.msra.mxu0 0.0
    %3888 = vmatprep.subr.mxu0 0.0
    %3889 = vmatpush1.msra.mxu0 0.0
    %3890 = vmatprep.subr.mxu0 0.0
    %3891 = vmatpush1.msra.mxu0 0.0
    %3892 = vmatprep.subr.mxu0 0.0
    %3893 = vmatpush1.msra.mxu0 0.0
    %3894 = vmatprep.subr.mxu0 0.0
    %3895 = vmatpush1.msra.mxu0 0.0
    %3896 = vmatprep.subr.mxu0 0.0
    %3897 = vmatpush1.msra.mxu0 0.0
    %3898 = vmatprep.subr.mxu0 0.0
    %3899 = vmatpush1.msra.mxu0 0.0
    %3900 = vmatprep.subr.mxu0 0.0
    %3901 = vmatpush1.msra.mxu0 0.0
    %3902 = vmatprep.subr.mxu0 0.0
    %3903 = vmatpush1.msra.mxu0 0.0
    %3904 = vmatprep.subr.mxu0 0.0
    %3905 = vmatpush1.msra.mxu0 0.0
    %3906 = vmatprep.subr.mxu0 0.0
    %3907 = vmatpush1.msra.mxu0 0.0
    %3908 = vmatprep.subr.mxu0 0.0
    %3909 = vmatpush1.msra.mxu0 0.0
    %3910 = vmatprep.subr.mxu0 0.0
    %3911 = vmatpush1.msra.mxu0 0.0
    %3912 = vmatprep.subr.mxu0 0.0
    %3913 = vmatpush1.msra.mxu0 0.0
    %3914 = vmatprep.subr.mxu0 0.0
    %3915 = vmatpush1.msra.mxu0 0.0
    %3916 = vmatprep.subr.mxu0 0.0
    %3917 = vmatpush1.msra.mxu0 0.0
    %3918 = vmatprep.subr.mxu0 0.0
    %3919 = vmatpush1.msra.mxu0 0.0
    %3920 = vmatprep.subr.mxu0 0.0
    %3921 = vmatpush1.msra.mxu0 0.0
    %3922 = vmatprep.subr.mxu0 0.0
    %3923 = vmatpush1.msra.mxu0 0.0
    %3924 = vmatprep.subr.mxu0 0.0
    %3925 = vmatpush1.msra.mxu0 0.0
    %3926 = vmatprep.subr.mxu0 0.0
    %3927 = vmatpush1.msra.mxu0 0.0
    %3928 = vmatprep.subr.mxu0 0.0
    %3929 = vmatpush1.msra.mxu0 0.0
    %3930 = vmatprep.subr.mxu0 0.0
    %3931 = vmatpush1.msra.mxu0 0.0
    %3932 = vmatprep.subr.mxu0 0.0
    %3933 = vmatpush1.msra.mxu0 0.0
    %3934 = vmatprep.subr.mxu0 0.0
    %3935 = vmatpush1.msra.mxu0 0.0
    %3936 = vmatprep.subr.mxu0 0.0
    %3937 = vmatpush1.msra.mxu0 0.0
    %3938 = vmatprep.subr.mxu0 0.0
    %3939 = vmatpush1.msra.mxu0 0.0
    %3940 = vmatprep.mubr.f32.mxu0 0.0
    %3941 = vmatmul.mubr.f32.gmra.mrb[0].mxu0 %v3874
    %v3942 = vpop.f32.mrb[0].mxu0
    %v3943 = vadd.f32 0.0, %v3942
    %v3944 = vpop.f32.mrb[0].mxu0
    %3945 = vdwg.mxu0
    %3946 = vrot.lane.b32.xlu0 %v3441, 104
    %v3947 = vpop.permute.xlu0 %3946
    %3948 = vrot.lane.b32.xlu0 %v3441, 72
    %v3949 = vpop.permute.xlu0 %3948
    %v3950 = vsel %vm149, %v3947, 0
    %v3952 = vsel %vm149, %v3949, 0
    %3954 = vmatprep.subr.mxu0 0.0
    %3955 = vmatpush1.xpose.msra.mxu0 %v3952
    %3956 = vmatprep.subr.mxu0 0.0
    %3957 = vmatpush1.xpose.msra.mxu0 0.0
    %3958 = vmatprep.subr.mxu0 0.0
    %3959 = vmatpush1.xpose.msra.mxu0 0.0
    %3960 = vmatprep.subr.mxu0 0.0
    %3961 = vmatpush1.xpose.msra.mxu0 0.0
    %3962 = vmatprep.subr.mxu0 0.0
    %3963 = vmatpush1.xpose.msra.mxu0 0.0
    %3964 = vmatprep.subr.mxu0 0.0
    %3965 = vmatpush1.xpose.msra.mxu0 0.0
    %3966 = vmatprep.subr.mxu0 0.0
    %3967 = vmatpush1.xpose.msra.mxu0 0.0
    %3968 = vmatprep.subr.mxu0 0.0
    %3969 = vmatpush1.xpose.msra.mxu0 0.0
    %3970 = vmatprep.subr.mxu0 0.0
    %3971 = vmatpush1.xpose.msra.mxu0 0.0
    %3972 = vmatprep.subr.mxu0 0.0
    %3973 = vmatpush1.xpose.msra.mxu0 0.0
    %3974 = vmatprep.subr.mxu0 0.0
    %3975 = vmatpush1.xpose.msra.mxu0 0.0
    %3976 = vmatprep.subr.mxu0 0.0
    %3977 = vmatpush1.xpose.msra.mxu0 0.0
    %3978 = vmatprep.subr.mxu0 0.0
    %3979 = vmatpush1.xpose.msra.mxu0 0.0
    %3980 = vmatprep.subr.mxu0 0.0
    %3981 = vmatpush1.xpose.msra.mxu0 0.0
    %3982 = vmatprep.subr.mxu0 0.0
    %3983 = vmatpush1.xpose.msra.mxu0 0.0
    %3984 = vmatprep.subr.mxu0 0.0
    %3985 = vmatpush1.xpose.msra.mxu0 0.0
    %3986 = vmatprep.subr.mxu0 0.0
    %3987 = vmatpush1.xpose.msra.mxu0 0.0
    %3988 = vmatprep.subr.mxu0 0.0
    %3989 = vmatpush1.xpose.msra.mxu0 0.0
    %3990 = vmatprep.subr.mxu0 0.0
    %3991 = vmatpush1.xpose.msra.mxu0 0.0
    %3992 = vmatprep.subr.mxu0 0.0
    %3993 = vmatpush1.xpose.msra.mxu0 0.0
    %3994 = vmatprep.subr.mxu0 0.0
    %3995 = vmatpush1.xpose.msra.mxu0 0.0
    %3996 = vmatprep.subr.mxu0 0.0
    %3997 = vmatpush1.xpose.msra.mxu0 0.0
    %3998 = vmatprep.subr.mxu0 0.0
    %3999 = vmatpush1.xpose.msra.mxu0 0.0
    %4000 = vmatprep.subr.mxu0 0.0
    %4001 = vmatpush1.xpose.msra.mxu0 0.0
    %4002 = vmatprep.subr.mxu0 0.0
    %4003 = vmatpush1.xpose.msra.mxu0 0.0
    %4004 = vmatprep.subr.mxu0 0.0
    %4005 = vmatpush1.xpose.msra.mxu0 0.0
    %4006 = vmatprep.subr.mxu0 0.0
    %4007 = vmatpush1.xpose.msra.mxu0 0.0
    %4008 = vmatprep.subr.mxu0 0.0
    %4009 = vmatpush1.xpose.msra.mxu0 0.0
    %4010 = vmatprep.subr.mxu0 0.0
    %4011 = vmatpush1.xpose.msra.mxu0 0.0
    %4012 = vmatprep.subr.mxu0 0.0
    %4013 = vmatpush1.xpose.msra.mxu0 0.0
    %4014 = vmatprep.subr.mxu0 0.0
    %4015 = vmatpush1.xpose.msra.mxu0 0.0
    %4016 = vmatprep.subr.mxu0 0.0
    %4017 = vmatpush1.xpose.msra.mxu0 0.0
    %4018 = vmatprep.mubr.f32.mxu0 0.0
    %4019 = vmatmul.mubr.f32.gmra.mrb[0].mxu0 %v3950
    %v4020 = vpop.f32.mrb[0].mxu0
    %v4021 = vadd.f32 0.0, %v4020
    %v4022 = vpop.f32.mrb[0].mxu0
    %4023 = vdwg.mxu0
    %v4024 = vmul.f32 %v4021, 0.35355338
    %v4025 = vsel %vm149, %v4024, -inf
    %4026 = vmax.xlane.f32.xlu0 %v4025
    %v4027 = vpop.xlane.xlu0 %4026
    %v4028 = vsub.f32 %v4024, %v4027
    %v4029 = vmul.f32 %v4028, 1.442695
    %v4030 = vpow.pop %v4029
    %v4031 = vsel %vm149, %v4030, 0.0
    %4032 = vadd.xlane.f32.xlu0 %v4031
    %v4033 = vpop.xlane.xlu0 %4032
    %v4034 = vrcp.pop %v4033
    %v4035 = vmul.f32 %v4030, %v4034
    %4036 = vrot.lane.b32.xlu0 %v3441, 40
    %v4037 = vpop.permute.xlu0 %4036
    %v4040 = vsel %vm149, %v4035, 0
    %4042 = vmatprep.subr.mxu0 0.0
    %4043 = vmatpush1.msra.mxu0 %v4037
    %4044 = vmatprep.subr.mxu0 0.0
    %4045 = vmatpush1.msra.mxu0 0.0
    %4046 = vmatprep.subr.mxu0 0.0
    %4047 = vmatpush1.msra.mxu0 0.0
    %4048 = vmatprep.subr.mxu0 0.0
    %4049 = vmatpush1.msra.mxu0 0.0
    %4050 = vmatprep.subr.mxu0 0.0
    %4051 = vmatpush1.msra.mxu0 0.0
    %4052 = vmatprep.subr.mxu0 0.0
    %4053 = vmatpush1.msra.mxu0 0.0
    %4054 = vmatprep.subr.mxu0 0.0
    %4055 = vmatpush1.msra.mxu0 0.0
    %4056 = vmatprep.subr.mxu0 0.0
    %4057 = vmatpush1.msra.mxu0 0.0
    %4058 = vmatprep.subr.mxu0 0.0
    %4059 = vmatpush1.msra.mxu0 0.0
    %4060 = vmatprep.subr.mxu0 0.0
    %4061 = vmatpush1.msra.mxu0 0.0
    %4062 = vmatprep.subr.mxu0 0.0
    %4063 = vmatpush1.msra.mxu0 0.0
    %4064 = vmatprep.subr.mxu0 0.0
    %4065 = vmatpush1.msra.mxu0 0.0
    %4066 = vmatprep.subr.mxu0 0.0
    %4067 = vmatpush1.msra.mxu0 0.0
    %4068 = vmatprep.subr.mxu0 0.0
    %4069 = vmatpush1.msra.mxu0 0.0
    %4070 = vmatprep.subr.mxu0 0.0
    %4071 = vmatpush1.msra.mxu0 0.0
    %4072 = vmatprep.subr.mxu0 0.0
    %4073 = vmatpush1.msra.mxu0 0.0
    %4074 = vmatprep.subr.mxu0 0.0
    %4075 = vmatpush1.msra.mxu0 0.0
    %4076 = vmatprep.subr.mxu0 0.0
    %4077 = vmatpush1.msra.mxu0 0.0
    %4078 = vmatprep.subr.mxu0 0.0
    %4079 = vmatpush1.msra.mxu0 0.0
    %4080 = vmatprep.subr.mxu0 0.0
    %4081 = vmatpush1.msra.mxu0 0.0
    %4082 = vmatprep.subr.mxu0 0.0
    %4083 = vmatpush1.msra.mxu0 0.0
    %4084 = vmatprep.subr.mxu0 0.0
    %4085 = vmatpush1.msra.mxu0 0.0
    %4086 = vmatprep.subr.mxu0 0.0
    %4087 = vmatpush1.msra.mxu0 0.0
    %4088 = vmatprep.subr.mxu0 0.0
    %4089 = vmatpush1.msra.mxu0 0.0
    %4090 = vmatprep.subr.mxu0 0.0
    %4091 = vmatpush1.msra.mxu0 0.0
    %4092 = vmatprep.subr.mxu0 0.0
    %4093 = vmatpush1.msra.mxu0 0.0
    %4094 = vmatprep.subr.mxu0 0.0
    %4095 = vmatpush1.msra.mxu0 0.0
    %4096 = vmatprep.subr.mxu0 0.0
    %4097 = vmatpush1.msra.mxu0 0.0
    %4098 = vmatprep.subr.mxu0 0.0
    %4099 = vmatpush1.msra.mxu0 0.0
    %4100 = vmatprep.subr.mxu0 0.0
    %4101 = vmatpush1.msra.mxu0 0.0
    %4102 = vmatprep.subr.mxu0 0.0
    %4103 = vmatpush1.msra.mxu0 0.0
    %4104 = vmatprep.subr.mxu0 0.0
    %4105 = vmatpush1.msra.mxu0 0.0
    %4106 = vmatprep.mubr.f32.mxu0 0.0
    %4107 = vmatmul.mubr.f32.gmra.mrb[0].mxu0 %v4040
    %v4108 = vpop.f32.mrb[0].mxu0
    %v4109 = vadd.f32 0.0, %v4108
    %v4110 = vpop.f32.mrb[0].mxu0
    %4111 = vdwg.mxu0
    %4113 = vrot.lane.b32.xlu0 %v3777, 8
    %v4114 = vpop.permute.xlu0 %4113
    %4117 = vrot.lane.b32.xlu0 %v3943, 16
    %v4118 = vpop.permute.xlu0 %4117
    %4121 = vrot.lane.b32.xlu0 %v4109, 24
    %v4122 = vpop.permute.xlu0 %4121
    %v4124 = vsel %vm149, %v3611, %v4114
    %v4125 = vsel %vm823, %v4124, %v4118
    %v4126 = vsel %vm825, %v4125, %v4122
    %4128 = vrot.lane.b32.xlu0 %v3446, 96
    %v4129 = vpop.permute.xlu0 %4128
    %v4130 = vsel %vm149, %v3446, 0
    %v4132 = vsel %vm149, %v4129, 0
    %4134 = vmatprep.subr.mxu0 0.0
    %4135 = vmatpush1.xpose.msra.mxu0 %v4132
    %4136 = vmatprep.subr.mxu0 0.0
    %4137 = vmatpush1.xpose.msra.mxu0 0.0
    %4138 = vmatprep.subr.mxu0 0.0
    %4139 = vmatpush1.xpose.msra.mxu0 0.0
    %4140 = vmatprep.subr.mxu0 0.0
    %4141 = vmatpush1.xpose.msra.mxu0 0.0
    %4142 = vmatprep.subr.mxu0 0.0
    %4143 = vmatpush1.xpose.msra.mxu0 0.0
    %4144 = vmatprep.subr.mxu0 0.0
    %4145 = vmatpush1.xpose.msra.mxu0 0.0
    %4146 = vmatprep.subr.mxu0 0.0
    %4147 = vmatpush1.xpose.msra.mxu0 0.0
    %4148 = vmatprep.subr.mxu0 0.0
    %4149 = vmatpush1.xpose.msra.mxu0 0.0
    %4150 = vmatprep.subr.mxu0 0.0
    %4151 = vmatpush1.xpose.msra.mxu0 0.0
    %4152 = vmatprep.subr.mxu0 0.0
    %4153 = vmatpush1.xpose.msra.mxu0 0.0
    %4154 = vmatprep.subr.mxu0 0.0
    %4155 = vmatpush1.xpose.msra.mxu0 0.0
    %4156 = vmatprep.subr.mxu0 0.0
    %4157 = vmatpush1.xpose.msra.mxu0 0.0
    %4158 = vmatprep.subr.mxu0 0.0
    %4159 = vmatpush1.xpose.msra.mxu0 0.0
    %4160 = vmatprep.subr.mxu0 0.0
    %4161 = vmatpush1.xpose.msra.mxu0 0.0
    %4162 = vmatprep.subr.mxu0 0.0
    %4163 = vmatpush1.xpose.msra.mxu0 0.0
    %4164 = vmatprep.subr.mxu0 0.0
    %4165 = vmatpush1.xpose.msra.mxu0 0.0
    %4166 = vmatprep.subr.mxu0 0.0
    %4167 = vmatpush1.xpose.msra.mxu0 0.0
    %4168 = vmatprep.subr.mxu0 0.0
    %4169 = vmatpush1.xpose.msra.mxu0 0.0
    %4170 = vmatprep.subr.mxu0 0.0
    %4171 = vmatpush1.xpose.msra.mxu0 0.0
    %4172 = vmatprep.subr.mxu0 0.0
    %4173 = vmatpush1.xpose.msra.mxu0 0.0
    %4174 = vmatprep.subr.mxu0 0.0
    %4175 = vmatpush1.xpose.msra.mxu0 0.0
    %4176 = vmatprep.subr.mxu0 0.0
    %4177 = vmatpush1.xpose.msra.mxu0 0.0
    %4178 = vmatprep.subr.mxu0 0.0
    %4179 = vmatpush1.xpose.msra.mxu0 0.0
    %4180 = vmatprep.subr.mxu0 0.0
    %4181 = vmatpush1.xpose.msra.mxu0 0.0
    %4182 = vmatprep.subr.mxu0 0.0
    %4183 = vmatpush1.xpose.msra.mxu0 0.0
    %4184 = vmatprep.subr.mxu0 0.0
    %4185 = vmatpush1.xpose.msra.mxu0 0.0
    %4186 = vmatprep.subr.mxu0 0.0
    %4187 = vmatpush1.xpose.msra.mxu0 0.0
    %4188 = vmatprep.subr.mxu0 0.0
    %4189 = vmatpush1.xpose.msra.mxu0 0.0
    %4190 = vmatprep.subr.mxu0 0.0
    %4191 = vmatpush1.xpose.msra.mxu0 0.0
    %4192 = vmatprep.subr.mxu0 0.0
    %4193 = vmatpush1.xpose.msra.mxu0 0.0
    %4194 = vmatprep.subr.mxu0 0.0
    %4195 = vmatpush1.xpose.msra.mxu0 0.0
    %4196 = vmatprep.subr.mxu0 0.0
    %4197 = vmatpush1.xpose.msra.mxu0 0.0
    %4198 = vmatprep.mubr.f32.mxu0 0.0
    %4199 = vmatmul.mubr.f32.gmra.mrb[0].mxu0 %v4130
    %v4200 = vpop.f32.mrb[0].mxu0
    %v4201 = vadd.f32 0.0, %v4200
    %v4202 = vpop.f32.mrb[0].mxu0
    %4203 = vdwg.mxu0
    %v4204 = vmul.f32 %v4201, 0.35355338
    %v4205 = vsel %vm149, %v4204, -inf
    %4206 = vmax.xlane.f32.xlu0 %v4205
    %v4207 = vpop.xlane.xlu0 %4206
    %v4208 = vsub.f32 %v4204, %v4207
    %v4209 = vmul.f32 %v4208, 1.442695
    %v4210 = vpow.pop %v4209
    %v4211 = vsel %vm149, %v4210, 0.0
    %4212 = vadd.xlane.f32.xlu0 %v4211
    %v4213 = vpop.xlane.xlu0 %4212
    %v4214 = vrcp.pop %v4213
    %v4215 = vmul.f32 %v4210, %v4214
    %4216 = vrot.lane.b32.xlu0 %v3446, 64
    %v4217 = vpop.permute.xlu0 %4216
    %v4220 = vsel %vm149, %v4215, 0
    %4222 = vmatprep.subr.mxu0 0.0
    %4223 = vmatpush1.msra.mxu0 %v4217
    %4224 = vmatprep.subr.mxu0 0.0
    %4225 = vmatpush1.msra.mxu0 0.0
    %4226 = vmatprep.subr.mxu0 0.0
    %4227 = vmatpush1.msra.mxu0 0.0
    %4228 = vmatprep.subr.mxu0 0.0
    %4229 = vmatpush1.msra.mxu0 0.0
    %4230 = vmatprep.subr.mxu0 0.0
    %4231 = vmatpush1.msra.mxu0 0.0
    %4232 = vmatprep.subr.mxu0 0.0
    %4233 = vmatpush1.msra.mxu0 0.0
    %4234 = vmatprep.subr.mxu0 0.0
    %4235 = vmatpush1.msra.mxu0 0.0
    %4236 = vmatprep.subr.mxu0 0.0
    %4237 = vmatpush1.msra.mxu0 0.0
    %4238 = vmatprep.subr.mxu0 0.0
    %4239 = vmatpush1.msra.mxu0 0.0
    %4240 = vmatprep.subr.mxu0 0.0
    %4241 = vmatpush1.msra.mxu0 0.0
    %4242 = vmatprep.subr.mxu0 0.0
    %4243 = vmatpush1.msra.mxu0 0.0
    %4244 = vmatprep.subr.mxu0 0.0
    %4245 = vmatpush1.msra.mxu0 0.0
    %4246 = vmatprep.subr.mxu0 0.0
    %4247 = vmatpush1.msra.mxu0 0.0
    %4248 = vmatprep.subr.mxu0 0.0
    %4249 = vmatpush1.msra.mxu0 0.0
    %4250 = vmatprep.subr.mxu0 0.0
    %4251 = vmatpush1.msra.mxu0 0.0
    %4252 = vmatprep.subr.mxu0 0.0
    %4253 = vmatpush1.msra.mxu0 0.0
    %4254 = vmatprep.subr.mxu0 0.0
    %4255 = vmatpush1.msra.mxu0 0.0
    %4256 = vmatprep.subr.mxu0 0.0
    %4257 = vmatpush1.msra.mxu0 0.0
    %4258 = vmatprep.subr.mxu0 0.0
    %4259 = vmatpush1.msra.mxu0 0.0
    %4260 = vmatprep.subr.mxu0 0.0
    %4261 = vmatpush1.msra.mxu0 0.0
    %4262 = vmatprep.subr.mxu0 0.0
    %4263 = vmatpush1.msra.mxu0 0.0
    %4264 = vmatprep.subr.mxu0 0.0
    %4265 = vmatpush1.msra.mxu0 0.0
    %4266 = vmatprep.subr.mxu0 0.0
    %4267 = vmatpush1.msra.mxu0 0.0
    %4268 = vmatprep.subr.mxu0 0.0
    %4269 = vmatpush1.msra.mxu0 0.0
    %4270 = vmatprep.subr.mxu0 0.0
    %4271 = vmatpush1.msra.mxu0 0.0
    %4272 = vmatprep.subr.mxu0 0.0
    %4273 = vmatpush1.msra.mxu0 0.0
    %4274 = vmatprep.subr.mxu0 0.0
    %4275 = vmatpush1.msra.mxu0 0.0
    %4276 = vmatprep.subr.mxu0 0.0
    %4277 = vmatpush1.msra.mxu0 0.0
    %4278 = vmatprep.subr.mxu0 0.0
    %4279 = vmatpush1.msra.mxu0 0.0
    %4280 = vmatprep.subr.mxu0 0.0
    %4281 = vmatpush1.msra.mxu0 0.0
    %4282 = vmatprep.subr.mxu0 0.0
    %4283 = vmatpush1.msra.mxu0 0.0
    %4284 = vmatprep.subr.mxu0 0.0
    %4285 = vmatpush1.msra.mxu0 0.0
    %4286 = vmatprep.mubr.f32.mxu0 0.0
    %4287 = vmatmul.mubr.f32.gmra.mrb[0].mxu0 %v4220
    %v4288 = vpop.f32.mrb[0].mxu0
    %v4289 = vadd.f32 0.0, %v4288
    %v4290 = vpop.f32.mrb[0].mxu0
    %4291 = vdwg.mxu0
    %4292 = vrot.lane.b32.xlu0 %v3446, 120
    %v4293 = vpop.permute.xlu0 %4292
    %4294 = vrot.lane.b32.xlu0 %v3446, 88
    %v4295 = vpop.permute.xlu0 %4294
    %v4296 = vsel %vm149, %v4293, 0
    %v4298 = vsel %vm149, %v4295, 0
    %4300 = vmatprep.subr.mxu0 0.0
    %4301 = vmatpush1.xpose.msra.mxu0 %v4298
    %4302 = vmatprep.subr.mxu0 0.0
    %4303 = vmatpush1.xpose.msra.mxu0 0.0
    %4304 = vmatprep.subr.mxu0 0.0
    %4305 = vmatpush1.xpose.msra.mxu0 0.0
    %4306 = vmatprep.subr.mxu0 0.0
    %4307 = vmatpush1.xpose.msra.mxu0 0.0
    %4308 = vmatprep.subr.mxu0 0.0
    %4309 = vmatpush1.xpose.msra.mxu0 0.0
    %4310 = vmatprep.subr.mxu0 0.0
    %4311 = vmatpush1.xpose.msra.mxu0 0.0
    %4312 = vmatprep.subr.mxu0 0.0
    %4313 = vmatpush1.xpose.msra.mxu0 0.0
    %4314 = vmatprep.subr.mxu0 0.0
    %4315 = vmatpush1.xpose.msra.mxu0 0.0
    %4316 = vmatprep.subr.mxu0 0.0
    %4317 = vmatpush1.xpose.msra.mxu0 0.0
    %4318 = vmatprep.subr.mxu0 0.0
    %4319 = vmatpush1.xpose.msra.mxu0 0.0
    %4320 = vmatprep.subr.mxu0 0.0
    %4321 = vmatpush1.xpose.msra.mxu0 0.0
    %4322 = vmatprep.subr.mxu0 0.0
    %4323 = vmatpush1.xpose.msra.mxu0 0.0
    %4324 = vmatprep.subr.mxu0 0.0
    %4325 = vmatpush1.xpose.msra.mxu0 0.0
    %4326 = vmatprep.subr.mxu0 0.0
    %4327 = vmatpush1.xpose.msra.mxu0 0.0
    %4328 = vmatprep.subr.mxu0 0.0
    %4329 = vmatpush1.xpose.msra.mxu0 0.0
    %4330 = vmatprep.subr.mxu0 0.0
    %4331 = vmatpush1.xpose.msra.mxu0 0.0
    %4332 = vmatprep.subr.mxu0 0.0
    %4333 = vmatpush1.xpose.msra.mxu0 0.0
    %4334 = vmatprep.subr.mxu0 0.0
    %4335 = vmatpush1.xpose.msra.mxu0 0.0
    %4336 = vmatprep.subr.mxu0 0.0
    %4337 = vmatpush1.xpose.msra.mxu0 0.0
    %4338 = vmatprep.subr.mxu0 0.0
    %4339 = vmatpush1.xpose.msra.mxu0 0.0
    %4340 = vmatprep.subr.mxu0 0.0
    %4341 = vmatpush1.xpose.msra.mxu0 0.0
    %4342 = vmatprep.subr.mxu0 0.0
    %4343 = vmatpush1.xpose.msra.mxu0 0.0
    %4344 = vmatprep.subr.mxu0 0.0
    %4345 = vmatpush1.xpose.msra.mxu0 0.0
    %4346 = vmatprep.subr.mxu0 0.0
    %4347 = vmatpush1.xpose.msra.mxu0 0.0
    %4348 = vmatprep.subr.mxu0 0.0
    %4349 = vmatpush1.xpose.msra.mxu0 0.0
    %4350 = vmatprep.subr.mxu0 0.0
    %4351 = vmatpush1.xpose.msra.mxu0 0.0
    %4352 = vmatprep.subr.mxu0 0.0
    %4353 = vmatpush1.xpose.msra.mxu0 0.0
    %4354 = vmatprep.subr.mxu0 0.0
    %4355 = vmatpush1.xpose.msra.mxu0 0.0
    %4356 = vmatprep.subr.mxu0 0.0
    %4357 = vmatpush1.xpose.msra.mxu0 0.0
    %4358 = vmatprep.subr.mxu0 0.0
    %4359 = vmatpush1.xpose.msra.mxu0 0.0
    %4360 = vmatprep.subr.mxu0 0.0
    %4361 = vmatpush1.xpose.msra.mxu0 0.0
    %4362 = vmatprep.subr.mxu0 0.0
    %4363 = vmatpush1.xpose.msra.mxu0 0.0
    %4364 = vmatprep.mubr.f32.mxu0 0.0
    %4365 = vmatmul.mubr.f32.gmra.mrb[0].mxu0 %v4296
    %v4366 = vpop.f32.mrb[0].mxu0
    %v4367 = vadd.f32 0.0, %v4366
    %v4368 = vpop.f32.mrb[0].mxu0
    %4369 = vdwg.mxu0
    %v4370 = vmul.f32 %v4367, 0.35355338
    %v4371 = vsel %vm149, %v4370, -inf
    %4372 = vmax.xlane.f32.xlu0 %v4371
    %v4373 = vpop.xlane.xlu0 %4372
    %v4374 = vsub.f32 %v4370, %v4373
    %v4375 = vmul.f32 %v4374, 1.442695
    %v4376 = vpow.pop %v4375
    %v4377 = vsel %vm149, %v4376, 0.0
    %4378 = vadd.xlane.f32.xlu0 %v4377
    %v4379 = vpop.xlane.xlu0 %4378
    %v4380 = vrcp.pop %v4379
    %v4381 = vmul.f32 %v4376, %v4380
    %4382 = vrot.lane.b32.xlu0 %v3446, 56
    %v4383 = vpop.permute.xlu0 %4382
    %v4386 = vsel %vm149, %v4381, 0
    %4388 = vmatprep.subr.mxu0 0.0
    %4389 = vmatpush1.msra.mxu0 %v4383
    %4390 = vmatprep.subr.mxu0 0.0
    %4391 = vmatpush1.msra.mxu0 0.0
    %4392 = vmatprep.subr.mxu0 0.0
    %4393 = vmatpush1.msra.mxu0 0.0
    %4394 = vmatprep.subr.mxu0 0.0
    %4395 = vmatpush1.msra.mxu0 0.0
    %4396 = vmatprep.subr.mxu0 0.0
    %4397 = vmatpush1.msra.mxu0 0.0
    %4398 = vmatprep.subr.mxu0 0.0
    %4399 = vmatpush1.msra.mxu0 0.0
    %4400 = vmatprep.subr.mxu0 0.0
    %4401 = vmatpush1.msra.mxu0 0.0
    %4402 = vmatprep.subr.mxu0 0.0
    %4403 = vmatpush1.msra.mxu0 0.0
    %4404 = vmatprep.subr.mxu0 0.0
    %4405 = vmatpush1.msra.mxu0 0.0
    %4406 = vmatprep.subr.mxu0 0.0
    %4407 = vmatpush1.msra.mxu0 0.0
    %4408 = vmatprep.subr.mxu0 0.0
    %4409 = vmatpush1.msra.mxu0 0.0
    %4410 = vmatprep.subr.mxu0 0.0
    %4411 = vmatpush1.msra.mxu0 0.0
    %4412 = vmatprep.subr.mxu0 0.0
    %4413 = vmatpush1.msra.mxu0 0.0
    %4414 = vmatprep.subr.mxu0 0.0
    %4415 = vmatpush1.msra.mxu0 0.0
    %4416 = vmatprep.subr.mxu0 0.0
    %4417 = vmatpush1.msra.mxu0 0.0
    %4418 = vmatprep.subr.mxu0 0.0
    %4419 = vmatpush1.msra.mxu0 0.0
    %4420 = vmatprep.subr.mxu0 0.0
    %4421 = vmatpush1.msra.mxu0 0.0
    %4422 = vmatprep.subr.mxu0 0.0
    %4423 = vmatpush1.msra.mxu0 0.0
    %4424 = vmatprep.subr.mxu0 0.0
    %4425 = vmatpush1.msra.mxu0 0.0
    %4426 = vmatprep.subr.mxu0 0.0
    %4427 = vmatpush1.msra.mxu0 0.0
    %4428 = vmatprep.subr.mxu0 0.0
    %4429 = vmatpush1.msra.mxu0 0.0
    %4430 = vmatprep.subr.mxu0 0.0
    %4431 = vmatpush1.msra.mxu0 0.0
    %4432 = vmatprep.subr.mxu0 0.0
    %4433 = vmatpush1.msra.mxu0 0.0
    %4434 = vmatprep.subr.mxu0 0.0
    %4435 = vmatpush1.msra.mxu0 0.0
    %4436 = vmatprep.subr.mxu0 0.0
    %4437 = vmatpush1.msra.mxu0 0.0
    %4438 = vmatprep.subr.mxu0 0.0
    %4439 = vmatpush1.msra.mxu0 0.0
    %4440 = vmatprep.subr.mxu0 0.0
    %4441 = vmatpush1.msra.mxu0 0.0
    %4442 = vmatprep.subr.mxu0 0.0
    %4443 = vmatpush1.msra.mxu0 0.0
    %4444 = vmatprep.subr.mxu0 0.0
    %4445 = vmatpush1.msra.mxu0 0.0
    %4446 = vmatprep.subr.mxu0 0.0
    %4447 = vmatpush1.msra.mxu0 0.0
    %4448 = vmatprep.subr.mxu0 0.0
    %4449 = vmatpush1.msra.mxu0 0.0
    %4450 = vmatprep.subr.mxu0 0.0
    %4451 = vmatpush1.msra.mxu0 0.0
    %4452 = vmatprep.mubr.f32.mxu0 0.0
    %4453 = vmatmul.mubr.f32.gmra.mrb[0].mxu0 %v4386
    %v4454 = vpop.f32.mrb[0].mxu0
    %v4455 = vadd.f32 0.0, %v4454
    %v4456 = vpop.f32.mrb[0].mxu0
    %4457 = vdwg.mxu0
    %4458 = vrot.lane.b32.xlu0 %v3446, 112
    %v4459 = vpop.permute.xlu0 %4458
    %4460 = vrot.lane.b32.xlu0 %v3446, 80
    %v4461 = vpop.permute.xlu0 %4460
    %v4462 = vsel %vm149, %v4459, 0
    %v4464 = vsel %vm149, %v4461, 0
    %4466 = vmatprep.subr.mxu0 0.0
    %4467 = vmatpush1.xpose.msra.mxu0 %v4464
    %4468 = vmatprep.subr.mxu0 0.0
    %4469 = vmatpush1.xpose.msra.mxu0 0.0
    %4470 = vmatprep.subr.mxu0 0.0
    %4471 = vmatpush1.xpose.msra.mxu0 0.0
    %4472 = vmatprep.subr.mxu0 0.0
    %4473 = vmatpush1.xpose.msra.mxu0 0.0
    %4474 = vmatprep.subr.mxu0 0.0
    %4475 = vmatpush1.xpose.msra.mxu0 0.0
    %4476 = vmatprep.subr.mxu0 0.0
    %4477 = vmatpush1.xpose.msra.mxu0 0.0
    %4478 = vmatprep.subr.mxu0 0.0
    %4479 = vmatpush1.xpose.msra.mxu0 0.0
    %4480 = vmatprep.subr.mxu0 0.0
    %4481 = vmatpush1.xpose.msra.mxu0 0.0
    %4482 = vmatprep.subr.mxu0 0.0
    %4483 = vmatpush1.xpose.msra.mxu0 0.0
    %4484 = vmatprep.subr.mxu0 0.0
    %4485 = vmatpush1.xpose.msra.mxu0 0.0
    %4486 = vmatprep.subr.mxu0 0.0
    %4487 = vmatpush1.xpose.msra.mxu0 0.0
    %4488 = vmatprep.subr.mxu0 0.0
    %4489 = vmatpush1.xpose.msra.mxu0 0.0
    %4490 = vmatprep.subr.mxu0 0.0
    %4491 = vmatpush1.xpose.msra.mxu0 0.0
    %4492 = vmatprep.subr.mxu0 0.0
    %4493 = vmatpush1.xpose.msra.mxu0 0.0
    %4494 = vmatprep.subr.mxu0 0.0
    %4495 = vmatpush1.xpose.msra.mxu0 0.0
    %4496 = vmatprep.subr.mxu0 0.0
    %4497 = vmatpush1.xpose.msra.mxu0 0.0
    %4498 = vmatprep.subr.mxu0 0.0
    %4499 = vmatpush1.xpose.msra.mxu0 0.0
    %4500 = vmatprep.subr.mxu0 0.0
    %4501 = vmatpush1.xpose.msra.mxu0 0.0
    %4502 = vmatprep.subr.mxu0 0.0
    %4503 = vmatpush1.xpose.msra.mxu0 0.0
    %4504 = vmatprep.subr.mxu0 0.0
    %4505 = vmatpush1.xpose.msra.mxu0 0.0
    %4506 = vmatprep.subr.mxu0 0.0
    %4507 = vmatpush1.xpose.msra.mxu0 0.0
    %4508 = vmatprep.subr.mxu0 0.0
    %4509 = vmatpush1.xpose.msra.mxu0 0.0
    %4510 = vmatprep.subr.mxu0 0.0
    %4511 = vmatpush1.xpose.msra.mxu0 0.0
    %4512 = vmatprep.subr.mxu0 0.0
    %4513 = vmatpush1.xpose.msra.mxu0 0.0
    %4514 = vmatprep.subr.mxu0 0.0
    %4515 = vmatpush1.xpose.msra.mxu0 0.0
    %4516 = vmatprep.subr.mxu0 0.0
    %4517 = vmatpush1.xpose.msra.mxu0 0.0
    %4518 = vmatprep.subr.mxu0 0.0
    %4519 = vmatpush1.xpose.msra.mxu0 0.0
    %4520 = vmatprep.subr.mxu0 0.0
    %4521 = vmatpush1.xpose.msra.mxu0 0.0
    %4522 = vmatprep.subr.mxu0 0.0
    %4523 = vmatpush1.xpose.msra.mxu0 0.0
    %4524 = vmatprep.subr.mxu0 0.0
    %4525 = vmatpush1.xpose.msra.mxu0 0.0
    %4526 = vmatprep.subr.mxu0 0.0
    %4527 = vmatpush1.xpose.msra.mxu0 0.0
    %4528 = vmatprep.subr.mxu0 0.0
    %4529 = vmatpush1.xpose.msra.mxu0 0.0
    %4530 = vmatprep.mubr.f32.mxu0 0.0
    %4531 = vmatmul.mubr.f32.gmra.mrb[0].mxu0 %v4462
    %v4532 = vpop.f32.mrb[0].mxu0
    %v4533 = vadd.f32 0.0, %v4532
    %v4534 = vpop.f32.mrb[0].mxu0
    %4535 = vdwg.mxu0
    %v4536 = vmul.f32 %v4533, 0.35355338
    %v4537 = vsel %vm149, %v4536, -inf
    %4538 = vmax.xlane.f32.xlu0 %v4537
    %v4539 = vpop.xlane.xlu0 %4538
    %v4540 = vsub.f32 %v4536, %v4539
    %v4541 = vmul.f32 %v4540, 1.442695
    %v4542 = vpow.pop %v4541
    %v4543 = vsel %vm149, %v4542, 0.0
    %4544 = vadd.xlane.f32.xlu0 %v4543
    %v4545 = vpop.xlane.xlu0 %4544
    %v4546 = vrcp.pop %v4545
    %v4547 = vmul.f32 %v4542, %v4546
    %4548 = vrot.lane.b32.xlu0 %v3446, 48
    %v4549 = vpop.permute.xlu0 %4548
    %v4552 = vsel %vm149, %v4547, 0
    %4554 = vmatprep.subr.mxu0 0.0
    %4555 = vmatpush1.msra.mxu0 %v4549
    %4556 = vmatprep.subr.mxu0 0.0
    %4557 = vmatpush1.msra.mxu0 0.0
    %4558 = vmatprep.subr.mxu0 0.0
    %4559 = vmatpush1.msra.mxu0 0.0
    %4560 = vmatprep.subr.mxu0 0.0
    %4561 = vmatpush1.msra.mxu0 0.0
    %4562 = vmatprep.subr.mxu0 0.0
    %4563 = vmatpush1.msra.mxu0 0.0
    %4564 = vmatprep.subr.mxu0 0.0
    %4565 = vmatpush1.msra.mxu0 0.0
    %4566 = vmatprep.subr.mxu0 0.0
    %4567 = vmatpush1.msra.mxu0 0.0
    %4568 = vmatprep.subr.mxu0 0.0
    %4569 = vmatpush1.msra.mxu0 0.0
    %4570 = vmatprep.subr.mxu0 0.0
    %4571 = vmatpush1.msra.mxu0 0.0
    %4572 = vmatprep.subr.mxu0 0.0
    %4573 = vmatpush1.msra.mxu0 0.0
    %4574 = vmatprep.subr.mxu0 0.0
    %4575 = vmatpush1.msra.mxu0 0.0
    %4576 = vmatprep.subr.mxu0 0.0
    %4577 = vmatpush1.msra.mxu0 0.0
    %4578 = vmatprep.subr.mxu0 0.0
    %4579 = vmatpush1.msra.mxu0 0.0
    %4580 = vmatprep.subr.mxu0 0.0
    %4581 = vmatpush1.msra.mxu0 0.0
    %4582 = vmatprep.subr.mxu0 0.0
    %4583 = vmatpush1.msra.mxu0 0.0
    %4584 = vmatprep.subr.mxu0 0.0
    %4585 = vmatpush1.msra.mxu0 0.0
    %4586 = vmatprep.subr.mxu0 0.0
    %4587 = vmatpush1.msra.mxu0 0.0
    %4588 = vmatprep.subr.mxu0 0.0
    %4589 = vmatpush1.msra.mxu0 0.0
    %4590 = vmatprep.subr.mxu0 0.0
    %4591 = vmatpush1.msra.mxu0 0.0
    %4592 = vmatprep.subr.mxu0 0.0
    %4593 = vmatpush1.msra.mxu0 0.0
    %4594 = vmatprep.subr.mxu0 0.0
    %4595 = vmatpush1.msra.mxu0 0.0
    %4596 = vmatprep.subr.mxu0 0.0
    %4597 = vmatpush1.msra.mxu0 0.0
    %4598 = vmatprep.subr.mxu0 0.0
    %4599 = vmatpush1.msra.mxu0 0.0
    %4600 = vmatprep.subr.mxu0 0.0
    %4601 = vmatpush1.msra.mxu0 0.0
    %4602 = vmatprep.subr.mxu0 0.0
    %4603 = vmatpush1.msra.mxu0 0.0
    %4604 = vmatprep.subr.mxu0 0.0
    %4605 = vmatpush1.msra.mxu0 0.0
    %4606 = vmatprep.subr.mxu0 0.0
    %4607 = vmatpush1.msra.mxu0 0.0
    %4608 = vmatprep.subr.mxu0 0.0
    %4609 = vmatpush1.msra.mxu0 0.0
    %4610 = vmatprep.subr.mxu0 0.0
    %4611 = vmatpush1.msra.mxu0 0.0
    %4612 = vmatprep.subr.mxu0 0.0
    %4613 = vmatpush1.msra.mxu0 0.0
    %4614 = vmatprep.subr.mxu0 0.0
    %4615 = vmatpush1.msra.mxu0 0.0
    %4616 = vmatprep.subr.mxu0 0.0
    %4617 = vmatpush1.msra.mxu0 0.0
    %4618 = vmatprep.mubr.f32.mxu0 0.0
    %4619 = vmatmul.mubr.f32.gmra.mrb[0].mxu0 %v4552
    %v4620 = vpop.f32.mrb[0].mxu0
    %v4621 = vadd.f32 0.0, %v4620
    %v4622 = vpop.f32.mrb[0].mxu0
    %4623 = vdwg.mxu0
    %4624 = vrot.lane.b32.xlu0 %v3446, 104
    %v4625 = vpop.permute.xlu0 %4624
    %4626 = vrot.lane.b32.xlu0 %v3446, 72
    %v4627 = vpop.permute.xlu0 %4626
    %v4628 = vsel %vm149, %v4625, 0
    %v4630 = vsel %vm149, %v4627, 0
    %4632 = vmatprep.subr.mxu0 0.0
    %4633 = vmatpush1.xpose.msra.mxu0 %v4630
    %4634 = vmatprep.subr.mxu0 0.0
    %4635 = vmatpush1.xpose.msra.mxu0 0.0
    %4636 = vmatprep.subr.mxu0 0.0
    %4637 = vmatpush1.xpose.msra.mxu0 0.0
    %4638 = vmatprep.subr.mxu0 0.0
    %4639 = vmatpush1.xpose.msra.mxu0 0.0
    %4640 = vmatprep.subr.mxu0 0.0
    %4641 = vmatpush1.xpose.msra.mxu0 0.0
    %4642 = vmatprep.subr.mxu0 0.0
    %4643 = vmatpush1.xpose.msra.mxu0 0.0
    %4644 = vmatprep.subr.mxu0 0.0
    %4645 = vmatpush1.xpose.msra.mxu0 0.0
    %4646 = vmatprep.subr.mxu0 0.0
    %4647 = vmatpush1.xpose.msra.mxu0 0.0
    %4648 = vmatprep.subr.mxu0 0.0
    %4649 = vmatpush1.xpose.msra.mxu0 0.0
    %4650 = vmatprep.subr.mxu0 0.0
    %4651 = vmatpush1.xpose.msra.mxu0 0.0
    %4652 = vmatprep.subr.mxu0 0.0
    %4653 = vmatpush1.xpose.msra.mxu0 0.0
    %4654 = vmatprep.subr.mxu0 0.0
    %4655 = vmatpush1.xpose.msra.mxu0 0.0
    %4656 = vmatprep.subr.mxu0 0.0
    %4657 = vmatpush1.xpose.msra.mxu0 0.0
    %4658 = vmatprep.subr.mxu0 0.0
    %4659 = vmatpush1.xpose.msra.mxu0 0.0
    %4660 = vmatprep.subr.mxu0 0.0
    %4661 = vmatpush1.xpose.msra.mxu0 0.0
    %4662 = vmatprep.subr.mxu0 0.0
    %4663 = vmatpush1.xpose.msra.mxu0 0.0
    %4664 = vmatprep.subr.mxu0 0.0
    %4665 = vmatpush1.xpose.msra.mxu0 0.0
    %4666 = vmatprep.subr.mxu0 0.0
    %4667 = vmatpush1.xpose.msra.mxu0 0.0
    %4668 = vmatprep.subr.mxu0 0.0
    %4669 = vmatpush1.xpose.msra.mxu0 0.0
    %4670 = vmatprep.subr.mxu0 0.0
    %4671 = vmatpush1.xpose.msra.mxu0 0.0
    %4672 = vmatprep.subr.mxu0 0.0
    %4673 = vmatpush1.xpose.msra.mxu0 0.0
    %4674 = vmatprep.subr.mxu0 0.0
    %4675 = vmatpush1.xpose.msra.mxu0 0.0
    %4676 = vmatprep.subr.mxu0 0.0
    %4677 = vmatpush1.xpose.msra.mxu0 0.0
    %4678 = vmatprep.subr.mxu0 0.0
    %4679 = vmatpush1.xpose.msra.mxu0 0.0
    %4680 = vmatprep.subr.mxu0 0.0
    %4681 = vmatpush1.xpose.msra.mxu0 0.0
    %4682 = vmatprep.subr.mxu0 0.0
    %4683 = vmatpush1.xpose.msra.mxu0 0.0
    %4684 = vmatprep.subr.mxu0 0.0
    %4685 = vmatpush1.xpose.msra.mxu0 0.0
    %4686 = vmatprep.subr.mxu0 0.0
    %4687 = vmatpush1.xpose.msra.mxu0 0.0
    %4688 = vmatprep.subr.mxu0 0.0
    %4689 = vmatpush1.xpose.msra.mxu0 0.0
    %4690 = vmatprep.subr.mxu0 0.0
    %4691 = vmatpush1.xpose.msra.mxu0 0.0
    %4692 = vmatprep.subr.mxu0 0.0
    %4693 = vmatpush1.xpose.msra.mxu0 0.0
    %4694 = vmatprep.subr.mxu0 0.0
    %4695 = vmatpush1.xpose.msra.mxu0 0.0
    %4696 = vmatprep.mubr.f32.mxu0 0.0
    %4697 = vmatmul.mubr.f32.gmra.mrb[0].mxu0 %v4628
    %v4698 = vpop.f32.mrb[0].mxu0
    %v4699 = vadd.f32 0.0, %v4698
    %v4700 = vpop.f32.mrb[0].mxu0
    %4701 = vdwg.mxu0
    %v4702 = vmul.f32 %v4699, 0.35355338
    %v4703 = vsel %vm149, %v4702, -inf
    %4704 = vmax.xlane.f32.xlu0 %v4703
    %v4705 = vpop.xlane.xlu0 %4704
    %v4706 = vsub.f32 %v4702, %v4705
    %v4707 = vmul.f32 %v4706, 1.442695
    %v4708 = vpow.pop %v4707
    %v4709 = vsel %vm149, %v4708, 0.0
    %4710 = vadd.xlane.f32.xlu0 %v4709
    %v4711 = vpop.xlane.xlu0 %4710
    %v4712 = vrcp.pop %v4711
    %v4713 = vmul.f32 %v4708, %v4712
    %4714 = vrot.lane.b32.xlu0 %v3446, 40
    %v4715 = vpop.permute.xlu0 %4714
    %v4718 = vsel %vm149, %v4713, 0
    %4720 = vmatprep.subr.mxu0 0.0
    %4721 = vmatpush1.msra.mxu0 %v4715
    %4722 = vmatprep.subr.mxu0 0.0
    %4723 = vmatpush1.msra.mxu0 0.0
    %4724 = vmatprep.subr.mxu0 0.0
    %4725 = vmatpush1.msra.mxu0 0.0
    %4726 = vmatprep.subr.mxu0 0.0
    %4727 = vmatpush1.msra.mxu0 0.0
    %4728 = vmatprep.subr.mxu0 0.0
    %4729 = vmatpush1.msra.mxu0 0.0
    %4730 = vmatprep.subr.mxu0 0.0
    %4731 = vmatpush1.msra.mxu0 0.0
    %4732 = vmatprep.subr.mxu0 0.0
    %4733 = vmatpush1.msra.mxu0 0.0
    %4734 = vmatprep.subr.mxu0 0.0
    %4735 = vmatpush1.msra.mxu0 0.0
    %4736 = vmatprep.subr.mxu0 0.0
    %4737 = vmatpush1.msra.mxu0 0.0
    %4738 = vmatprep.subr.mxu0 0.0
    %4739 = vmatpush1.msra.mxu0 0.0
    %4740 = vmatprep.subr.mxu0 0.0
    %4741 = vmatpush1.msra.mxu0 0.0
    %4742 = vmatprep.subr.mxu0 0.0
    %4743 = vmatpush1.msra.mxu0 0.0
    %4744 = vmatprep.subr.mxu0 0.0
    %4745 = vmatpush1.msra.mxu0 0.0
    %4746 = vmatprep.subr.mxu0 0.0
    %4747 = vmatpush1.msra.mxu0 0.0
    %4748 = vmatprep.subr.mxu0 0.0
    %4749 = vmatpush1.msra.mxu0 0.0
    %4750 = vmatprep.subr.mxu0 0.0
    %4751 = vmatpush1.msra.mxu0 0.0
    %4752 = vmatprep.subr.mxu0 0.0
    %4753 = vmatpush1.msra.mxu0 0.0
    %4754 = vmatprep.subr.mxu0 0.0
    %4755 = vmatpush1.msra.mxu0 0.0
    %4756 = vmatprep.subr.mxu0 0.0
    %4757 = vmatpush1.msra.mxu0 0.0
    %4758 = vmatprep.subr.mxu0 0.0
    %4759 = vmatpush1.msra.mxu0 0.0
    %4760 = vmatprep.subr.mxu0 0.0
    %4761 = vmatpush1.msra.mxu0 0.0
    %4762 = vmatprep.subr.mxu0 0.0
    %4763 = vmatpush1.msra.mxu0 0.0
    %4764 = vmatprep.subr.mxu0 0.0
    %4765 = vmatpush1.msra.mxu0 0.0
    %4766 = vmatprep.subr.mxu0 0.0
    %4767 = vmatpush1.msra.mxu0 0.0
    %4768 = vmatprep.subr.mxu0 0.0
    %4769 = vmatpush1.msra.mxu0 0.0
    %4770 = vmatprep.subr.mxu0 0.0
    %4771 = vmatpush1.msra.mxu0 0.0
    %4772 = vmatprep.subr.mxu0 0.0
    %4773 = vmatpush1.msra.mxu0 0.0
    %4774 = vmatprep.subr.mxu0 0.0
    %4775 = vmatpush1.msra.mxu0 0.0
    %4776 = vmatprep.subr.mxu0 0.0
    %4777 = vmatpush1.msra.mxu0 0.0
    %4778 = vmatprep.subr.mxu0 0.0
    %4779 = vmatpush1.msra.mxu0 0.0
    %4780 = vmatprep.subr.mxu0 0.0
    %4781 = vmatpush1.msra.mxu0 0.0
    %4782 = vmatprep.subr.mxu0 0.0
    %4783 = vmatpush1.msra.mxu0 0.0
    %4784 = vmatprep.mubr.f32.mxu0 0.0
    %4785 = vmatmul.mubr.f32.gmra.mrb[0].mxu0 %v4718
    %v4786 = vpop.f32.mrb[0].mxu0
    %v4787 = vadd.f32 0.0, %v4786
    %v4788 = vpop.f32.mrb[0].mxu0
    %4789 = vdwg.mxu0
    %4791 = vrot.lane.b32.xlu0 %v4455, 8
    %v4792 = vpop.permute.xlu0 %4791
    %4795 = vrot.lane.b32.xlu0 %v4621, 16
    %v4796 = vpop.permute.xlu0 %4795
    %4799 = vrot.lane.b32.xlu0 %v4787, 24
    %v4800 = vpop.permute.xlu0 %4799
    %v4802 = vsel %vm149, %v4289, %v4792
    %v4803 = vsel %vm823, %v4802, %v4796
    %v4804 = vsel %vm825, %v4803, %v4800
    %s4805 = scalar_lea.vmem %s3, 32
    %v4806 = vld [vmem:[%s4805] sm:$0xff]
    %v4807 = vld [vmem:[%s4805 + $0x8] sm:$0xff]
    %v4808 = vld [vmem:[%s4805 + $0x10] sm:$0xff]
    %v4809 = vld [vmem:[%s4805 + $0x18] sm:$0xff]
    %s4810 = scalar_lea.vmem %s4, 1
    %v4811 = vld [vmem:[%s4810] sm:$0x1]
    %v4813 = vlaneseq
    %v4814 = vshrl.u32 %v4813, 7
    %v4815 = vsub.s32 0, %v4814
    %v4816 = vrot.slane %v4811, %v4815
    %v4819 = vsel %vm64, %v4126, 0
    %v4822 = vsel %vm64, %v4804, 0
    %4824 = vmatprep.subr.mxu0 0.0
    %4825 = vmatpush1.msra.mxu0 %v4806
    %4826 = vmatprep.subr.mxu0 0.0
    %4827 = vmatpush1.msra.mxu0 %v4807
    %4828 = vmatprep.subr.mxu0 0.0
    %4829 = vmatpush1.msra.mxu0 %v4808
    %4830 = vmatprep.subr.mxu0 0.0
    %4831 = vmatpush1.msra.mxu0 %v4809
    %4832 = vmatprep.subr.mxu0 0.0
    %4833 = vmatpush1.msra.mxu0 0.0
    %4834 = vmatprep.subr.mxu0 0.0
    %4835 = vmatpush1.msra.mxu0 0.0
    %4836 = vmatprep.subr.mxu0 0.0
    %4837 = vmatpush1.msra.mxu0 0.0
    %4838 = vmatprep.subr.mxu0 0.0
    %4839 = vmatpush1.msra.mxu0 0.0
    %4840 = vmatprep.subr.mxu0 0.0
    %4841 = vmatpush1.msra.mxu0 0.0
    %4842 = vmatprep.subr.mxu0 0.0
    %4843 = vmatpush1.msra.mxu0 0.0
    %4844 = vmatprep.subr.mxu0 0.0
    %4845 = vmatpush1.msra.mxu0 0.0
    %4846 = vmatprep.subr.mxu0 0.0
    %4847 = vmatpush1.msra.mxu0 0.0
    %4848 = vmatprep.subr.mxu0 0.0
    %4849 = vmatpush1.msra.mxu0 0.0
    %4850 = vmatprep.subr.mxu0 0.0
    %4851 = vmatpush1.msra.mxu0 0.0
    %4852 = vmatprep.subr.mxu0 0.0
    %4853 = vmatpush1.msra.mxu0 0.0
    %4854 = vmatprep.subr.mxu0 0.0
    %4855 = vmatpush1.msra.mxu0 0.0
    %4856 = vmatprep.subr.mxu0 0.0
    %4857 = vmatpush1.msra.mxu0 0.0
    %4858 = vmatprep.subr.mxu0 0.0
    %4859 = vmatpush1.msra.mxu0 0.0
    %4860 = vmatprep.subr.mxu0 0.0
    %4861 = vmatpush1.msra.mxu0 0.0
    %4862 = vmatprep.subr.mxu0 0.0
    %4863 = vmatpush1.msra.mxu0 0.0
    %4864 = vmatprep.subr.mxu0 0.0
    %4865 = vmatpush1.msra.mxu0 0.0
    %4866 = vmatprep.subr.mxu0 0.0
    %4867 = vmatpush1.msra.mxu0 0.0
    %4868 = vmatprep.subr.mxu0 0.0
    %4869 = vmatpush1.msra.mxu0 0.0
    %4870 = vmatprep.subr.mxu0 0.0
    %4871 = vmatpush1.msra.mxu0 0.0
    %4872 = vmatprep.subr.mxu0 0.0
    %4873 = vmatpush1.msra.mxu0 0.0
    %4874 = vmatprep.subr.mxu0 0.0
    %4875 = vmatpush1.msra.mxu0 0.0
    %4876 = vmatprep.subr.mxu0 0.0
    %4877 = vmatpush1.msra.mxu0 0.0
    %4878 = vmatprep.subr.mxu0 0.0
    %4879 = vmatpush1.msra.mxu0 0.0
    %4880 = vmatprep.subr.mxu0 0.0
    %4881 = vmatpush1.msra.mxu0 0.0
    %4882 = vmatprep.subr.mxu0 0.0
    %4883 = vmatpush1.msra.mxu0 0.0
    %4884 = vmatprep.subr.mxu0 0.0
    %4885 = vmatpush1.msra.mxu0 0.0
    %4886 = vmatprep.subr.mxu0 0.0
    %4887 = vmatpush1.msra.mxu0 0.0
    %4888 = vmatprep.mubr.f32.mxu0 0.0
    %4889 = vmatmul.mubr.f32.gmra.mrb[0].mxu0 %v4819
    %v4890 = vpop.f32.mrb[0].mxu0
    %v4891 = vadd.f32 %v4816, %v4890
    %v4892 = vpop.f32.mrb[0].mxu0
    %4893 = vmatprep.mubr.f32.mxu0 0.0
    %4894 = vmatmul.mubr.f32.gmra.mrb[0].mxu0 %v4822
    %v4895 = vpop.f32.mrb[0].mxu0
    %v4896 = vadd.f32 %v4816, %v4895
    %v4897 = vpop.f32.mrb[0].mxu0
    %4898 = vdwg.mxu0
    %v4899 = vadd.f32 %v3353, %v4891
    %v4900 = vadd.f32 %v3354, %v4896
    %s4901 = scalar_lea.vmem %s5, 1
    %v4902 = vld [vmem:[%s4901] sm:$0x1]
    %s4903 = scalar_lea.vmem %s6, 1
    %v4904 = vld [vmem:[%s4903] sm:$0x1]
    %v4905 = vsel %vm64, %v4899, 0.0
    %4906 = vadd.xlane.f32.xlu0 %v4905
    %v4907 = vpop.xlane.xlu0 %4906
    %v4908 = vsel %vm64, %v4900, 0.0
    %4909 = vadd.xlane.f32.xlu0 %v4908
    %v4910 = vpop.xlane.xlu0 %4909
    %v4911 = vmul.f32 %v4907, %v1607
    %v4912 = vmul.f32 %v4910, %v1607
    %v4913 = vsub.f32 %v4899, %v4911
    %v4914 = vsub.f32 %v4900, %v4912
    %v4915 = vmul.f32 %v4913, %v4913
    %v4916 = vmul.f32 %v4914, %v4914
    %v4917 = vsel %vm64, %v4915, 0.0
    %4918 = vadd.xlane.f32.xlu0 %v4917
    %v4919 = vpop.xlane.xlu0 %4918
    %v4920 = vsel %vm64, %v4916, 0.0
    %4921 = vadd.xlane.f32.xlu0 %v4920
    %v4922 = vpop.xlane.xlu0 %4921
    %v4923 = vmul.f32 %v4919, %v1607
    %v4924 = vmul.f32 %v4922, %v1607
    %v4925 = vadd.f32 %v4923, 1e-05
    %v4926 = vadd.f32 %v4924, 1e-05
    %v4927 = vrsqrt.pop %v4925
    %v4928 = vrsqrt.pop %v4926
    %v4929 = vmul.f32 %v4913, %v4927
    %v4930 = vmul.f32 %v4914, %v4928
    %v4932 = vlaneseq
    %v4933 = vshrl.u32 %v4932, 7
    %v4934 = vsub.s32 0, %v4933
    %v4935 = vrot.slane %v4902, %v4934
    %v4937 = vmul.f32 %v4929, %v4935
    %v4938 = vmul.f32 %v4930, %v4935
    %v4940 = vlaneseq
    %v4941 = vshrl.u32 %v4940, 7
    %v4942 = vsub.s32 0, %v4941
    %v4943 = vrot.slane %v4904, %v4942
    %v4945 = vadd.f32 %v4937, %v4943
    %v4946 = vadd.f32 %v4938, %v4943
    %s4947 = scalar_lea.vmem %s7, 512
    %v4948 = vld [vmem:[%s4947] sm:$0xff]
    %v4949 = vld [vmem:[%s4947 + $0x8] sm:$0xff]
    %v4950 = vld [vmem:[%s4947 + $0x10] sm:$0xff]
    %v4951 = vld [vmem:[%s4947 + $0x18] sm:$0xff]
    %v4952 = vld [vmem:[%s4947 + $0x20] sm:$0xff]
    %v4953 = vld [vmem:[%s4947 + $0x28] sm:$0xff]
    %v4954 = vld [vmem:[%s4947 + $0x30] sm:$0xff]
    %v4955 = vld [vmem:[%s4947 + $0x38] sm:$0xff]
    %v4956 = vld [vmem:[%s4947 + $0x40] sm:$0xff]
    %v4957 = vld [vmem:[%s4947 + $0x48] sm:$0xff]
    %v4958 = vld [vmem:[%s4947 + $0x50] sm:$0xff]
    %v4959 = vld [vmem:[%s4947 + $0x58] sm:$0xff]
    %v4960 = vld [vmem:[%s4947 + $0x60] sm:$0xff]
    %v4961 = vld [vmem:[%s4947 + $0x68] sm:$0xff]
    %v4962 = vld [vmem:[%s4947 + $0x70] sm:$0xff]
    %v4963 = vld [vmem:[%s4947 + $0x78] sm:$0xff]
    %v4964 = vld [vmem:[%s4947 + $0x80] sm:$0xff]
    %v4965 = vld [vmem:[%s4947 + $0x88] sm:$0xff]
    %v4966 = vld [vmem:[%s4947 + $0x90] sm:$0xff]
    %v4967 = vld [vmem:[%s4947 + $0x98] sm:$0xff]
    %v4968 = vld [vmem:[%s4947 + $0xa0] sm:$0xff]
    %v4969 = vld [vmem:[%s4947 + $0xa8] sm:$0xff]
    %v4970 = vld [vmem:[%s4947 + $0xb0] sm:$0xff]
    %v4971 = vld [vmem:[%s4947 + $0xb8] sm:$0xff]
    %v4972 = vld [vmem:[%s4947 + $0xc0] sm:$0xff]
    %v4973 = vld [vmem:[%s4947 + $0xc8] sm:$0xff]
    %v4974 = vld [vmem:[%s4947 + $0xd0] sm:$0xff]
    %v4975 = vld [vmem:[%s4947 + $0xd8] sm:$0xff]
    %v4976 = vld [vmem:[%s4947 + $0xe0] sm:$0xff]
    %v4977 = vld [vmem:[%s4947 + $0xe8] sm:$0xff]
    %v4978 = vld [vmem:[%s4947 + $0xf0] sm:$0xff]
    %v4979 = vld [vmem:[%s4947 + $0xf8] sm:$0xff]
    %v4980 = vld [vmem:[%s4947 + $0x100] sm:$0xff]
    %v4981 = vld [vmem:[%s4947 + $0x108] sm:$0xff]
    %v4982 = vld [vmem:[%s4947 + $0x110] sm:$0xff]
    %v4983 = vld [vmem:[%s4947 + $0x118] sm:$0xff]
    %v4984 = vld [vmem:[%s4947 + $0x120] sm:$0xff]
    %v4985 = vld [vmem:[%s4947 + $0x128] sm:$0xff]
    %v4986 = vld [vmem:[%s4947 + $0x130] sm:$0xff]
    %v4987 = vld [vmem:[%s4947 + $0x138] sm:$0xff]
    %v4988 = vld [vmem:[%s4947 + $0x140] sm:$0xff]
    %v4989 = vld [vmem:[%s4947 + $0x148] sm:$0xff]
    %v4990 = vld [vmem:[%s4947 + $0x150] sm:$0xff]
    %v4991 = vld [vmem:[%s4947 + $0x158] sm:$0xff]
    %v4992 = vld [vmem:[%s4947 + $0x160] sm:$0xff]
    %v4993 = vld [vmem:[%s4947 + $0x168] sm:$0xff]
    %v4994 = vld [vmem:[%s4947 + $0x170] sm:$0xff]
    %v4995 = vld [vmem:[%s4947 + $0x178] sm:$0xff]
    %v4996 = vld [vmem:[%s4947 + $0x180] sm:$0xff]
    %v4997 = vld [vmem:[%s4947 + $0x188] sm:$0xff]
    %v4998 = vld [vmem:[%s4947 + $0x190] sm:$0xff]
    %v4999 = vld [vmem:[%s4947 + $0x198] sm:$0xff]
    %v5000 = vld [vmem:[%s4947 + $0x1a0] sm:$0xff]
    %v5001 = vld [vmem:[%s4947 + $0x1a8] sm:$0xff]
    %v5002 = vld [vmem:[%s4947 + $0x1b0] sm:$0xff]
    %v5003 = vld [vmem:[%s4947 + $0x1b8] sm:$0xff]
    %v5004 = vld [vmem:[%s4947 + $0x1c0] sm:$0xff]
    %v5005 = vld [vmem:[%s4947 + $0x1c8] sm:$0xff]
    %v5006 = vld [vmem:[%s4947 + $0x1d0] sm:$0xff]
    %v5007 = vld [vmem:[%s4947 + $0x1d8] sm:$0xff]
    %v5008 = vld [vmem:[%s4947 + $0x1e0] sm:$0xff]
    %v5009 = vld [vmem:[%s4947 + $0x1e8] sm:$0xff]
    %v5010 = vld [vmem:[%s4947 + $0x1f0] sm:$0xff]
    %v5011 = vld [vmem:[%s4947 + $0x1f8] sm:$0xff]
    %s5012 = scalar_lea.vmem %s8, 16
    %v5013 = vld [vmem:[%s5012] sm:$0xff]
    %v5014 = vld [vmem:[%s5012 + $0x8] sm:$0xff]
    %v5017 = vlaneseq
    %v5018 = vshrl.u32 %v5017, 7
    %v5019 = vsub.s32 0, %v5018
    %v5020 = vrot.slane %v5013, %v5019
    %v5021 = vlaneseq
    %v5022 = vshrl.u32 %v5021, 7
    %v5023 = vsub.s32 1, %v5022
    %v5024 = vrot.slane %v5013, %v5023
    %v5025 = vlaneseq
    %v5026 = vshrl.u32 %v5025, 7
    %v5027 = vsub.s32 2, %v5026
    %v5028 = vrot.slane %v5013, %v5027
    %v5029 = vlaneseq
    %v5030 = vshrl.u32 %v5029, 7
    %v5031 = vsub.s32 3, %v5030
    %v5032 = vrot.slane %v5013, %v5031
    %v5033 = vlaneseq
    %v5034 = vshrl.u32 %v5033, 7
    %v5035 = vsub.s32 4, %v5034
    %v5036 = vrot.slane %v5013, %v5035
    %v5037 = vlaneseq
    %v5038 = vshrl.u32 %v5037, 7
    %v5039 = vsub.s32 5, %v5038
    %v5040 = vrot.slane %v5013, %v5039
    %v5041 = vlaneseq
    %v5042 = vshrl.u32 %v5041, 7
    %v5043 = vsub.s32 6, %v5042
    %v5044 = vrot.slane %v5013, %v5043
    %v5045 = vlaneseq
    %v5046 = vshrl.u32 %v5045, 7
    %v5047 = vsub.s32 7, %v5046
    %v5048 = vrot.slane %v5013, %v5047
    %v5049 = vlaneseq
    %v5050 = vshrl.u32 %v5049, 7
    %v5051 = vsub.s32 0, %v5050
    %v5052 = vrot.slane %v5014, %v5051
    %v5053 = vlaneseq
    %v5054 = vshrl.u32 %v5053, 7
    %v5055 = vsub.s32 1, %v5054
    %v5056 = vrot.slane %v5014, %v5055
    %v5057 = vlaneseq
    %v5058 = vshrl.u32 %v5057, 7
    %v5059 = vsub.s32 2, %v5058
    %v5060 = vrot.slane %v5014, %v5059
    %v5061 = vlaneseq
    %v5062 = vshrl.u32 %v5061, 7
    %v5063 = vsub.s32 3, %v5062
    %v5064 = vrot.slane %v5014, %v5063
    %v5065 = vlaneseq
    %v5066 = vshrl.u32 %v5065, 7
    %v5067 = vsub.s32 4, %v5066
    %v5068 = vrot.slane %v5014, %v5067
    %v5069 = vlaneseq
    %v5070 = vshrl.u32 %v5069, 7
    %v5071 = vsub.s32 5, %v5070
    %v5072 = vrot.slane %v5014, %v5071
    %v5073 = vlaneseq
    %v5074 = vshrl.u32 %v5073, 7
    %v5075 = vsub.s32 6, %v5074
    %v5076 = vrot.slane %v5014, %v5075
    %v5077 = vlaneseq
    %v5078 = vshrl.u32 %v5077, 7
    %v5079 = vsub.s32 7, %v5078
    %v5080 = vrot.slane %v5014, %v5079
    %v5098 = vsel %vm64, %v4945, 0
    %v5101 = vsel %vm64, %v4946, 0
    %5103 = vmatprep.subr.mxu0 %v4949
    %5104 = vmatpush1.msra.mxu0 %v4948
    %5105 = vmatprep.subr.mxu0 %v4965
    %5106 = vmatpush1.msra.mxu0 %v4964
    %5107 = vmatprep.subr.mxu0 %v4981
    %5108 = vmatpush1.msra.mxu0 %v4980
    %5109 = vmatprep.subr.mxu0 %v4997
    %5110 = vmatpush1.msra.mxu0 %v4996
    %5111 = vmatprep.subr.mxu0 0.0
    %5112 = vmatpush1.msra.mxu0 0.0
    %5113 = vmatprep.subr.mxu0 0.0
    %5114 = vmatpush1.msra.mxu0 0.0
    %5115 = vmatprep.subr.mxu0 0.0
    %5116 = vmatpush1.msra.mxu0 0.0
    %5117 = vmatprep.subr.mxu0 0.0
    %5118 = vmatpush1.msra.mxu0 0.0
    %5119 = vmatprep.subr.mxu0 0.0
    %5120 = vmatpush1.msra.mxu0 0.0
    %5121 = vmatprep.subr.mxu0 0.0
    %5122 = vmatpush1.msra.mxu0 0.0
    %5123 = vmatprep.subr.mxu0 0.0
    %5124 = vmatpush1.msra.mxu0 0.0
    %5125 = vmatprep.subr.mxu0 0.0
    %5126 = vmatpush1.msra.mxu0 0.0
    %5127 = vmatprep.subr.mxu0 0.0
    %5128 = vmatpush1.msra.mxu0 0.0
    %5129 = vmatprep.subr.mxu0 0.0
    %5130 = vmatpush1.msra.mxu0 0.0
    %5131 = vmatprep.subr.mxu0 0.0
    %5132 = vmatpush1.msra.mxu0 0.0
    %5133 = vmatprep.subr.mxu0 0.0
    %5134 = vmatpush1.msra.mxu0 0.0
    %5135 = vmatprep.subr.mxu0 0.0
    %5136 = vmatpush1.msra.mxu0 0.0
    %5137 = vmatprep.subr.mxu0 0.0
    %5138 = vmatpush1.msra.mxu0 0.0
    %5139 = vmatprep.subr.mxu0 0.0
    %5140 = vmatpush1.msra.mxu0 0.0
    %5141 = vmatprep.subr.mxu0 0.0
    %5142 = vmatpush1.msra.mxu0 0.0
    %5143 = vmatprep.subr.mxu0 0.0
    %5144 = vmatpush1.msra.mxu0 0.0
    %5145 = vmatprep.subr.mxu0 0.0
    %5146 = vmatpush1.msra.mxu0 0.0
    %5147 = vmatprep.subr.mxu0 0.0
    %5148 = vmatpush1.msra.mxu0 0.0
    %5149 = vmatprep.subr.mxu0 0.0
    %5150 = vmatpush1.msra.mxu0 0.0
    %5151 = vmatprep.subr.mxu0 0.0
    %5152 = vmatpush1.msra.mxu0 0.0
    %5153 = vmatprep.subr.mxu0 0.0
    %5154 = vmatpush1.msra.mxu0 0.0
    %5155 = vmatprep.subr.mxu0 0.0
    %5156 = vmatpush1.msra.mxu0 0.0
    %5157 = vmatprep.subr.mxu0 0.0
    %5158 = vmatpush1.msra.mxu0 0.0
    %5159 = vmatprep.subr.mxu0 0.0
    %5160 = vmatpush1.msra.mxu0 0.0
    %5161 = vmatprep.subr.mxu0 0.0
    %5162 = vmatpush1.msra.mxu0 0.0
    %5163 = vmatprep.subr.mxu0 0.0
    %5164 = vmatpush1.msra.mxu0 0.0
    %5165 = vmatprep.subr.mxu0 0.0
    %5166 = vmatpush1.msra.mxu0 0.0
    %5167 = vmatprep.mubr.f32.mxu0 0.0
    %5168 = vmatmul.mubr.f32.gmra.mrb[0].mxu0 %v5098
    %v5169 = vpop.f32.mrb[0].mxu0
    %v5170 = vadd.f32 %v5020, %v5169
    %v5171 = vpop.f32.mrb[0].mxu0
    %v5172 = vadd.f32 %v5024, %v5171
    %5173 = vmatprep.mubr.f32.mxu0 0.0
    %5174 = vmatmul.mubr.f32.gmra.mrb[0].mxu0 %v5101
    %v5175 = vpop.f32.mrb[0].mxu0
    %v5176 = vadd.f32 %v5020, %v5175
    %v5177 = vpop.f32.mrb[0].mxu0
    %v5178 = vadd.f32 %v5024, %v5177
    %5179 = vdwg.mxu0
    %5180 = vmatprep.subr.mxu0 %v4951
    %5181 = vmatpush1.msra.mxu0 %v4950
    %5182 = vmatprep.subr.mxu0 %v4967
    %5183 = vmatpush1.msra.mxu0 %v4966
    %5184 = vmatprep.subr.mxu0 %v4983
    %5185 = vmatpush1.msra.mxu0 %v4982
    %5186 = vmatprep.subr.mxu0 %v4999
    %5187 = vmatpush1.msra.mxu0 %v4998
    %5188 = vmatprep.subr.mxu0 0.0
    %5189 = vmatpush1.msra.mxu0 0.0
    %5190 = vmatprep.subr.mxu0 0.0
    %5191 = vmatpush1.msra.mxu0 0.0
    %5192 = vmatprep.subr.mxu0 0.0
    %5193 = vmatpush1.msra.mxu0 0.0
    %5194 = vmatprep.subr.mxu0 0.0
    %5195 = vmatpush1.msra.mxu0 0.0
    %5196 = vmatprep.subr.mxu0 0.0
    %5197 = vmatpush1.msra.mxu0 0.0
    %5198 = vmatprep.subr.mxu0 0.0
    %5199 = vmatpush1.msra.mxu0 0.0
    %5200 = vmatprep.subr.mxu0 0.0
    %5201 = vmatpush1.msra.mxu0 0.0
    %5202 = vmatprep.subr.mxu0 0.0
    %5203 = vmatpush1.msra.mxu0 0.0
    %5204 = vmatprep.subr.mxu0 0.0
    %5205 = vmatpush1.msra.mxu0 0.0
    %5206 = vmatprep.subr.mxu0 0.0
    %5207 = vmatpush1.msra.mxu0 0.0
    %5208 = vmatprep.subr.mxu0 0.0
    %5209 = vmatpush1.msra.mxu0 0.0
    %5210 = vmatprep.subr.mxu0 0.0
    %5211 = vmatpush1.msra.mxu0 0.0
    %5212 = vmatprep.subr.mxu0 0.0
    %5213 = vmatpush1.msra.mxu0 0.0
    %5214 = vmatprep.subr.mxu0 0.0
    %5215 = vmatpush1.msra.mxu0 0.0
    %5216 = vmatprep.subr.mxu0 0.0
    %5217 = vmatpush1.msra.mxu0 0.0
    %5218 = vmatprep.subr.mxu0 0.0
    %5219 = vmatpush1.msra.mxu0 0.0
    %5220 = vmatprep.subr.mxu0 0.0
    %5221 = vmatpush1.msra.mxu0 0.0
    %5222 = vmatprep.subr.mxu0 0.0
    %5223 = vmatpush1.msra.mxu0 0.0
    %5224 = vmatprep.subr.mxu0 0.0
    %5225 = vmatpush1.msra.mxu0 0.0
    %5226 = vmatprep.subr.mxu0 0.0
    %5227 = vmatpush1.msra.mxu0 0.0
    %5228 = vmatprep.subr.mxu0 0.0
    %5229 = vmatpush1.msra.mxu0 0.0
    %5230 = vmatprep.subr.mxu0 0.0
    %5231 = vmatpush1.msra.mxu0 0.0
    %5232 = vmatprep.subr.mxu0 0.0
    %5233 = vmatpush1.msra.mxu0 0.0
    %5234 = vmatprep.subr.mxu0 0.0
    %5235 = vmatpush1.msra.mxu0 0.0
    %5236 = vmatprep.subr.mxu0 0.0
    %5237 = vmatpush1.msra.mxu0 0.0
    %5238 = vmatprep.subr.mxu0 0.0
    %5239 = vmatpush1.msra.mxu0 0.0
    %5240 = vmatprep.subr.mxu0 0.0
    %5241 = vmatpush1.msra.mxu0 0.0
    %5242 = vmatprep.subr.mxu0 0.0
    %5243 = vmatpush1.msra.mxu0 0.0
    %5244 = vmatprep.mubr.f32.mxu0 0.0
    %5245 = vmatmul.mubr.f32.gmra.mrb[0].mxu0 %v5098
    %v5246 = vpop.f32.mrb[0].mxu0
    %v5247 = vadd.f32 %v5028, %v5246
    %v5248 = vpop.f32.mrb[0].mxu0
    %v5249 = vadd.f32 %v5032, %v5248
    %5250 = vmatprep.mubr.f32.mxu0 0.0
    %5251 = vmatmul.mubr.f32.gmra.mrb[0].mxu0 %v5101
    %v5252 = vpop.f32.mrb[0].mxu0
    %v5253 = vadd.f32 %v5028, %v5252
    %v5254 = vpop.f32.mrb[0].mxu0
    %v5255 = vadd.f32 %v5032, %v5254
    %5256 = vdwg.mxu0
    %5257 = vmatprep.subr.mxu0 %v4953
    %5258 = vmatpush1.msra.mxu0 %v4952
    %5259 = vmatprep.subr.mxu0 %v4969
    %5260 = vmatpush1.msra.mxu0 %v4968
    %5261 = vmatprep.subr.mxu0 %v4985
    %5262 = vmatpush1.msra.mxu0 %v4984
    %5263 = vmatprep.subr.mxu0 %v5001
    %5264 = vmatpush1.msra.mxu0 %v5000
    %5265 = vmatprep.subr.mxu0 0.0
    %5266 = vmatpush1.msra.mxu0 0.0
    %5267 = vmatprep.subr.mxu0 0.0
    %5268 = vmatpush1.msra.mxu0 0.0
    %5269 = vmatprep.subr.mxu0 0.0
    %5270 = vmatpush1.msra.mxu0 0.0
    %5271 = vmatprep.subr.mxu0 0.0
    %5272 = vmatpush1.msra.mxu0 0.0
    %5273 = vmatprep.subr.mxu0 0.0
    %5274 = vmatpush1.msra.mxu0 0.0
    %5275 = vmatprep.subr.mxu0 0.0
    %5276 = vmatpush1.msra.mxu0 0.0
    %5277 = vmatprep.subr.mxu0 0.0
    %5278 = vmatpush1.msra.mxu0 0.0
    %5279 = vmatprep.subr.mxu0 0.0
    %5280 = vmatpush1.msra.mxu0 0.0
    %5281 = vmatprep.subr.mxu0 0.0
    %5282 = vmatpush1.msra.mxu0 0.0
    %5283 = vmatprep.subr.mxu0 0.0
    %5284 = vmatpush1.msra.mxu0 0.0
    %5285 = vmatprep.subr.mxu0 0.0
    %5286 = vmatpush1.msra.mxu0 0.0
    %5287 = vmatprep.subr.mxu0 0.0
    %5288 = vmatpush1.msra.mxu0 0.0
    %5289 = vmatprep.subr.mxu0 0.0
    %5290 = vmatpush1.msra.mxu0 0.0
    %5291 = vmatprep.subr.mxu0 0.0
    %5292 = vmatpush1.msra.mxu0 0.0
    %5293 = vmatprep.subr.mxu0 0.0
    %5294 = vmatpush1.msra.mxu0 0.0
    %5295 = vmatprep.subr.mxu0 0.0
    %5296 = vmatpush1.msra.mxu0 0.0
    %5297 = vmatprep.subr.mxu0 0.0
    %5298 = vmatpush1.msra.mxu0 0.0
    %5299 = vmatprep.subr.mxu0 0.0
    %5300 = vmatpush1.msra.mxu0 0.0
    %5301 = vmatprep.subr.mxu0 0.0
    %5302 = vmatpush1.msra.mxu0 0.0
    %5303 = vmatprep.subr.mxu0 0.0
    %5304 = vmatpush1.msra.mxu0 0.0
    %5305 = vmatprep.subr.mxu0 0.0
    %5306 = vmatpush1.msra.mxu0 0.0
    %5307 = vmatprep.subr.mxu0 0.0
    %5308 = vmatpush1.msra.mxu0 0.0
    %5309 = vmatprep.subr.mxu0 0.0
    %5310 = vmatpush1.msra.mxu0 0.0
    %5311 = vmatprep.subr.mxu0 0.0
    %5312 = vmatpush1.msra.mxu0 0.0
    %5313 = vmatprep.subr.mxu0 0.0
    %5314 = vmatpush1.msra.mxu0 0.0
    %5315 = vmatprep.subr.mxu0 0.0
    %5316 = vmatpush1.msra.mxu0 0.0
    %5317 = vmatprep.subr.mxu0 0.0
    %5318 = vmatpush1.msra.mxu0 0.0
    %5319 = vmatprep.subr.mxu0 0.0
    %5320 = vmatpush1.msra.mxu0 0.0
    %5321 = vmatprep.mubr.f32.mxu0 0.0
    %5322 = vmatmul.mubr.f32.gmra.mrb[0].mxu0 %v5098
    %v5323 = vpop.f32.mrb[0].mxu0
    %v5324 = vadd.f32 %v5036, %v5323
    %v5325 = vpop.f32.mrb[0].mxu0
    %v5326 = vadd.f32 %v5040, %v5325
    %5327 = vmatprep.mubr.f32.mxu0 0.0
    %5328 = vmatmul.mubr.f32.gmra.mrb[0].mxu0 %v5101
    %v5329 = vpop.f32.mrb[0].mxu0
    %v5330 = vadd.f32 %v5036, %v5329
    %v5331 = vpop.f32.mrb[0].mxu0
    %v5332 = vadd.f32 %v5040, %v5331
    %5333 = vdwg.mxu0
    %5334 = vmatprep.subr.mxu0 %v4955
    %5335 = vmatpush1.msra.mxu0 %v4954
    %5336 = vmatprep.subr.mxu0 %v4971
    %5337 = vmatpush1.msra.mxu0 %v4970
    %5338 = vmatprep.subr.mxu0 %v4987
    %5339 = vmatpush1.msra.mxu0 %v4986
    %5340 = vmatprep.subr.mxu0 %v5003
    %5341 = vmatpush1.msra.mxu0 %v5002
    %5342 = vmatprep.subr.mxu0 0.0
    %5343 = vmatpush1.msra.mxu0 0.0
    %5344 = vmatprep.subr.mxu0 0.0
    %5345 = vmatpush1.msra.mxu0 0.0
    %5346 = vmatprep.subr.mxu0 0.0
    %5347 = vmatpush1.msra.mxu0 0.0
    %5348 = vmatprep.subr.mxu0 0.0
    %5349 = vmatpush1.msra.mxu0 0.0
    %5350 = vmatprep.subr.mxu0 0.0
    %5351 = vmatpush1.msra.mxu0 0.0
    %5352 = vmatprep.subr.mxu0 0.0
    %5353 = vmatpush1.msra.mxu0 0.0
    %5354 = vmatprep.subr.mxu0 0.0
    %5355 = vmatpush1.msra.mxu0 0.0
    %5356 = vmatprep.subr.mxu0 0.0
    %5357 = vmatpush1.msra.mxu0 0.0
    %5358 = vmatprep.subr.mxu0 0.0
    %5359 = vmatpush1.msra.mxu0 0.0
    %5360 = vmatprep.subr.mxu0 0.0
    %5361 = vmatpush1.msra.mxu0 0.0
    %5362 = vmatprep.subr.mxu0 0.0
    %5363 = vmatpush1.msra.mxu0 0.0
    %5364 = vmatprep.subr.mxu0 0.0
    %5365 = vmatpush1.msra.mxu0 0.0
    %5366 = vmatprep.subr.mxu0 0.0
    %5367 = vmatpush1.msra.mxu0 0.0
    %5368 = vmatprep.subr.mxu0 0.0
    %5369 = vmatpush1.msra.mxu0 0.0
    %5370 = vmatprep.subr.mxu0 0.0
    %5371 = vmatpush1.msra.mxu0 0.0
    %5372 = vmatprep.subr.mxu0 0.0
    %5373 = vmatpush1.msra.mxu0 0.0
    %5374 = vmatprep.subr.mxu0 0.0
    %5375 = vmatpush1.msra.mxu0 0.0
    %5376 = vmatprep.subr.mxu0 0.0
    %5377 = vmatpush1.msra.mxu0 0.0
    %5378 = vmatprep.subr.mxu0 0.0
    %5379 = vmatpush1.msra.mxu0 0.0
    %5380 = vmatprep.subr.mxu0 0.0
    %5381 = vmatpush1.msra.mxu0 0.0
    %5382 = vmatprep.subr.mxu0 0.0
    %5383 = vmatpush1.msra.mxu0 0.0
    %5384 = vmatprep.subr.mxu0 0.0
    %5385 = vmatpush1.msra.mxu0 0.0
    %5386 = vmatprep.subr.mxu0 0.0
    %5387 = vmatpush1.msra.mxu0 0.0
    %5388 = vmatprep.subr.mxu0 0.0
    %5389 = vmatpush1.msra.mxu0 0.0
    %5390 = vmatprep.subr.mxu0 0.0
    %5391 = vmatpush1.msra.mxu0 0.0
    %5392 = vmatprep.subr.mxu0 0.0
    %5393 = vmatpush1.msra.mxu0 0.0
    %5394 = vmatprep.subr.mxu0 0.0
    %5395 = vmatpush1.msra.mxu0 0.0
    %5396 = vmatprep.subr.mxu0 0.0
    %5397 = vmatpush1.msra.mxu0 0.0
    %5398 = vmatprep.mubr.f32.mxu0 0.0
    %5399 = vmatmul.mubr.f32.gmra.mrb[0].mxu0 %v5098
    %v5400 = vpop.f32.mrb[0].mxu0
    %v5401 = vadd.f32 %v5044, %v5400
    %v5402 = vpop.f32.mrb[0].mxu0
    %v5403 = vadd.f32 %v5048, %v5402
    %5404 = vmatprep.mubr.f32.mxu0 0.0
    %5405 = vmatmul.mubr.f32.gmra.mrb[0].mxu0 %v5101
    %v5406 = vpop.f32.mrb[0].mxu0
    %v5407 = vadd.f32 %v5044, %v5406
    %v5408 = vpop.f32.mrb[0].mxu0
    %v5409 = vadd.f32 %v5048, %v5408
    %5410 = vdwg.mxu0
    %5411 = vmatprep.subr.mxu0 %v4957
    %5412 = vmatpush1.msra.mxu0 %v4956
    %5413 = vmatprep.subr.mxu0 %v4973
    %5414 = vmatpush1.msra.mxu0 %v4972
    %5415 = vmatprep.subr.mxu0 %v4989
    %5416 = vmatpush1.msra.mxu0 %v4988
    %5417 = vmatprep.subr.mxu0 %v5005
    %5418 = vmatpush1.msra.mxu0 %v5004
    %5419 = vmatprep.subr.mxu0 0.0
    %5420 = vmatpush1.msra.mxu0 0.0
    %5421 = vmatprep.subr.mxu0 0.0
    %5422 = vmatpush1.msra.mxu0 0.0
    %5423 = vmatprep.subr.mxu0 0.0
    %5424 = vmatpush1.msra.mxu0 0.0
    %5425 = vmatprep.subr.mxu0 0.0
    %5426 = vmatpush1.msra.mxu0 0.0
    %5427 = vmatprep.subr.mxu0 0.0
    %5428 = vmatpush1.msra.mxu0 0.0
    %5429 = vmatprep.subr.mxu0 0.0
    %5430 = vmatpush1.msra.mxu0 0.0
    %5431 = vmatprep.subr.mxu0 0.0
    %5432 = vmatpush1.msra.mxu0 0.0
    %5433 = vmatprep.subr.mxu0 0.0
    %5434 = vmatpush1.msra.mxu0 0.0
    %5435 = vmatprep.subr.mxu0 0.0
    %5436 = vmatpush1.msra.mxu0 0.0
    %5437 = vmatprep.subr.mxu0 0.0
    %5438 = vmatpush1.msra.mxu0 0.0
    %5439 = vmatprep.subr.mxu0 0.0
    %5440 = vmatpush1.msra.mxu0 0.0
    %5441 = vmatprep.subr.mxu0 0.0
    %5442 = vmatpush1.msra.mxu0 0.0
    %5443 = vmatprep.subr.mxu0 0.0
    %5444 = vmatpush1.msra.mxu0 0.0
    %5445 = vmatprep.subr.mxu0 0.0
    %5446 = vmatpush1.msra.mxu0 0.0
    %5447 = vmatprep.subr.mxu0 0.0
    %5448 = vmatpush1.msra.mxu0 0.0
    %5449 = vmatprep.subr.mxu0 0.0
    %5450 = vmatpush1.msra.mxu0 0.0
    %5451 = vmatprep.subr.mxu0 0.0
    %5452 = vmatpush1.msra.mxu0 0.0
    %5453 = vmatprep.subr.mxu0 0.0
    %5454 = vmatpush1.msra.mxu0 0.0
    %5455 = vmatprep.subr.mxu0 0.0
    %5456 = vmatpush1.msra.mxu0 0.0
    %5457 = vmatprep.subr.mxu0 0.0
    %5458 = vmatpush1.msra.mxu0 0.0
    %5459 = vmatprep.subr.mxu0 0.0
    %5460 = vmatpush1.msra.mxu0 0.0
    %5461 = vmatprep.subr.mxu0 0.0
    %5462 = vmatpush1.msra.mxu0 0.0
    %5463 = vmatprep.subr.mxu0 0.0
    %5464 = vmatpush1.msra.mxu0 0.0
    %5465 = vmatprep.subr.mxu0 0.0
    %5466 = vmatpush1.msra.mxu0 0.0
    %5467 = vmatprep.subr.mxu0 0.0
    %5468 = vmatpush1.msra.mxu0 0.0
    %5469 = vmatprep.subr.mxu0 0.0
    %5470 = vmatpush1.msra.mxu0 0.0
    %5471 = vmatprep.subr.mxu0 0.0
    %5472 = vmatpush1.msra.mxu0 0.0
    %5473 = vmatprep.subr.mxu0 0.0
    %5474 = vmatpush1.msra.mxu0 0.0
    %5475 = vmatprep.mubr.f32.mxu0 0.0
    %5476 = vmatmul.mubr.f32.gmra.mrb[0].mxu0 %v5098
    %v5477 = vpop.f32.mrb[0].mxu0
    %v5478 = vadd.f32 %v5052, %v5477
    %v5479 = vpop.f32.mrb[0].mxu0
    %v5480 = vadd.f32 %v5056, %v5479
    %5481 = vmatprep.mubr.f32.mxu0 0.0
    %5482 = vmatmul.mubr.f32.gmra.mrb[0].mxu0 %v5101
    %v5483 = vpop.f32.mrb[0].mxu0
    %v5484 = vadd.f32 %v5052, %v5483
    %v5485 = vpop.f32.mrb[0].mxu0
    %v5486 = vadd.f32 %v5056, %v5485
    %5487 = vdwg.mxu0
    %5488 = vmatprep.subr.mxu0 %v4959
    %5489 = vmatpush1.msra.mxu0 %v4958
    %5490 = vmatprep.subr.mxu0 %v4975
    %5491 = vmatpush1.msra.mxu0 %v4974
    %5492 = vmatprep.subr.mxu0 %v4991
    %5493 = vmatpush1.msra.mxu0 %v4990
    %5494 = vmatprep.subr.mxu0 %v5007
    %5495 = vmatpush1.msra.mxu0 %v5006
    %5496 = vmatprep.subr.mxu0 0.0
    %5497 = vmatpush1.msra.mxu0 0.0
    %5498 = vmatprep.subr.mxu0 0.0
    %5499 = vmatpush1.msra.mxu0 0.0
    %5500 = vmatprep.subr.mxu0 0.0
    %5501 = vmatpush1.msra.mxu0 0.0
    %5502 = vmatprep.subr.mxu0 0.0
    %5503 = vmatpush1.msra.mxu0 0.0
    %5504 = vmatprep.subr.mxu0 0.0
    %5505 = vmatpush1.msra.mxu0 0.0
    %5506 = vmatprep.subr.mxu0 0.0
    %5507 = vmatpush1.msra.mxu0 0.0
    %5508 = vmatprep.subr.mxu0 0.0
    %5509 = vmatpush1.msra.mxu0 0.0
    %5510 = vmatprep.subr.mxu0 0.0
    %5511 = vmatpush1.msra.mxu0 0.0
    %5512 = vmatprep.subr.mxu0 0.0
    %5513 = vmatpush1.msra.mxu0 0.0
    %5514 = vmatprep.subr.mxu0 0.0
    %5515 = vmatpush1.msra.mxu0 0.0
    %5516 = vmatprep.subr.mxu0 0.0
    %5517 = vmatpush1.msra.mxu0 0.0
    %5518 = vmatprep.subr.mxu0 0.0
    %5519 = vmatpush1.msra.mxu0 0.0
    %5520 = vmatprep.subr.mxu0 0.0
    %5521 = vmatpush1.msra.mxu0 0.0
    %5522 = vmatprep.subr.mxu0 0.0
    %5523 = vmatpush1.msra.mxu0 0.0
    %5524 = vmatprep.subr.mxu0 0.0
    %5525 = vmatpush1.msra.mxu0 0.0
    %5526 = vmatprep.subr.mxu0 0.0
    %5527 = vmatpush1.msra.mxu0 0.0
    %5528 = vmatprep.subr.mxu0 0.0
    %5529 = vmatpush1.msra.mxu0 0.0
    %5530 = vmatprep.subr.mxu0 0.0
    %5531 = vmatpush1.msra.mxu0 0.0
    %5532 = vmatprep.subr.mxu0 0.0
    %5533 = vmatpush1.msra.mxu0 0.0
    %5534 = vmatprep.subr.mxu0 0.0
    %5535 = vmatpush1.msra.mxu0 0.0
    %5536 = vmatprep.subr.mxu0 0.0
    %5537 = vmatpush1.msra.mxu0 0.0
    %5538 = vmatprep.subr.mxu0 0.0
    %5539 = vmatpush1.msra.mxu0 0.0
    %5540 = vmatprep.subr.mxu0 0.0
    %5541 = vmatpush1.msra.mxu0 0.0
    %5542 = vmatprep.subr.mxu0 0.0
    %5543 = vmatpush1.msra.mxu0 0.0
    %5544 = vmatprep.subr.mxu0 0.0
    %5545 = vmatpush1.msra.mxu0 0.0
    %5546 = vmatprep.subr.mxu0 0.0
    %5547 = vmatpush1.msra.mxu0 0.0
    %5548 = vmatprep.subr.mxu0 0.0
    %5549 = vmatpush1.msra.mxu0 0.0
    %5550 = vmatprep.subr.mxu0 0.0
    %5551 = vmatpush1.msra.mxu0 0.0
    %5552 = vmatprep.mubr.f32.mxu0 0.0
    %5553 = vmatmul.mubr.f32.gmra.mrb[0].mxu0 %v5098
    %v5554 = vpop.f32.mrb[0].mxu0
    %v5555 = vadd.f32 %v5060, %v5554
    %v5556 = vpop.f32.mrb[0].mxu0
    %v5557 = vadd.f32 %v5064, %v5556
    %5558 = vmatprep.mubr.f32.mxu0 0.0
    %5559 = vmatmul.mubr.f32.gmra.mrb[0].mxu0 %v5101
    %v5560 = vpop.f32.mrb[0].mxu0
    %v5561 = vadd.f32 %v5060, %v5560
    %v5562 = vpop.f32.mrb[0].mxu0
    %v5563 = vadd.f32 %v5064, %v5562
    %5564 = vdwg.mxu0
    %5565 = vmatprep.subr.mxu0 %v4961
    %5566 = vmatpush1.msra.mxu0 %v4960
    %5567 = vmatprep.subr.mxu0 %v4977
    %5568 = vmatpush1.msra.mxu0 %v4976
    %5569 = vmatprep.subr.mxu0 %v4993
    %5570 = vmatpush1.msra.mxu0 %v4992
    %5571 = vmatprep.subr.mxu0 %v5009
    %5572 = vmatpush1.msra.mxu0 %v5008
    %5573 = vmatprep.subr.mxu0 0.0
    %5574 = vmatpush1.msra.mxu0 0.0
    %5575 = vmatprep.subr.mxu0 0.0
    %5576 = vmatpush1.msra.mxu0 0.0
    %5577 = vmatprep.subr.mxu0 0.0
    %5578 = vmatpush1.msra.mxu0 0.0
    %5579 = vmatprep.subr.mxu0 0.0
    %5580 = vmatpush1.msra.mxu0 0.0
    %5581 = vmatprep.subr.mxu0 0.0
    %5582 = vmatpush1.msra.mxu0 0.0
    %5583 = vmatprep.subr.mxu0 0.0
    %5584 = vmatpush1.msra.mxu0 0.0
    %5585 = vmatprep.subr.mxu0 0.0
    %5586 = vmatpush1.msra.mxu0 0.0
    %5587 = vmatprep.subr.mxu0 0.0
    %5588 = vmatpush1.msra.mxu0 0.0
    %5589 = vmatprep.subr.mxu0 0.0
    %5590 = vmatpush1.msra.mxu0 0.0
    %5591 = vmatprep.subr.mxu0 0.0
    %5592 = vmatpush1.msra.mxu0 0.0
    %5593 = vmatprep.subr.mxu0 0.0
    %5594 = vmatpush1.msra.mxu0 0.0
    %5595 = vmatprep.subr.mxu0 0.0
    %5596 = vmatpush1.msra.mxu0 0.0
    %5597 = vmatprep.subr.mxu0 0.0
    %5598 = vmatpush1.msra.mxu0 0.0
    %5599 = vmatprep.subr.mxu0 0.0
    %5600 = vmatpush1.msra.mxu0 0.0
    %5601 = vmatprep.subr.mxu0 0.0
    %5602 = vmatpush1.msra.mxu0 0.0
    %5603 = vmatprep.subr.mxu0 0.0
    %5604 = vmatpush1.msra.mxu0 0.0
    %5605 = vmatprep.subr.mxu0 0.0
    %5606 = vmatpush1.msra.mxu0 0.0
    %5607 = vmatprep.subr.mxu0 0.0
    %5608 = vmatpush1.msra.mxu0 0.0
    %5609 = vmatprep.subr.mxu0 0.0
    %5610 = vmatpush1.msra.mxu0 0.0
    %5611 = vmatprep.subr.mxu0 0.0
    %5612 = vmatpush1.msra.mxu0 0.0
    %5613 = vmatprep.subr.mxu0 0.0
    %5614 = vmatpush1.msra.mxu0 0.0
    %5615 = vmatprep.subr.mxu0 0.0
    %5616 = vmatpush1.msra.mxu0 0.0
    %5617 = vmatprep.subr.mxu0 0.0
    %5618 = vmatpush1.msra.mxu0 0.0
    %5619 = vmatprep.subr.mxu0 0.0
    %5620 = vmatpush1.msra.mxu0 0.0
    %5621 = vmatprep.subr.mxu0 0.0
    %5622 = vmatpush1.msra.mxu0 0.0
    %5623 = vmatprep.subr.mxu0 0.0
    %5624 = vmatpush1.msra.mxu0 0.0
    %5625 = vmatprep.subr.mxu0 0.0
    %5626 = vmatpush1.msra.mxu0 0.0
    %5627 = vmatprep.subr.mxu0 0.0
    %5628 = vmatpush1.msra.mxu0 0.0
    %5629 = vmatprep.mubr.f32.mxu0 0.0
    %5630 = vmatmul.mubr.f32.gmra.mrb[0].mxu0 %v5098
    %v5631 = vpop.f32.mrb[0].mxu0
    %v5632 = vadd.f32 %v5068, %v5631
    %v5633 = vpop.f32.mrb[0].mxu0
    %v5634 = vadd.f32 %v5072, %v5633
    %5635 = vmatprep.mubr.f32.mxu0 0.0
    %5636 = vmatmul.mubr.f32.gmra.mrb[0].mxu0 %v5101
    %v5637 = vpop.f32.mrb[0].mxu0
    %v5638 = vadd.f32 %v5068, %v5637
    %v5639 = vpop.f32.mrb[0].mxu0
    %v5640 = vadd.f32 %v5072, %v5639
    %5641 = vdwg.mxu0
    %5642 = vmatprep.subr.mxu0 %v4963
    %5643 = vmatpush1.msra.mxu0 %v4962
    %5644 = vmatprep.subr.mxu0 %v4979
    %5645 = vmatpush1.msra.mxu0 %v4978
    %5646 = vmatprep.subr.mxu0 %v4995
    %5647 = vmatpush1.msra.mxu0 %v4994
    %5648 = vmatprep.subr.mxu0 %v5011
    %5649 = vmatpush1.msra.mxu0 %v5010
    %5650 = vmatprep.subr.mxu0 0.0
    %5651 = vmatpush1.msra.mxu0 0.0
    %5652 = vmatprep.subr.mxu0 0.0
    %5653 = vmatpush1.msra.mxu0 0.0
    %5654 = vmatprep.subr.mxu0 0.0
    %5655 = vmatpush1.msra.mxu0 0.0
    %5656 = vmatprep.subr.mxu0 0.0
    %5657 = vmatpush1.msra.mxu0 0.0
    %5658 = vmatprep.subr.mxu0 0.0
    %5659 = vmatpush1.msra.mxu0 0.0
    %5660 = vmatprep.subr.mxu0 0.0
    %5661 = vmatpush1.msra.mxu0 0.0
    %5662 = vmatprep.subr.mxu0 0.0
    %5663 = vmatpush1.msra.mxu0 0.0
    %5664 = vmatprep.subr.mxu0 0.0
    %5665 = vmatpush1.msra.mxu0 0.0
    %5666 = vmatprep.subr.mxu0 0.0
    %5667 = vmatpush1.msra.mxu0 0.0
    %5668 = vmatprep.subr.mxu0 0.0
    %5669 = vmatpush1.msra.mxu0 0.0
    %5670 = vmatprep.subr.mxu0 0.0
    %5671 = vmatpush1.msra.mxu0 0.0
    %5672 = vmatprep.subr.mxu0 0.0
    %5673 = vmatpush1.msra.mxu0 0.0
    %5674 = vmatprep.subr.mxu0 0.0
    %5675 = vmatpush1.msra.mxu0 0.0
    %5676 = vmatprep.subr.mxu0 0.0
    %5677 = vmatpush1.msra.mxu0 0.0
    %5678 = vmatprep.subr.mxu0 0.0
    %5679 = vmatpush1.msra.mxu0 0.0
    %5680 = vmatprep.subr.mxu0 0.0
    %5681 = vmatpush1.msra.mxu0 0.0
    %5682 = vmatprep.subr.mxu0 0.0
    %5683 = vmatpush1.msra.mxu0 0.0
    %5684 = vmatprep.subr.mxu0 0.0
    %5685 = vmatpush1.msra.mxu0 0.0
    %5686 = vmatprep.subr.mxu0 0.0
    %5687 = vmatpush1.msra.mxu0 0.0
    %5688 = vmatprep.subr.mxu0 0.0
    %5689 = vmatpush1.msra.mxu0 0.0
    %5690 = vmatprep.subr.mxu0 0.0
    %5691 = vmatpush1.msra.mxu0 0.0
    %5692 = vmatprep.subr.mxu0 0.0
    %5693 = vmatpush1.msra.mxu0 0.0
    %5694 = vmatprep.subr.mxu0 0.0
    %5695 = vmatpush1.msra.mxu0 0.0
    %5696 = vmatprep.subr.mxu0 0.0
    %5697 = vmatpush1.msra.mxu0 0.0
    %5698 = vmatprep.subr.mxu0 0.0
    %5699 = vmatpush1.msra.mxu0 0.0
    %5700 = vmatprep.subr.mxu0 0.0
    %5701 = vmatpush1.msra.mxu0 0.0
    %5702 = vmatprep.subr.mxu0 0.0
    %5703 = vmatpush1.msra.mxu0 0.0
    %5704 = vmatprep.subr.mxu0 0.0
    %5705 = vmatpush1.msra.mxu0 0.0
    %5706 = vmatprep.mubr.f32.mxu0 0.0
    %5707 = vmatmul.mubr.f32.gmra.mrb[0].mxu0 %v5098
    %v5708 = vpop.f32.mrb[0].mxu0
    %v5709 = vadd.f32 %v5076, %v5708
    %v5710 = vpop.f32.mrb[0].mxu0
    %v5711 = vadd.f32 %v5080, %v5710
    %5712 = vmatprep.mubr.f32.mxu0 0.0
    %5713 = vmatmul.mubr.f32.gmra.mrb[0].mxu0 %v5101
    %v5714 = vpop.f32.mrb[0].mxu0
    %v5715 = vadd.f32 %v5076, %v5714
    %v5716 = vpop.f32.mrb[0].mxu0
    %v5717 = vadd.f32 %v5080, %v5716
    %5718 = vdwg.mxu0
    %v5719 = vmax.f32 %v5170, 0.0
    %v5720 = vmax.f32 %v5172, 0.0
    %v5721 = vmax.f32 %v5247, 0.0
    %v5722 = vmax.f32 %v5249, 0.0
    %v5723 = vmax.f32 %v5324, 0.0
    %v5724 = vmax.f32 %v5326, 0.0
    %v5725 = vmax.f32 %v5401, 0.0
    %v5726 = vmax.f32 %v5403, 0.0
    %v5727 = vmax.f32 %v5478, 0.0
    %v5728 = vmax.f32 %v5480, 0.0
    %v5729 = vmax.f32 %v5555, 0.0
    %v5730 = vmax.f32 %v5557, 0.0
    %v5731 = vmax.f32 %v5632, 0.0
    %v5732 = vmax.f32 %v5634, 0.0
    %v5733 = vmax.f32 %v5709, 0.0
    %v5734 = vmax.f32 %v5711, 0.0
    %v5735 = vmax.f32 %v5176, 0.0
    %v5736 = vmax.f32 %v5178, 0.0
    %v5737 = vmax.f32 %v5253, 0.0
    %v5738 = vmax.f32 %v5255, 0.0
    %v5739 = vmax.f32 %v5330, 0.0
    %v5740 = vmax.f32 %v5332, 0.0
    %v5741 = vmax.f32 %v5407, 0.0
    %v5742 = vmax.f32 %v5409, 0.0
    %v5743 = vmax.f32 %v5484, 0.0
    %v5744 = vmax.f32 %v5486, 0.0
    %v5745 = vmax.f32 %v5561, 0.0
    %v5746 = vmax.f32 %v5563, 0.0
    %v5747 = vmax.f32 %v5638, 0.0
    %v5748 = vmax.f32 %v5640, 0.0
    %v5749 = vmax.f32 %v5715, 0.0
    %v5750 = vmax.f32 %v5717, 0.0
    %s5751 = scalar_lea.vmem %s9, 2048
    %v5752 = vld [vmem:[%s5751] sm:$0xff]
    %v5753 = vld [vmem:[%s5751 + $0x8] sm:$0xff]
    %v5754 = vld [vmem:[%s5751 + $0x10] sm:$0xff]
    %v5755 = vld [vmem:[%s5751 + $0x18] sm:$0xff]
    %v5756 = vld [vmem:[%s5751 + $0x20] sm:$0xff]
    %v5757 = vld [vmem:[%s5751 + $0x28] sm:$0xff]
    %v5758 = vld [vmem:[%s5751 + $0x30] sm:$0xff]
    %v5759 = vld [vmem:[%s5751 + $0x38] sm:$0xff]
    %v5760 = vld [vmem:[%s5751 + $0x40] sm:$0xff]
    %v5761 = vld [vmem:[%s5751 + $0x48] sm:$0xff]
    %v5762 = vld [vmem:[%s5751 + $0x50] sm:$0xff]
    %v5763 = vld [vmem:[%s5751 + $0x58] sm:$0xff]
    %v5764 = vld [vmem:[%s5751 + $0x60] sm:$0xff]
    %v5765 = vld [vmem:[%s5751 + $0x68] sm:$0xff]
    %v5766 = vld [vmem:[%s5751 + $0x70] sm:$0xff]
    %v5767 = vld [vmem:[%s5751 + $0x78] sm:$0xff]
    %v5768 = vld [vmem:[%s5751 + $0x80] sm:$0xff]
    %v5769 = vld [vmem:[%s5751 + $0x88] sm:$0xff]
    %v5770 = vld [vmem:[%s5751 + $0x90] sm:$0xff]
    %v5771 = vld [vmem:[%s5751 + $0x98] sm:$0xff]
    %v5772 = vld [vmem:[%s5751 + $0xa0] sm:$0xff]
    %v5773 = vld [vmem:[%s5751 + $0xa8] sm:$0xff]
    %v5774 = vld [vmem:[%s5751 + $0xb0] sm:$0xff]
    %v5775 = vld [vmem:[%s5751 + $0xb8] sm:$0xff]
    %v5776 = vld [vmem:[%s5751 + $0xc0] sm:$0xff]
    %v5777 = vld [vmem:[%s5751 + $0xc8] sm:$0xff]
    %v5778 = vld [vmem:[%s5751 + $0xd0] sm:$0xff]
    %v5779 = vld [vmem:[%s5751 + $0xd8] sm:$0xff]
    %v5780 = vld [vmem:[%s5751 + $0xe0] sm:$0xff]
    %v5781 = vld [vmem:[%s5751 + $0xe8] sm:$0xff]
    %v5782 = vld [vmem:[%s5751 + $0xf0] sm:$0xff]
    %v5783 = vld [vmem:[%s5751 + $0xf8] sm:$0xff]
    %v5784 = vld [vmem:[%s5751 + $0x100] sm:$0xff]
    %v5785 = vld [vmem:[%s5751 + $0x108] sm:$0xff]
    %v5786 = vld [vmem:[%s5751 + $0x110] sm:$0xff]
    %v5787 = vld [vmem:[%s5751 + $0x118] sm:$0xff]
    %v5788 = vld [vmem:[%s5751 + $0x120] sm:$0xff]
    %v5789 = vld [vmem:[%s5751 + $0x128] sm:$0xff]
    %v5790 = vld [vmem:[%s5751 + $0x130] sm:$0xff]
    %v5791 = vld [vmem:[%s5751 + $0x138] sm:$0xff]
    %v5792 = vld [vmem:[%s5751 + $0x140] sm:$0xff]
    %v5793 = vld [vmem:[%s5751 + $0x148] sm:$0xff]
    %v5794 = vld [vmem:[%s5751 + $0x150] sm:$0xff]
    %v5795 = vld [vmem:[%s5751 + $0x158] sm:$0xff]
    %v5796 = vld [vmem:[%s5751 + $0x160] sm:$0xff]
    %v5797 = vld [vmem:[%s5751 + $0x168] sm:$0xff]
    %v5798 = vld [vmem:[%s5751 + $0x170] sm:$0xff]
    %v5799 = vld [vmem:[%s5751 + $0x178] sm:$0xff]
    %v5800 = vld [vmem:[%s5751 + $0x180] sm:$0xff]
    %v5801 = vld [vmem:[%s5751 + $0x188] sm:$0xff]
    %v5802 = vld [vmem:[%s5751 + $0x190] sm:$0xff]
    %v5803 = vld [vmem:[%s5751 + $0x198] sm:$0xff]
    %v5804 = vld [vmem:[%s5751 + $0x1a0] sm:$0xff]
    %v5805 = vld [vmem:[%s5751 + $0x1a8] sm:$0xff]
    %v5806 = vld [vmem:[%s5751 + $0x1b0] sm:$0xff]
    %v5807 = vld [vmem:[%s5751 + $0x1b8] sm:$0xff]
    %v5808 = vld [vmem:[%s5751 + $0x1c0] sm:$0xff]
    %v5809 = vld [vmem:[%s5751 + $0x1c8] sm:$0xff]
    %v5810 = vld [vmem:[%s5751 + $0x1d0] sm:$0xff]
    %v5811 = vld [vmem:[%s5751 + $0x1d8] sm:$0xff]
    %v5812 = vld [vmem:[%s5751 + $0x1e0] sm:$0xff]
    %v5813 = vld [vmem:[%s5751 + $0x1e8] sm:$0xff]
    %v5814 = vld [vmem:[%s5751 + $0x1f0] sm:$0xff]
    %v5815 = vld [vmem:[%s5751 + $0x1f8] sm:$0xff]
    %v5816 = vld [vmem:[%s5751 + $0x200] sm:$0xff]
    %v5817 = vld [vmem:[%s5751 + $0x208] sm:$0xff]
    %v5818 = vld [vmem:[%s5751 + $0x210] sm:$0xff]
    %v5819 = vld [vmem:[%s5751 + $0x218] sm:$0xff]
    %v5820 = vld [vmem:[%s5751 + $0x220] sm:$0xff]
    %v5821 = vld [vmem:[%s5751 + $0x228] sm:$0xff]
    %v5822 = vld [vmem:[%s5751 + $0x230] sm:$0xff]
    %v5823 = vld [vmem:[%s5751 + $0x238] sm:$0xff]
    %v5824 = vld [vmem:[%s5751 + $0x240] sm:$0xff]
    %v5825 = vld [vmem:[%s5751 + $0x248] sm:$0xff]
    %v5826 = vld [vmem:[%s5751 + $0x250] sm:$0xff]
    %v5827 = vld [vmem:[%s5751 + $0x258] sm:$0xff]
    %v5828 = vld [vmem:[%s5751 + $0x260] sm:$0xff]
    %v5829 = vld [vmem:[%s5751 + $0x268] sm:$0xff]
    %v5830 = vld [vmem:[%s5751 + $0x270] sm:$0xff]
    %v5831 = vld [vmem:[%s5751 + $0x278] sm:$0xff]
    %v5832 = vld [vmem:[%s5751 + $0x280] sm:$0xff]
    %v5833 = vld [vmem:[%s5751 + $0x288] sm:$0xff]
    %v5834 = vld [vmem:[%s5751 + $0x290] sm:$0xff]
    %v5835 = vld [vmem:[%s5751 + $0x298] sm:$0xff]
    %v5836 = vld [vmem:[%s5751 + $0x2a0] sm:$0xff]
    %v5837 = vld [vmem:[%s5751 + $0x2a8] sm:$0xff]
    %v5838 = vld [vmem:[%s5751 + $0x2b0] sm:$0xff]
    %v5839 = vld [vmem:[%s5751 + $0x2b8] sm:$0xff]
    %v5840 = vld [vmem:[%s5751 + $0x2c0] sm:$0xff]
    %v5841 = vld [vmem:[%s5751 + $0x2c8] sm:$0xff]
    %v5842 = vld [vmem:[%s5751 + $0x2d0] sm:$0xff]
    %v5843 = vld [vmem:[%s5751 + $0x2d8] sm:$0xff]
    %v5844 = vld [vmem:[%s5751 + $0x2e0] sm:$0xff]
    %v5845 = vld [vmem:[%s5751 + $0x2e8] sm:$0xff]
    %v5846 = vld [vmem:[%s5751 + $0x2f0] sm:$0xff]
    %v5847 = vld [vmem:[%s5751 + $0x2f8] sm:$0xff]
    %v5848 = vld [vmem:[%s5751 + $0x300] sm:$0xff]
    %v5849 = vld [vmem:[%s5751 + $0x308] sm:$0xff]
    %v5850 = vld [vmem:[%s5751 + $0x310] sm:$0xff]
    %v5851 = vld [vmem:[%s5751 + $0x318] sm:$0xff]
    %v5852 = vld [vmem:[%s5751 + $0x320] sm:$0xff]
    %v5853 = vld [vmem:[%s5751 + $0x328] sm:$0xff]
    %v5854 = vld [vmem:[%s5751 + $0x330] sm:$0xff]
    %v5855 = vld [vmem:[%s5751 + $0x338] sm:$0xff]
    %v5856 = vld [vmem:[%s5751 + $0x340] sm:$0xff]
    %v5857 = vld [vmem:[%s5751 + $0x348] sm:$0xff]
    %v5858 = vld [vmem:[%s5751 + $0x350] sm:$0xff]
    %v5859 = vld [vmem:[%s5751 + $0x358] sm:$0xff]
    %v5860 = vld [vmem:[%s5751 + $0x360] sm:$0xff]
    %v5861 = vld [vmem:[%s5751 + $0x368] sm:$0xff]
    %v5862 = vld [vmem:[%s5751 + $0x370] sm:$0xff]
    %v5863 = vld [vmem:[%s5751 + $0x378] sm:$0xff]
    %v5864 = vld [vmem:[%s5751 + $0x380] sm:$0xff]
    %v5865 = vld [vmem:[%s5751 + $0x388] sm:$0xff]
    %v5866 = vld [vmem:[%s5751 + $0x390] sm:$0xff]
    %v5867 = vld [vmem:[%s5751 + $0x398] sm:$0xff]
    %v5868 = vld [vmem:[%s5751 + $0x3a0] sm:$0xff]
    %v5869 = vld [vmem:[%s5751 + $0x3a8] sm:$0xff]
    %v5870 = vld [vmem:[%s5751 + $0x3b0] sm:$0xff]
    %v5871 = vld [vmem:[%s5751 + $0x3b8] sm:$0xff]
    %v5872 = vld [vmem:[%s5751 + $0x3c0] sm:$0xff]
    %v5873 = vld [vmem:[%s5751 + $0x3c8] sm:$0xff]
    %v5874 = vld [vmem:[%s5751 + $0x3d0] sm:$0xff]
    %v5875 = vld [vmem:[%s5751 + $0x3d8] sm:$0xff]
    %v5876 = vld [vmem:[%s5751 + $0x3e0] sm:$0xff]
    %v5877 = vld [vmem:[%s5751 + $0x3e8] sm:$0xff]
    %v5878 = vld [vmem:[%s5751 + $0x3f0] sm:$0xff]
    %v5879 = vld [vmem:[%s5751 + $0x3f8] sm:$0xff]
    %v5880 = vld [vmem:[%s5751 + $0x400] sm:$0xff]
    %v5881 = vld [vmem:[%s5751 + $0x408] sm:$0xff]
    %v5882 = vld [vmem:[%s5751 + $0x410] sm:$0xff]
    %v5883 = vld [vmem:[%s5751 + $0x418] sm:$0xff]
    %v5884 = vld [vmem:[%s5751 + $0x420] sm:$0xff]
    %v5885 = vld [vmem:[%s5751 + $0x428] sm:$0xff]
    %v5886 = vld [vmem:[%s5751 + $0x430] sm:$0xff]
    %v5887 = vld [vmem:[%s5751 + $0x438] sm:$0xff]
    %v5888 = vld [vmem:[%s5751 + $0x440] sm:$0xff]
    %v5889 = vld [vmem:[%s5751 + $0x448] sm:$0xff]
    %v5890 = vld [vmem:[%s5751 + $0x450] sm:$0xff]
    %v5891 = vld [vmem:[%s5751 + $0x458] sm:$0xff]
    %v5892 = vld [vmem:[%s5751 + $0x460] sm:$0xff]
    %v5893 = vld [vmem:[%s5751 + $0x468] sm:$0xff]
    %v5894 = vld [vmem:[%s5751 + $0x470] sm:$0xff]
    %v5895 = vld [vmem:[%s5751 + $0x478] sm:$0xff]
    %v5896 = vld [vmem:[%s5751 + $0x480] sm:$0xff]
    %v5897 = vld [vmem:[%s5751 + $0x488] sm:$0xff]
    %v5898 = vld [vmem:[%s5751 + $0x490] sm:$0xff]
    %v5899 = vld [vmem:[%s5751 + $0x498] sm:$0xff]
    %v5900 = vld [vmem:[%s5751 + $0x4a0] sm:$0xff]
    %v5901 = vld [vmem:[%s5751 + $0x4a8] sm:$0xff]
    %v5902 = vld [vmem:[%s5751 + $0x4b0] sm:$0xff]
    %v5903 = vld [vmem:[%s5751 + $0x4b8] sm:$0xff]
    %v5904 = vld [vmem:[%s5751 + $0x4c0] sm:$0xff]
    %v5905 = vld [vmem:[%s5751 + $0x4c8] sm:$0xff]
    %v5906 = vld [vmem:[%s5751 + $0x4d0] sm:$0xff]
    %v5907 = vld [vmem:[%s5751 + $0x4d8] sm:$0xff]
    %v5908 = vld [vmem:[%s5751 + $0x4e0] sm:$0xff]
    %v5909 = vld [vmem:[%s5751 + $0x4e8] sm:$0xff]
    %v5910 = vld [vmem:[%s5751 + $0x4f0] sm:$0xff]
    %v5911 = vld [vmem:[%s5751 + $0x4f8] sm:$0xff]
    %v5912 = vld [vmem:[%s5751 + $0x500] sm:$0xff]
    %v5913 = vld [vmem:[%s5751 + $0x508] sm:$0xff]
    %v5914 = vld [vmem:[%s5751 + $0x510] sm:$0xff]
    %v5915 = vld [vmem:[%s5751 + $0x518] sm:$0xff]
    %v5916 = vld [vmem:[%s5751 + $0x520] sm:$0xff]
    %v5917 = vld [vmem:[%s5751 + $0x528] sm:$0xff]
    %v5918 = vld [vmem:[%s5751 + $0x530] sm:$0xff]
    %v5919 = vld [vmem:[%s5751 + $0x538] sm:$0xff]
    %v5920 = vld [vmem:[%s5751 + $0x540] sm:$0xff]
    %v5921 = vld [vmem:[%s5751 + $0x548] sm:$0xff]
    %v5922 = vld [vmem:[%s5751 + $0x550] sm:$0xff]
    %v5923 = vld [vmem:[%s5751 + $0x558] sm:$0xff]
    %v5924 = vld [vmem:[%s5751 + $0x560] sm:$0xff]
    %v5925 = vld [vmem:[%s5751 + $0x568] sm:$0xff]
    %v5926 = vld [vmem:[%s5751 + $0x570] sm:$0xff]
    %v5927 = vld [vmem:[%s5751 + $0x578] sm:$0xff]
    %v5928 = vld [vmem:[%s5751 + $0x580] sm:$0xff]
    %v5929 = vld [vmem:[%s5751 + $0x588] sm:$0xff]
    %v5930 = vld [vmem:[%s5751 + $0x590] sm:$0xff]
    %v5931 = vld [vmem:[%s5751 + $0x598] sm:$0xff]
    %v5932 = vld [vmem:[%s5751 + $0x5a0] sm:$0xff]
    %v5933 = vld [vmem:[%s5751 + $0x5a8] sm:$0xff]
    %v5934 = vld [vmem:[%s5751 + $0x5b0] sm:$0xff]
    %v5935 = vld [vmem:[%s5751 + $0x5b8] sm:$0xff]
    %v5936 = vld [vmem:[%s5751 + $0x5c0] sm:$0xff]
    %v5937 = vld [vmem:[%s5751 + $0x5c8] sm:$0xff]
    %v5938 = vld [vmem:[%s5751 + $0x5d0] sm:$0xff]
    %v5939 = vld [vmem:[%s5751 + $0x5d8] sm:$0xff]
    %v5940 = vld [vmem:[%s5751 + $0x5e0] sm:$0xff]
    %v5941 = vld [vmem:[%s5751 + $0x5e8] sm:$0xff]
    %v5942 = vld [vmem:[%s5751 + $0x5f0] sm:$0xff]
    %v5943 = vld [vmem:[%s5751 + $0x5f8] sm:$0xff]
    %v5944 = vld [vmem:[%s5751 + $0x600] sm:$0xff]
    %v5945 = vld [vmem:[%s5751 + $0x608] sm:$0xff]
    %v5946 = vld [vmem:[%s5751 + $0x610] sm:$0xff]
    %v5947 = vld [vmem:[%s5751 + $0x618] sm:$0xff]
    %v5948 = vld [vmem:[%s5751 + $0x620] sm:$0xff]
    %v5949 = vld [vmem:[%s5751 + $0x628] sm:$0xff]
    %v5950 = vld [vmem:[%s5751 + $0x630] sm:$0xff]
    %v5951 = vld [vmem:[%s5751 + $0x638] sm:$0xff]
    %v5952 = vld [vmem:[%s5751 + $0x640] sm:$0xff]
    %v5953 = vld [vmem:[%s5751 + $0x648] sm:$0xff]
    %v5954 = vld [vmem:[%s5751 + $0x650] sm:$0xff]
    %v5955 = vld [vmem:[%s5751 + $0x658] sm:$0xff]
    %v5956 = vld [vmem:[%s5751 + $0x660] sm:$0xff]
    %v5957 = vld [vmem:[%s5751 + $0x668] sm:$0xff]
    %v5958 = vld [vmem:[%s5751 + $0x670] sm:$0xff]
    %v5959 = vld [vmem:[%s5751 + $0x678] sm:$0xff]
    %v5960 = vld [vmem:[%s5751 + $0x680] sm:$0xff]
    %v5961 = vld [vmem:[%s5751 + $0x688] sm:$0xff]
    %v5962 = vld [vmem:[%s5751 + $0x690] sm:$0xff]
    %v5963 = vld [vmem:[%s5751 + $0x698] sm:$0xff]
    %v5964 = vld [vmem:[%s5751 + $0x6a0] sm:$0xff]
    %v5965 = vld [vmem:[%s5751 + $0x6a8] sm:$0xff]
    %v5966 = vld [vmem:[%s5751 + $0x6b0] sm:$0xff]
    %v5967 = vld [vmem:[%s5751 + $0x6b8] sm:$0xff]
    %v5968 = vld [vmem:[%s5751 + $0x6c0] sm:$0xff]
    %v5969 = vld [vmem:[%s5751 + $0x6c8] sm:$0xff]
    %v5970 = vld [vmem:[%s5751 + $0x6d0] sm:$0xff]
    %v5971 = vld [vmem:[%s5751 + $0x6d8] sm:$0xff]
    %v5972 = vld [vmem:[%s5751 + $0x6e0] sm:$0xff]
    %v5973 = vld [vmem:[%s5751 + $0x6e8] sm:$0xff]
    %v5974 = vld [vmem:[%s5751 + $0x6f0] sm:$0xff]
    %v5975 = vld [vmem:[%s5751 + $0x6f8] sm:$0xff]
    %v5976 = vld [vmem:[%s5751 + $0x700] sm:$0xff]
    %v5977 = vld [vmem:[%s5751 + $0x708] sm:$0xff]
    %v5978 = vld [vmem:[%s5751 + $0x710] sm:$0xff]
    %v5979 = vld [vmem:[%s5751 + $0x718] sm:$0xff]
    %v5980 = vld [vmem:[%s5751 + $0x720] sm:$0xff]
    %v5981 = vld [vmem:[%s5751 + $0x728] sm:$0xff]
    %v5982 = vld [vmem:[%s5751 + $0x730] sm:$0xff]
    %v5983 = vld [vmem:[%s5751 + $0x738] sm:$0xff]
    %v5984 = vld [vmem:[%s5751 + $0x740] sm:$0xff]
    %v5985 = vld [vmem:[%s5751 + $0x748] sm:$0xff]
    %v5986 = vld [vmem:[%s5751 + $0x750] sm:$0xff]
    %v5987 = vld [vmem:[%s5751 + $0x758] sm:$0xff]
    %v5988 = vld [vmem:[%s5751 + $0x760] sm:$0xff]
    %v5989 = vld [vmem:[%s5751 + $0x768] sm:$0xff]
    %v5990 = vld [vmem:[%s5751 + $0x770] sm:$0xff]
    %v5991 = vld [vmem:[%s5751 + $0x778] sm:$0xff]
    %v5992 = vld [vmem:[%s5751 + $0x780] sm:$0xff]
    %v5993 = vld [vmem:[%s5751 + $0x788] sm:$0xff]
    %v5994 = vld [vmem:[%s5751 + $0x790] sm:$0xff]
    %v5995 = vld [vmem:[%s5751 + $0x798] sm:$0xff]
    %v5996 = vld [vmem:[%s5751 + $0x7a0] sm:$0xff]
    %v5997 = vld [vmem:[%s5751 + $0x7a8] sm:$0xff]
    %v5998 = vld [vmem:[%s5751 + $0x7b0] sm:$0xff]
    %v5999 = vld [vmem:[%s5751 + $0x7b8] sm:$0xff]
    %v6000 = vld [vmem:[%s5751 + $0x7c0] sm:$0xff]
    %v6001 = vld [vmem:[%s5751 + $0x7c8] sm:$0xff]
    %v6002 = vld [vmem:[%s5751 + $0x7d0] sm:$0xff]
    %v6003 = vld [vmem:[%s5751 + $0x7d8] sm:$0xff]
    %v6004 = vld [vmem:[%s5751 + $0x7e0] sm:$0xff]
    %v6005 = vld [vmem:[%s5751 + $0x7e8] sm:$0xff]
    %v6006 = vld [vmem:[%s5751 + $0x7f0] sm:$0xff]
    %v6007 = vld [vmem:[%s5751 + $0x7f8] sm:$0xff]
    %s6008 = scalar_lea.vmem %s10, 1
    %v6009 = vld [vmem:[%s6008] sm:$0x1]
    %v6011 = vlaneseq
    %v6012 = vshrl.u32 %v6011, 7
    %v6013 = vsub.s32 0, %v6012
    %v6014 = vrot.slane %v6009, %v6013
    %6016 = vmatprep.subr.mxu0 0.0
    %6017 = vmatpush1.msra.mxu0 %v5752
    %6018 = vmatprep.subr.mxu0 0.0
    %6019 = vmatpush1.msra.mxu0 %v5753
    %6020 = vmatprep.subr.mxu0 0.0
    %6021 = vmatpush1.msra.mxu0 %v5754
    %6022 = vmatprep.subr.mxu0 0.0
    %6023 = vmatpush1.msra.mxu0 %v5755
    %6024 = vmatprep.subr.mxu0 0.0
    %6025 = vmatpush1.msra.mxu0 %v5756
    %6026 = vmatprep.subr.mxu0 0.0
    %6027 = vmatpush1.msra.mxu0 %v5757
    %6028 = vmatprep.subr.mxu0 0.0
    %6029 = vmatpush1.msra.mxu0 %v5758
    %6030 = vmatprep.subr.mxu0 0.0
    %6031 = vmatpush1.msra.mxu0 %v5759
    %6032 = vmatprep.subr.mxu0 0.0
    %6033 = vmatpush1.msra.mxu0 %v5760
    %6034 = vmatprep.subr.mxu0 0.0
    %6035 = vmatpush1.msra.mxu0 %v5761
    %6036 = vmatprep.subr.mxu0 0.0
    %6037 = vmatpush1.msra.mxu0 %v5762
    %6038 = vmatprep.subr.mxu0 0.0
    %6039 = vmatpush1.msra.mxu0 %v5763
    %6040 = vmatprep.subr.mxu0 0.0
    %6041 = vmatpush1.msra.mxu0 %v5764
    %6042 = vmatprep.subr.mxu0 0.0
    %6043 = vmatpush1.msra.mxu0 %v5765
    %6044 = vmatprep.subr.mxu0 0.0
    %6045 = vmatpush1.msra.mxu0 %v5766
    %6046 = vmatprep.subr.mxu0 0.0
    %6047 = vmatpush1.msra.mxu0 %v5767
    %6048 = vmatprep.subr.mxu0 0.0
    %6049 = vmatpush1.msra.mxu0 %v5768
    %6050 = vmatprep.subr.mxu0 0.0
    %6051 = vmatpush1.msra.mxu0 %v5769
    %6052 = vmatprep.subr.mxu0 0.0
    %6053 = vmatpush1.msra.mxu0 %v5770
    %6054 = vmatprep.subr.mxu0 0.0
    %6055 = vmatpush1.msra.mxu0 %v5771
    %6056 = vmatprep.subr.mxu0 0.0
    %6057 = vmatpush1.msra.mxu0 %v5772
    %6058 = vmatprep.subr.mxu0 0.0
    %6059 = vmatpush1.msra.mxu0 %v5773
    %6060 = vmatprep.subr.mxu0 0.0
    %6061 = vmatpush1.msra.mxu0 %v5774
    %6062 = vmatprep.subr.mxu0 0.0
    %6063 = vmatpush1.msra.mxu0 %v5775
    %6064 = vmatprep.subr.mxu0 0.0
    %6065 = vmatpush1.msra.mxu0 %v5776
    %6066 = vmatprep.subr.mxu0 0.0
    %6067 = vmatpush1.msra.mxu0 %v5777
    %6068 = vmatprep.subr.mxu0 0.0
    %6069 = vmatpush1.msra.mxu0 %v5778
    %6070 = vmatprep.subr.mxu0 0.0
    %6071 = vmatpush1.msra.mxu0 %v5779
    %6072 = vmatprep.subr.mxu0 0.0
    %6073 = vmatpush1.msra.mxu0 %v5780
    %6074 = vmatprep.subr.mxu0 0.0
    %6075 = vmatpush1.msra.mxu0 %v5781
    %6076 = vmatprep.subr.mxu0 0.0
    %6077 = vmatpush1.msra.mxu0 %v5782
    %6078 = vmatprep.subr.mxu0 0.0
    %6079 = vmatpush1.msra.mxu0 %v5783
    %6080 = vmatprep.mubr.f32.mxu0 %v5720
    %6081 = vmatmul.mubr.f32.gmra.mrb[0].mxu0 %v5719
    %v6082 = vpop.f32.mrb[0].mxu0
    %v6083 = vadd.f32 %v6014, %v6082
    %v6084 = vpop.f32.mrb[0].mxu0
    %6085 = vmatprep.mubr.f32.mxu0 %v5736
    %6086 = vmatmul.mubr.f32.gmra.mrb[0].mxu0 %v5735
    %v6087 = vpop.f32.mrb[0].mxu0
    %v6088 = vadd.f32 %v6014, %v6087
    %v6089 = vpop.f32.mrb[0].mxu0
    %6090 = vdwg.mxu0
    %6091 = vmatprep.subr.mxu0 0.0
    %6092 = vmatpush1.msra.mxu0 %v5784
    %6093 = vmatprep.subr.mxu0 0.0
    %6094 = vmatpush1.msra.mxu0 %v5785
    %6095 = vmatprep.subr.mxu0 0.0
    %6096 = vmatpush1.msra.mxu0 %v5786
    %6097 = vmatprep.subr.mxu0 0.0
    %6098 = vmatpush1.msra.mxu0 %v5787
    %6099 = vmatprep.subr.mxu0 0.0
    %6100 = vmatpush1.msra.mxu0 %v5788
    %6101 = vmatprep.subr.mxu0 0.0
    %6102 = vmatpush1.msra.mxu0 %v5789
    %6103 = vmatprep.subr.mxu0 0.0
    %6104 = vmatpush1.msra.mxu0 %v5790
    %6105 = vmatprep.subr.mxu0 0.0
    %6106 = vmatpush1.msra.mxu0 %v5791
    %6107 = vmatprep.subr.mxu0 0.0
    %6108 = vmatpush1.msra.mxu0 %v5792
    %6109 = vmatprep.subr.mxu0 0.0
    %6110 = vmatpush1.msra.mxu0 %v5793
    %6111 = vmatprep.subr.mxu0 0.0
    %6112 = vmatpush1.msra.mxu0 %v5794
    %6113 = vmatprep.subr.mxu0 0.0
    %6114 = vmatpush1.msra.mxu0 %v5795
    %6115 = vmatprep.subr.mxu0 0.0
    %6116 = vmatpush1.msra.mxu0 %v5796
    %6117 = vmatprep.subr.mxu0 0.0
    %6118 = vmatpush1.msra.mxu0 %v5797
    %6119 = vmatprep.subr.mxu0 0.0
    %6120 = vmatpush1.msra.mxu0 %v5798
    %6121 = vmatprep.subr.mxu0 0.0
    %6122 = vmatpush1.msra.mxu0 %v5799
    %6123 = vmatprep.subr.mxu0 0.0
    %6124 = vmatpush1.msra.mxu0 %v5800
    %6125 = vmatprep.subr.mxu0 0.0
    %6126 = vmatpush1.msra.mxu0 %v5801
    %6127 = vmatprep.subr.mxu0 0.0
    %6128 = vmatpush1.msra.mxu0 %v5802
    %6129 = vmatprep.subr.mxu0 0.0
    %6130 = vmatpush1.msra.mxu0 %v5803
    %6131 = vmatprep.subr.mxu0 0.0
    %6132 = vmatpush1.msra.mxu0 %v5804
    %6133 = vmatprep.subr.mxu0 0.0
    %6134 = vmatpush1.msra.mxu0 %v5805
    %6135 = vmatprep.subr.mxu0 0.0
    %6136 = vmatpush1.msra.mxu0 %v5806
    %6137 = vmatprep.subr.mxu0 0.0
    %6138 = vmatpush1.msra.mxu0 %v5807
    %6139 = vmatprep.subr.mxu0 0.0
    %6140 = vmatpush1.msra.mxu0 %v5808
    %6141 = vmatprep.subr.mxu0 0.0
    %6142 = vmatpush1.msra.mxu0 %v5809
    %6143 = vmatprep.subr.mxu0 0.0
    %6144 = vmatpush1.msra.mxu0 %v5810
    %6145 = vmatprep.subr.mxu0 0.0
    %6146 = vmatpush1.msra.mxu0 %v5811
    %6147 = vmatprep.subr.mxu0 0.0
    %6148 = vmatpush1.msra.mxu0 %v5812
    %6149 = vmatprep.subr.mxu0 0.0
    %6150 = vmatpush1.msra.mxu0 %v5813
    %6151 = vmatprep.subr.mxu0 0.0
    %6152 = vmatpush1.msra.mxu0 %v5814
    %6153 = vmatprep.subr.mxu0 0.0
    %6154 = vmatpush1.msra.mxu0 %v5815
    %6155 = vmatprep.mubr.f32.mxu0 %v5722
    %6156 = vmatmul.mubr.f32.gmra.mrb[0].mxu0 %v5721
    %v6157 = vpop.f32.mrb[0].mxu0
    %v6158 = vadd.f32 %v6083, %v6157
    %v6159 = vpop.f32.mrb[0].mxu0
    %6160 = vmatprep.mubr.f32.mxu0 %v5738
    %6161 = vmatmul.mubr.f32.gmra.mrb[0].mxu0 %v5737
    %v6162 = vpop.f32.mrb[0].mxu0
    %v6163 = vadd.f32 %v6088, %v6162
    %v6164 = vpop.f32.mrb[0].mxu0
    %6165 = vdwg.mxu0
    %6166 = vmatprep.subr.mxu0 0.0
    %6167 = vmatpush1.msra.mxu0 %v5816
    %6168 = vmatprep.subr.mxu0 0.0
    %6169 = vmatpush1.msra.mxu0 %v5817
    %6170 = vmatprep.subr.mxu0 0.0
    %6171 = vmatpush1.msra.mxu0 %v5818
    %6172 = vmatprep.subr.mxu0 0.0
    %6173 = vmatpush1.msra.mxu0 %v5819
    %6174 = vmatprep.subr.mxu0 0.0
    %6175 = vmatpush1.msra.mxu0 %v5820
    %6176 = vmatprep.subr.mxu0 0.0
    %6177 = vmatpush1.msra.mxu0 %v5821
    %6178 = vmatprep.subr.mxu0 0.0
    %6179 = vmatpush1.msra.mxu0 %v5822
    %6180 = vmatprep.subr.mxu0 0.0
    %6181 = vmatpush1.msra.mxu0 %v5823
    %6182 = vmatprep.subr.mxu0 0.0
    %6183 = vmatpush1.msra.mxu0 %v5824
    %6184 = vmatprep.subr.mxu0 0.0
    %6185 = vmatpush1.msra.mxu0 %v5825
    %6186 = vmatprep.subr.mxu0 0.0
    %6187 = vmatpush1.msra.mxu0 %v5826
    %6188 = vmatprep.subr.mxu0 0.0
    %6189 = vmatpush1.msra.mxu0 %v5827
    %6190 = vmatprep.subr.mxu0 0.0
    %6191 = vmatpush1.msra.mxu0 %v5828
    %6192 = vmatprep.subr.mxu0 0.0
    %6193 = vmatpush1.msra.mxu0 %v5829
    %6194 = vmatprep.subr.mxu0 0.0
    %6195 = vmatpush1.msra.mxu0 %v5830
    %6196 = vmatprep.subr.mxu0 0.0
    %6197 = vmatpush1.msra.mxu0 %v5831
    %6198 = vmatprep.subr.mxu0 0.0
    %6199 = vmatpush1.msra.mxu0 %v5832
    %6200 = vmatprep.subr.mxu0 0.0
    %6201 = vmatpush1.msra.mxu0 %v5833
    %6202 = vmatprep.subr.mxu0 0.0
    %6203 = vmatpush1.msra.mxu0 %v5834
    %6204 = vmatprep.subr.mxu0 0.0
    %6205 = vmatpush1.msra.mxu0 %v5835
    %6206 = vmatprep.subr.mxu0 0.0
    %6207 = vmatpush1.msra.mxu0 %v5836
    %6208 = vmatprep.subr.mxu0 0.0
    %6209 = vmatpush1.msra.mxu0 %v5837
    %6210 = vmatprep.subr.mxu0 0.0
    %6211 = vmatpush1.msra.mxu0 %v5838
    %6212 = vmatprep.subr.mxu0 0.0
    %6213 = vmatpush1.msra.mxu0 %v5839
    %6214 = vmatprep.subr.mxu0 0.0
    %6215 = vmatpush1.msra.mxu0 %v5840
    %6216 = vmatprep.subr.mxu0 0.0
    %6217 = vmatpush1.msra.mxu0 %v5841
    %6218 = vmatprep.subr.mxu0 0.0
    %6219 = vmatpush1.msra.mxu0 %v5842
    %6220 = vmatprep.subr.mxu0 0.0
    %6221 = vmatpush1.msra.mxu0 %v5843
    %6222 = vmatprep.subr.mxu0 0.0
    %6223 = vmatpush1.msra.mxu0 %v5844
    %6224 = vmatprep.subr.mxu0 0.0
    %6225 = vmatpush1.msra.mxu0 %v5845
    %6226 = vmatprep.subr.mxu0 0.0
    %6227 = vmatpush1.msra.mxu0 %v5846
    %6228 = vmatprep.subr.mxu0 0.0
    %6229 = vmatpush1.msra.mxu0 %v5847
    %6230 = vmatprep.mubr.f32.mxu0 %v5724
    %6231 = vmatmul.mubr.f32.gmra.mrb[0].mxu0 %v5723
    %v6232 = vpop.f32.mrb[0].mxu0
    %v6233 = vadd.f32 %v6158, %v6232
    %v6234 = vpop.f32.mrb[0].mxu0
    %6235 = vmatprep.mubr.f32.mxu0 %v5740
    %6236 = vmatmul.mubr.f32.gmra.mrb[0].mxu0 %v5739
    %v6237 = vpop.f32.mrb[0].mxu0
    %v6238 = vadd.f32 %v6163, %v6237
    %v6239 = vpop.f32.mrb[0].mxu0
    %6240 = vdwg.mxu0
    %6241 = vmatprep.subr.mxu0 0.0
    %6242 = vmatpush1.msra.mxu0 %v5848
    %6243 = vmatprep.subr.mxu0 0.0
    %6244 = vmatpush1.msra.mxu0 %v5849
    %6245 = vmatprep.subr.mxu0 0.0
    %6246 = vmatpush1.msra.mxu0 %v5850
    %6247 = vmatprep.subr.mxu0 0.0
    %6248 = vmatpush1.msra.mxu0 %v5851
    %6249 = vmatprep.subr.mxu0 0.0
    %6250 = vmatpush1.msra.mxu0 %v5852
    %6251 = vmatprep.subr.mxu0 0.0
    %6252 = vmatpush1.msra.mxu0 %v5853
    %6253 = vmatprep.subr.mxu0 0.0
    %6254 = vmatpush1.msra.mxu0 %v5854
    %6255 = vmatprep.subr.mxu0 0.0
    %6256 = vmatpush1.msra.mxu0 %v5855
    %6257 = vmatprep.subr.mxu0 0.0
    %6258 = vmatpush1.msra.mxu0 %v5856
    %6259 = vmatprep.subr.mxu0 0.0
    %6260 = vmatpush1.msra.mxu0 %v5857
    %6261 = vmatprep.subr.mxu0 0.0
    %6262 = vmatpush1.msra.mxu0 %v5858
    %6263 = vmatprep.subr.mxu0 0.0
    %6264 = vmatpush1.msra.mxu0 %v5859
    %6265 = vmatprep.subr.mxu0 0.0
    %6266 = vmatpush1.msra.mxu0 %v5860
    %6267 = vmatprep.subr.mxu0 0.0
    %6268 = vmatpush1.msra.mxu0 %v5861
    %6269 = vmatprep.subr.mxu0 0.0
    %6270 = vmatpush1.msra.mxu0 %v5862
    %6271 = vmatprep.subr.mxu0 0.0
    %6272 = vmatpush1.msra.mxu0 %v5863
    %6273 = vmatprep.subr.mxu0 0.0
    %6274 = vmatpush1.msra.mxu0 %v5864
    %6275 = vmatprep.subr.mxu0 0.0
    %6276 = vmatpush1.msra.mxu0 %v5865
    %6277 = vmatprep.subr.mxu0 0.0
    %6278 = vmatpush1.msra.mxu0 %v5866
    %6279 = vmatprep.subr.mxu0 0.0
    %6280 = vmatpush1.msra.mxu0 %v5867
    %6281 = vmatprep.subr.mxu0 0.0
    %6282 = vmatpush1.msra.mxu0 %v5868
    %6283 = vmatprep.subr.mxu0 0.0
    %6284 = vmatpush1.msra.mxu0 %v5869
    %6285 = vmatprep.subr.mxu0 0.0
    %6286 = vmatpush1.msra.mxu0 %v5870
    %6287 = vmatprep.subr.mxu0 0.0
    %6288 = vmatpush1.msra.mxu0 %v5871
    %6289 = vmatprep.subr.mxu0 0.0
    %6290 = vmatpush1.msra.mxu0 %v5872
    %6291 = vmatprep.subr.mxu0 0.0
    %6292 = vmatpush1.msra.mxu0 %v5873
    %6293 = vmatprep.subr.mxu0 0.0
    %6294 = vmatpush1.msra.mxu0 %v5874
    %6295 = vmatprep.subr.mxu0 0.0
    %6296 = vmatpush1.msra.mxu0 %v5875
    %6297 = vmatprep.subr.mxu0 0.0
    %6298 = vmatpush1.msra.mxu0 %v5876
    %6299 = vmatprep.subr.mxu0 0.0
    %6300 = vmatpush1.msra.mxu0 %v5877
    %6301 = vmatprep.subr.mxu0 0.0
    %6302 = vmatpush1.msra.mxu0 %v5878
    %6303 = vmatprep.subr.mxu0 0.0
    %6304 = vmatpush1.msra.mxu0 %v5879
    %6305 = vmatprep.mubr.f32.mxu0 %v5726
    %6306 = vmatmul.mubr.f32.gmra.mrb[0].mxu0 %v5725
    %v6307 = vpop.f32.mrb[0].mxu0
    %v6308 = vadd.f32 %v6233, %v6307
    %v6309 = vpop.f32.mrb[0].mxu0
    %6310 = vmatprep.mubr.f32.mxu0 %v5742
    %6311 = vmatmul.mubr.f32.gmra.mrb[0].mxu0 %v5741
    %v6312 = vpop.f32.mrb[0].mxu0
    %v6313 = vadd.f32 %v6238, %v6312
    %v6314 = vpop.f32.mrb[0].mxu0
    %6315 = vdwg.mxu0
    %6316 = vmatprep.subr.mxu0 0.0
    %6317 = vmatpush1.msra.mxu0 %v5880
    %6318 = vmatprep.subr.mxu0 0.0
    %6319 = vmatpush1.msra.mxu0 %v5881
    %6320 = vmatprep.subr.mxu0 0.0
    %6321 = vmatpush1.msra.mxu0 %v5882
    %6322 = vmatprep.subr.mxu0 0.0
    %6323 = vmatpush1.msra.mxu0 %v5883
    %6324 = vmatprep.subr.mxu0 0.0
    %6325 = vmatpush1.msra.mxu0 %v5884
    %6326 = vmatprep.subr.mxu0 0.0
    %6327 = vmatpush1.msra.mxu0 %v5885
    %6328 = vmatprep.subr.mxu0 0.0
    %6329 = vmatpush1.msra.mxu0 %v5886
    %6330 = vmatprep.subr.mxu0 0.0
    %6331 = vmatpush1.msra.mxu0 %v5887
    %6332 = vmatprep.subr.mxu0 0.0
    %6333 = vmatpush1.msra.mxu0 %v5888
    %6334 = vmatprep.subr.mxu0 0.0
    %6335 = vmatpush1.msra.mxu0 %v5889
    %6336 = vmatprep.subr.mxu0 0.0
    %6337 = vmatpush1.msra.mxu0 %v5890
    %6338 = vmatprep.subr.mxu0 0.0
    %6339 = vmatpush1.msra.mxu0 %v5891
    %6340 = vmatprep.subr.mxu0 0.0
    %6341 = vmatpush1.msra.mxu0 %v5892
    %6342 = vmatprep.subr.mxu0 0.0
    %6343 = vmatpush1.msra.mxu0 %v5893
    %6344 = vmatprep.subr.mxu0 0.0
    %6345 = vmatpush1.msra.mxu0 %v5894
    %6346 = vmatprep.subr.mxu0 0.0
    %6347 = vmatpush1.msra.mxu0 %v5895
    %6348 = vmatprep.subr.mxu0 0.0
    %6349 = vmatpush1.msra.mxu0 %v5896
    %6350 = vmatprep.subr.mxu0 0.0
    %6351 = vmatpush1.msra.mxu0 %v5897
    %6352 = vmatprep.subr.mxu0 0.0
    %6353 = vmatpush1.msra.mxu0 %v5898
    %6354 = vmatprep.subr.mxu0 0.0
    %6355 = vmatpush1.msra.mxu0 %v5899
    %6356 = vmatprep.subr.mxu0 0.0
    %6357 = vmatpush1.msra.mxu0 %v5900
    %6358 = vmatprep.subr.mxu0 0.0
    %6359 = vmatpush1.msra.mxu0 %v5901
    %6360 = vmatprep.subr.mxu0 0.0
    %6361 = vmatpush1.msra.mxu0 %v5902
    %6362 = vmatprep.subr.mxu0 0.0
    %6363 = vmatpush1.msra.mxu0 %v5903
    %6364 = vmatprep.subr.mxu0 0.0
    %6365 = vmatpush1.msra.mxu0 %v5904
    %6366 = vmatprep.subr.mxu0 0.0
    %6367 = vmatpush1.msra.mxu0 %v5905
    %6368 = vmatprep.subr.mxu0 0.0
    %6369 = vmatpush1.msra.mxu0 %v5906
    %6370 = vmatprep.subr.mxu0 0.0
    %6371 = vmatpush1.msra.mxu0 %v5907
    %6372 = vmatprep.subr.mxu0 0.0
    %6373 = vmatpush1.msra.mxu0 %v5908
    %6374 = vmatprep.subr.mxu0 0.0
    %6375 = vmatpush1.msra.mxu0 %v5909
    %6376 = vmatprep.subr.mxu0 0.0
    %6377 = vmatpush1.msra.mxu0 %v5910
    %6378 = vmatprep.subr.mxu0 0.0
    %6379 = vmatpush1.msra.mxu0 %v5911
    %6380 = vmatprep.mubr.f32.mxu0 %v5728
    %6381 = vmatmul.mubr.f32.gmra.mrb[0].mxu0 %v5727
    %v6382 = vpop.f32.mrb[0].mxu0
    %v6383 = vadd.f32 %v6308, %v6382
    %v6384 = vpop.f32.mrb[0].mxu0
    %6385 = vmatprep.mubr.f32.mxu0 %v5744
    %6386 = vmatmul.mubr.f32.gmra.mrb[0].mxu0 %v5743
    %v6387 = vpop.f32.mrb[0].mxu0
    %v6388 = vadd.f32 %v6313, %v6387
    %v6389 = vpop.f32.mrb[0].mxu0
    %6390 = vdwg.mxu0
    %6391 = vmatprep.subr.mxu0 0.0
    %6392 = vmatpush1.msra.mxu0 %v5912
    %6393 = vmatprep.subr.mxu0 0.0
    %6394 = vmatpush1.msra.mxu0 %v5913
    %6395 = vmatprep.subr.mxu0 0.0
    %6396 = vmatpush1.msra.mxu0 %v5914
    %6397 = vmatprep.subr.mxu0 0.0
    %6398 = vmatpush1.msra.mxu0 %v5915
    %6399 = vmatprep.subr.mxu0 0.0
    %6400 = vmatpush1.msra.mxu0 %v5916
    %6401 = vmatprep.subr.mxu0 0.0
    %6402 = vmatpush1.msra.mxu0 %v5917
    %6403 = vmatprep.subr.mxu0 0.0
    %6404 = vmatpush1.msra.mxu0 %v5918
    %6405 = vmatprep.subr.mxu0 0.0
    %6406 = vmatpush1.msra.mxu0 %v5919
    %6407 = vmatprep.subr.mxu0 0.0
    %6408 = vmatpush1.msra.mxu0 %v5920
    %6409 = vmatprep.subr.mxu0 0.0
    %6410 = vmatpush1.msra.mxu0 %v5921
    %6411 = vmatprep.subr.mxu0 0.0
    %6412 = vmatpush1.msra.mxu0 %v5922
    %6413 = vmatprep.subr.mxu0 0.0
    %6414 = vmatpush1.msra.mxu0 %v5923
    %6415 = vmatprep.subr.mxu0 0.0
    %6416 = vmatpush1.msra.mxu0 %v5924
    %6417 = vmatprep.subr.mxu0 0.0
    %6418 = vmatpush1.msra.mxu0 %v5925
    %6419 = vmatprep.subr.mxu0 0.0
    %6420 = vmatpush1.msra.mxu0 %v5926
    %6421 = vmatprep.subr.mxu0 0.0
    %6422 = vmatpush1.msra.mxu0 %v5927
    %6423 = vmatprep.subr.mxu0 0.0
    %6424 = vmatpush1.msra.mxu0 %v5928
    %6425 = vmatprep.subr.mxu0 0.0
    %6426 = vmatpush1.msra.mxu0 %v5929
    %6427 = vmatprep.subr.mxu0 0.0
    %6428 = vmatpush1.msra.mxu0 %v5930
    %6429 = vmatprep.subr.mxu0 0.0
    %6430 = vmatpush1.msra.mxu0 %v5931
    %6431 = vmatprep.subr.mxu0 0.0
    %6432 = vmatpush1.msra.mxu0 %v5932
    %6433 = vmatprep.subr.mxu0 0.0
    %6434 = vmatpush1.msra.mxu0 %v5933
    %6435 = vmatprep.subr.mxu0 0.0
    %6436 = vmatpush1.msra.mxu0 %v5934
    %6437 = vmatprep.subr.mxu0 0.0
    %6438 = vmatpush1.msra.mxu0 %v5935
    %6439 = vmatprep.subr.mxu0 0.0
    %6440 = vmatpush1.msra.mxu0 %v5936
    %6441 = vmatprep.subr.mxu0 0.0
    %6442 = vmatpush1.msra.mxu0 %v5937
    %6443 = vmatprep.subr.mxu0 0.0
    %6444 = vmatpush1.msra.mxu0 %v5938
    %6445 = vmatprep.subr.mxu0 0.0
    %6446 = vmatpush1.msra.mxu0 %v5939
    %6447 = vmatprep.subr.mxu0 0.0
    %6448 = vmatpush1.msra.mxu0 %v5940
    %6449 = vmatprep.subr.mxu0 0.0
    %6450 = vmatpush1.msra.mxu0 %v5941
    %6451 = vmatprep.subr.mxu0 0.0
    %6452 = vmatpush1.msra.mxu0 %v5942
    %6453 = vmatprep.subr.mxu0 0.0
    %6454 = vmatpush1.msra.mxu0 %v5943
    %6455 = vmatprep.mubr.f32.mxu0 %v5730
    %6456 = vmatmul.mubr.f32.gmra.mrb[0].mxu0 %v5729
    %v6457 = vpop.f32.mrb[0].mxu0
    %v6458 = vadd.f32 %v6383, %v6457
    %v6459 = vpop.f32.mrb[0].mxu0
    %6460 = vmatprep.mubr.f32.mxu0 %v5746
    %6461 = vmatmul.mubr.f32.gmra.mrb[0].mxu0 %v5745
    %v6462 = vpop.f32.mrb[0].mxu0
    %v6463 = vadd.f32 %v6388, %v6462
    %v6464 = vpop.f32.mrb[0].mxu0
    %6465 = vdwg.mxu0
    %6466 = vmatprep.subr.mxu0 0.0
    %6467 = vmatpush1.msra.mxu0 %v5944
    %6468 = vmatprep.subr.mxu0 0.0
    %6469 = vmatpush1.msra.mxu0 %v5945
    %6470 = vmatprep.subr.mxu0 0.0
    %6471 = vmatpush1.msra.mxu0 %v5946
    %6472 = vmatprep.subr.mxu0 0.0
    %6473 = vmatpush1.msra.mxu0 %v5947
    %6474 = vmatprep.subr.mxu0 0.0
    %6475 = vmatpush1.msra.mxu0 %v5948
    %6476 = vmatprep.subr.mxu0 0.0
    %6477 = vmatpush1.msra.mxu0 %v5949
    %6478 = vmatprep.subr.mxu0 0.0
    %6479 = vmatpush1.msra.mxu0 %v5950
    %6480 = vmatprep.subr.mxu0 0.0
    %6481 = vmatpush1.msra.mxu0 %v5951
    %6482 = vmatprep.subr.mxu0 0.0
    %6483 = vmatpush1.msra.mxu0 %v5952
    %6484 = vmatprep.subr.mxu0 0.0
    %6485 = vmatpush1.msra.mxu0 %v5953
    %6486 = vmatprep.subr.mxu0 0.0
    %6487 = vmatpush1.msra.mxu0 %v5954
    %6488 = vmatprep.subr.mxu0 0.0
    %6489 = vmatpush1.msra.mxu0 %v5955
    %6490 = vmatprep.subr.mxu0 0.0
    %6491 = vmatpush1.msra.mxu0 %v5956
    %6492 = vmatprep.subr.mxu0 0.0
    %6493 = vmatpush1.msra.mxu0 %v5957
    %6494 = vmatprep.subr.mxu0 0.0
    %6495 = vmatpush1.msra.mxu0 %v5958
    %6496 = vmatprep.subr.mxu0 0.0
    %6497 = vmatpush1.msra.mxu0 %v5959
    %6498 = vmatprep.subr.mxu0 0.0
    %6499 = vmatpush1.msra.mxu0 %v5960
    %6500 = vmatprep.subr.mxu0 0.0
    %6501 = vmatpush1.msra.mxu0 %v5961
    %6502 = vmatprep.subr.mxu0 0.0
    %6503 = vmatpush1.msra.mxu0 %v5962
    %6504 = vmatprep.subr.mxu0 0.0
    %6505 = vmatpush1.msra.mxu0 %v5963
    %6506 = vmatprep.subr.mxu0 0.0
    %6507 = vmatpush1.msra.mxu0 %v5964
    %6508 = vmatprep.subr.mxu0 0.0
    %6509 = vmatpush1.msra.mxu0 %v5965
    %6510 = vmatprep.subr.mxu0 0.0
    %6511 = vmatpush1.msra.mxu0 %v5966
    %6512 = vmatprep.subr.mxu0 0.0
    %6513 = vmatpush1.msra.mxu0 %v5967
    %6514 = vmatprep.subr.mxu0 0.0
    %6515 = vmatpush1.msra.mxu0 %v5968
    %6516 = vmatprep.subr.mxu0 0.0
    %6517 = vmatpush1.msra.mxu0 %v5969
    %6518 = vmatprep.subr.mxu0 0.0
    %6519 = vmatpush1.msra.mxu0 %v5970
    %6520 = vmatprep.subr.mxu0 0.0
    %6521 = vmatpush1.msra.mxu0 %v5971
    %6522 = vmatprep.subr.mxu0 0.0
    %6523 = vmatpush1.msra.mxu0 %v5972
    %6524 = vmatprep.subr.mxu0 0.0
    %6525 = vmatpush1.msra.mxu0 %v5973
    %6526 = vmatprep.subr.mxu0 0.0
    %6527 = vmatpush1.msra.mxu0 %v5974
    %6528 = vmatprep.subr.mxu0 0.0
    %6529 = vmatpush1.msra.mxu0 %v5975
    %6530 = vmatprep.mubr.f32.mxu0 %v5732
    %6531 = vmatmul.mubr.f32.gmra.mrb[0].mxu0 %v5731
    %v6532 = vpop.f32.mrb[0].mxu0
    %v6533 = vadd.f32 %v6458, %v6532
    %v6534 = vpop.f32.mrb[0].mxu0
    %6535 = vmatprep.mubr.f32.mxu0 %v5748
    %6536 = vmatmul.mubr.f32.gmra.mrb[0].mxu0 %v5747
    %v6537 = vpop.f32.mrb[0].mxu0
    %v6538 = vadd.f32 %v6463, %v6537
    %v6539 = vpop.f32.mrb[0].mxu0
    %6540 = vdwg.mxu0
    %6541 = vmatprep.subr.mxu0 0.0
    %6542 = vmatpush1.msra.mxu0 %v5976
    %6543 = vmatprep.subr.mxu0 0.0
    %6544 = vmatpush1.msra.mxu0 %v5977
    %6545 = vmatprep.subr.mxu0 0.0
    %6546 = vmatpush1.msra.mxu0 %v5978
    %6547 = vmatprep.subr.mxu0 0.0
    %6548 = vmatpush1.msra.mxu0 %v5979
    %6549 = vmatprep.subr.mxu0 0.0
    %6550 = vmatpush1.msra.mxu0 %v5980
    %6551 = vmatprep.subr.mxu0 0.0
    %6552 = vmatpush1.msra.mxu0 %v5981
    %6553 = vmatprep.subr.mxu0 0.0
    %6554 = vmatpush1.msra.mxu0 %v5982
    %6555 = vmatprep.subr.mxu0 0.0
    %6556 = vmatpush1.msra.mxu0 %v5983
    %6557 = vmatprep.subr.mxu0 0.0
    %6558 = vmatpush1.msra.mxu0 %v5984
    %6559 = vmatprep.subr.mxu0 0.0
    %6560 = vmatpush1.msra.mxu0 %v5985
    %6561 = vmatprep.subr.mxu0 0.0
    %6562 = vmatpush1.msra.mxu0 %v5986
    %6563 = vmatprep.subr.mxu0 0.0
    %6564 = vmatpush1.msra.mxu0 %v5987
    %6565 = vmatprep.subr.mxu0 0.0
    %6566 = vmatpush1.msra.mxu0 %v5988
    %6567 = vmatprep.subr.mxu0 0.0
    %6568 = vmatpush1.msra.mxu0 %v5989
    %6569 = vmatprep.subr.mxu0 0.0
    %6570 = vmatpush1.msra.mxu0 %v5990
    %6571 = vmatprep.subr.mxu0 0.0
    %6572 = vmatpush1.msra.mxu0 %v5991
    %6573 = vmatprep.subr.mxu0 0.0
    %6574 = vmatpush1.msra.mxu0 %v5992
    %6575 = vmatprep.subr.mxu0 0.0
    %6576 = vmatpush1.msra.mxu0 %v5993
    %6577 = vmatprep.subr.mxu0 0.0
    %6578 = vmatpush1.msra.mxu0 %v5994
    %6579 = vmatprep.subr.mxu0 0.0
    %6580 = vmatpush1.msra.mxu0 %v5995
    %6581 = vmatprep.subr.mxu0 0.0
    %6582 = vmatpush1.msra.mxu0 %v5996
    %6583 = vmatprep.subr.mxu0 0.0
    %6584 = vmatpush1.msra.mxu0 %v5997
    %6585 = vmatprep.subr.mxu0 0.0
    %6586 = vmatpush1.msra.mxu0 %v5998
    %6587 = vmatprep.subr.mxu0 0.0
    %6588 = vmatpush1.msra.mxu0 %v5999
    %6589 = vmatprep.subr.mxu0 0.0
    %6590 = vmatpush1.msra.mxu0 %v6000
    %6591 = vmatprep.subr.mxu0 0.0
    %6592 = vmatpush1.msra.mxu0 %v6001
    %6593 = vmatprep.subr.mxu0 0.0
    %6594 = vmatpush1.msra.mxu0 %v6002
    %6595 = vmatprep.subr.mxu0 0.0
    %6596 = vmatpush1.msra.mxu0 %v6003
    %6597 = vmatprep.subr.mxu0 0.0
    %6598 = vmatpush1.msra.mxu0 %v6004
    %6599 = vmatprep.subr.mxu0 0.0
    %6600 = vmatpush1.msra.mxu0 %v6005
    %6601 = vmatprep.subr.mxu0 0.0
    %6602 = vmatpush1.msra.mxu0 %v6006
    %6603 = vmatprep.subr.mxu0 0.0
    %6604 = vmatpush1.msra.mxu0 %v6007
    %6605 = vmatprep.mubr.f32.mxu0 %v5734
    %6606 = vmatmul.mubr.f32.gmra.mrb[0].mxu0 %v5733
    %v6607 = vpop.f32.mrb[0].mxu0
    %v6608 = vadd.f32 %v6533, %v6607
    %v6609 = vpop.f32.mrb[0].mxu0
    %6610 = vmatprep.mubr.f32.mxu0 %v5750
    %6611 = vmatmul.mubr.f32.gmra.mrb[0].mxu0 %v5749
    %v6612 = vpop.f32.mrb[0].mxu0
    %v6613 = vadd.f32 %v6538, %v6612
    %v6614 = vpop.f32.mrb[0].mxu0
    %6615 = vdwg.mxu0
    %v6616 = vadd.f32 %v4945, %v6608
    %v6617 = vadd.f32 %v4946, %v6613
    %s6618 = scalar_lea.vmem %s11, 1
    %v6619 = vld [vmem:[%s6618] sm:$0x1]
    %s6620 = scalar_lea.vmem %s12, 1
    %v6621 = vld [vmem:[%s6620] sm:$0x1]
    %v6622 = vsel %vm64, %v6616, 0.0
    %6623 = vadd.xlane.f32.xlu0 %v6622
    %v6624 = vpop.xlane.xlu0 %6623
    %v6625 = vsel %vm64, %v6617, 0.0
    %6626 = vadd.xlane.f32.xlu0 %v6625
    %v6627 = vpop.xlane.xlu0 %6626
    %v6628 = vmul.f32 %v6624, %v1607
    %v6629 = vmul.f32 %v6627, %v1607
    %v6630 = vsub.f32 %v6616, %v6628
    %v6631 = vsub.f32 %v6617, %v6629
    %v6632 = vmul.f32 %v6630, %v6630
    %v6633 = vmul.f32 %v6631, %v6631
    %v6634 = vsel %vm64, %v6632, 0.0
    %6635 = vadd.xlane.f32.xlu0 %v6634
    %v6636 = vpop.xlane.xlu0 %6635
    %v6637 = vsel %vm64, %v6633, 0.0
    %6638 = vadd.xlane.f32.xlu0 %v6637
    %v6639 = vpop.xlane.xlu0 %6638
    %v6640 = vmul.f32 %v6636, %v1607
    %v6641 = vmul.f32 %v6639, %v1607
    %v6642 = vadd.f32 %v6640, 1e-05
    %v6643 = vadd.f32 %v6641, 1e-05
    %v6644 = vrsqrt.pop %v6642
    %v6645 = vrsqrt.pop %v6643
    %v6646 = vmul.f32 %v6630, %v6644
    %v6647 = vmul.f32 %v6631, %v6645
    %v6649 = vlaneseq
    %v6650 = vshrl.u32 %v6649, 7
    %v6651 = vsub.s32 0, %v6650
    %v6652 = vrot.slane %v6619, %v6651
    %v6654 = vmul.f32 %v6646, %v6652
    %v6655 = vmul.f32 %v6647, %v6652
    %v6657 = vlaneseq
    %v6658 = vshrl.u32 %v6657, 7
    %v6659 = vsub.s32 0, %v6658
    %v6660 = vrot.slane %v6621, %v6659
    %v6662 = vadd.f32 %v6654, %v6660
    %v6663 = vadd.f32 %v6655, %v6660
    %v6665 = vrot.slane %v6662, 7
    %v6668 = vrot.slane %v6663, 6
    %vm6670 = vcmask 1040384
    %v6671 = vsel %vm6670, %v6665, %v6668
    %v6672 = vld [vmem:[%s13] sm:$0xff]
    %v6673 = vld [vmem:[%s13 + $0x8] sm:$0xff]
    %v6674 = vld [vmem:[%s13 + $0x10] sm:$0xff]
    %v6675 = vld [vmem:[%s13 + $0x18] sm:$0xff]
    %v6676 = vld [vmem:[%s14] sm:$0x1]
    %v6678 = vlaneseq
    %v6679 = vshrl.u32 %v6678, 7
    %v6680 = vsub.s32 0, %v6679
    %v6681 = vrot.slane %v6676, %v6680
    %v6684 = vsel %vm64, %v6671, 0
    %6686 = vmatprep.subr.mxu0 0.0
    %6687 = vmatpush1.msra.mxu0 %v6672
    %6688 = vmatprep.subr.mxu0 0.0
    %6689 = vmatpush1.msra.mxu0 %v6673
    %6690 = vmatprep.subr.mxu0 0.0
    %6691 = vmatpush1.msra.mxu0 %v6674
    %6692 = vmatprep.subr.mxu0 0.0
    %6693 = vmatpush1.msra.mxu0 %v6675
    %6694 = vmatprep.subr.mxu0 0.0
    %6695 = vmatpush1.msra.mxu0 0.0
    %6696 = vmatprep.subr.mxu0 0.0
    %6697 = vmatpush1.msra.mxu0 0.0
    %6698 = vmatprep.subr.mxu0 0.0
    %6699 = vmatpush1.msra.mxu0 0.0
    %6700 = vmatprep.subr.mxu0 0.0
    %6701 = vmatpush1.msra.mxu0 0.0
    %6702 = vmatprep.subr.mxu0 0.0
    %6703 = vmatpush1.msra.mxu0 0.0
    %6704 = vmatprep.subr.mxu0 0.0
    %6705 = vmatpush1.msra.mxu0 0.0
    %6706 = vmatprep.subr.mxu0 0.0
    %6707 = vmatpush1.msra.mxu0 0.0
    %6708 = vmatprep.subr.mxu0 0.0
    %6709 = vmatpush1.msra.mxu0 0.0
    %6710 = vmatprep.subr.mxu0 0.0
    %6711 = vmatpush1.msra.mxu0 0.0
    %6712 = vmatprep.subr.mxu0 0.0
    %6713 = vmatpush1.msra.mxu0 0.0
    %6714 = vmatprep.subr.mxu0 0.0
    %6715 = vmatpush1.msra.mxu0 0.0
    %6716 = vmatprep.subr.mxu0 0.0
    %6717 = vmatpush1.msra.mxu0 0.0
    %6718 = vmatprep.subr.mxu0 0.0
    %6719 = vmatpush1.msra.mxu0 0.0
    %6720 = vmatprep.subr.mxu0 0.0
    %6721 = vmatpush1.msra.mxu0 0.0
    %6722 = vmatprep.subr.mxu0 0.0
    %6723 = vmatpush1.msra.mxu0 0.0
    %6724 = vmatprep.subr.mxu0 0.0
    %6725 = vmatpush1.msra.mxu0 0.0
    %6726 = vmatprep.subr.mxu0 0.0
    %6727 = vmatpush1.msra.mxu0 0.0
    %6728 = vmatprep.subr.mxu0 0.0
    %6729 = vmatpush1.msra.mxu0 0.0
    %6730 = vmatprep.subr.mxu0 0.0
    %6731 = vmatpush1.msra.mxu0 0.0
    %6732 = vmatprep.subr.mxu0 0.0
    %6733 = vmatpush1.msra.mxu0 0.0
    %6734 = vmatprep.subr.mxu0 0.0
    %6735 = vmatpush1.msra.mxu0 0.0
    %6736 = vmatprep.subr.mxu0 0.0
    %6737 = vmatpush1.msra.mxu0 0.0
    %6738 = vmatprep.subr.mxu0 0.0
    %6739 = vmatpush1.msra.mxu0 0.0
    %6740 = vmatprep.subr.mxu0 0.0
    %6741 = vmatpush1.msra.mxu0 0.0
    %6742 = vmatprep.subr.mxu0 0.0
    %6743 = vmatpush1.msra.mxu0 0.0
    %6744 = vmatprep.subr.mxu0 0.0
    %6745 = vmatpush1.msra.mxu0 0.0
    %6746 = vmatprep.subr.mxu0 0.0
    %6747 = vmatpush1.msra.mxu0 0.0
    %6748 = vmatprep.subr.mxu0 0.0
    %6749 = vmatpush1.msra.mxu0 0.0
    %6750 = vmatprep.mubr.f32.mxu0 0.0
    %6751 = vmatmul.mubr.f32.gmra.mrb[0].mxu0 %v6684
    %v6752 = vpop.f32.mrb[0].mxu0
    %v6753 = vadd.f32 %v6681, %v6752
    %v6754 = vpop.f32.mrb[0].mxu0
    %6755 = vdwg.mxu0
    %vm6756 = vcmask 254976
    %6757 = vst.msk [vmem:[#allocation2] sm:$0x3] %vm6756, %v6753
    // Predicated region
    $region62: #{transformer_with_attention.1} parent=1 // pred_check
      _
    $region63: #{transformer_with_attention.1} parent=1 // pred_check_branch
      %6759 = sbr.rel (0) target = $region65
    $region64: #{transformer_with_attention.1} parent=1 // pred_region
      %s6761 = ssub.s32 32, 32
      %6762 = vsyncadd [#allocation3], %s6761
      %s6764 = sshll.u32 [#allocation2], 4
      %s6765 = int_to_ptr.vmem [resolvable:$true] %s6764
      %6767 = dma.vmem_to_hbm [thread:$0]  %s6765, 32, %s15, [#allocation3]
    $region65: #{transformer_with_attention.1} parent=1 // pred_fallthru
      _
    // Predicated region
    $region66: #{transformer_with_attention.1} parent=1 // pred_check
      _
    $region67: #{transformer_with_attention.1} parent=1 // pred_check_branch
      %6769 = sbr.rel (0) target = $region69
    $region68: #{transformer_with_attention.1} parent=1 // pred_region
      %6770 = dma.done [#allocation3], 32
    $region69: #{transformer_with_attention.1} parent=1 // pred_fallthru
      _
    %6771 = vsyncpa [#allocation3], 1

</llo_original>
